<compile_context>
chip_gen: v7x
topology: tpu7x:2x2x1
jax: 0.10.0
libtpu: 0.0.40
codegen_flags: <defaults>
</compile_context>

<pallas_src>
import math

import jax
import jax.numpy as jnp
from jax import lax
from jax.experimental import pallas as pl
from jax.experimental.pallas import tpu as pltpu

_KP = 128  # lane-aligned per-tap K block used for conv1's patch matrix


def _round_up(x, m):
    return (x + m - 1) // m * m


def _fold_bn(gamma, beta, mean, var, eps=1e-5):
    scale = gamma / jnp.sqrt(var + eps)
    return scale, beta - mean * scale


# ------------------------------- Pallas kernel ------------------------------

def _make_block_kernel(*, H, W, Cin, Cp, planes, stride, nb):
    """Fused BasicBlock kernel factory (eval-mode BN folded into weights)."""
    Wp = W + 2                      # padded row width of the conv1 input
    mimg = H * Wp                   # conv1 output rows per image (incl. junk cols)
    H2 = (H - 1) // stride + 1
    W2 = (W - 1) // stride + 1
    Wp2 = W2 + 2                    # padded row width of the conv2 input
    mimg2 = H2 * Wp2                # conv2 output rows per image (incl. junk cols)

    def kernel(x_ref, w1_ref, b1_ref, w2_ref, b2_ref, o_ref,
               xpad, p1, hbuf, p2, *extra):
        y1buf = extra[0] if stride != 1 else None

        bias1 = b1_ref[...]                                   # (1, Cp) f32
        bias2 = b2_ref[...]
        # ReLU only on the real conv1 channels; the "copy" channels
        # [planes, planes+Cin) carry the shortcut through un-activated.
        lane = lax.broadcasted_iota(jnp.int32, (1, Cp), 1)
        relu1_mask = lane < planes
        # rows whose flattened column index is a wrap-around junk column
        col2 = lax.broadcasted_iota(jnp.int32, (mimg2, 1), 0) % Wp2
        row2_valid = col2 < W2
        if stride == 1:
            col1 = lax.broadcasted_iota(jnp.int32, (mimg, 1), 0) % Wp
            row1_valid = col1 < W

        # ---- per-step scratch init: padding lanes / rows must be zero ------
        if Cin < _KP:
            xpad[...] = jnp.zeros_like(xpad)
        hbuf[...] = jnp.zeros_like(hbuf)

        def one_image(b):
            # lane-pad the input image (channels -> 128) inside VMEM
            xpad[:, :Cin] = x_ref[b]

            # ------- conv1: pack the 9 taps along K, one dense MXU dot ------
            for dy in range(3):
                for dx in range(3):
                    t = 3 * dy + dx
                    off = dy * Wp + dx
                    p1[:, t * _KP:(t + 1) * _KP] = xpad[off:off + mimg, :]
            y1 = jnp.dot(p1[...], w1_ref[...],
                         preferred_element_type=jnp.float32)
            y1 = y1 + bias1
            y1 = jnp.where(relu1_mask, jnp.maximum(y1, 0.0), y1)

            if stride == 1:
                # masked junk columns become conv2's zero spatial padding
                y1 = jnp.where(row1_valid, y1, 0.0)
                hbuf[Wp2 + 1:Wp2 + 1 + mimg2, :] = y1.astype(hbuf.dtype)
            else:
                # epilogue subsampling: keep every `stride`-th row / column.
                # TODO(synk): compute only the needed (strided) windows.
                y1buf[...] = y1
                for oy2 in range(H2):
                    dst = Wp2 + 1 + oy2 * Wp2
                    src = stride * oy2 * Wp
                    hbuf[dst:dst + W2, :] = y1buf[
                        pl.ds(src, W2, stride=stride), :].astype(hbuf.dtype)

            # ------- conv2 (+ shortcut via the copy channels) ---------------
            for dy in range(3):
                for dx in range(3):
                    t = 3 * dy + dx
                    off = dy * Wp2 + dx
                    p2[:, t * Cp:(t + 1) * Cp] = hbuf[off:off + mimg2, :]
            y2 = jnp.dot(p2[...], w2_ref[...],
                         preferred_element_type=jnp.float32)
            y2 = jnp.maximum(y2 + bias2, 0.0)
            y2 = jnp.where(row2_valid, y2, 0.0)

            row0 = b * mimg2
            if not isinstance(b, int) and mimg2 % 8 == 0:
                row0 = pl.multiple_of(row0, 8)
            o_ref[pl.ds(row0, mimg2), :] = y2.astype(o_ref.dtype)

        if nb == 1:
            one_image(0)
        else:
            def body(b, carry):
                one_image(b)
                return carry
            lax.fori_loop(0, nb, body, 0)

    return kernel


# ------------------------------ host-side wrapper ----------------------------

def basic_block_forward(x_nchw, params, stride=1, option="A",
                        compute_dtype=jnp.bfloat16, images_per_step=None):
    """Pallas implementation of BasicBlock.forward (NCHW in/out, eval-mode BN)."""
    (w1, g1, b1, m1, v1, w2, g2, b2, m2, v2) = params
    N, Cin, H, W = x_nchw.shape
    planes = int(w1.shape[0])
    if option != "A":
        raise NotImplementedError("TODO(synk): option-B (1x1 conv) shortcut")
    assert stride in (1, 2), "CIFAR BasicBlock uses stride 1 or 2"
    assert Cin <= 128, "TODO(synk): tile input channels > 128"

    cdtype = jnp.dtype(compute_dtype)
    # conv1 output lanes: `planes` real channels + `Cin` shortcut copy channels.
    Cp = _round_up(planes + Cin, 128)
    shortcut_identity = (stride == 1 and Cin == planes)
    res_off = 0 if shortcut_identity else planes // 4

    Wp = W + 2
    mimg = H * Wp
    D1 = (H + 3) * Wp
    H2 = (H - 1) // stride + 1
    W2 = (W - 1) // stride + 1
    Wp2 = W2 + 2
    mimg2 = H2 * Wp2
    D1h = (H2 + 3) * Wp2

    if mimg * 9 * _KP * cdtype.itemsize > 24 * 1024 * 1024:
        raise NotImplementedError(
            "TODO(synk): tile the per-image M dimension for large spatial sizes")

    # ---- batch tile: a few images per grid step, but keep >= 2 steps so a
    # v7x megacore can split the (parallel) grid across its two TensorCores.
    align = 8 // math.gcd(mimg2, 8)
    if images_per_step is None:
        nb = max(1, min(8, 4096 // mimg2))
        if N >= 2:
            nb = min(nb, max(1, N // 2))
    else:
        nb = max(1, int(images_per_step))
    nb = min(nb, max(N, 1))
    nb = max(align, (nb // align) * align)
    Np = _round_up(N, nb)
    steps = Np // nb

    # ---- fold BN into the conv weights; fold the shortcut into the matmuls.
    scale1, bias1 = _fold_bn(g1, b1, m1, v1)
    w1t = jnp.transpose(w1, (2, 3, 1, 0)) * scale1             # (3,3,Cin,planes)
    w1t = jnp.pad(w1t, ((0, 0), (0, 0), (0, _KP - Cin), (0, Cp - planes)))
    copy1 = jnp.zeros((_KP, Cp), w1t.dtype).at[
        jnp.arange(Cin), planes + jnp.arange(Cin)].set(1.0)
    w1t = w1t.at[1, 1].add(copy1)            # centre tap carries x through
    w1k = w1t.reshape(9 * _KP, Cp).astype(cdtype)
    b1k = jnp.pad(bias1, (0, Cp - planes)).reshape(1, Cp).astype(jnp.float32)

    scale2, bias2 = _fold_bn(g2, b2, m2, v2)
    w2t = jnp.transpose(w2, (2, 3, 1, 0)) * scale2              # (3,3,pl,pl)
    w2t = jnp.pad(w2t, ((0, 0), (0, 0), (0, Cp - planes), (0, Cp - planes)))
    sel = jnp.zeros((Cp, Cp), w2t.dtype).at[
        planes + jnp.arange(Cin), res_off + jnp.arange(Cin)].set(1.0)
    w2t = w2t.at[1, 1].add(sel)              # centre tap adds the shortcut
    w2k = w2t.reshape(9 * Cp, Cp).astype(cdtype)
    b2k = jnp.pad(bias2, (0, Cp - planes)).reshape(1, Cp).astype(jnp.float32)

    # ---- host-side layout glue: spatial pad + row flatten + batch pad.
    # TODO(synk): do this inside the kernel to save one HBM round trip.
    x = jnp.transpose(x_nchw, (0, 2, 3, 1))                     # NHWC
    xp = jnp.pad(x, ((0, Np - N), (1, 2), (1, 1), (0, 0))).astype(cdtype)
    xf = xp.reshape(Np, D1, Cin)

    kernel = _make_block_kernel(H=H, W=W, Cin=Cin, Cp=Cp, planes=planes,
                                stride=stride, nb=nb)

    scratch = [
        pltpu.VMEM((D1, _KP), cdtype),           # lane-padded input image
        pltpu.VMEM((mimg, 9 * _KP), cdtype),     # conv1 K-packed patches
        pltpu.VMEM((D1h, Cp), cdtype),           # padded conv2 input (out1+copy)
        pltpu.VMEM((mimg2, 9 * Cp), cdtype),     # conv2 K-packed patches
    ]
    if stride != 1:
        scratch.append(pltpu.VMEM((mimg, Cp), jnp.float32))  # full-res conv1 out

    flops = 2 * Np * (mimg * (9 * _KP) * Cp + mimg2 * (9 * Cp) * Cp)
    bytes_accessed = int(
        xf.size * xf.dtype.itemsize
        + w1k.size * w1k.dtype.itemsize + w2k.size * w2k.dtype.itemsize
        + (b1k.size + b2k.size) * 4
        + Np * mimg2 * Cp * cdtype.itemsize)

    out = pl.pallas_call(
        kernel,
        out_shape=jax.ShapeDtypeStruct((Np * mimg2, Cp), cdtype),
        grid=(steps,),
        in_specs=[
            pl.BlockSpec((nb, D1, Cin), lambda i: (i, 0, 0)),
            pl.BlockSpec((9 * _KP, Cp), lambda i: (0, 0)),
            pl.BlockSpec((1, Cp), lambda i: (0, 0)),
            pl.BlockSpec((9 * Cp, Cp), lambda i: (0, 0)),
            pl.BlockSpec((1, Cp), lambda i: (0, 0)),
        ],
        out_specs=pl.BlockSpec((nb * mimg2, Cp), lambda i: (i, 0)),
        scratch_shapes=scratch,
        compiler_params=pltpu.CompilerParams(
            dimension_semantics=("parallel",),
            vmem_limit_bytes=48 * 1024 * 1024),
        cost_estimate=pl.CostEstimate(flops=flops, transcendentals=0,
                                      bytes_accessed=bytes_accessed),
    )(xf, w1k, b1k, w2k, b2k)

    # strip batch padding, the 2 junk columns per row, and the padded channels
    out = out.reshape(Np, H2, Wp2, Cp)[:N, :, :W2, :planes]
    return jnp.transpose(out, (0, 3, 1, 2)).astype(jnp.float32)   # NCHW


# ------------------------------ pure-JAX reference --------------------------

def basic_block_reference(x, params, stride=1):
    (w1, g1, b1, m1, v1, w2, g2, b2, m2, v2) = params
    in_planes = x.shape[1]
    planes = w1.shape[0]

    def conv(a, w, s):
        return lax.conv_general_dilated(
            a, w, (s, s), ((1, 1), (1, 1)),
            dimension_numbers=("NCHW", "OIHW", "NCHW"),
            precision=lax.Precision.HIGHEST)

    def bn(a, g, b, m, v, eps=1e-5):
        sh = (1, -1, 1, 1)
        return (a - m.reshape(sh)) / jnp.sqrt(v + eps).reshape(sh) \
            * g.reshape(sh) + b.reshape(sh)

    out = jax.nn.relu(bn(conv(x, w1, stride), g1, b1, m1, v1))
    out = bn(conv(out, w2, 1), g2, b2, m2, v2)
    if stride != 1 or in_planes != planes:
        sc = x[:, :, ::2, ::2]
        pad = planes // 4
        sc = jnp.pad(sc, ((0, 0), (pad, pad), (0, 0), (0, 0)))
    else:
        sc = x
    return jax.nn.relu(out + sc)


# ----------------------------------- main ------------------------------------

if __name__ == "__main__":
    def make_params(key, in_planes, planes):
        ks = jax.random.split(key, 10)
        w1 = jax.random.normal(ks[0], (planes, in_planes, 3, 3), jnp.float32) * 0.1
        g1 = jax.random.uniform(ks[1], (planes,), jnp.float32, 0.5, 1.5)
        b1 = jax.random.normal(ks[2], (planes,), jnp.float32) * 0.1
        m1 = jax.random.normal(ks[3], (planes,), jnp.float32) * 0.1
        v1 = jax.random.uniform(ks[4], (planes,), jnp.float32, 0.5, 1.5)
        w2 = jax.random.normal(ks[5], (planes, planes, 3, 3), jnp.float32) * 0.1
        g2 = jax.random.uniform(ks[6], (planes,), jnp.float32, 0.5, 1.5)
        b2 = jax.random.normal(ks[7], (planes,), jnp.float32) * 0.1
        m2 = jax.random.normal(ks[8], (planes,), jnp.float32) * 0.1
        v2 = jax.random.uniform(ks[9], (planes,), jnp.float32, 0.5, 1.5)
        return (w1, g1, b1, m1, v1, w2, g2, b2, m2, v2)

    fwd = jax.jit(basic_block_forward,
                  static_argnames=("stride", "option", "compute_dtype",
                                   "images_per_step"))

    key = jax.random.PRNGKey(0)
    kp1, kp2, kx1, kx2, kx3 = jax.random.split(key, 5)

    # case 1: identity shortcut, stride 1 (N=2, C=4, 16x16)
    N, C, P, H, W = 2, 4, 4, 16, 16
    params = make_params(kp1, C, P)
    x = jax.random.normal(kx1, (N, C, H, W), jnp.float32)
    ref = jax.block_until_ready(basic_block_reference(x, params, stride=1))

    out_f32 = jax.block_until_ready(
        fwd(x, params, stride=1, compute_dtype=jnp.float32))
    assert out_f32.shape == ref.shape == (N, P, H, W)
    err = float(jnp.max(jnp.abs(out_f32 - ref)))
    assert err < 1e-3, f"f32 path mismatch: {err}"

    out_bf16 = jax.block_until_ready(fwd(x, params, stride=1))
    err = float(jnp.max(jnp.abs(out_bf16 - ref)))
    assert err < 1e-1, f"bf16 path mismatch: {err}"

    # case 2: option-A shortcut (stride 2, channels 4 -> 8), f32 tight check
    N2, C2, P2, H2s, W2s = 2, 4, 8, 16, 16
    params2 = make_params(kp2, C2, P2)
    x2 = jax.random.normal(kx2, (N2, C2, H2s, W2s), jnp.float32)
    ref2 = jax.block_until_ready(basic_block_reference(x2, params2, stride=2))
    out2 = jax.block_until_ready(
        fwd(x2, params2, stride=2, compute_dtype=jnp.float32))
    assert out2.shape == ref2.shape == (N2, P2, H2s // 2, W2s // 2)
    err = float(jnp.max(jnp.abs(out2 - ref2)))
    assert err < 1e-3, f"stride-2 path mismatch: {err}"

    # case 3: multiple images per grid step (in-kernel fori-loop path), bf16
    N3 = 4
    x3 = jax.random.normal(kx3, (N3, C, H, W), jnp.float32)
    ref3 = jax.block_until_ready(basic_block_reference(x3, params, stride=1))
    out3 = jax.block_until_ready(fwd(x3, params, stride=1, images_per_step=2))
    err = float(jnp.max(jnp.abs(out3 - ref3)))
    assert err < 1e-1, f"multi-image (fori) path mismatch: {err}"

    print("KERNEL_OK")
</pallas_src>

<mosaic_0001>
module attributes {stable_mosaic.version = 11 : i64} {
  func.func @kernel(%arg0: i32, %arg1: memref<1x342x4xf32, #tpu.memory_space<vmem>>, %arg2: memref<1152x128xf32, #tpu.memory_space<vmem>>, %arg3: memref<1x128xf32, #tpu.memory_space<vmem>>, %arg4: memref<1152x128xf32, #tpu.memory_space<vmem>>, %arg5: memref<1x128xf32, #tpu.memory_space<vmem>>, %arg6: memref<288x128xf32, #tpu.memory_space<vmem>>, %arg7: memref<342x128xf32, #tpu.memory_space<vmem>>, %arg8: memref<288x1152xf32, #tpu.memory_space<vmem>>, %arg9: memref<342x128xf32, #tpu.memory_space<vmem>>, %arg10: memref<288x1152xf32, #tpu.memory_space<vmem>>) attributes {dimension_semantics = [#tpu.dimension_semantics<parallel>], iteration_bounds = array<i64: 2>, scalar_prefetch = 0 : i64, scratch_operands = 4 : i64, tpu.core_type = #tpu.core_type<tc>, window_params = [{transform_indices = @transform_0, window_bounds = array<i64: 1, 342, 4>}, {pipeline_mode = #tpu.pipeline_mode<synchronous>, transform_indices = @transform_1, window_bounds = array<i64: 1152, 128>}, {pipeline_mode = #tpu.pipeline_mode<synchronous>, transform_indices = @transform_2, window_bounds = array<i64: 1, 128>}, {pipeline_mode = #tpu.pipeline_mode<synchronous>, transform_indices = @transform_3, window_bounds = array<i64: 1152, 128>}, {pipeline_mode = #tpu.pipeline_mode<synchronous>, transform_indices = @transform_4, window_bounds = array<i64: 1, 128>}, {transform_indices = @transform_5, window_bounds = array<i64: 288, 128>}]} {
    %c0 = arith.constant 0 : index
    %c0_0 = arith.constant 0 : index
    %0 = vector.load %arg3[%c0, %c0_0] : memref<1x128xf32, #tpu.memory_space<vmem>>, vector<1x128xf32>
    %c0_1 = arith.constant 0 : index
    %c0_2 = arith.constant 0 : index
    %1 = vector.load %arg5[%c0_1, %c0_2] : memref<1x128xf32, #tpu.memory_space<vmem>>, vector<1x128xf32>
    %2 = tpu.iota {dimensions = array<i32: 1>} : vector<1x128xi32>
    %c4_i32 = arith.constant 4 : i32
    %3 = vector.broadcast %c4_i32 : i32 to vector<1x128xi32>
    %4 = arith.cmpi slt, %2, %3 : vector<1x128xi32>
    %5 = tpu.iota {dimensions = array<i32: 0>} : vector<288x1xi32>
    %c18_i32 = arith.constant 18 : i32
    %c0_i32 = arith.constant 0 : i32
    %6 = arith.cmpi eq, %c18_i32, %c0_i32 : i32
    %c1_i32 = arith.constant 1 : i32
    %7 = arith.select %6, %c1_i32, %c18_i32 : i32
    %8 = vector.broadcast %7 : i32 to vector<288x1xi32>
    %9 = arith.remsi %5, %8 : vector<288x1xi32>
    %c0_i32_3 = arith.constant 0 : i32
    %10 = vector.broadcast %c0_i32_3 : i32 to vector<288x1xi32>
    %11 = arith.cmpi ne, %9, %10 : vector<288x1xi32>
    %c0_i32_4 = arith.constant 0 : i32
    %12 = vector.broadcast %c0_i32_4 : i32 to vector<288x1xi32>
    %13 = arith.cmpi slt, %9, %12 : vector<288x1xi32>
    %c0_i32_5 = arith.constant 0 : i32
    %14 = arith.cmpi slt, %7, %c0_i32_5 : i32
    %15 = vector.broadcast %14 : i1 to vector<288x1xi1>
    %16 = vector.broadcast %15 : vector<288x1xi1> to vector<288x1xi1>
    %17 = arith.xori %13, %16 : vector<288x1xi1>
    %18 = arith.andi %17, %11 : vector<288x1xi1>
    %19 = vector.broadcast %7 : i32 to vector<288x1xi32>
    %20 = arith.addi %9, %19 : vector<288x1xi32>
    %21 = arith.select %18, %20, %9 : vector<288x1xi1>, vector<288x1xi32>
    %c16_i32 = arith.constant 16 : i32
    %22 = vector.broadcast %c16_i32 : i32 to vector<288x1xi32>
    %23 = arith.cmpi slt, %21, %22 : vector<288x1xi32>
    %24 = tpu.iota {dimensions = array<i32: 0>} : vector<288x1xi32>
    %c18_i32_6 = arith.constant 18 : i32
    %c0_i32_7 = arith.constant 0 : i32
    %25 = arith.cmpi eq, %c18_i32_6, %c0_i32_7 : i32
    %c1_i32_8 = arith.constant 1 : i32
    %26 = arith.select %25, %c1_i32_8, %c18_i32_6 : i32
    %27 = vector.broadcast %26 : i32 to vector<288x1xi32>
    %28 = arith.remsi %24, %27 : vector<288x1xi32>
    %c0_i32_9 = arith.constant 0 : i32
    %29 = vector.broadcast %c0_i32_9 : i32 to vector<288x1xi32>
    %30 = arith.cmpi ne, %28, %29 : vector<288x1xi32>
    %c0_i32_10 = arith.constant 0 : i32
    %31 = vector.broadcast %c0_i32_10 : i32 to vector<288x1xi32>
    %32 = arith.cmpi slt, %28, %31 : vector<288x1xi32>
    %c0_i32_11 = arith.constant 0 : i32
    %33 = arith.cmpi slt, %26, %c0_i32_11 : i32
    %34 = vector.broadcast %33 : i1 to vector<288x1xi1>
    %35 = vector.broadcast %34 : vector<288x1xi1> to vector<288x1xi1>
    %36 = arith.xori %32, %35 : vector<288x1xi1>
    %37 = arith.andi %36, %30 : vector<288x1xi1>
    %38 = vector.broadcast %26 : i32 to vector<288x1xi32>
    %39 = arith.addi %28, %38 : vector<288x1xi32>
    %40 = arith.select %37, %39, %28 : vector<288x1xi1>, vector<288x1xi32>
    %c16_i32_12 = arith.constant 16 : i32
    %41 = vector.broadcast %c16_i32_12 : i32 to vector<288x1xi32>
    %42 = arith.cmpi slt, %40, %41 : vector<288x1xi32>
    %cst = arith.constant 0.000000e+00 : f32
    %43 = vector.broadcast %cst : f32 to vector<342x128xf32>
    %c0_13 = arith.constant 0 : index
    %c0_14 = arith.constant 0 : index
    %44 = vector.load %arg7[%c0_13, %c0_14] : memref<342x128xf32, #tpu.memory_space<vmem>>, vector<342x128xf32>
    tpu.vector_store %arg7[%c0_13, %c0_14], %43 {strides = array<i32>} : memref<342x128xf32, #tpu.memory_space<vmem>>, vector<342x128xf32>,
    %cst_15 = arith.constant 0.000000e+00 : f32
    %45 = vector.broadcast %cst_15 : f32 to vector<342x128xf32>
    %c0_16 = arith.constant 0 : index
    %c0_17 = arith.constant 0 : index
    %46 = vector.load %arg9[%c0_16, %c0_17] : memref<342x128xf32, #tpu.memory_space<vmem>>, vector<342x128xf32>
    tpu.vector_store %arg9[%c0_16, %c0_17], %45 {strides = array<i32>} : memref<342x128xf32, #tpu.memory_space<vmem>>, vector<342x128xf32>,
    %c0_18 = arith.constant 0 : index
    %c0_19 = arith.constant 0 : index
    %c0_20 = arith.constant 0 : index
    %47 = vector.load %arg1[%c0_18, %c0_19, %c0_20] : memref<1x342x4xf32, #tpu.memory_space<vmem>>, vector<1x342x4xf32>
    %48 = vector.shape_cast %47 : vector<1x342x4xf32> to vector<342x4xf32>
    %c0_21 = arith.constant 0 : index
    %c0_22 = arith.constant 0 : index
    %49 = vector.load %arg7[%c0_21, %c0_22] : memref<342x128xf32, #tpu.memory_space<vmem>>, vector<342x4xf32>
    tpu.vector_store %arg7[%c0_21, %c0_22], %48 {strides = array<i32>} : memref<342x128xf32, #tpu.memory_space<vmem>>, vector<342x4xf32>,
    %c0_23 = arith.constant 0 : index
    %c0_24 = arith.constant 0 : index
    %50 = vector.load %arg7[%c0_23, %c0_24] : memref<342x128xf32, #tpu.memory_space<vmem>>, vector<288x128xf32>
    %c0_25 = arith.constant 0 : index
    %c0_26 = arith.constant 0 : index
    %51 = vector.load %arg8[%c0_25, %c0_26] : memref<288x1152xf32, #tpu.memory_space<vmem>>, vector<288x128xf32>
    tpu.vector_store %arg8[%c0_25, %c0_26], %50 {strides = array<i32>} : memref<288x1152xf32, #tpu.memory_space<vmem>>, vector<288x128xf32>,
    %c1 = arith.constant 1 : index
    %c0_27 = arith.constant 0 : index
    %52 = vector.load %arg7[%c1, %c0_27] : memref<342x128xf32, #tpu.memory_space<vmem>>, vector<288x128xf32>
    %c0_28 = arith.constant 0 : index
    %c128 = arith.constant 128 : index
    %53 = vector.load %arg8[%c0_28, %c128] : memref<288x1152xf32, #tpu.memory_space<vmem>>, vector<288x128xf32>
    tpu.vector_store %arg8[%c0_28, %c128], %52 {strides = array<i32>} : memref<288x1152xf32, #tpu.memory_space<vmem>>, vector<288x128xf32>,
    %c2 = arith.constant 2 : index
    %c0_29 = arith.constant 0 : index
    %54 = vector.load %arg7[%c2, %c0_29] : memref<342x128xf32, #tpu.memory_space<vmem>>, vector<288x128xf32>
    %c0_30 = arith.constant 0 : index
    %c256 = arith.constant 256 : index
    %55 = vector.load %arg8[%c0_30, %c256] : memref<288x1152xf32, #tpu.memory_space<vmem>>, vector<288x128xf32>
    tpu.vector_store %arg8[%c0_30, %c256], %54 {strides = array<i32>} : memref<288x1152xf32, #tpu.memory_space<vmem>>, vector<288x128xf32>,
    %c18 = arith.constant 18 : index
    %c0_31 = arith.constant 0 : index
    %56 = vector.load %arg7[%c18, %c0_31] : memref<342x128xf32, #tpu.memory_space<vmem>>, vector<288x128xf32>
    %c0_32 = arith.constant 0 : index
    %c384 = arith.constant 384 : index
    %57 = vector.load %arg8[%c0_32, %c384] : memref<288x1152xf32, #tpu.memory_space<vmem>>, vector<288x128xf32>
    tpu.vector_store %arg8[%c0_32, %c384], %56 {strides = array<i32>} : memref<288x1152xf32, #tpu.memory_space<vmem>>, vector<288x128xf32>,
    %c19 = arith.constant 19 : index
    %c0_33 = arith.constant 0 : index
    %58 = vector.load %arg7[%c19, %c0_33] : memref<342x128xf32, #tpu.memory_space<vmem>>, vector<288x128xf32>
    %c0_34 = arith.constant 0 : index
    %c512 = arith.constant 512 : index
    %59 = vector.load %arg8[%c0_34, %c512] : memref<288x1152xf32, #tpu.memory_space<vmem>>, vector<288x128xf32>
    tpu.vector_store %arg8[%c0_34, %c512], %58 {strides = array<i32>} : memref<288x1152xf32, #tpu.memory_space<vmem>>, vector<288x128xf32>,
    %c20 = arith.constant 20 : index
    %c0_35 = arith.constant 0 : index
    %60 = vector.load %arg7[%c20, %c0_35] : memref<342x128xf32, #tpu.memory_space<vmem>>, vector<288x128xf32>
    %c0_36 = arith.constant 0 : index
    %c640 = arith.constant 640 : index
    %61 = vector.load %arg8[%c0_36, %c640] : memref<288x1152xf32, #tpu.memory_space<vmem>>, vector<288x128xf32>
    tpu.vector_store %arg8[%c0_36, %c640], %60 {strides = array<i32>} : memref<288x1152xf32, #tpu.memory_space<vmem>>, vector<288x128xf32>,
    %c36 = arith.constant 36 : index
    %c0_37 = arith.constant 0 : index
    %62 = vector.load %arg7[%c36, %c0_37] : memref<342x128xf32, #tpu.memory_space<vmem>>, vector<288x128xf32>
    %c0_38 = arith.constant 0 : index
    %c768 = arith.constant 768 : index
    %63 = vector.load %arg8[%c0_38, %c768] : memref<288x1152xf32, #tpu.memory_space<vmem>>, vector<288x128xf32>
    tpu.vector_store %arg8[%c0_38, %c768], %62 {strides = array<i32>} : memref<288x1152xf32, #tpu.memory_space<vmem>>, vector<288x128xf32>,
    %c37 = arith.constant 37 : index
    %c0_39 = arith.constant 0 : index
    %64 = vector.load %arg7[%c37, %c0_39] : memref<342x128xf32, #tpu.memory_space<vmem>>, vector<288x128xf32>
    %c0_40 = arith.constant 0 : index
    %c896 = arith.constant 896 : index
    %65 = vector.load %arg8[%c0_40, %c896] : memref<288x1152xf32, #tpu.memory_space<vmem>>, vector<288x128xf32>
    tpu.vector_store %arg8[%c0_40, %c896], %64 {strides = array<i32>} : memref<288x1152xf32, #tpu.memory_space<vmem>>, vector<288x128xf32>,
    %c38 = arith.constant 38 : index
    %c0_41 = arith.constant 0 : index
    %66 = vector.load %arg7[%c38, %c0_41] : memref<342x128xf32, #tpu.memory_space<vmem>>, vector<288x128xf32>
    %c0_42 = arith.constant 0 : index
    %c1024 = arith.constant 1024 : index
    %67 = vector.load %arg8[%c0_42, %c1024] : memref<288x1152xf32, #tpu.memory_space<vmem>>, vector<288x128xf32>
    tpu.vector_store %arg8[%c0_42, %c1024], %66 {strides = array<i32>} : memref<288x1152xf32, #tpu.memory_space<vmem>>, vector<288x128xf32>,
    %c0_43 = arith.constant 0 : index
    %c0_44 = arith.constant 0 : index
    %68 = vector.load %arg8[%c0_43, %c0_44] : memref<288x1152xf32, #tpu.memory_space<vmem>>, vector<288x1152xf32>
    %c0_45 = arith.constant 0 : index
    %c0_46 = arith.constant 0 : index
    %69 = vector.load %arg2[%c0_45, %c0_46] : memref<1152x128xf32, #tpu.memory_space<vmem>>, vector<1152x128xf32>
    %cst_47 = arith.constant dense<0.000000e+00> : vector<288x128xf32>
    %70 = tpu.matmul %68, %69, %cst_47 {dimension_numbers = #tpu.dot_dimension_numbers<[1], [0], [0], [1], [0, 0, 1, 1], [], []>} : vector<288x1152xf32>, vector<1152x128xf32>, vector<288x128xf32> -> vector<288x128xf32>
    %71 = vector.broadcast %0 : vector<1x128xf32> to vector<288x128xf32>
    %72 = arith.addf %70, %71 : vector<288x128xf32>
    %cst_48 = arith.constant 0.000000e+00 : f32
    %73 = vector.broadcast %cst_48 : f32 to vector<288x128xf32>
    %74 = arith.maximumf %72, %73 : vector<288x128xf32>
    %75 = vector.shape_cast %4 : vector<1x128xi1> to vector<1x128xi1>
    %76 = vector.broadcast %75 : vector<1x128xi1> to vector<288x128xi1>
    %77 = arith.select %76, %74, %72 : vector<288x128xi1>, vector<288x128xf32>
    %cst_49 = arith.constant 0.000000e+00 : f32
    %78 = vector.shape_cast %42 : vector<288x1xi1> to vector<288x1xi1>
    %79 = vector.broadcast %78 : vector<288x1xi1> to vector<288x128xi1>
    %80 = vector.broadcast %cst_49 : f32 to vector<288x128xf32>
    %81 = arith.select %79, %77, %80 : vector<288x128xi1>, vector<288x128xf32>
    %c19_50 = arith.constant 19 : index
    %c0_51 = arith.constant 0 : index
    %82 = vector.load %arg9[%c19_50, %c0_51] : memref<342x128xf32, #tpu.memory_space<vmem>>, vector<288x128xf32>
    tpu.vector_store %arg9[%c19_50, %c0_51], %81 {strides = array<i32>} : memref<342x128xf32, #tpu.memory_space<vmem>>, vector<288x128xf32>,
    %c0_52 = arith.constant 0 : index
    %c0_53 = arith.constant 0 : index
    %83 = vector.load %arg9[%c0_52, %c0_53] : memref<342x128xf32, #tpu.memory_space<vmem>>, vector<288x128xf32>
    %c0_54 = arith.constant 0 : index
    %c0_55 = arith.constant 0 : index
    %84 = vector.load %arg10[%c0_54, %c0_55] : memref<288x1152xf32, #tpu.memory_space<vmem>>, vector<288x128xf32>
    tpu.vector_store %arg10[%c0_54, %c0_55], %83 {strides = array<i32>} : memref<288x1152xf32, #tpu.memory_space<vmem>>, vector<288x128xf32>,
    %c1_56 = arith.constant 1 : index
    %c0_57 = arith.constant 0 : index
    %85 = vector.load %arg9[%c1_56, %c0_57] : memref<342x128xf32, #tpu.memory_space<vmem>>, vector<288x128xf32>
    %c0_58 = arith.constant 0 : index
    %c128_59 = arith.constant 128 : index
    %86 = vector.load %arg10[%c0_58, %c128_59] : memref<288x1152xf32, #tpu.memory_space<vmem>>, vector<288x128xf32>
    tpu.vector_store %arg10[%c0_58, %c128_59], %85 {strides = array<i32>} : memref<288x1152xf32, #tpu.memory_space<vmem>>, vector<288x128xf32>,
    %c2_60 = arith.constant 2 : index
    %c0_61 = arith.constant 0 : index
    %87 = vector.load %arg9[%c2_60, %c0_61] : memref<342x128xf32, #tpu.memory_space<vmem>>, vector<288x128xf32>
    %c0_62 = arith.constant 0 : index
    %c256_63 = arith.constant 256 : index
    %88 = vector.load %arg10[%c0_62, %c256_63] : memref<288x1152xf32, #tpu.memory_space<vmem>>, vector<288x128xf32>
    tpu.vector_store %arg10[%c0_62, %c256_63], %87 {strides = array<i32>} : memref<288x1152xf32, #tpu.memory_space<vmem>>, vector<288x128xf32>,
    %c18_64 = arith.constant 18 : index
    %c0_65 = arith.constant 0 : index
    %89 = vector.load %arg9[%c18_64, %c0_65] : memref<342x128xf32, #tpu.memory_space<vmem>>, vector<288x128xf32>
    %c0_66 = arith.constant 0 : index
    %c384_67 = arith.constant 384 : index
    %90 = vector.load %arg10[%c0_66, %c384_67] : memref<288x1152xf32, #tpu.memory_space<vmem>>, vector<288x128xf32>
    tpu.vector_store %arg10[%c0_66, %c384_67], %89 {strides = array<i32>} : memref<288x1152xf32, #tpu.memory_space<vmem>>, vector<288x128xf32>,
    %c19_68 = arith.constant 19 : index
    %c0_69 = arith.constant 0 : index
    %91 = vector.load %arg9[%c19_68, %c0_69] : memref<342x128xf32, #tpu.memory_space<vmem>>, vector<288x128xf32>
    %c0_70 = arith.constant 0 : index
    %c512_71 = arith.constant 512 : index
    %92 = vector.load %arg10[%c0_70, %c512_71] : memref<288x1152xf32, #tpu.memory_space<vmem>>, vector<288x128xf32>
    tpu.vector_store %arg10[%c0_70, %c512_71], %91 {strides = array<i32>} : memref<288x1152xf32, #tpu.memory_space<vmem>>, vector<288x128xf32>,
    %c20_72 = arith.constant 20 : index
    %c0_73 = arith.constant 0 : index
    %93 = vector.load %arg9[%c20_72, %c0_73] : memref<342x128xf32, #tpu.memory_space<vmem>>, vector<288x128xf32>
    %c0_74 = arith.constant 0 : index
    %c640_75 = arith.constant 640 : index
    %94 = vector.load %arg10[%c0_74, %c640_75] : memref<288x1152xf32, #tpu.memory_space<vmem>>, vector<288x128xf32>
    tpu.vector_store %arg10[%c0_74, %c640_75], %93 {strides = array<i32>} : memref<288x1152xf32, #tpu.memory_space<vmem>>, vector<288x128xf32>,
    %c36_76 = arith.constant 36 : index
    %c0_77 = arith.constant 0 : index
    %95 = vector.load %arg9[%c36_76, %c0_77] : memref<342x128xf32, #tpu.memory_space<vmem>>, vector<288x128xf32>
    %c0_78 = arith.constant 0 : index
    %c768_79 = arith.constant 768 : index
    %96 = vector.load %arg10[%c0_78, %c768_79] : memref<288x1152xf32, #tpu.memory_space<vmem>>, vector<288x128xf32>
    tpu.vector_store %arg10[%c0_78, %c768_79], %95 {strides = array<i32>} : memref<288x1152xf32, #tpu.memory_space<vmem>>, vector<288x128xf32>,
    %c37_80 = arith.constant 37 : index
    %c0_81 = arith.constant 0 : index
    %97 = vector.load %arg9[%c37_80, %c0_81] : memref<342x128xf32, #tpu.memory_space<vmem>>, vector<288x128xf32>
    %c0_82 = arith.constant 0 : index
    %c896_83 = arith.constant 896 : index
    %98 = vector.load %arg10[%c0_82, %c896_83] : memref<288x1152xf32, #tpu.memory_space<vmem>>, vector<288x128xf32>
    tpu.vector_store %arg10[%c0_82, %c896_83], %97 {strides = array<i32>} : memref<288x1152xf32, #tpu.memory_space<vmem>>, vector<288x128xf32>,
    %c38_84 = arith.constant 38 : index
    %c0_85 = arith.constant 0 : index
    %99 = vector.load %arg9[%c38_84, %c0_85] : memref<342x128xf32, #tpu.memory_space<vmem>>, vector<288x128xf32>
    %c0_86 = arith.constant 0 : index
    %c1024_87 = arith.constant 1024 : index
    %100 = vector.load %arg10[%c0_86, %c1024_87] : memref<288x1152xf32, #tpu.memory_space<vmem>>, vector<288x128xf32>
    tpu.vector_store %arg10[%c0_86, %c1024_87], %99 {strides = array<i32>} : memref<288x1152xf32, #tpu.memory_space<vmem>>, vector<288x128xf32>,
    %c0_88 = arith.constant 0 : index
    %c0_89 = arith.constant 0 : index
    %101 = vector.load %arg10[%c0_88, %c0_89] : memref<288x1152xf32, #tpu.memory_space<vmem>>, vector<288x1152xf32>
    %c0_90 = arith.constant 0 : index
    %c0_91 = arith.constant 0 : index
    %102 = vector.load %arg4[%c0_90, %c0_91] : memref<1152x128xf32, #tpu.memory_space<vmem>>, vector<1152x128xf32>
    %cst_92 = arith.constant dense<0.000000e+00> : vector<288x128xf32>
    %103 = tpu.matmul %101, %102, %cst_92 {dimension_numbers = #tpu.dot_dimension_numbers<[1], [0], [0], [1], [0, 0, 1, 1], [], []>} : vector<288x1152xf32>, vector<1152x128xf32>, vector<288x128xf32> -> vector<288x128xf32>
    %104 = vector.broadcast %1 : vector<1x128xf32> to vector<288x128xf32>
    %105 = arith.addf %103, %104 : vector<288x128xf32>
    %cst_93 = arith.constant 0.000000e+00 : f32
    %106 = vector.broadcast %cst_93 : f32 to vector<288x128xf32>
    %107 = arith.maximumf %105, %106 : vector<288x128xf32>
    %cst_94 = arith.constant 0.000000e+00 : f32
    %108 = vector.shape_cast %23 : vector<288x1xi1> to vector<288x1xi1>
    %109 = vector.broadcast %108 : vector<288x1xi1> to vector<288x128xi1>
    %110 = vector.broadcast %cst_94 : f32 to vector<288x128xf32>
    %111 = arith.select %109, %107, %110 : vector<288x128xi1>, vector<288x128xf32>
    %c0_95 = arith.constant 0 : index
    %c0_96 = arith.constant 0 : index
    %112 = vector.load %arg6[%c0_95, %c0_96] : memref<288x128xf32, #tpu.memory_space<vmem>>, vector<288x128xf32>
    tpu.vector_store %arg6[%c0_95, %c0_96], %111 {strides = array<i32>} : memref<288x128xf32, #tpu.memory_space<vmem>>, vector<288x128xf32>,
    return
  }
  func.func @transform_0(%arg0: i32) -> (i32, i32, i32) {
    %c0_i32 = arith.constant 0 : i32
    %c0_i32_0 = arith.constant 0 : i32
    %c0_i32_1 = arith.constant 0 : i32
    return %arg0, %c0_i32, %c0_i32_0 : i32, i32, i32
  }
  func.func @transform_1(%arg0: i32) -> (i32, i32) {
    %c0_i32 = arith.constant 0 : i32
    %c0_i32_0 = arith.constant 0 : i32
    %c0_i32_1 = arith.constant 0 : i32
    return %c0_i32, %c0_i32_0 : i32, i32
  }
  func.func @transform_2(%arg0: i32) -> (i32, i32) {
    %c0_i32 = arith.constant 0 : i32
    %c0_i32_0 = arith.constant 0 : i32
    %c0_i32_1 = arith.constant 0 : i32
    return %c0_i32, %c0_i32_0 : i32, i32
  }
  func.func @transform_3(%arg0: i32) -> (i32, i32) {
    %c0_i32 = arith.constant 0 : i32
    %c0_i32_0 = arith.constant 0 : i32
    %c0_i32_1 = arith.constant 0 : i32
    return %c0_i32, %c0_i32_0 : i32, i32
  }
  func.func @transform_4(%arg0: i32) -> (i32, i32) {
    %c0_i32 = arith.constant 0 : i32
    %c0_i32_0 = arith.constant 0 : i32
    %c0_i32_1 = arith.constant 0 : i32
    return %c0_i32, %c0_i32_0 : i32, i32
  }
  func.func @transform_5(%arg0: i32) -> (i32, i32) {
    %c0_i32 = arith.constant 0 : i32
    %c0_i32_0 = arith.constant 0 : i32
    return %arg0, %c0_i32 : i32, i32
  }
}

</mosaic_0001>

<llo_original>
// kernel: basic_block_forward.1
$region0: #{basic_block_forward.1}
  #allocation0 [shape = 'u32[]', space=smem, size = 0x4, offset = 0x4, fixed_abs, tag = 'smem constant byte address 0x4 - core index']
  #allocation1 [shape = 'u32[144,128]{1,0:T(1,128)}', space=vmem, size = 0x12000, scoped, tag = 'internal scratch']
  #allocation2 [shape = 'f32[342,128]{1,0:T(8,128)}', space=vmem, size = 0x2b000, scoped, tag = 'scratch operand']
  #allocation3 [shape = 'f32[288,1152]{1,0:T(8,128)}', space=vmem, size = 0x144000, scoped, tag = 'scratch operand']
  #allocation4 [shape = 'f32[342,128]{1,0:T(8,128)}', space=vmem, size = 0x2b000, scoped, tag = 'scratch operand']
  #allocation5 [shape = 'f32[288,1152]{1,0:T(8,128)}', space=vmem, size = 0x144000, scoped, tag = 'scratch operand']
  %s0 = inlined_call_operand.vmem [shape: f32[2,342,4], index: 0, kind: input, shape index: {}]
  %s1 = inlined_call_operand.vmem [shape: f32[1152,128], index: 1, kind: input, shape index: {}]
  %s2 = inlined_call_operand.vmem [shape: f32[1,128], index: 2, kind: input, shape index: {}]
  %s3 = inlined_call_operand.vmem [shape: f32[1152,128], index: 3, kind: input, shape index: {}]
  %s4 = inlined_call_operand.vmem [shape: f32[1,128], index: 4, kind: input, shape index: {}]
  %s5 = inlined_call_operand.vmem [shape: f32[576,128], index: 5, kind: output, shape index: {}]
  %s6 = sld [smem:[#allocation0]]
  $region53: #{basic_block_forward.1} parent=0
    _
  %s8 = ssub.s32 1, %s6
  %s9 = scalar_select 0, %s8, %s6
  loop: start=0, step=1, limit=4
  $region2: #{basic_block_forward.1} parent=0 // loop_pre_header
    _
  $region3: #{basic_block_forward.1} parent=0 // loop_header
    %s11 = sphi 0, %s15
    %p12 = scmp.ge.s32.totalorder %s11, 4
    %s21 = sphi 0, %s23
    %s24 = sphi 0, %s21
    %s25 = sphi 0, %s24
    %s41 = sphi 0, %s25
    %s45 = sphi 0, %s45
    %s47 = sphi 0, %s45
    %s48 = sphi 0, %s47
    %s62 = sphi 0, %s48
    %s66 = sphi 0, %s66
    %s68 = sphi 0, %s66
    %s69 = sphi 0, %s68
    %s83 = sphi 0, %s69
    %s87 = sphi 0, %s87
    %s89 = sphi 0, %s87
    %s90 = sphi 0, %s89
    %s104 = sphi 0, %s90
    %s108 = sphi 0, %s108
    %s110 = sphi 0, %s108
    %s111 = sphi 0, %s110
    %s125 = sphi 0, %s111
    %s131 = sphi 0, %s133
    %s134 = sphi 0, %s131
    %s135 = sphi 0, %s134
    %s151 = sphi 0, %s135
  $region4: #{basic_block_forward.1} parent=0 // loop_header_branch
    %14 = sbr.rel (%p12) target = $region8
  $region5: #{basic_block_forward.1} parent=0 // loop_body
    %s16 = ssub.s32 %s11, 1
    %s17 = ssub.s32 %s11, 2
    %s18 = sadd.s32 %s11, 1
    %s19 = ssub.s32 %s11, %s18
    %p20 = scmp.eq.s32.totalorder %s19, 0
    %s22 = sadd.s32 %s21, 1
    %s23 = scalar_select %p20, %s21, %s22
    %p26 = pneg %p20
    %p27 = scmp.eq.s32.totalorder %s11, 1
    %p28 = por %p26, %p27
    %p29 = scmp.ne.s32.totalorder %s21, %s24
    %p30 = scmp.eq.s32.totalorder %s11, 0
    %p31 = por %p29, %p30
    %p32 = scmp.ne.s32.totalorder %s21, %s24
    %p33 = scmp.eq.s32.totalorder %s16, 1
    %p34 = por %p32, %p33
    %p35 = scmp.ne.s32.totalorder %s24, %s25
    %p36 = scmp.eq.s32.totalorder %s16, 0
    %p37 = por %p35, %p36
    %p38 = scmp.ne.s32.totalorder %s24, %s25
    %p39 = scmp.eq.s32.totalorder %s17, 1
    %p40 = por %p38, %p39
    %p42 = scmp.ne.s32.totalorder %s25, %s41
    %p43 = scmp.eq.s32.totalorder %s17, 0
    %p44 = por %p42, %p43
    %s46 = sadd.s32 %s45, 1
    %p49 = scmp.eq.s32.totalorder %s11, 1
    %p50 = scmp.ne.s32.totalorder %s45, %s47
    %p51 = scmp.eq.s32.totalorder %s11, 0
    %p52 = por %p50, %p51
    %p53 = scmp.ne.s32.totalorder %s45, %s47
    %p54 = scmp.eq.s32.totalorder %s16, 1
    %p55 = por %p53, %p54
    %p56 = scmp.ne.s32.totalorder %s47, %s48
    %p57 = scmp.eq.s32.totalorder %s16, 0
    %p58 = por %p56, %p57
    %p59 = scmp.ne.s32.totalorder %s47, %s48
    %p60 = scmp.eq.s32.totalorder %s17, 1
    %p61 = por %p59, %p60
    %p63 = scmp.ne.s32.totalorder %s48, %s62
    %p64 = scmp.eq.s32.totalorder %s17, 0
    %p65 = por %p63, %p64
    %s67 = sadd.s32 %s66, 1
    %p70 = scmp.eq.s32.totalorder %s11, 1
    %p71 = scmp.ne.s32.totalorder %s66, %s68
    %p72 = scmp.eq.s32.totalorder %s11, 0
    %p73 = por %p71, %p72
    %p74 = scmp.ne.s32.totalorder %s66, %s68
    %p75 = scmp.eq.s32.totalorder %s16, 1
    %p76 = por %p74, %p75
    %p77 = scmp.ne.s32.totalorder %s68, %s69
    %p78 = scmp.eq.s32.totalorder %s16, 0
    %p79 = por %p77, %p78
    %p80 = scmp.ne.s32.totalorder %s68, %s69
    %p81 = scmp.eq.s32.totalorder %s17, 1
    %p82 = por %p80, %p81
    %p84 = scmp.ne.s32.totalorder %s69, %s83
    %p85 = scmp.eq.s32.totalorder %s17, 0
    %p86 = por %p84, %p85
    %s88 = sadd.s32 %s87, 1
    %p91 = scmp.eq.s32.totalorder %s11, 1
    %p92 = scmp.ne.s32.totalorder %s87, %s89
    %p93 = scmp.eq.s32.totalorder %s11, 0
    %p94 = por %p92, %p93
    %p95 = scmp.ne.s32.totalorder %s87, %s89
    %p96 = scmp.eq.s32.totalorder %s16, 1
    %p97 = por %p95, %p96
    %p98 = scmp.ne.s32.totalorder %s89, %s90
    %p99 = scmp.eq.s32.totalorder %s16, 0
    %p100 = por %p98, %p99
    %p101 = scmp.ne.s32.totalorder %s89, %s90
    %p102 = scmp.eq.s32.totalorder %s17, 1
    %p103 = por %p101, %p102
    %p105 = scmp.ne.s32.totalorder %s90, %s104
    %p106 = scmp.eq.s32.totalorder %s17, 0
    %p107 = por %p105, %p106
    %s109 = sadd.s32 %s108, 1
    %p112 = scmp.eq.s32.totalorder %s11, 1
    %p113 = scmp.ne.s32.totalorder %s108, %s110
    %p114 = scmp.eq.s32.totalorder %s11, 0
    %p115 = por %p113, %p114
    %p116 = scmp.ne.s32.totalorder %s108, %s110
    %p117 = scmp.eq.s32.totalorder %s16, 1
    %p118 = por %p116, %p117
    %p119 = scmp.ne.s32.totalorder %s110, %s111
    %p120 = scmp.eq.s32.totalorder %s16, 0
    %p121 = por %p119, %p120
    %p122 = scmp.ne.s32.totalorder %s110, %s111
    %p123 = scmp.eq.s32.totalorder %s17, 1
    %p124 = por %p122, %p123
    %p126 = scmp.ne.s32.totalorder %s111, %s125
    %p127 = scmp.eq.s32.totalorder %s17, 0
    %p128 = por %p126, %p127
    %s129 = ssub.s32 %s11, %s18
    %p130 = scmp.eq.s32.totalorder %s129, 0
    %s132 = sadd.s32 %s131, 1
    %s133 = scalar_select %p130, %s131, %s132
    %p136 = pneg %p130
    %p137 = scmp.eq.s32.totalorder %s11, 1
    %p138 = por %p136, %p137
    %p139 = scmp.ne.s32.totalorder %s131, %s134
    %p140 = scmp.eq.s32.totalorder %s11, 0
    %p141 = por %p139, %p140
    %p142 = scmp.ne.s32.totalorder %s131, %s134
    %p143 = scmp.eq.s32.totalorder %s16, 1
    %p144 = por %p142, %p143
    %p145 = scmp.ne.s32.totalorder %s134, %s135
    %p146 = scmp.eq.s32.totalorder %s16, 0
    %p147 = por %p145, %p146
    %p148 = scmp.ne.s32.totalorder %s134, %s135
    %p149 = scmp.eq.s32.totalorder %s17, 1
    %p150 = por %p148, %p149
    %p152 = scmp.ne.s32.totalorder %s135, %s151
    %p153 = scmp.eq.s32.totalorder %s17, 0
    %p154 = por %p152, %p153
    %p155 = scmp.le.s32.totalorder 1, %s11
    %p156 = scmp.lt.s32.totalorder %s11, 3
    %p157 = pnand %p155, %p156
    %p158 = pneg %p157
    // Predicated region
    $region9: #{basic_block_forward.1} parent=5 // pred_check
      _
    $region10: #{basic_block_forward.1} parent=5 // pred_check_branch
      %160 = sbr.rel (%p157) target = $region12
    $region11: #{basic_block_forward.1} parent=5 // pred_region
      %s161 = ssub.s32 %s11, 1
      // Predicated region
      $region13: #{basic_block_forward.1} parent=11 // pred_check
        %p162 = pneg %p58
      $region14: #{basic_block_forward.1} parent=11 // pred_check_branch
        %164 = sbr.rel (%p162) target = $region16
      $region15: #{basic_block_forward.1} parent=11 // pred_region
        _
      $region16: #{basic_block_forward.1} parent=11 // pred_fallthru
        _
      // Predicated region
      $region17: #{basic_block_forward.1} parent=11 // pred_check
        %p165 = pneg %p79
      $region18: #{basic_block_forward.1} parent=11 // pred_check_branch
        %167 = sbr.rel (%p165) target = $region20
      $region19: #{basic_block_forward.1} parent=11 // pred_region
        _
      $region20: #{basic_block_forward.1} parent=11 // pred_fallthru
        _
      // Predicated region
      $region21: #{basic_block_forward.1} parent=11 // pred_check
        %p168 = pneg %p100
      $region22: #{basic_block_forward.1} parent=11 // pred_check_branch
        %170 = sbr.rel (%p168) target = $region24
      $region23: #{basic_block_forward.1} parent=11 // pred_region
        _
      $region24: #{basic_block_forward.1} parent=11 // pred_fallthru
        _
      // Predicated region
      $region25: #{basic_block_forward.1} parent=11 // pred_check
        %p171 = pneg %p121
      $region26: #{basic_block_forward.1} parent=11 // pred_check_branch
        %173 = sbr.rel (%p171) target = $region28
      $region27: #{basic_block_forward.1} parent=11 // pred_region
        _
      $region28: #{basic_block_forward.1} parent=11 // pred_fallthru
        _
    $region12: #{basic_block_forward.1} parent=5 // pred_fallthru
      _
    %p174 = scmp.lt.s32.totalorder %s11, 2
    // Predicated region
    $region29: #{basic_block_forward.1} parent=5 // pred_check
      %p175 = pneg %p174
    $region30: #{basic_block_forward.1} parent=5 // pred_check_branch
      %177 = sbr.rel (%p175) target = $region32
    $region31: #{basic_block_forward.1} parent=5 // pred_region
      // Predicated region
      $region33: #{basic_block_forward.1} parent=31 // pred_check
        %p178 = pneg %p31
      $region34: #{basic_block_forward.1} parent=31 // pred_check_branch
        %180 = sbr.rel (%p178) target = $region36
      $region35: #{basic_block_forward.1} parent=31 // pred_region
        %p181 = scmp.lt.s32.totalorder %s11, 1
        %s182 = scalar_select %p181, %s11, 1
        %s183 = smul.addr %s182, 43
        %s184 = smul.addr %s183, 8
        %s185 = scalar_lea.vmem %s0, %s184
      $region36: #{basic_block_forward.1} parent=31 // pred_fallthru
        _
    $region32: #{basic_block_forward.1} parent=5 // pred_fallthru
      _
    %p186 = scmp.le.s32.totalorder 1, %s11
    %p187 = scmp.lt.s32.totalorder %s11, 3
    %p188 = pnand %p186, %p187
    %p189 = pneg %p188
    // Predicated region
    $region37: #{basic_block_forward.1} parent=5 // pred_check
      _
    $region38: #{basic_block_forward.1} parent=5 // pred_check_branch
      %191 = sbr.rel (%p188) target = $region40
    $region39: #{basic_block_forward.1} parent=5 // pred_region
      %s192 = ssub.s32 %s11, 1
      %p193 = scmp.lt.s32.totalorder %s16, 1
      %s194 = scalar_select %p193, %s16, 1
      %s195 = smul.addr %s194, 43
      %s196 = smul.addr %s195, 8
      %s197 = scalar_lea.vmem %s0, %s196
      %p198 = pneg %p37
      %p199 = pneg %p34
      %p200 = pneg %p58
      %p201 = pneg %p55
      %p202 = pneg %p79
      %p203 = pneg %p76
      %p204 = pneg %p100
      %p205 = pneg %p97
      %p206 = pneg %p121
      %p207 = pneg %p118
      %p208 = pneg %p147
      %p209 = pneg %p144
      %s210 = smul.u32 36, %s16
      %p211 = scmp.lt.s32.totalorder %s210, 71
      %s212 = scalar_select %p211, %s210, 71
      %s213 = smul.addr %s212, 8
      %s214 = scalar_lea.vmem %s5, %s213
      %p215 = scmp.lt.s32.totalorder %s16, 1
      %s216 = scalar_select %p215, %s16, 1
      %s217 = smul.addr %s216, 43
      %s218 = smul.addr %s217, 8
      %s219 = scalar_lea.vmem %s0, %s218
      %s220 = smul.u32 36, %s16
      %p221 = scmp.lt.s32.totalorder %s220, 71
      %s222 = scalar_select %p221, %s220, 71
      %s223 = smul.addr %s222, 8
      %s224 = scalar_lea.vmem %s5, %s223
      %s225 = smul.u32 36, %s16
      %v226 = vld [vmem:[%s2] sm:$0x1]
      %v227 = vld [vmem:[%s4] sm:$0x1]
      %v228 = vlaneseq
      %v229 = vand.u32 %v228, 127
      %vm230 = vcmp.lt.s32.totalorder %v229, 4
      %v231 = vlaneseq
      %v232 = vshrl.u32 %v231, 7
      %v233 = vadd.s32 %v232, 8
      %v234 = vadd.s32 %v232, 16
      %v235 = vadd.s32 %v232, 24
      %v236 = vadd.s32 %v232, 32
      %v237 = vadd.s32 %v232, 40
      %v238 = vadd.s32 %v232, 48
      %v239 = vadd.s32 %v232, 56
      %v240 = vadd.s32 %v232, 64
      %v241 = vadd.s32 %v232, 72
      %v242 = vadd.s32 %v232, 80
      %v243 = vadd.s32 %v232, 88
      %v244 = vadd.s32 %v232, 96
      %v245 = vadd.s32 %v232, 104
      %v246 = vadd.s32 %v232, 112
      %v247 = vadd.s32 %v232, 120
      %v248 = vadd.s32 %v232, 128
      %v249 = vadd.s32 %v232, 136
      %v250 = vadd.s32 %v232, 144
      %v251 = vadd.s32 %v232, 152
      %v252 = vadd.s32 %v232, 160
      %v253 = vadd.s32 %v232, 168
      %v254 = vadd.s32 %v232, 176
      %v255 = vadd.s32 %v232, 184
      %v256 = vadd.s32 %v232, 192
      %v257 = vadd.s32 %v232, 200
      %v258 = vadd.s32 %v232, 208
      %v259 = vadd.s32 %v232, 216
      %v260 = vadd.s32 %v232, 224
      %v261 = vadd.s32 %v232, 232
      %v262 = vadd.s32 %v232, 240
      %v263 = vadd.s32 %v232, 248
      %v264 = vadd.s32 %v232, 256
      %v265 = vadd.s32 %v232, 264
      %v266 = vadd.s32 %v232, 272
      %v267 = vadd.s32 %v232, 280
      %vm268 = vcmp.lt.s32.totalorder %v232, 0
      %v269 = vsub.s32 0, %v232
      %v270 = vsel %vm268, %v269, %v232
      %v271 = vmul.u32.u64.compose %v270, 3817748708
      %v272 = vextract.low.u32 %v271
      %v273 = vextract.high.u32 %v271
      %v274 = vshrl.u32 %v273, 4
      %v275 = vmul.u32 %v274, 18
      %v276 = vsub.s32 %v270, %v275
      %v277 = vsub.s32 0, %v276
      %v278 = vsel %vm268, %v277, %v276
      %vm279 = vcmp.lt.s32.totalorder %v233, 0
      %v280 = vsub.s32 0, %v233
      %v281 = vsel %vm279, %v280, %v233
      %v282 = vmul.u32.u64.compose %v281, 3817748708
      %v283 = vextract.low.u32 %v282
      %v284 = vextract.high.u32 %v282
      %v285 = vshrl.u32 %v284, 4
      %v286 = vmul.u32 %v285, 18
      %v287 = vsub.s32 %v281, %v286
      %v288 = vsub.s32 0, %v287
      %v289 = vsel %vm279, %v288, %v287
      %vm290 = vcmp.lt.s32.totalorder %v234, 0
      %v291 = vsub.s32 0, %v234
      %v292 = vsel %vm290, %v291, %v234
      %v293 = vmul.u32.u64.compose %v292, 3817748708
      %v294 = vextract.low.u32 %v293
      %v295 = vextract.high.u32 %v293
      %v296 = vshrl.u32 %v295, 4
      %v297 = vmul.u32 %v296, 18
      %v298 = vsub.s32 %v292, %v297
      %v299 = vsub.s32 0, %v298
      %v300 = vsel %vm290, %v299, %v298
      %vm301 = vcmp.lt.s32.totalorder %v235, 0
      %v302 = vsub.s32 0, %v235
      %v303 = vsel %vm301, %v302, %v235
      %v304 = vmul.u32.u64.compose %v303, 3817748708
      %v305 = vextract.low.u32 %v304
      %v306 = vextract.high.u32 %v304
      %v307 = vshrl.u32 %v306, 4
      %v308 = vmul.u32 %v307, 18
      %v309 = vsub.s32 %v303, %v308
      %v310 = vsub.s32 0, %v309
      %v311 = vsel %vm301, %v310, %v309
      %vm312 = vcmp.lt.s32.totalorder %v236, 0
      %v313 = vsub.s32 0, %v236
      %v314 = vsel %vm312, %v313, %v236
      %v315 = vmul.u32.u64.compose %v314, 3817748708
      %v316 = vextract.low.u32 %v315
      %v317 = vextract.high.u32 %v315
      %v318 = vshrl.u32 %v317, 4
      %v319 = vmul.u32 %v318, 18
      %v320 = vsub.s32 %v314, %v319
      %v321 = vsub.s32 0, %v320
      %v322 = vsel %vm312, %v321, %v320
      %vm323 = vcmp.lt.s32.totalorder %v237, 0
      %v324 = vsub.s32 0, %v237
      %v325 = vsel %vm323, %v324, %v237
      %v326 = vmul.u32.u64.compose %v325, 3817748708
      %v327 = vextract.low.u32 %v326
      %v328 = vextract.high.u32 %v326
      %v329 = vshrl.u32 %v328, 4
      %v330 = vmul.u32 %v329, 18
      %v331 = vsub.s32 %v325, %v330
      %v332 = vsub.s32 0, %v331
      %v333 = vsel %vm323, %v332, %v331
      %vm334 = vcmp.lt.s32.totalorder %v238, 0
      %v335 = vsub.s32 0, %v238
      %v336 = vsel %vm334, %v335, %v238
      %v337 = vmul.u32.u64.compose %v336, 3817748708
      %v338 = vextract.low.u32 %v337
      %v339 = vextract.high.u32 %v337
      %v340 = vshrl.u32 %v339, 4
      %v341 = vmul.u32 %v340, 18
      %v342 = vsub.s32 %v336, %v341
      %v343 = vsub.s32 0, %v342
      %v344 = vsel %vm334, %v343, %v342
      %vm345 = vcmp.lt.s32.totalorder %v239, 0
      %v346 = vsub.s32 0, %v239
      %v347 = vsel %vm345, %v346, %v239
      %v348 = vmul.u32.u64.compose %v347, 3817748708
      %v349 = vextract.low.u32 %v348
      %v350 = vextract.high.u32 %v348
      %v351 = vshrl.u32 %v350, 4
      %v352 = vmul.u32 %v351, 18
      %v353 = vsub.s32 %v347, %v352
      %v354 = vsub.s32 0, %v353
      %v355 = vsel %vm345, %v354, %v353
      %vm356 = vcmp.lt.s32.totalorder %v240, 0
      %v357 = vsub.s32 0, %v240
      %v358 = vsel %vm356, %v357, %v240
      %v359 = vmul.u32.u64.compose %v358, 3817748708
      %v360 = vextract.low.u32 %v359
      %v361 = vextract.high.u32 %v359
      %v362 = vshrl.u32 %v361, 4
      %v363 = vmul.u32 %v362, 18
      %v364 = vsub.s32 %v358, %v363
      %v365 = vsub.s32 0, %v364
      %v366 = vsel %vm356, %v365, %v364
      %vm367 = vcmp.lt.s32.totalorder %v241, 0
      %v368 = vsub.s32 0, %v241
      %v369 = vsel %vm367, %v368, %v241
      %v370 = vmul.u32.u64.compose %v369, 3817748708
      %v371 = vextract.low.u32 %v370
      %v372 = vextract.high.u32 %v370
      %v373 = vshrl.u32 %v372, 4
      %v374 = vmul.u32 %v373, 18
      %v375 = vsub.s32 %v369, %v374
      %v376 = vsub.s32 0, %v375
      %v377 = vsel %vm367, %v376, %v375
      %vm378 = vcmp.lt.s32.totalorder %v242, 0
      %v379 = vsub.s32 0, %v242
      %v380 = vsel %vm378, %v379, %v242
      %v381 = vmul.u32.u64.compose %v380, 3817748708
      %v382 = vextract.low.u32 %v381
      %v383 = vextract.high.u32 %v381
      %v384 = vshrl.u32 %v383, 4
      %v385 = vmul.u32 %v384, 18
      %v386 = vsub.s32 %v380, %v385
      %v387 = vsub.s32 0, %v386
      %v388 = vsel %vm378, %v387, %v386
      %vm389 = vcmp.lt.s32.totalorder %v243, 0
      %v390 = vsub.s32 0, %v243
      %v391 = vsel %vm389, %v390, %v243
      %v392 = vmul.u32.u64.compose %v391, 3817748708
      %v393 = vextract.low.u32 %v392
      %v394 = vextract.high.u32 %v392
      %v395 = vshrl.u32 %v394, 4
      %v396 = vmul.u32 %v395, 18
      %v397 = vsub.s32 %v391, %v396
      %v398 = vsub.s32 0, %v397
      %v399 = vsel %vm389, %v398, %v397
      %vm400 = vcmp.lt.s32.totalorder %v244, 0
      %v401 = vsub.s32 0, %v244
      %v402 = vsel %vm400, %v401, %v244
      %v403 = vmul.u32.u64.compose %v402, 3817748708
      %v404 = vextract.low.u32 %v403
      %v405 = vextract.high.u32 %v403
      %v406 = vshrl.u32 %v405, 4
      %v407 = vmul.u32 %v406, 18
      %v408 = vsub.s32 %v402, %v407
      %v409 = vsub.s32 0, %v408
      %v410 = vsel %vm400, %v409, %v408
      %vm411 = vcmp.lt.s32.totalorder %v245, 0
      %v412 = vsub.s32 0, %v245
      %v413 = vsel %vm411, %v412, %v245
      %v414 = vmul.u32.u64.compose %v413, 3817748708
      %v415 = vextract.low.u32 %v414
      %v416 = vextract.high.u32 %v414
      %v417 = vshrl.u32 %v416, 4
      %v418 = vmul.u32 %v417, 18
      %v419 = vsub.s32 %v413, %v418
      %v420 = vsub.s32 0, %v419
      %v421 = vsel %vm411, %v420, %v419
      %vm422 = vcmp.lt.s32.totalorder %v246, 0
      %v423 = vsub.s32 0, %v246
      %v424 = vsel %vm422, %v423, %v246
      %v425 = vmul.u32.u64.compose %v424, 3817748708
      %v426 = vextract.low.u32 %v425
      %v427 = vextract.high.u32 %v425
      %v428 = vshrl.u32 %v427, 4
      %v429 = vmul.u32 %v428, 18
      %v430 = vsub.s32 %v424, %v429
      %v431 = vsub.s32 0, %v430
      %v432 = vsel %vm422, %v431, %v430
      %vm433 = vcmp.lt.s32.totalorder %v247, 0
      %v434 = vsub.s32 0, %v247
      %v435 = vsel %vm433, %v434, %v247
      %v436 = vmul.u32.u64.compose %v435, 3817748708
      %v437 = vextract.low.u32 %v436
      %v438 = vextract.high.u32 %v436
      %v439 = vshrl.u32 %v438, 4
      %v440 = vmul.u32 %v439, 18
      %v441 = vsub.s32 %v435, %v440
      %v442 = vsub.s32 0, %v441
      %v443 = vsel %vm433, %v442, %v441
      %vm444 = vcmp.lt.s32.totalorder %v248, 0
      %v445 = vsub.s32 0, %v248
      %v446 = vsel %vm444, %v445, %v248
      %v447 = vmul.u32.u64.compose %v446, 3817748708
      %v448 = vextract.low.u32 %v447
      %v449 = vextract.high.u32 %v447
      %v450 = vshrl.u32 %v449, 4
      %v451 = vmul.u32 %v450, 18
      %v452 = vsub.s32 %v446, %v451
      %v453 = vsub.s32 0, %v452
      %v454 = vsel %vm444, %v453, %v452
      %vm455 = vcmp.lt.s32.totalorder %v249, 0
      %v456 = vsub.s32 0, %v249
      %v457 = vsel %vm455, %v456, %v249
      %v458 = vmul.u32.u64.compose %v457, 3817748708
      %v459 = vextract.low.u32 %v458
      %v460 = vextract.high.u32 %v458
      %v461 = vshrl.u32 %v460, 4
      %v462 = vmul.u32 %v461, 18
      %v463 = vsub.s32 %v457, %v462
      %v464 = vsub.s32 0, %v463
      %v465 = vsel %vm455, %v464, %v463
      %vm466 = vcmp.lt.s32.totalorder %v250, 0
      %v467 = vsub.s32 0, %v250
      %v468 = vsel %vm466, %v467, %v250
      %v469 = vmul.u32.u64.compose %v468, 3817748708
      %v470 = vextract.low.u32 %v469
      %v471 = vextract.high.u32 %v469
      %v472 = vshrl.u32 %v471, 4
      %v473 = vmul.u32 %v472, 18
      %v474 = vsub.s32 %v468, %v473
      %v475 = vsub.s32 0, %v474
      %v476 = vsel %vm466, %v475, %v474
      %vm477 = vcmp.lt.s32.totalorder %v251, 0
      %v478 = vsub.s32 0, %v251
      %v479 = vsel %vm477, %v478, %v251
      %v480 = vmul.u32.u64.compose %v479, 3817748708
      %v481 = vextract.low.u32 %v480
      %v482 = vextract.high.u32 %v480
      %v483 = vshrl.u32 %v482, 4
      %v484 = vmul.u32 %v483, 18
      %v485 = vsub.s32 %v479, %v484
      %v486 = vsub.s32 0, %v485
      %v487 = vsel %vm477, %v486, %v485
      %vm488 = vcmp.lt.s32.totalorder %v252, 0
      %v489 = vsub.s32 0, %v252
      %v490 = vsel %vm488, %v489, %v252
      %v491 = vmul.u32.u64.compose %v490, 3817748708
      %v492 = vextract.low.u32 %v491
      %v493 = vextract.high.u32 %v491
      %v494 = vshrl.u32 %v493, 4
      %v495 = vmul.u32 %v494, 18
      %v496 = vsub.s32 %v490, %v495
      %v497 = vsub.s32 0, %v496
      %v498 = vsel %vm488, %v497, %v496
      %vm499 = vcmp.lt.s32.totalorder %v253, 0
      %v500 = vsub.s32 0, %v253
      %v501 = vsel %vm499, %v500, %v253
      %v502 = vmul.u32.u64.compose %v501, 3817748708
      %v503 = vextract.low.u32 %v502
      %v504 = vextract.high.u32 %v502
      %v505 = vshrl.u32 %v504, 4
      %v506 = vmul.u32 %v505, 18
      %v507 = vsub.s32 %v501, %v506
      %v508 = vsub.s32 0, %v507
      %v509 = vsel %vm499, %v508, %v507
      %vm510 = vcmp.lt.s32.totalorder %v254, 0
      %v511 = vsub.s32 0, %v254
      %v512 = vsel %vm510, %v511, %v254
      %v513 = vmul.u32.u64.compose %v512, 3817748708
      %v514 = vextract.low.u32 %v513
      %v515 = vextract.high.u32 %v513
      %v516 = vshrl.u32 %v515, 4
      %v517 = vmul.u32 %v516, 18
      %v518 = vsub.s32 %v512, %v517
      %v519 = vsub.s32 0, %v518
      %v520 = vsel %vm510, %v519, %v518
      %vm521 = vcmp.lt.s32.totalorder %v255, 0
      %v522 = vsub.s32 0, %v255
      %v523 = vsel %vm521, %v522, %v255
      %v524 = vmul.u32.u64.compose %v523, 3817748708
      %v525 = vextract.low.u32 %v524
      %v526 = vextract.high.u32 %v524
      %v527 = vshrl.u32 %v526, 4
      %v528 = vmul.u32 %v527, 18
      %v529 = vsub.s32 %v523, %v528
      %v530 = vsub.s32 0, %v529
      %v531 = vsel %vm521, %v530, %v529
      %vm532 = vcmp.lt.s32.totalorder %v256, 0
      %v533 = vsub.s32 0, %v256
      %v534 = vsel %vm532, %v533, %v256
      %v535 = vmul.u32.u64.compose %v534, 3817748708
      %v536 = vextract.low.u32 %v535
      %v537 = vextract.high.u32 %v535
      %v538 = vshrl.u32 %v537, 4
      %v539 = vmul.u32 %v538, 18
      %v540 = vsub.s32 %v534, %v539
      %v541 = vsub.s32 0, %v540
      %v542 = vsel %vm532, %v541, %v540
      %vm543 = vcmp.lt.s32.totalorder %v257, 0
      %v544 = vsub.s32 0, %v257
      %v545 = vsel %vm543, %v544, %v257
      %v546 = vmul.u32.u64.compose %v545, 3817748708
      %v547 = vextract.low.u32 %v546
      %v548 = vextract.high.u32 %v546
      %v549 = vshrl.u32 %v548, 4
      %v550 = vmul.u32 %v549, 18
      %v551 = vsub.s32 %v545, %v550
      %v552 = vsub.s32 0, %v551
      %v553 = vsel %vm543, %v552, %v551
      %vm554 = vcmp.lt.s32.totalorder %v258, 0
      %v555 = vsub.s32 0, %v258
      %v556 = vsel %vm554, %v555, %v258
      %v557 = vmul.u32.u64.compose %v556, 3817748708
      %v558 = vextract.low.u32 %v557
      %v559 = vextract.high.u32 %v557
      %v560 = vshrl.u32 %v559, 4
      %v561 = vmul.u32 %v560, 18
      %v562 = vsub.s32 %v556, %v561
      %v563 = vsub.s32 0, %v562
      %v564 = vsel %vm554, %v563, %v562
      %vm565 = vcmp.lt.s32.totalorder %v259, 0
      %v566 = vsub.s32 0, %v259
      %v567 = vsel %vm565, %v566, %v259
      %v568 = vmul.u32.u64.compose %v567, 3817748708
      %v569 = vextract.low.u32 %v568
      %v570 = vextract.high.u32 %v568
      %v571 = vshrl.u32 %v570, 4
      %v572 = vmul.u32 %v571, 18
      %v573 = vsub.s32 %v567, %v572
      %v574 = vsub.s32 0, %v573
      %v575 = vsel %vm565, %v574, %v573
      %vm576 = vcmp.lt.s32.totalorder %v260, 0
      %v577 = vsub.s32 0, %v260
      %v578 = vsel %vm576, %v577, %v260
      %v579 = vmul.u32.u64.compose %v578, 3817748708
      %v580 = vextract.low.u32 %v579
      %v581 = vextract.high.u32 %v579
      %v582 = vshrl.u32 %v581, 4
      %v583 = vmul.u32 %v582, 18
      %v584 = vsub.s32 %v578, %v583
      %v585 = vsub.s32 0, %v584
      %v586 = vsel %vm576, %v585, %v584
      %vm587 = vcmp.lt.s32.totalorder %v261, 0
      %v588 = vsub.s32 0, %v261
      %v589 = vsel %vm587, %v588, %v261
      %v590 = vmul.u32.u64.compose %v589, 3817748708
      %v591 = vextract.low.u32 %v590
      %v592 = vextract.high.u32 %v590
      %v593 = vshrl.u32 %v592, 4
      %v594 = vmul.u32 %v593, 18
      %v595 = vsub.s32 %v589, %v594
      %v596 = vsub.s32 0, %v595
      %v597 = vsel %vm587, %v596, %v595
      %vm598 = vcmp.lt.s32.totalorder %v262, 0
      %v599 = vsub.s32 0, %v262
      %v600 = vsel %vm598, %v599, %v262
      %v601 = vmul.u32.u64.compose %v600, 3817748708
      %v602 = vextract.low.u32 %v601
      %v603 = vextract.high.u32 %v601
      %v604 = vshrl.u32 %v603, 4
      %v605 = vmul.u32 %v604, 18
      %v606 = vsub.s32 %v600, %v605
      %v607 = vsub.s32 0, %v606
      %v608 = vsel %vm598, %v607, %v606
      %vm609 = vcmp.lt.s32.totalorder %v263, 0
      %v610 = vsub.s32 0, %v263
      %v611 = vsel %vm609, %v610, %v263
      %v612 = vmul.u32.u64.compose %v611, 3817748708
      %v613 = vextract.low.u32 %v612
      %v614 = vextract.high.u32 %v612
      %v615 = vshrl.u32 %v614, 4
      %v616 = vmul.u32 %v615, 18
      %v617 = vsub.s32 %v611, %v616
      %v618 = vsub.s32 0, %v617
      %v619 = vsel %vm609, %v618, %v617
      %vm620 = vcmp.lt.s32.totalorder %v264, 0
      %v621 = vsub.s32 0, %v264
      %v622 = vsel %vm620, %v621, %v264
      %v623 = vmul.u32.u64.compose %v622, 3817748708
      %v624 = vextract.low.u32 %v623
      %v625 = vextract.high.u32 %v623
      %v626 = vshrl.u32 %v625, 4
      %v627 = vmul.u32 %v626, 18
      %v628 = vsub.s32 %v622, %v627
      %v629 = vsub.s32 0, %v628
      %v630 = vsel %vm620, %v629, %v628
      %vm631 = vcmp.lt.s32.totalorder %v265, 0
      %v632 = vsub.s32 0, %v265
      %v633 = vsel %vm631, %v632, %v265
      %v634 = vmul.u32.u64.compose %v633, 3817748708
      %v635 = vextract.low.u32 %v634
      %v636 = vextract.high.u32 %v634
      %v637 = vshrl.u32 %v636, 4
      %v638 = vmul.u32 %v637, 18
      %v639 = vsub.s32 %v633, %v638
      %v640 = vsub.s32 0, %v639
      %v641 = vsel %vm631, %v640, %v639
      %vm642 = vcmp.lt.s32.totalorder %v266, 0
      %v643 = vsub.s32 0, %v266
      %v644 = vsel %vm642, %v643, %v266
      %v645 = vmul.u32.u64.compose %v644, 3817748708
      %v646 = vextract.low.u32 %v645
      %v647 = vextract.high.u32 %v645
      %v648 = vshrl.u32 %v647, 4
      %v649 = vmul.u32 %v648, 18
      %v650 = vsub.s32 %v644, %v649
      %v651 = vsub.s32 0, %v650
      %v652 = vsel %vm642, %v651, %v650
      %vm653 = vcmp.lt.s32.totalorder %v267, 0
      %v654 = vsub.s32 0, %v267
      %v655 = vsel %vm653, %v654, %v267
      %v656 = vmul.u32.u64.compose %v655, 3817748708
      %v657 = vextract.low.u32 %v656
      %v658 = vextract.high.u32 %v656
      %v659 = vshrl.u32 %v658, 4
      %v660 = vmul.u32 %v659, 18
      %v661 = vsub.s32 %v655, %v660
      %v662 = vsub.s32 0, %v661
      %v663 = vsel %vm653, %v662, %v661
      %vm664 = vcmp.ne.s32.totalorder %v278, 0
      %vm665 = vcmp.ne.s32.totalorder %v289, 0
      %vm666 = vcmp.ne.s32.totalorder %v300, 0
      %vm667 = vcmp.ne.s32.totalorder %v311, 0
      %vm668 = vcmp.ne.s32.totalorder %v322, 0
      %vm669 = vcmp.ne.s32.totalorder %v333, 0
      %vm670 = vcmp.ne.s32.totalorder %v344, 0
      %vm671 = vcmp.ne.s32.totalorder %v355, 0
      %vm672 = vcmp.ne.s32.totalorder %v366, 0
      %vm673 = vcmp.ne.s32.totalorder %v377, 0
      %vm674 = vcmp.ne.s32.totalorder %v388, 0
      %vm675 = vcmp.ne.s32.totalorder %v399, 0
      %vm676 = vcmp.ne.s32.totalorder %v410, 0
      %vm677 = vcmp.ne.s32.totalorder %v421, 0
      %vm678 = vcmp.ne.s32.totalorder %v432, 0
      %vm679 = vcmp.ne.s32.totalorder %v443, 0
      %vm680 = vcmp.ne.s32.totalorder %v454, 0
      %vm681 = vcmp.ne.s32.totalorder %v465, 0
      %vm682 = vcmp.ne.s32.totalorder %v476, 0
      %vm683 = vcmp.ne.s32.totalorder %v487, 0
      %vm684 = vcmp.ne.s32.totalorder %v498, 0
      %vm685 = vcmp.ne.s32.totalorder %v509, 0
      %vm686 = vcmp.ne.s32.totalorder %v520, 0
      %vm687 = vcmp.ne.s32.totalorder %v531, 0
      %vm688 = vcmp.ne.s32.totalorder %v542, 0
      %vm689 = vcmp.ne.s32.totalorder %v553, 0
      %vm690 = vcmp.ne.s32.totalorder %v564, 0
      %vm691 = vcmp.ne.s32.totalorder %v575, 0
      %vm692 = vcmp.ne.s32.totalorder %v586, 0
      %vm693 = vcmp.ne.s32.totalorder %v597, 0
      %vm694 = vcmp.ne.s32.totalorder %v608, 0
      %vm695 = vcmp.ne.s32.totalorder %v619, 0
      %vm696 = vcmp.ne.s32.totalorder %v630, 0
      %vm697 = vcmp.ne.s32.totalorder %v641, 0
      %vm698 = vcmp.ne.s32.totalorder %v652, 0
      %vm699 = vcmp.ne.s32.totalorder %v663, 0
      %vm700 = vcmp.lt.s32.totalorder %v278, 0
      %vm701 = vcmp.lt.s32.totalorder %v289, 0
      %vm702 = vcmp.lt.s32.totalorder %v300, 0
      %vm703 = vcmp.lt.s32.totalorder %v311, 0
      %vm704 = vcmp.lt.s32.totalorder %v322, 0
      %vm705 = vcmp.lt.s32.totalorder %v333, 0
      %vm706 = vcmp.lt.s32.totalorder %v344, 0
      %vm707 = vcmp.lt.s32.totalorder %v355, 0
      %vm708 = vcmp.lt.s32.totalorder %v366, 0
      %vm709 = vcmp.lt.s32.totalorder %v377, 0
      %vm710 = vcmp.lt.s32.totalorder %v388, 0
      %vm711 = vcmp.lt.s32.totalorder %v399, 0
      %vm712 = vcmp.lt.s32.totalorder %v410, 0
      %vm713 = vcmp.lt.s32.totalorder %v421, 0
      %vm714 = vcmp.lt.s32.totalorder %v432, 0
      %vm715 = vcmp.lt.s32.totalorder %v443, 0
      %vm716 = vcmp.lt.s32.totalorder %v454, 0
      %vm717 = vcmp.lt.s32.totalorder %v465, 0
      %vm718 = vcmp.lt.s32.totalorder %v476, 0
      %vm719 = vcmp.lt.s32.totalorder %v487, 0
      %vm720 = vcmp.lt.s32.totalorder %v498, 0
      %vm721 = vcmp.lt.s32.totalorder %v509, 0
      %vm722 = vcmp.lt.s32.totalorder %v520, 0
      %vm723 = vcmp.lt.s32.totalorder %v531, 0
      %vm724 = vcmp.lt.s32.totalorder %v542, 0
      %vm725 = vcmp.lt.s32.totalorder %v553, 0
      %vm726 = vcmp.lt.s32.totalorder %v564, 0
      %vm727 = vcmp.lt.s32.totalorder %v575, 0
      %vm728 = vcmp.lt.s32.totalorder %v586, 0
      %vm729 = vcmp.lt.s32.totalorder %v597, 0
      %vm730 = vcmp.lt.s32.totalorder %v608, 0
      %vm731 = vcmp.lt.s32.totalorder %v619, 0
      %vm732 = vcmp.lt.s32.totalorder %v630, 0
      %vm733 = vcmp.lt.s32.totalorder %v641, 0
      %vm734 = vcmp.lt.s32.totalorder %v652, 0
      %vm735 = vcmp.lt.s32.totalorder %v663, 0
      %vm736 = vmand %vm700, %vm664
      %vm737 = vmand %vm701, %vm665
      %vm738 = vmand %vm702, %vm666
      %vm739 = vmand %vm703, %vm667
      %vm740 = vmand %vm704, %vm668
      %vm741 = vmand %vm705, %vm669
      %vm742 = vmand %vm706, %vm670
      %vm743 = vmand %vm707, %vm671
      %vm744 = vmand %vm708, %vm672
      %vm745 = vmand %vm709, %vm673
      %vm746 = vmand %vm710, %vm674
      %vm747 = vmand %vm711, %vm675
      %vm748 = vmand %vm712, %vm676
      %vm749 = vmand %vm713, %vm677
      %vm750 = vmand %vm714, %vm678
      %vm751 = vmand %vm715, %vm679
      %vm752 = vmand %vm716, %vm680
      %vm753 = vmand %vm717, %vm681
      %vm754 = vmand %vm718, %vm682
      %vm755 = vmand %vm719, %vm683
      %vm756 = vmand %vm720, %vm684
      %vm757 = vmand %vm721, %vm685
      %vm758 = vmand %vm722, %vm686
      %vm759 = vmand %vm723, %vm687
      %vm760 = vmand %vm724, %vm688
      %vm761 = vmand %vm725, %vm689
      %vm762 = vmand %vm726, %vm690
      %vm763 = vmand %vm727, %vm691
      %vm764 = vmand %vm728, %vm692
      %vm765 = vmand %vm729, %vm693
      %vm766 = vmand %vm730, %vm694
      %vm767 = vmand %vm731, %vm695
      %vm768 = vmand %vm732, %vm696
      %vm769 = vmand %vm733, %vm697
      %vm770 = vmand %vm734, %vm698
      %vm771 = vmand %vm735, %vm699
      %v772 = vadd.s32 %v278, 18
      %v773 = vadd.s32 %v289, 18
      %v774 = vadd.s32 %v300, 18
      %v775 = vadd.s32 %v311, 18
      %v776 = vadd.s32 %v322, 18
      %v777 = vadd.s32 %v333, 18
      %v778 = vadd.s32 %v344, 18
      %v779 = vadd.s32 %v355, 18
      %v780 = vadd.s32 %v366, 18
      %v781 = vadd.s32 %v377, 18
      %v782 = vadd.s32 %v388, 18
      %v783 = vadd.s32 %v399, 18
      %v784 = vadd.s32 %v410, 18
      %v785 = vadd.s32 %v421, 18
      %v786 = vadd.s32 %v432, 18
      %v787 = vadd.s32 %v443, 18
      %v788 = vadd.s32 %v454, 18
      %v789 = vadd.s32 %v465, 18
      %v790 = vadd.s32 %v476, 18
      %v791 = vadd.s32 %v487, 18
      %v792 = vadd.s32 %v498, 18
      %v793 = vadd.s32 %v509, 18
      %v794 = vadd.s32 %v520, 18
      %v795 = vadd.s32 %v531, 18
      %v796 = vadd.s32 %v542, 18
      %v797 = vadd.s32 %v553, 18
      %v798 = vadd.s32 %v564, 18
      %v799 = vadd.s32 %v575, 18
      %v800 = vadd.s32 %v586, 18
      %v801 = vadd.s32 %v597, 18
      %v802 = vadd.s32 %v608, 18
      %v803 = vadd.s32 %v619, 18
      %v804 = vadd.s32 %v630, 18
      %v805 = vadd.s32 %v641, 18
      %v806 = vadd.s32 %v652, 18
      %v807 = vadd.s32 %v663, 18
      %v808 = vsel %vm736, %v772, %v278
      %v809 = vsel %vm737, %v773, %v289
      %v810 = vsel %vm738, %v774, %v300
      %v811 = vsel %vm739, %v775, %v311
      %v812 = vsel %vm740, %v776, %v322
      %v813 = vsel %vm741, %v777, %v333
      %v814 = vsel %vm742, %v778, %v344
      %v815 = vsel %vm743, %v779, %v355
      %v816 = vsel %vm744, %v780, %v366
      %v817 = vsel %vm745, %v781, %v377
      %v818 = vsel %vm746, %v782, %v388
      %v819 = vsel %vm747, %v783, %v399
      %v820 = vsel %vm748, %v784, %v410
      %v821 = vsel %vm749, %v785, %v421
      %v822 = vsel %vm750, %v786, %v432
      %v823 = vsel %vm751, %v787, %v443
      %v824 = vsel %vm752, %v788, %v454
      %v825 = vsel %vm753, %v789, %v465
      %v826 = vsel %vm754, %v790, %v476
      %v827 = vsel %vm755, %v791, %v487
      %v828 = vsel %vm756, %v792, %v498
      %v829 = vsel %vm757, %v793, %v509
      %v830 = vsel %vm758, %v794, %v520
      %v831 = vsel %vm759, %v795, %v531
      %v832 = vsel %vm760, %v796, %v542
      %v833 = vsel %vm761, %v797, %v553
      %v834 = vsel %vm762, %v798, %v564
      %v835 = vsel %vm763, %v799, %v575
      %v836 = vsel %vm764, %v800, %v586
      %v837 = vsel %vm765, %v801, %v597
      %v838 = vsel %vm766, %v802, %v608
      %v839 = vsel %vm767, %v803, %v619
      %v840 = vsel %vm768, %v804, %v630
      %v841 = vsel %vm769, %v805, %v641
      %v842 = vsel %vm770, %v806, %v652
      %v843 = vsel %vm771, %v807, %v663
      %vm844 = vcmp.lt.s32.totalorder %v808, 16
      %vm845 = vcmp.lt.s32.totalorder %v809, 16
      %vm846 = vcmp.lt.s32.totalorder %v810, 16
      %vm847 = vcmp.lt.s32.totalorder %v811, 16
      %vm848 = vcmp.lt.s32.totalorder %v812, 16
      %vm849 = vcmp.lt.s32.totalorder %v813, 16
      %vm850 = vcmp.lt.s32.totalorder %v814, 16
      %vm851 = vcmp.lt.s32.totalorder %v815, 16
      %vm852 = vcmp.lt.s32.totalorder %v816, 16
      %vm853 = vcmp.lt.s32.totalorder %v817, 16
      %vm854 = vcmp.lt.s32.totalorder %v818, 16
      %vm855 = vcmp.lt.s32.totalorder %v819, 16
      %vm856 = vcmp.lt.s32.totalorder %v820, 16
      %vm857 = vcmp.lt.s32.totalorder %v821, 16
      %vm858 = vcmp.lt.s32.totalorder %v822, 16
      %vm859 = vcmp.lt.s32.totalorder %v823, 16
      %vm860 = vcmp.lt.s32.totalorder %v824, 16
      %vm861 = vcmp.lt.s32.totalorder %v825, 16
      %vm862 = vcmp.lt.s32.totalorder %v826, 16
      %vm863 = vcmp.lt.s32.totalorder %v827, 16
      %vm864 = vcmp.lt.s32.totalorder %v828, 16
      %vm865 = vcmp.lt.s32.totalorder %v829, 16
      %vm866 = vcmp.lt.s32.totalorder %v830, 16
      %vm867 = vcmp.lt.s32.totalorder %v831, 16
      %vm868 = vcmp.lt.s32.totalorder %v832, 16
      %vm869 = vcmp.lt.s32.totalorder %v833, 16
      %vm870 = vcmp.lt.s32.totalorder %v834, 16
      %vm871 = vcmp.lt.s32.totalorder %v835, 16
      %vm872 = vcmp.lt.s32.totalorder %v836, 16
      %vm873 = vcmp.lt.s32.totalorder %v837, 16
      %vm874 = vcmp.lt.s32.totalorder %v838, 16
      %vm875 = vcmp.lt.s32.totalorder %v839, 16
      %vm876 = vcmp.lt.s32.totalorder %v840, 16
      %vm877 = vcmp.lt.s32.totalorder %v841, 16
      %vm878 = vcmp.lt.s32.totalorder %v842, 16
      %vm879 = vcmp.lt.s32.totalorder %v843, 16
      %880 = vst [vmem:[#allocation2] sm:$0xff] 0.0
      %881 = vst [vmem:[#allocation2 + $0x8] sm:$0xff] 0.0
      %882 = vst [vmem:[#allocation2 + $0x10] sm:$0xff] 0.0
      %883 = vst [vmem:[#allocation2 + $0x18] sm:$0xff] 0.0
      %884 = vst [vmem:[#allocation2 + $0x20] sm:$0xff] 0.0
      %885 = vst [vmem:[#allocation2 + $0x28] sm:$0xff] 0.0
      %886 = vst [vmem:[#allocation2 + $0x30] sm:$0xff] 0.0
      %887 = vst [vmem:[#allocation2 + $0x38] sm:$0xff] 0.0
      %888 = vst [vmem:[#allocation2 + $0x40] sm:$0xff] 0.0
      %889 = vst [vmem:[#allocation2 + $0x48] sm:$0xff] 0.0
      %890 = vst [vmem:[#allocation2 + $0x50] sm:$0xff] 0.0
      %891 = vst [vmem:[#allocation2 + $0x58] sm:$0xff] 0.0
      %892 = vst [vmem:[#allocation2 + $0x60] sm:$0xff] 0.0
      %893 = vst [vmem:[#allocation2 + $0x68] sm:$0xff] 0.0
      %894 = vst [vmem:[#allocation2 + $0x70] sm:$0xff] 0.0
      %895 = vst [vmem:[#allocation2 + $0x78] sm:$0xff] 0.0
      %896 = vst [vmem:[#allocation2 + $0x80] sm:$0xff] 0.0
      %897 = vst [vmem:[#allocation2 + $0x88] sm:$0xff] 0.0
      %898 = vst [vmem:[#allocation2 + $0x90] sm:$0xff] 0.0
      %899 = vst [vmem:[#allocation2 + $0x98] sm:$0xff] 0.0
      %900 = vst [vmem:[#allocation2 + $0xa0] sm:$0xff] 0.0
      %901 = vst [vmem:[#allocation2 + $0xa8] sm:$0xff] 0.0
      %902 = vst [vmem:[#allocation2 + $0xb0] sm:$0xff] 0.0
      %903 = vst [vmem:[#allocation2 + $0xb8] sm:$0xff] 0.0
      %904 = vst [vmem:[#allocation2 + $0xc0] sm:$0xff] 0.0
      %905 = vst [vmem:[#allocation2 + $0xc8] sm:$0xff] 0.0
      %906 = vst [vmem:[#allocation2 + $0xd0] sm:$0xff] 0.0
      %907 = vst [vmem:[#allocation2 + $0xd8] sm:$0xff] 0.0
      %908 = vst [vmem:[#allocation2 + $0xe0] sm:$0xff] 0.0
      %909 = vst [vmem:[#allocation2 + $0xe8] sm:$0xff] 0.0
      %910 = vst [vmem:[#allocation2 + $0xf0] sm:$0xff] 0.0
      %911 = vst [vmem:[#allocation2 + $0xf8] sm:$0xff] 0.0
      %912 = vst [vmem:[#allocation2 + $0x100] sm:$0xff] 0.0
      %913 = vst [vmem:[#allocation2 + $0x108] sm:$0xff] 0.0
      %914 = vst [vmem:[#allocation2 + $0x110] sm:$0xff] 0.0
      %915 = vst [vmem:[#allocation2 + $0x118] sm:$0xff] 0.0
      %916 = vst [vmem:[#allocation2 + $0x120] sm:$0xff] 0.0
      %917 = vst [vmem:[#allocation2 + $0x128] sm:$0xff] 0.0
      %918 = vst [vmem:[#allocation2 + $0x130] sm:$0xff] 0.0
      %919 = vst [vmem:[#allocation2 + $0x138] sm:$0xff] 0.0
      %920 = vst [vmem:[#allocation2 + $0x140] sm:$0xff] 0.0
      %921 = vst [vmem:[#allocation2 + $0x148] sm:$0xff] 0.0
      %922 = vst [vmem:[#allocation2 + $0x150] sm:$0x3f] 0.0
      %923 = vst [vmem:[#allocation4] sm:$0xff] 0.0
      %924 = vst [vmem:[#allocation4 + $0x8] sm:$0xff] 0.0
      %925 = vst [vmem:[#allocation4 + $0x10] sm:$0xff] 0.0
      %926 = vst [vmem:[#allocation4 + $0x18] sm:$0xff] 0.0
      %927 = vst [vmem:[#allocation4 + $0x20] sm:$0xff] 0.0
      %928 = vst [vmem:[#allocation4 + $0x28] sm:$0xff] 0.0
      %929 = vst [vmem:[#allocation4 + $0x30] sm:$0xff] 0.0
      %930 = vst [vmem:[#allocation4 + $0x38] sm:$0xff] 0.0
      %931 = vst [vmem:[#allocation4 + $0x40] sm:$0xff] 0.0
      %932 = vst [vmem:[#allocation4 + $0x48] sm:$0xff] 0.0
      %933 = vst [vmem:[#allocation4 + $0x50] sm:$0xff] 0.0
      %934 = vst [vmem:[#allocation4 + $0x58] sm:$0xff] 0.0
      %935 = vst [vmem:[#allocation4 + $0x60] sm:$0xff] 0.0
      %936 = vst [vmem:[#allocation4 + $0x68] sm:$0xff] 0.0
      %937 = vst [vmem:[#allocation4 + $0x70] sm:$0xff] 0.0
      %938 = vst [vmem:[#allocation4 + $0x78] sm:$0xff] 0.0
      %939 = vst [vmem:[#allocation4 + $0x80] sm:$0xff] 0.0
      %940 = vst [vmem:[#allocation4 + $0x88] sm:$0xff] 0.0
      %941 = vst [vmem:[#allocation4 + $0x90] sm:$0xff] 0.0
      %942 = vst [vmem:[#allocation4 + $0x98] sm:$0xff] 0.0
      %943 = vst [vmem:[#allocation4 + $0xa0] sm:$0xff] 0.0
      %944 = vst [vmem:[#allocation4 + $0xa8] sm:$0xff] 0.0
      %945 = vst [vmem:[#allocation4 + $0xb0] sm:$0xff] 0.0
      %946 = vst [vmem:[#allocation4 + $0xb8] sm:$0xff] 0.0
      %947 = vst [vmem:[#allocation4 + $0xc0] sm:$0xff] 0.0
      %948 = vst [vmem:[#allocation4 + $0xc8] sm:$0xff] 0.0
      %949 = vst [vmem:[#allocation4 + $0xd0] sm:$0xff] 0.0
      %950 = vst [vmem:[#allocation4 + $0xd8] sm:$0xff] 0.0
      %951 = vst [vmem:[#allocation4 + $0xe0] sm:$0xff] 0.0
      %952 = vst [vmem:[#allocation4 + $0xe8] sm:$0xff] 0.0
      %953 = vst [vmem:[#allocation4 + $0xf0] sm:$0xff] 0.0
      %954 = vst [vmem:[#allocation4 + $0xf8] sm:$0xff] 0.0
      %955 = vst [vmem:[#allocation4 + $0x100] sm:$0xff] 0.0
      %956 = vst [vmem:[#allocation4 + $0x108] sm:$0xff] 0.0
      %957 = vst [vmem:[#allocation4 + $0x110] sm:$0xff] 0.0
      %958 = vst [vmem:[#allocation4 + $0x118] sm:$0xff] 0.0
      %959 = vst [vmem:[#allocation4 + $0x120] sm:$0xff] 0.0
      %960 = vst [vmem:[#allocation4 + $0x128] sm:$0xff] 0.0
      %961 = vst [vmem:[#allocation4 + $0x130] sm:$0xff] 0.0
      %962 = vst [vmem:[#allocation4 + $0x138] sm:$0xff] 0.0
      %963 = vst [vmem:[#allocation4 + $0x140] sm:$0xff] 0.0
      %964 = vst [vmem:[#allocation4 + $0x148] sm:$0xff] 0.0
      %965 = vst [vmem:[#allocation4 + $0x150] sm:$0x3f] 0.0
      %v966 = vld [vmem:[%s219] sm:$0xff]
      %v967 = vld [vmem:[%s219 + $0x8] sm:$0xff]
      %v968 = vld [vmem:[%s219 + $0x10] sm:$0xff]
      %v969 = vld [vmem:[%s219 + $0x18] sm:$0xff]
      %v970 = vld [vmem:[%s219 + $0x20] sm:$0xff]
      %v971 = vld [vmem:[%s219 + $0x28] sm:$0xff]
      %v972 = vld [vmem:[%s219 + $0x30] sm:$0xff]
      %v973 = vld [vmem:[%s219 + $0x38] sm:$0xff]
      %v974 = vld [vmem:[%s219 + $0x40] sm:$0xff]
      %v975 = vld [vmem:[%s219 + $0x48] sm:$0xff]
      %v976 = vld [vmem:[%s219 + $0x50] sm:$0xff]
      %v977 = vld [vmem:[%s219 + $0x58] sm:$0xff]
      %v978 = vld [vmem:[%s219 + $0x60] sm:$0xff]
      %v979 = vld [vmem:[%s219 + $0x68] sm:$0xff]
      %v980 = vld [vmem:[%s219 + $0x70] sm:$0xff]
      %v981 = vld [vmem:[%s219 + $0x78] sm:$0xff]
      %v982 = vld [vmem:[%s219 + $0x80] sm:$0xff]
      %v983 = vld [vmem:[%s219 + $0x88] sm:$0xff]
      %v984 = vld [vmem:[%s219 + $0x90] sm:$0xff]
      %v985 = vld [vmem:[%s219 + $0x98] sm:$0xff]
      %v986 = vld [vmem:[%s219 + $0xa0] sm:$0xff]
      %v987 = vld [vmem:[%s219 + $0xa8] sm:$0xff]
      %v988 = vld [vmem:[%s219 + $0xb0] sm:$0xff]
      %v989 = vld [vmem:[%s219 + $0xb8] sm:$0xff]
      %v990 = vld [vmem:[%s219 + $0xc0] sm:$0xff]
      %v991 = vld [vmem:[%s219 + $0xc8] sm:$0xff]
      %v992 = vld [vmem:[%s219 + $0xd0] sm:$0xff]
      %v993 = vld [vmem:[%s219 + $0xd8] sm:$0xff]
      %v994 = vld [vmem:[%s219 + $0xe0] sm:$0xff]
      %v995 = vld [vmem:[%s219 + $0xe8] sm:$0xff]
      %v996 = vld [vmem:[%s219 + $0xf0] sm:$0xff]
      %v997 = vld [vmem:[%s219 + $0xf8] sm:$0xff]
      %v998 = vld [vmem:[%s219 + $0x100] sm:$0xff]
      %v999 = vld [vmem:[%s219 + $0x108] sm:$0xff]
      %v1000 = vld [vmem:[%s219 + $0x110] sm:$0xff]
      %v1001 = vld [vmem:[%s219 + $0x118] sm:$0xff]
      %v1002 = vld [vmem:[%s219 + $0x120] sm:$0xff]
      %v1003 = vld [vmem:[%s219 + $0x128] sm:$0xff]
      %v1004 = vld [vmem:[%s219 + $0x130] sm:$0xff]
      %v1005 = vld [vmem:[%s219 + $0x138] sm:$0xff]
      %v1006 = vld [vmem:[%s219 + $0x140] sm:$0xff]
      %v1007 = vld [vmem:[%s219 + $0x148] sm:$0xff]
      %v1008 = vld [vmem:[%s219 + $0x150] sm:$0x3f]
      %vm1009 = vcmask 31744
      %1010 = vst.msk [vmem:[#allocation2] sm:$0xff] %vm1009, %v966
      %1011 = vst.msk [vmem:[#allocation2 + $0x8] sm:$0xff] %vm1009, %v967
      %1012 = vst.msk [vmem:[#allocation2 + $0x10] sm:$0xff] %vm1009, %v968
      %1013 = vst.msk [vmem:[#allocation2 + $0x18] sm:$0xff] %vm1009, %v969
      %1014 = vst.msk [vmem:[#allocation2 + $0x20] sm:$0xff] %vm1009, %v970
      %1015 = vst.msk [vmem:[#allocation2 + $0x28] sm:$0xff] %vm1009, %v971
      %1016 = vst.msk [vmem:[#allocation2 + $0x30] sm:$0xff] %vm1009, %v972
      %1017 = vst.msk [vmem:[#allocation2 + $0x38] sm:$0xff] %vm1009, %v973
      %1018 = vst.msk [vmem:[#allocation2 + $0x40] sm:$0xff] %vm1009, %v974
      %1019 = vst.msk [vmem:[#allocation2 + $0x48] sm:$0xff] %vm1009, %v975
      %1020 = vst.msk [vmem:[#allocation2 + $0x50] sm:$0xff] %vm1009, %v976
      %1021 = vst.msk [vmem:[#allocation2 + $0x58] sm:$0xff] %vm1009, %v977
      %1022 = vst.msk [vmem:[#allocation2 + $0x60] sm:$0xff] %vm1009, %v978
      %1023 = vst.msk [vmem:[#allocation2 + $0x68] sm:$0xff] %vm1009, %v979
      %1024 = vst.msk [vmem:[#allocation2 + $0x70] sm:$0xff] %vm1009, %v980
      %1025 = vst.msk [vmem:[#allocation2 + $0x78] sm:$0xff] %vm1009, %v981
      %1026 = vst.msk [vmem:[#allocation2 + $0x80] sm:$0xff] %vm1009, %v982
      %1027 = vst.msk [vmem:[#allocation2 + $0x88] sm:$0xff] %vm1009, %v983
      %1028 = vst.msk [vmem:[#allocation2 + $0x90] sm:$0xff] %vm1009, %v984
      %1029 = vst.msk [vmem:[#allocation2 + $0x98] sm:$0xff] %vm1009, %v985
      %1030 = vst.msk [vmem:[#allocation2 + $0xa0] sm:$0xff] %vm1009, %v986
      %1031 = vst.msk [vmem:[#allocation2 + $0xa8] sm:$0xff] %vm1009, %v987
      %1032 = vst.msk [vmem:[#allocation2 + $0xb0] sm:$0xff] %vm1009, %v988
      %1033 = vst.msk [vmem:[#allocation2 + $0xb8] sm:$0xff] %vm1009, %v989
      %1034 = vst.msk [vmem:[#allocation2 + $0xc0] sm:$0xff] %vm1009, %v990
      %1035 = vst.msk [vmem:[#allocation2 + $0xc8] sm:$0xff] %vm1009, %v991
      %1036 = vst.msk [vmem:[#allocation2 + $0xd0] sm:$0xff] %vm1009, %v992
      %1037 = vst.msk [vmem:[#allocation2 + $0xd8] sm:$0xff] %vm1009, %v993
      %1038 = vst.msk [vmem:[#allocation2 + $0xe0] sm:$0xff] %vm1009, %v994
      %1039 = vst.msk [vmem:[#allocation2 + $0xe8] sm:$0xff] %vm1009, %v995
      %1040 = vst.msk [vmem:[#allocation2 + $0xf0] sm:$0xff] %vm1009, %v996
      %1041 = vst.msk [vmem:[#allocation2 + $0xf8] sm:$0xff] %vm1009, %v997
      %1042 = vst.msk [vmem:[#allocation2 + $0x100] sm:$0xff] %vm1009, %v998
      %1043 = vst.msk [vmem:[#allocation2 + $0x108] sm:$0xff] %vm1009, %v999
      %1044 = vst.msk [vmem:[#allocation2 + $0x110] sm:$0xff] %vm1009, %v1000
      %1045 = vst.msk [vmem:[#allocation2 + $0x118] sm:$0xff] %vm1009, %v1001
      %1046 = vst.msk [vmem:[#allocation2 + $0x120] sm:$0xff] %vm1009, %v1002
      %1047 = vst.msk [vmem:[#allocation2 + $0x128] sm:$0xff] %vm1009, %v1003
      %1048 = vst.msk [vmem:[#allocation2 + $0x130] sm:$0xff] %vm1009, %v1004
      %1049 = vst.msk [vmem:[#allocation2 + $0x138] sm:$0xff] %vm1009, %v1005
      %1050 = vst.msk [vmem:[#allocation2 + $0x140] sm:$0xff] %vm1009, %v1006
      %1051 = vst.msk [vmem:[#allocation2 + $0x148] sm:$0xff] %vm1009, %v1007
      %vm1052 = vcmask 29696
      %1053 = vst.msk [vmem:[#allocation2 + $0x150] sm:$0x3f] %vm1052, %v1008
      %v1054 = vld [vmem:[#allocation2] sm:$0xff]
      %v1055 = vld [vmem:[#allocation2 + $0x8] sm:$0xff]
      %v1056 = vld [vmem:[#allocation2 + $0x10] sm:$0xff]
      %v1057 = vld [vmem:[#allocation2 + $0x18] sm:$0xff]
      %v1058 = vld [vmem:[#allocation2 + $0x20] sm:$0xff]
      %v1059 = vld [vmem:[#allocation2 + $0x28] sm:$0xff]
      %v1060 = vld [vmem:[#allocation2 + $0x30] sm:$0xff]
      %v1061 = vld [vmem:[#allocation2 + $0x38] sm:$0xff]
      %v1062 = vld [vmem:[#allocation2 + $0x40] sm:$0xff]
      %v1063 = vld [vmem:[#allocation2 + $0x48] sm:$0xff]
      %v1064 = vld [vmem:[#allocation2 + $0x50] sm:$0xff]
      %v1065 = vld [vmem:[#allocation2 + $0x58] sm:$0xff]
      %v1066 = vld [vmem:[#allocation2 + $0x60] sm:$0xff]
      %v1067 = vld [vmem:[#allocation2 + $0x68] sm:$0xff]
      %v1068 = vld [vmem:[#allocation2 + $0x70] sm:$0xff]
      %v1069 = vld [vmem:[#allocation2 + $0x78] sm:$0xff]
      %v1070 = vld [vmem:[#allocation2 + $0x80] sm:$0xff]
      %v1071 = vld [vmem:[#allocation2 + $0x88] sm:$0xff]
      %v1072 = vld [vmem:[#allocation2 + $0x90] sm:$0xff]
      %v1073 = vld [vmem:[#allocation2 + $0x98] sm:$0xff]
      %v1074 = vld [vmem:[#allocation2 + $0xa0] sm:$0xff]
      %v1075 = vld [vmem:[#allocation2 + $0xa8] sm:$0xff]
      %v1076 = vld [vmem:[#allocation2 + $0xb0] sm:$0xff]
      %v1077 = vld [vmem:[#allocation2 + $0xb8] sm:$0xff]
      %v1078 = vld [vmem:[#allocation2 + $0xc0] sm:$0xff]
      %v1079 = vld [vmem:[#allocation2 + $0xc8] sm:$0xff]
      %v1080 = vld [vmem:[#allocation2 + $0xd0] sm:$0xff]
      %v1081 = vld [vmem:[#allocation2 + $0xd8] sm:$0xff]
      %v1082 = vld [vmem:[#allocation2 + $0xe0] sm:$0xff]
      %v1083 = vld [vmem:[#allocation2 + $0xe8] sm:$0xff]
      %v1084 = vld [vmem:[#allocation2 + $0xf0] sm:$0xff]
      %v1085 = vld [vmem:[#allocation2 + $0xf8] sm:$0xff]
      %v1086 = vld [vmem:[#allocation2 + $0x100] sm:$0xff]
      %v1087 = vld [vmem:[#allocation2 + $0x108] sm:$0xff]
      %v1088 = vld [vmem:[#allocation2 + $0x110] sm:$0xff]
      %v1089 = vld [vmem:[#allocation2 + $0x118] sm:$0xff]
      %1090 = vst [vmem:[#allocation3] sm:$0xff] %v1054
      %1091 = vst [vmem:[#allocation3 + $0x48] sm:$0xff] %v1055
      %1092 = vst [vmem:[#allocation3 + $0x90] sm:$0xff] %v1056
      %1093 = vst [vmem:[#allocation3 + $0xd8] sm:$0xff] %v1057
      %1094 = vst [vmem:[#allocation3 + $0x120] sm:$0xff] %v1058
      %1095 = vst [vmem:[#allocation3 + $0x168] sm:$0xff] %v1059
      %1096 = vst [vmem:[#allocation3 + $0x1b0] sm:$0xff] %v1060
      %1097 = vst [vmem:[#allocation3 + $0x1f8] sm:$0xff] %v1061
      %1098 = vst [vmem:[#allocation3 + $0x240] sm:$0xff] %v1062
      %1099 = vst [vmem:[#allocation3 + $0x288] sm:$0xff] %v1063
      %1100 = vst [vmem:[#allocation3 + $0x2d0] sm:$0xff] %v1064
      %1101 = vst [vmem:[#allocation3 + $0x318] sm:$0xff] %v1065
      %1102 = vst [vmem:[#allocation3 + $0x360] sm:$0xff] %v1066
      %1103 = vst [vmem:[#allocation3 + $0x3a8] sm:$0xff] %v1067
      %1104 = vst [vmem:[#allocation3 + $0x3f0] sm:$0xff] %v1068
      %1105 = vst [vmem:[#allocation3 + $0x438] sm:$0xff] %v1069
      %1106 = vst [vmem:[#allocation3 + $0x480] sm:$0xff] %v1070
      %1107 = vst [vmem:[#allocation3 + $0x4c8] sm:$0xff] %v1071
      %1108 = vst [vmem:[#allocation3 + $0x510] sm:$0xff] %v1072
      %1109 = vst [vmem:[#allocation3 + $0x558] sm:$0xff] %v1073
      %1110 = vst [vmem:[#allocation3 + $0x5a0] sm:$0xff] %v1074
      %1111 = vst [vmem:[#allocation3 + $0x5e8] sm:$0xff] %v1075
      %1112 = vst [vmem:[#allocation3 + $0x630] sm:$0xff] %v1076
      %1113 = vst [vmem:[#allocation3 + $0x678] sm:$0xff] %v1077
      %1114 = vst [vmem:[#allocation3 + $0x6c0] sm:$0xff] %v1078
      %1115 = vst [vmem:[#allocation3 + $0x708] sm:$0xff] %v1079
      %1116 = vst [vmem:[#allocation3 + $0x750] sm:$0xff] %v1080
      %1117 = vst [vmem:[#allocation3 + $0x798] sm:$0xff] %v1081
      %1118 = vst [vmem:[#allocation3 + $0x7e0] sm:$0xff] %v1082
      %1119 = vst [vmem:[#allocation3 + $0x828] sm:$0xff] %v1083
      %1120 = vst [vmem:[#allocation3 + $0x870] sm:$0xff] %v1084
      %1121 = vst [vmem:[#allocation3 + $0x8b8] sm:$0xff] %v1085
      %1122 = vst [vmem:[#allocation3 + $0x900] sm:$0xff] %v1086
      %1123 = vst [vmem:[#allocation3 + $0x948] sm:$0xff] %v1087
      %1124 = vst [vmem:[#allocation3 + $0x990] sm:$0xff] %v1088
      %1125 = vst [vmem:[#allocation3 + $0x9d8] sm:$0xff] %v1089
      %v1126 = vld [vmem:[#allocation2 + $0x1] sm:$0xff]
      %v1127 = vld [vmem:[#allocation2 + $0x9] sm:$0xff]
      %v1128 = vld [vmem:[#allocation2 + $0x11] sm:$0xff]
      %v1129 = vld [vmem:[#allocation2 + $0x19] sm:$0xff]
      %v1130 = vld [vmem:[#allocation2 + $0x21] sm:$0xff]
      %v1131 = vld [vmem:[#allocation2 + $0x29] sm:$0xff]
      %v1132 = vld [vmem:[#allocation2 + $0x31] sm:$0xff]
      %v1133 = vld [vmem:[#allocation2 + $0x39] sm:$0xff]
      %v1134 = vld [vmem:[#allocation2 + $0x41] sm:$0xff]
      %v1135 = vld [vmem:[#allocation2 + $0x49] sm:$0xff]
      %v1136 = vld [vmem:[#allocation2 + $0x51] sm:$0xff]
      %v1137 = vld [vmem:[#allocation2 + $0x59] sm:$0xff]
      %v1138 = vld [vmem:[#allocation2 + $0x61] sm:$0xff]
      %v1139 = vld [vmem:[#allocation2 + $0x69] sm:$0xff]
      %v1140 = vld [vmem:[#allocation2 + $0x71] sm:$0xff]
      %v1141 = vld [vmem:[#allocation2 + $0x79] sm:$0xff]
      %v1142 = vld [vmem:[#allocation2 + $0x81] sm:$0xff]
      %v1143 = vld [vmem:[#allocation2 + $0x89] sm:$0xff]
      %v1144 = vld [vmem:[#allocation2 + $0x91] sm:$0xff]
      %v1145 = vld [vmem:[#allocation2 + $0x99] sm:$0xff]
      %v1146 = vld [vmem:[#allocation2 + $0xa1] sm:$0xff]
      %v1147 = vld [vmem:[#allocation2 + $0xa9] sm:$0xff]
      %v1148 = vld [vmem:[#allocation2 + $0xb1] sm:$0xff]
      %v1149 = vld [vmem:[#allocation2 + $0xb9] sm:$0xff]
      %v1150 = vld [vmem:[#allocation2 + $0xc1] sm:$0xff]
      %v1151 = vld [vmem:[#allocation2 + $0xc9] sm:$0xff]
      %v1152 = vld [vmem:[#allocation2 + $0xd1] sm:$0xff]
      %v1153 = vld [vmem:[#allocation2 + $0xd9] sm:$0xff]
      %v1154 = vld [vmem:[#allocation2 + $0xe1] sm:$0xff]
      %v1155 = vld [vmem:[#allocation2 + $0xe9] sm:$0xff]
      %v1156 = vld [vmem:[#allocation2 + $0xf1] sm:$0xff]
      %v1157 = vld [vmem:[#allocation2 + $0xf9] sm:$0xff]
      %v1158 = vld [vmem:[#allocation2 + $0x101] sm:$0xff]
      %v1159 = vld [vmem:[#allocation2 + $0x109] sm:$0xff]
      %v1160 = vld [vmem:[#allocation2 + $0x111] sm:$0xff]
      %v1161 = vld [vmem:[#allocation2 + $0x119] sm:$0xff]
      %1162 = vst [vmem:[#allocation3 + $0x8] sm:$0xff] %v1126
      %1163 = vst [vmem:[#allocation3 + $0x50] sm:$0xff] %v1127
      %1164 = vst [vmem:[#allocation3 + $0x98] sm:$0xff] %v1128
      %1165 = vst [vmem:[#allocation3 + $0xe0] sm:$0xff] %v1129
      %1166 = vst [vmem:[#allocation3 + $0x128] sm:$0xff] %v1130
      %1167 = vst [vmem:[#allocation3 + $0x170] sm:$0xff] %v1131
      %1168 = vst [vmem:[#allocation3 + $0x1b8] sm:$0xff] %v1132
      %1169 = vst [vmem:[#allocation3 + $0x200] sm:$0xff] %v1133
      %1170 = vst [vmem:[#allocation3 + $0x248] sm:$0xff] %v1134
      %1171 = vst [vmem:[#allocation3 + $0x290] sm:$0xff] %v1135
      %1172 = vst [vmem:[#allocation3 + $0x2d8] sm:$0xff] %v1136
      %1173 = vst [vmem:[#allocation3 + $0x320] sm:$0xff] %v1137
      %1174 = vst [vmem:[#allocation3 + $0x368] sm:$0xff] %v1138
      %1175 = vst [vmem:[#allocation3 + $0x3b0] sm:$0xff] %v1139
      %1176 = vst [vmem:[#allocation3 + $0x3f8] sm:$0xff] %v1140
      %1177 = vst [vmem:[#allocation3 + $0x440] sm:$0xff] %v1141
      %1178 = vst [vmem:[#allocation3 + $0x488] sm:$0xff] %v1142
      %1179 = vst [vmem:[#allocation3 + $0x4d0] sm:$0xff] %v1143
      %1180 = vst [vmem:[#allocation3 + $0x518] sm:$0xff] %v1144
      %1181 = vst [vmem:[#allocation3 + $0x560] sm:$0xff] %v1145
      %1182 = vst [vmem:[#allocation3 + $0x5a8] sm:$0xff] %v1146
      %1183 = vst [vmem:[#allocation3 + $0x5f0] sm:$0xff] %v1147
      %1184 = vst [vmem:[#allocation3 + $0x638] sm:$0xff] %v1148
      %1185 = vst [vmem:[#allocation3 + $0x680] sm:$0xff] %v1149
      %1186 = vst [vmem:[#allocation3 + $0x6c8] sm:$0xff] %v1150
      %1187 = vst [vmem:[#allocation3 + $0x710] sm:$0xff] %v1151
      %1188 = vst [vmem:[#allocation3 + $0x758] sm:$0xff] %v1152
      %1189 = vst [vmem:[#allocation3 + $0x7a0] sm:$0xff] %v1153
      %1190 = vst [vmem:[#allocation3 + $0x7e8] sm:$0xff] %v1154
      %1191 = vst [vmem:[#allocation3 + $0x830] sm:$0xff] %v1155
      %1192 = vst [vmem:[#allocation3 + $0x878] sm:$0xff] %v1156
      %1193 = vst [vmem:[#allocation3 + $0x8c0] sm:$0xff] %v1157
      %1194 = vst [vmem:[#allocation3 + $0x908] sm:$0xff] %v1158
      %1195 = vst [vmem:[#allocation3 + $0x950] sm:$0xff] %v1159
      %1196 = vst [vmem:[#allocation3 + $0x998] sm:$0xff] %v1160
      %1197 = vst [vmem:[#allocation3 + $0x9e0] sm:$0xff] %v1161
      %v1198 = vld [vmem:[#allocation2 + $0x2] sm:$0xff]
      %v1199 = vld [vmem:[#allocation2 + $0xa] sm:$0xff]
      %v1200 = vld [vmem:[#allocation2 + $0x12] sm:$0xff]
      %v1201 = vld [vmem:[#allocation2 + $0x1a] sm:$0xff]
      %v1202 = vld [vmem:[#allocation2 + $0x22] sm:$0xff]
      %v1203 = vld [vmem:[#allocation2 + $0x2a] sm:$0xff]
      %v1204 = vld [vmem:[#allocation2 + $0x32] sm:$0xff]
      %v1205 = vld [vmem:[#allocation2 + $0x3a] sm:$0xff]
      %v1206 = vld [vmem:[#allocation2 + $0x42] sm:$0xff]
      %v1207 = vld [vmem:[#allocation2 + $0x4a] sm:$0xff]
      %v1208 = vld [vmem:[#allocation2 + $0x52] sm:$0xff]
      %v1209 = vld [vmem:[#allocation2 + $0x5a] sm:$0xff]
      %v1210 = vld [vmem:[#allocation2 + $0x62] sm:$0xff]
      %v1211 = vld [vmem:[#allocation2 + $0x6a] sm:$0xff]
      %v1212 = vld [vmem:[#allocation2 + $0x72] sm:$0xff]
      %v1213 = vld [vmem:[#allocation2 + $0x7a] sm:$0xff]
      %v1214 = vld [vmem:[#allocation2 + $0x82] sm:$0xff]
      %v1215 = vld [vmem:[#allocation2 + $0x8a] sm:$0xff]
      %v1216 = vld [vmem:[#allocation2 + $0x92] sm:$0xff]
      %v1217 = vld [vmem:[#allocation2 + $0x9a] sm:$0xff]
      %v1218 = vld [vmem:[#allocation2 + $0xa2] sm:$0xff]
      %v1219 = vld [vmem:[#allocation2 + $0xaa] sm:$0xff]
      %v1220 = vld [vmem:[#allocation2 + $0xb2] sm:$0xff]
      %v1221 = vld [vmem:[#allocation2 + $0xba] sm:$0xff]
      %v1222 = vld [vmem:[#allocation2 + $0xc2] sm:$0xff]
      %v1223 = vld [vmem:[#allocation2 + $0xca] sm:$0xff]
      %v1224 = vld [vmem:[#allocation2 + $0xd2] sm:$0xff]
      %v1225 = vld [vmem:[#allocation2 + $0xda] sm:$0xff]
      %v1226 = vld [vmem:[#allocation2 + $0xe2] sm:$0xff]
      %v1227 = vld [vmem:[#allocation2 + $0xea] sm:$0xff]
      %v1228 = vld [vmem:[#allocation2 + $0xf2] sm:$0xff]
      %v1229 = vld [vmem:[#allocation2 + $0xfa] sm:$0xff]
      %v1230 = vld [vmem:[#allocation2 + $0x102] sm:$0xff]
      %v1231 = vld [vmem:[#allocation2 + $0x10a] sm:$0xff]
      %v1232 = vld [vmem:[#allocation2 + $0x112] sm:$0xff]
      %v1233 = vld [vmem:[#allocation2 + $0x11a] sm:$0xff]
      %1234 = vst [vmem:[#allocation3 + $0x10] sm:$0xff] %v1198
      %1235 = vst [vmem:[#allocation3 + $0x58] sm:$0xff] %v1199
      %1236 = vst [vmem:[#allocation3 + $0xa0] sm:$0xff] %v1200
      %1237 = vst [vmem:[#allocation3 + $0xe8] sm:$0xff] %v1201
      %1238 = vst [vmem:[#allocation3 + $0x130] sm:$0xff] %v1202
      %1239 = vst [vmem:[#allocation3 + $0x178] sm:$0xff] %v1203
      %1240 = vst [vmem:[#allocation3 + $0x1c0] sm:$0xff] %v1204
      %1241 = vst [vmem:[#allocation3 + $0x208] sm:$0xff] %v1205
      %1242 = vst [vmem:[#allocation3 + $0x250] sm:$0xff] %v1206
      %1243 = vst [vmem:[#allocation3 + $0x298] sm:$0xff] %v1207
      %1244 = vst [vmem:[#allocation3 + $0x2e0] sm:$0xff] %v1208
      %1245 = vst [vmem:[#allocation3 + $0x328] sm:$0xff] %v1209
      %1246 = vst [vmem:[#allocation3 + $0x370] sm:$0xff] %v1210
      %1247 = vst [vmem:[#allocation3 + $0x3b8] sm:$0xff] %v1211
      %1248 = vst [vmem:[#allocation3 + $0x400] sm:$0xff] %v1212
      %1249 = vst [vmem:[#allocation3 + $0x448] sm:$0xff] %v1213
      %1250 = vst [vmem:[#allocation3 + $0x490] sm:$0xff] %v1214
      %1251 = vst [vmem:[#allocation3 + $0x4d8] sm:$0xff] %v1215
      %1252 = vst [vmem:[#allocation3 + $0x520] sm:$0xff] %v1216
      %1253 = vst [vmem:[#allocation3 + $0x568] sm:$0xff] %v1217
      %1254 = vst [vmem:[#allocation3 + $0x5b0] sm:$0xff] %v1218
      %1255 = vst [vmem:[#allocation3 + $0x5f8] sm:$0xff] %v1219
      %1256 = vst [vmem:[#allocation3 + $0x640] sm:$0xff] %v1220
      %1257 = vst [vmem:[#allocation3 + $0x688] sm:$0xff] %v1221
      %1258 = vst [vmem:[#allocation3 + $0x6d0] sm:$0xff] %v1222
      %1259 = vst [vmem:[#allocation3 + $0x718] sm:$0xff] %v1223
      %1260 = vst [vmem:[#allocation3 + $0x760] sm:$0xff] %v1224
      %1261 = vst [vmem:[#allocation3 + $0x7a8] sm:$0xff] %v1225
      %1262 = vst [vmem:[#allocation3 + $0x7f0] sm:$0xff] %v1226
      %1263 = vst [vmem:[#allocation3 + $0x838] sm:$0xff] %v1227
      %1264 = vst [vmem:[#allocation3 + $0x880] sm:$0xff] %v1228
      %1265 = vst [vmem:[#allocation3 + $0x8c8] sm:$0xff] %v1229
      %1266 = vst [vmem:[#allocation3 + $0x910] sm:$0xff] %v1230
      %1267 = vst [vmem:[#allocation3 + $0x958] sm:$0xff] %v1231
      %1268 = vst [vmem:[#allocation3 + $0x9a0] sm:$0xff] %v1232
      %1269 = vst [vmem:[#allocation3 + $0x9e8] sm:$0xff] %v1233
      %v1270 = vld [vmem:[#allocation2 + $0x12] sm:$0xff]
      %v1271 = vld [vmem:[#allocation2 + $0x1a] sm:$0xff]
      %v1272 = vld [vmem:[#allocation2 + $0x22] sm:$0xff]
      %v1273 = vld [vmem:[#allocation2 + $0x2a] sm:$0xff]
      %v1274 = vld [vmem:[#allocation2 + $0x32] sm:$0xff]
      %v1275 = vld [vmem:[#allocation2 + $0x3a] sm:$0xff]
      %v1276 = vld [vmem:[#allocation2 + $0x42] sm:$0xff]
      %v1277 = vld [vmem:[#allocation2 + $0x4a] sm:$0xff]
      %v1278 = vld [vmem:[#allocation2 + $0x52] sm:$0xff]
      %v1279 = vld [vmem:[#allocation2 + $0x5a] sm:$0xff]
      %v1280 = vld [vmem:[#allocation2 + $0x62] sm:$0xff]
      %v1281 = vld [vmem:[#allocation2 + $0x6a] sm:$0xff]
      %v1282 = vld [vmem:[#allocation2 + $0x72] sm:$0xff]
      %v1283 = vld [vmem:[#allocation2 + $0x7a] sm:$0xff]
      %v1284 = vld [vmem:[#allocation2 + $0x82] sm:$0xff]
      %v1285 = vld [vmem:[#allocation2 + $0x8a] sm:$0xff]
      %v1286 = vld [vmem:[#allocation2 + $0x92] sm:$0xff]
      %v1287 = vld [vmem:[#allocation2 + $0x9a] sm:$0xff]
      %v1288 = vld [vmem:[#allocation2 + $0xa2] sm:$0xff]
      %v1289 = vld [vmem:[#allocation2 + $0xaa] sm:$0xff]
      %v1290 = vld [vmem:[#allocation2 + $0xb2] sm:$0xff]
      %v1291 = vld [vmem:[#allocation2 + $0xba] sm:$0xff]
      %v1292 = vld [vmem:[#allocation2 + $0xc2] sm:$0xff]
      %v1293 = vld [vmem:[#allocation2 + $0xca] sm:$0xff]
      %v1294 = vld [vmem:[#allocation2 + $0xd2] sm:$0xff]
      %v1295 = vld [vmem:[#allocation2 + $0xda] sm:$0xff]
      %v1296 = vld [vmem:[#allocation2 + $0xe2] sm:$0xff]
      %v1297 = vld [vmem:[#allocation2 + $0xea] sm:$0xff]
      %v1298 = vld [vmem:[#allocation2 + $0xf2] sm:$0xff]
      %v1299 = vld [vmem:[#allocation2 + $0xfa] sm:$0xff]
      %v1300 = vld [vmem:[#allocation2 + $0x102] sm:$0xff]
      %v1301 = vld [vmem:[#allocation2 + $0x10a] sm:$0xff]
      %v1302 = vld [vmem:[#allocation2 + $0x112] sm:$0xff]
      %v1303 = vld [vmem:[#allocation2 + $0x11a] sm:$0xff]
      %v1304 = vld [vmem:[#allocation2 + $0x122] sm:$0xff]
      %v1305 = vld [vmem:[#allocation2 + $0x12a] sm:$0xff]
      %1306 = vst [vmem:[#allocation3 + $0x18] sm:$0xff] %v1270
      %1307 = vst [vmem:[#allocation3 + $0x60] sm:$0xff] %v1271
      %1308 = vst [vmem:[#allocation3 + $0xa8] sm:$0xff] %v1272
      %1309 = vst [vmem:[#allocation3 + $0xf0] sm:$0xff] %v1273
      %1310 = vst [vmem:[#allocation3 + $0x138] sm:$0xff] %v1274
      %1311 = vst [vmem:[#allocation3 + $0x180] sm:$0xff] %v1275
      %1312 = vst [vmem:[#allocation3 + $0x1c8] sm:$0xff] %v1276
      %1313 = vst [vmem:[#allocation3 + $0x210] sm:$0xff] %v1277
      %1314 = vst [vmem:[#allocation3 + $0x258] sm:$0xff] %v1278
      %1315 = vst [vmem:[#allocation3 + $0x2a0] sm:$0xff] %v1279
      %1316 = vst [vmem:[#allocation3 + $0x2e8] sm:$0xff] %v1280
      %1317 = vst [vmem:[#allocation3 + $0x330] sm:$0xff] %v1281
      %1318 = vst [vmem:[#allocation3 + $0x378] sm:$0xff] %v1282
      %1319 = vst [vmem:[#allocation3 + $0x3c0] sm:$0xff] %v1283
      %1320 = vst [vmem:[#allocation3 + $0x408] sm:$0xff] %v1284
      %1321 = vst [vmem:[#allocation3 + $0x450] sm:$0xff] %v1285
      %1322 = vst [vmem:[#allocation3 + $0x498] sm:$0xff] %v1286
      %1323 = vst [vmem:[#allocation3 + $0x4e0] sm:$0xff] %v1287
      %1324 = vst [vmem:[#allocation3 + $0x528] sm:$0xff] %v1288
      %1325 = vst [vmem:[#allocation3 + $0x570] sm:$0xff] %v1289
      %1326 = vst [vmem:[#allocation3 + $0x5b8] sm:$0xff] %v1290
      %1327 = vst [vmem:[#allocation3 + $0x600] sm:$0xff] %v1291
      %1328 = vst [vmem:[#allocation3 + $0x648] sm:$0xff] %v1292
      %1329 = vst [vmem:[#allocation3 + $0x690] sm:$0xff] %v1293
      %1330 = vst [vmem:[#allocation3 + $0x6d8] sm:$0xff] %v1294
      %1331 = vst [vmem:[#allocation3 + $0x720] sm:$0xff] %v1295
      %1332 = vst [vmem:[#allocation3 + $0x768] sm:$0xff] %v1296
      %1333 = vst [vmem:[#allocation3 + $0x7b0] sm:$0xff] %v1297
      %1334 = vst [vmem:[#allocation3 + $0x7f8] sm:$0xff] %v1298
      %1335 = vst [vmem:[#allocation3 + $0x840] sm:$0xff] %v1299
      %1336 = vst [vmem:[#allocation3 + $0x888] sm:$0xff] %v1300
      %1337 = vst [vmem:[#allocation3 + $0x8d0] sm:$0xff] %v1301
      %1338 = vst [vmem:[#allocation3 + $0x918] sm:$0xff] %v1302
      %1339 = vst [vmem:[#allocation3 + $0x960] sm:$0xff] %v1303
      %1340 = vst [vmem:[#allocation3 + $0x9a8] sm:$0xff] %v1304
      %1341 = vst [vmem:[#allocation3 + $0x9f0] sm:$0xff] %v1305
      %v1342 = vld [vmem:[#allocation2 + $0x13] sm:$0xff]
      %v1343 = vld [vmem:[#allocation2 + $0x1b] sm:$0xff]
      %v1344 = vld [vmem:[#allocation2 + $0x23] sm:$0xff]
      %v1345 = vld [vmem:[#allocation2 + $0x2b] sm:$0xff]
      %v1346 = vld [vmem:[#allocation2 + $0x33] sm:$0xff]
      %v1347 = vld [vmem:[#allocation2 + $0x3b] sm:$0xff]
      %v1348 = vld [vmem:[#allocation2 + $0x43] sm:$0xff]
      %v1349 = vld [vmem:[#allocation2 + $0x4b] sm:$0xff]
      %v1350 = vld [vmem:[#allocation2 + $0x53] sm:$0xff]
      %v1351 = vld [vmem:[#allocation2 + $0x5b] sm:$0xff]
      %v1352 = vld [vmem:[#allocation2 + $0x63] sm:$0xff]
      %v1353 = vld [vmem:[#allocation2 + $0x6b] sm:$0xff]
      %v1354 = vld [vmem:[#allocation2 + $0x73] sm:$0xff]
      %v1355 = vld [vmem:[#allocation2 + $0x7b] sm:$0xff]
      %v1356 = vld [vmem:[#allocation2 + $0x83] sm:$0xff]
      %v1357 = vld [vmem:[#allocation2 + $0x8b] sm:$0xff]
      %v1358 = vld [vmem:[#allocation2 + $0x93] sm:$0xff]
      %v1359 = vld [vmem:[#allocation2 + $0x9b] sm:$0xff]
      %v1360 = vld [vmem:[#allocation2 + $0xa3] sm:$0xff]
      %v1361 = vld [vmem:[#allocation2 + $0xab] sm:$0xff]
      %v1362 = vld [vmem:[#allocation2 + $0xb3] sm:$0xff]
      %v1363 = vld [vmem:[#allocation2 + $0xbb] sm:$0xff]
      %v1364 = vld [vmem:[#allocation2 + $0xc3] sm:$0xff]
      %v1365 = vld [vmem:[#allocation2 + $0xcb] sm:$0xff]
      %v1366 = vld [vmem:[#allocation2 + $0xd3] sm:$0xff]
      %v1367 = vld [vmem:[#allocation2 + $0xdb] sm:$0xff]
      %v1368 = vld [vmem:[#allocation2 + $0xe3] sm:$0xff]
      %v1369 = vld [vmem:[#allocation2 + $0xeb] sm:$0xff]
      %v1370 = vld [vmem:[#allocation2 + $0xf3] sm:$0xff]
      %v1371 = vld [vmem:[#allocation2 + $0xfb] sm:$0xff]
      %v1372 = vld [vmem:[#allocation2 + $0x103] sm:$0xff]
      %v1373 = vld [vmem:[#allocation2 + $0x10b] sm:$0xff]
      %v1374 = vld [vmem:[#allocation2 + $0x113] sm:$0xff]
      %v1375 = vld [vmem:[#allocation2 + $0x11b] sm:$0xff]
      %v1376 = vld [vmem:[#allocation2 + $0x123] sm:$0xff]
      %v1377 = vld [vmem:[#allocation2 + $0x12b] sm:$0xff]
      %1378 = vst [vmem:[#allocation3 + $0x20] sm:$0xff] %v1342
      %1379 = vst [vmem:[#allocation3 + $0x68] sm:$0xff] %v1343
      %1380 = vst [vmem:[#allocation3 + $0xb0] sm:$0xff] %v1344
      %1381 = vst [vmem:[#allocation3 + $0xf8] sm:$0xff] %v1345
      %1382 = vst [vmem:[#allocation3 + $0x140] sm:$0xff] %v1346
      %1383 = vst [vmem:[#allocation3 + $0x188] sm:$0xff] %v1347
      %1384 = vst [vmem:[#allocation3 + $0x1d0] sm:$0xff] %v1348
      %1385 = vst [vmem:[#allocation3 + $0x218] sm:$0xff] %v1349
      %1386 = vst [vmem:[#allocation3 + $0x260] sm:$0xff] %v1350
      %1387 = vst [vmem:[#allocation3 + $0x2a8] sm:$0xff] %v1351
      %1388 = vst [vmem:[#allocation3 + $0x2f0] sm:$0xff] %v1352
      %1389 = vst [vmem:[#allocation3 + $0x338] sm:$0xff] %v1353
      %1390 = vst [vmem:[#allocation3 + $0x380] sm:$0xff] %v1354
      %1391 = vst [vmem:[#allocation3 + $0x3c8] sm:$0xff] %v1355
      %1392 = vst [vmem:[#allocation3 + $0x410] sm:$0xff] %v1356
      %1393 = vst [vmem:[#allocation3 + $0x458] sm:$0xff] %v1357
      %1394 = vst [vmem:[#allocation3 + $0x4a0] sm:$0xff] %v1358
      %1395 = vst [vmem:[#allocation3 + $0x4e8] sm:$0xff] %v1359
      %1396 = vst [vmem:[#allocation3 + $0x530] sm:$0xff] %v1360
      %1397 = vst [vmem:[#allocation3 + $0x578] sm:$0xff] %v1361
      %1398 = vst [vmem:[#allocation3 + $0x5c0] sm:$0xff] %v1362
      %1399 = vst [vmem:[#allocation3 + $0x608] sm:$0xff] %v1363
      %1400 = vst [vmem:[#allocation3 + $0x650] sm:$0xff] %v1364
      %1401 = vst [vmem:[#allocation3 + $0x698] sm:$0xff] %v1365
      %1402 = vst [vmem:[#allocation3 + $0x6e0] sm:$0xff] %v1366
      %1403 = vst [vmem:[#allocation3 + $0x728] sm:$0xff] %v1367
      %1404 = vst [vmem:[#allocation3 + $0x770] sm:$0xff] %v1368
      %1405 = vst [vmem:[#allocation3 + $0x7b8] sm:$0xff] %v1369
      %1406 = vst [vmem:[#allocation3 + $0x800] sm:$0xff] %v1370
      %1407 = vst [vmem:[#allocation3 + $0x848] sm:$0xff] %v1371
      %1408 = vst [vmem:[#allocation3 + $0x890] sm:$0xff] %v1372
      %1409 = vst [vmem:[#allocation3 + $0x8d8] sm:$0xff] %v1373
      %1410 = vst [vmem:[#allocation3 + $0x920] sm:$0xff] %v1374
      %1411 = vst [vmem:[#allocation3 + $0x968] sm:$0xff] %v1375
      %1412 = vst [vmem:[#allocation3 + $0x9b0] sm:$0xff] %v1376
      %1413 = vst [vmem:[#allocation3 + $0x9f8] sm:$0xff] %v1377
      %v1414 = vld [vmem:[#allocation2 + $0x14] sm:$0xff]
      %v1415 = vld [vmem:[#allocation2 + $0x1c] sm:$0xff]
      %v1416 = vld [vmem:[#allocation2 + $0x24] sm:$0xff]
      %v1417 = vld [vmem:[#allocation2 + $0x2c] sm:$0xff]
      %v1418 = vld [vmem:[#allocation2 + $0x34] sm:$0xff]
      %v1419 = vld [vmem:[#allocation2 + $0x3c] sm:$0xff]
      %v1420 = vld [vmem:[#allocation2 + $0x44] sm:$0xff]
      %v1421 = vld [vmem:[#allocation2 + $0x4c] sm:$0xff]
      %v1422 = vld [vmem:[#allocation2 + $0x54] sm:$0xff]
      %v1423 = vld [vmem:[#allocation2 + $0x5c] sm:$0xff]
      %v1424 = vld [vmem:[#allocation2 + $0x64] sm:$0xff]
      %v1425 = vld [vmem:[#allocation2 + $0x6c] sm:$0xff]
      %v1426 = vld [vmem:[#allocation2 + $0x74] sm:$0xff]
      %v1427 = vld [vmem:[#allocation2 + $0x7c] sm:$0xff]
      %v1428 = vld [vmem:[#allocation2 + $0x84] sm:$0xff]
      %v1429 = vld [vmem:[#allocation2 + $0x8c] sm:$0xff]
      %v1430 = vld [vmem:[#allocation2 + $0x94] sm:$0xff]
      %v1431 = vld [vmem:[#allocation2 + $0x9c] sm:$0xff]
      %v1432 = vld [vmem:[#allocation2 + $0xa4] sm:$0xff]
      %v1433 = vld [vmem:[#allocation2 + $0xac] sm:$0xff]
      %v1434 = vld [vmem:[#allocation2 + $0xb4] sm:$0xff]
      %v1435 = vld [vmem:[#allocation2 + $0xbc] sm:$0xff]
      %v1436 = vld [vmem:[#allocation2 + $0xc4] sm:$0xff]
      %v1437 = vld [vmem:[#allocation2 + $0xcc] sm:$0xff]
      %v1438 = vld [vmem:[#allocation2 + $0xd4] sm:$0xff]
      %v1439 = vld [vmem:[#allocation2 + $0xdc] sm:$0xff]
      %v1440 = vld [vmem:[#allocation2 + $0xe4] sm:$0xff]
      %v1441 = vld [vmem:[#allocation2 + $0xec] sm:$0xff]
      %v1442 = vld [vmem:[#allocation2 + $0xf4] sm:$0xff]
      %v1443 = vld [vmem:[#allocation2 + $0xfc] sm:$0xff]
      %v1444 = vld [vmem:[#allocation2 + $0x104] sm:$0xff]
      %v1445 = vld [vmem:[#allocation2 + $0x10c] sm:$0xff]
      %v1446 = vld [vmem:[#allocation2 + $0x114] sm:$0xff]
      %v1447 = vld [vmem:[#allocation2 + $0x11c] sm:$0xff]
      %v1448 = vld [vmem:[#allocation2 + $0x124] sm:$0xff]
      %v1449 = vld [vmem:[#allocation2 + $0x12c] sm:$0xff]
      %1450 = vst [vmem:[#allocation3 + $0x28] sm:$0xff] %v1414
      %1451 = vst [vmem:[#allocation3 + $0x70] sm:$0xff] %v1415
      %1452 = vst [vmem:[#allocation3 + $0xb8] sm:$0xff] %v1416
      %1453 = vst [vmem:[#allocation3 + $0x100] sm:$0xff] %v1417
      %1454 = vst [vmem:[#allocation3 + $0x148] sm:$0xff] %v1418
      %1455 = vst [vmem:[#allocation3 + $0x190] sm:$0xff] %v1419
      %1456 = vst [vmem:[#allocation3 + $0x1d8] sm:$0xff] %v1420
      %1457 = vst [vmem:[#allocation3 + $0x220] sm:$0xff] %v1421
      %1458 = vst [vmem:[#allocation3 + $0x268] sm:$0xff] %v1422
      %1459 = vst [vmem:[#allocation3 + $0x2b0] sm:$0xff] %v1423
      %1460 = vst [vmem:[#allocation3 + $0x2f8] sm:$0xff] %v1424
      %1461 = vst [vmem:[#allocation3 + $0x340] sm:$0xff] %v1425
      %1462 = vst [vmem:[#allocation3 + $0x388] sm:$0xff] %v1426
      %1463 = vst [vmem:[#allocation3 + $0x3d0] sm:$0xff] %v1427
      %1464 = vst [vmem:[#allocation3 + $0x418] sm:$0xff] %v1428
      %1465 = vst [vmem:[#allocation3 + $0x460] sm:$0xff] %v1429
      %1466 = vst [vmem:[#allocation3 + $0x4a8] sm:$0xff] %v1430
      %1467 = vst [vmem:[#allocation3 + $0x4f0] sm:$0xff] %v1431
      %1468 = vst [vmem:[#allocation3 + $0x538] sm:$0xff] %v1432
      %1469 = vst [vmem:[#allocation3 + $0x580] sm:$0xff] %v1433
      %1470 = vst [vmem:[#allocation3 + $0x5c8] sm:$0xff] %v1434
      %1471 = vst [vmem:[#allocation3 + $0x610] sm:$0xff] %v1435
      %1472 = vst [vmem:[#allocation3 + $0x658] sm:$0xff] %v1436
      %1473 = vst [vmem:[#allocation3 + $0x6a0] sm:$0xff] %v1437
      %1474 = vst [vmem:[#allocation3 + $0x6e8] sm:$0xff] %v1438
      %1475 = vst [vmem:[#allocation3 + $0x730] sm:$0xff] %v1439
      %1476 = vst [vmem:[#allocation3 + $0x778] sm:$0xff] %v1440
      %1477 = vst [vmem:[#allocation3 + $0x7c0] sm:$0xff] %v1441
      %1478 = vst [vmem:[#allocation3 + $0x808] sm:$0xff] %v1442
      %1479 = vst [vmem:[#allocation3 + $0x850] sm:$0xff] %v1443
      %1480 = vst [vmem:[#allocation3 + $0x898] sm:$0xff] %v1444
      %1481 = vst [vmem:[#allocation3 + $0x8e0] sm:$0xff] %v1445
      %1482 = vst [vmem:[#allocation3 + $0x928] sm:$0xff] %v1446
      %1483 = vst [vmem:[#allocation3 + $0x970] sm:$0xff] %v1447
      %1484 = vst [vmem:[#allocation3 + $0x9b8] sm:$0xff] %v1448
      %1485 = vst [vmem:[#allocation3 + $0xa00] sm:$0xff] %v1449
      %v1486 = vld [vmem:[#allocation2 + $0x24] sm:$0xff]
      %v1487 = vld [vmem:[#allocation2 + $0x2c] sm:$0xff]
      %v1488 = vld [vmem:[#allocation2 + $0x34] sm:$0xff]
      %v1489 = vld [vmem:[#allocation2 + $0x3c] sm:$0xff]
      %v1490 = vld [vmem:[#allocation2 + $0x44] sm:$0xff]
      %v1491 = vld [vmem:[#allocation2 + $0x4c] sm:$0xff]
      %v1492 = vld [vmem:[#allocation2 + $0x54] sm:$0xff]
      %v1493 = vld [vmem:[#allocation2 + $0x5c] sm:$0xff]
      %v1494 = vld [vmem:[#allocation2 + $0x64] sm:$0xff]
      %v1495 = vld [vmem:[#allocation2 + $0x6c] sm:$0xff]
      %v1496 = vld [vmem:[#allocation2 + $0x74] sm:$0xff]
      %v1497 = vld [vmem:[#allocation2 + $0x7c] sm:$0xff]
      %v1498 = vld [vmem:[#allocation2 + $0x84] sm:$0xff]
      %v1499 = vld [vmem:[#allocation2 + $0x8c] sm:$0xff]
      %v1500 = vld [vmem:[#allocation2 + $0x94] sm:$0xff]
      %v1501 = vld [vmem:[#allocation2 + $0x9c] sm:$0xff]
      %v1502 = vld [vmem:[#allocation2 + $0xa4] sm:$0xff]
      %v1503 = vld [vmem:[#allocation2 + $0xac] sm:$0xff]
      %v1504 = vld [vmem:[#allocation2 + $0xb4] sm:$0xff]
      %v1505 = vld [vmem:[#allocation2 + $0xbc] sm:$0xff]
      %v1506 = vld [vmem:[#allocation2 + $0xc4] sm:$0xff]
      %v1507 = vld [vmem:[#allocation2 + $0xcc] sm:$0xff]
      %v1508 = vld [vmem:[#allocation2 + $0xd4] sm:$0xff]
      %v1509 = vld [vmem:[#allocation2 + $0xdc] sm:$0xff]
      %v1510 = vld [vmem:[#allocation2 + $0xe4] sm:$0xff]
      %v1511 = vld [vmem:[#allocation2 + $0xec] sm:$0xff]
      %v1512 = vld [vmem:[#allocation2 + $0xf4] sm:$0xff]
      %v1513 = vld [vmem:[#allocation2 + $0xfc] sm:$0xff]
      %v1514 = vld [vmem:[#allocation2 + $0x104] sm:$0xff]
      %v1515 = vld [vmem:[#allocation2 + $0x10c] sm:$0xff]
      %v1516 = vld [vmem:[#allocation2 + $0x114] sm:$0xff]
      %v1517 = vld [vmem:[#allocation2 + $0x11c] sm:$0xff]
      %v1518 = vld [vmem:[#allocation2 + $0x124] sm:$0xff]
      %v1519 = vld [vmem:[#allocation2 + $0x12c] sm:$0xff]
      %v1520 = vld [vmem:[#allocation2 + $0x134] sm:$0xff]
      %v1521 = vld [vmem:[#allocation2 + $0x13c] sm:$0xff]
      %1522 = vst [vmem:[#allocation3 + $0x30] sm:$0xff] %v1486
      %1523 = vst [vmem:[#allocation3 + $0x78] sm:$0xff] %v1487
      %1524 = vst [vmem:[#allocation3 + $0xc0] sm:$0xff] %v1488
      %1525 = vst [vmem:[#allocation3 + $0x108] sm:$0xff] %v1489
      %1526 = vst [vmem:[#allocation3 + $0x150] sm:$0xff] %v1490
      %1527 = vst [vmem:[#allocation3 + $0x198] sm:$0xff] %v1491
      %1528 = vst [vmem:[#allocation3 + $0x1e0] sm:$0xff] %v1492
      %1529 = vst [vmem:[#allocation3 + $0x228] sm:$0xff] %v1493
      %1530 = vst [vmem:[#allocation3 + $0x270] sm:$0xff] %v1494
      %1531 = vst [vmem:[#allocation3 + $0x2b8] sm:$0xff] %v1495
      %1532 = vst [vmem:[#allocation3 + $0x300] sm:$0xff] %v1496
      %1533 = vst [vmem:[#allocation3 + $0x348] sm:$0xff] %v1497
      %1534 = vst [vmem:[#allocation3 + $0x390] sm:$0xff] %v1498
      %1535 = vst [vmem:[#allocation3 + $0x3d8] sm:$0xff] %v1499
      %1536 = vst [vmem:[#allocation3 + $0x420] sm:$0xff] %v1500
      %1537 = vst [vmem:[#allocation3 + $0x468] sm:$0xff] %v1501
      %1538 = vst [vmem:[#allocation3 + $0x4b0] sm:$0xff] %v1502
      %1539 = vst [vmem:[#allocation3 + $0x4f8] sm:$0xff] %v1503
      %1540 = vst [vmem:[#allocation3 + $0x540] sm:$0xff] %v1504
      %1541 = vst [vmem:[#allocation3 + $0x588] sm:$0xff] %v1505
      %1542 = vst [vmem:[#allocation3 + $0x5d0] sm:$0xff] %v1506
      %1543 = vst [vmem:[#allocation3 + $0x618] sm:$0xff] %v1507
      %1544 = vst [vmem:[#allocation3 + $0x660] sm:$0xff] %v1508
      %1545 = vst [vmem:[#allocation3 + $0x6a8] sm:$0xff] %v1509
      %1546 = vst [vmem:[#allocation3 + $0x6f0] sm:$0xff] %v1510
      %1547 = vst [vmem:[#allocation3 + $0x738] sm:$0xff] %v1511
      %1548 = vst [vmem:[#allocation3 + $0x780] sm:$0xff] %v1512
      %1549 = vst [vmem:[#allocation3 + $0x7c8] sm:$0xff] %v1513
      %1550 = vst [vmem:[#allocation3 + $0x810] sm:$0xff] %v1514
      %1551 = vst [vmem:[#allocation3 + $0x858] sm:$0xff] %v1515
      %1552 = vst [vmem:[#allocation3 + $0x8a0] sm:$0xff] %v1516
      %1553 = vst [vmem:[#allocation3 + $0x8e8] sm:$0xff] %v1517
      %1554 = vst [vmem:[#allocation3 + $0x930] sm:$0xff] %v1518
      %1555 = vst [vmem:[#allocation3 + $0x978] sm:$0xff] %v1519
      %1556 = vst [vmem:[#allocation3 + $0x9c0] sm:$0xff] %v1520
      %1557 = vst [vmem:[#allocation3 + $0xa08] sm:$0xff] %v1521
      %v1558 = vld [vmem:[#allocation2 + $0x25] sm:$0xff]
      %v1559 = vld [vmem:[#allocation2 + $0x2d] sm:$0xff]
      %v1560 = vld [vmem:[#allocation2 + $0x35] sm:$0xff]
      %v1561 = vld [vmem:[#allocation2 + $0x3d] sm:$0xff]
      %v1562 = vld [vmem:[#allocation2 + $0x45] sm:$0xff]
      %v1563 = vld [vmem:[#allocation2 + $0x4d] sm:$0xff]
      %v1564 = vld [vmem:[#allocation2 + $0x55] sm:$0xff]
      %v1565 = vld [vmem:[#allocation2 + $0x5d] sm:$0xff]
      %v1566 = vld [vmem:[#allocation2 + $0x65] sm:$0xff]
      %v1567 = vld [vmem:[#allocation2 + $0x6d] sm:$0xff]
      %v1568 = vld [vmem:[#allocation2 + $0x75] sm:$0xff]
      %v1569 = vld [vmem:[#allocation2 + $0x7d] sm:$0xff]
      %v1570 = vld [vmem:[#allocation2 + $0x85] sm:$0xff]
      %v1571 = vld [vmem:[#allocation2 + $0x8d] sm:$0xff]
      %v1572 = vld [vmem:[#allocation2 + $0x95] sm:$0xff]
      %v1573 = vld [vmem:[#allocation2 + $0x9d] sm:$0xff]
      %v1574 = vld [vmem:[#allocation2 + $0xa5] sm:$0xff]
      %v1575 = vld [vmem:[#allocation2 + $0xad] sm:$0xff]
      %v1576 = vld [vmem:[#allocation2 + $0xb5] sm:$0xff]
      %v1577 = vld [vmem:[#allocation2 + $0xbd] sm:$0xff]
      %v1578 = vld [vmem:[#allocation2 + $0xc5] sm:$0xff]
      %v1579 = vld [vmem:[#allocation2 + $0xcd] sm:$0xff]
      %v1580 = vld [vmem:[#allocation2 + $0xd5] sm:$0xff]
      %v1581 = vld [vmem:[#allocation2 + $0xdd] sm:$0xff]
      %v1582 = vld [vmem:[#allocation2 + $0xe5] sm:$0xff]
      %v1583 = vld [vmem:[#allocation2 + $0xed] sm:$0xff]
      %v1584 = vld [vmem:[#allocation2 + $0xf5] sm:$0xff]
      %v1585 = vld [vmem:[#allocation2 + $0xfd] sm:$0xff]
      %v1586 = vld [vmem:[#allocation2 + $0x105] sm:$0xff]
      %v1587 = vld [vmem:[#allocation2 + $0x10d] sm:$0xff]
      %v1588 = vld [vmem:[#allocation2 + $0x115] sm:$0xff]
      %v1589 = vld [vmem:[#allocation2 + $0x11d] sm:$0xff]
      %v1590 = vld [vmem:[#allocation2 + $0x125] sm:$0xff]
      %v1591 = vld [vmem:[#allocation2 + $0x12d] sm:$0xff]
      %v1592 = vld [vmem:[#allocation2 + $0x135] sm:$0xff]
      %v1593 = vld [vmem:[#allocation2 + $0x13d] sm:$0xff]
      %1594 = vst [vmem:[#allocation3 + $0x38] sm:$0xff] %v1558
      %1595 = vst [vmem:[#allocation3 + $0x80] sm:$0xff] %v1559
      %1596 = vst [vmem:[#allocation3 + $0xc8] sm:$0xff] %v1560
      %1597 = vst [vmem:[#allocation3 + $0x110] sm:$0xff] %v1561
      %1598 = vst [vmem:[#allocation3 + $0x158] sm:$0xff] %v1562
      %1599 = vst [vmem:[#allocation3 + $0x1a0] sm:$0xff] %v1563
      %1600 = vst [vmem:[#allocation3 + $0x1e8] sm:$0xff] %v1564
      %1601 = vst [vmem:[#allocation3 + $0x230] sm:$0xff] %v1565
      %1602 = vst [vmem:[#allocation3 + $0x278] sm:$0xff] %v1566
      %1603 = vst [vmem:[#allocation3 + $0x2c0] sm:$0xff] %v1567
      %1604 = vst [vmem:[#allocation3 + $0x308] sm:$0xff] %v1568
      %1605 = vst [vmem:[#allocation3 + $0x350] sm:$0xff] %v1569
      %1606 = vst [vmem:[#allocation3 + $0x398] sm:$0xff] %v1570
      %1607 = vst [vmem:[#allocation3 + $0x3e0] sm:$0xff] %v1571
      %1608 = vst [vmem:[#allocation3 + $0x428] sm:$0xff] %v1572
      %1609 = vst [vmem:[#allocation3 + $0x470] sm:$0xff] %v1573
      %1610 = vst [vmem:[#allocation3 + $0x4b8] sm:$0xff] %v1574
      %1611 = vst [vmem:[#allocation3 + $0x500] sm:$0xff] %v1575
      %1612 = vst [vmem:[#allocation3 + $0x548] sm:$0xff] %v1576
      %1613 = vst [vmem:[#allocation3 + $0x590] sm:$0xff] %v1577
      %1614 = vst [vmem:[#allocation3 + $0x5d8] sm:$0xff] %v1578
      %1615 = vst [vmem:[#allocation3 + $0x620] sm:$0xff] %v1579
      %1616 = vst [vmem:[#allocation3 + $0x668] sm:$0xff] %v1580
      %1617 = vst [vmem:[#allocation3 + $0x6b0] sm:$0xff] %v1581
      %1618 = vst [vmem:[#allocation3 + $0x6f8] sm:$0xff] %v1582
      %1619 = vst [vmem:[#allocation3 + $0x740] sm:$0xff] %v1583
      %1620 = vst [vmem:[#allocation3 + $0x788] sm:$0xff] %v1584
      %1621 = vst [vmem:[#allocation3 + $0x7d0] sm:$0xff] %v1585
      %1622 = vst [vmem:[#allocation3 + $0x818] sm:$0xff] %v1586
      %1623 = vst [vmem:[#allocation3 + $0x860] sm:$0xff] %v1587
      %1624 = vst [vmem:[#allocation3 + $0x8a8] sm:$0xff] %v1588
      %1625 = vst [vmem:[#allocation3 + $0x8f0] sm:$0xff] %v1589
      %1626 = vst [vmem:[#allocation3 + $0x938] sm:$0xff] %v1590
      %1627 = vst [vmem:[#allocation3 + $0x980] sm:$0xff] %v1591
      %1628 = vst [vmem:[#allocation3 + $0x9c8] sm:$0xff] %v1592
      %1629 = vst [vmem:[#allocation3 + $0xa10] sm:$0xff] %v1593
      %v1630 = vld [vmem:[#allocation2 + $0x26] sm:$0xff]
      %v1631 = vld [vmem:[#allocation2 + $0x2e] sm:$0xff]
      %v1632 = vld [vmem:[#allocation2 + $0x36] sm:$0xff]
      %v1633 = vld [vmem:[#allocation2 + $0x3e] sm:$0xff]
      %v1634 = vld [vmem:[#allocation2 + $0x46] sm:$0xff]
      %v1635 = vld [vmem:[#allocation2 + $0x4e] sm:$0xff]
      %v1636 = vld [vmem:[#allocation2 + $0x56] sm:$0xff]
      %v1637 = vld [vmem:[#allocation2 + $0x5e] sm:$0xff]
      %v1638 = vld [vmem:[#allocation2 + $0x66] sm:$0xff]
      %v1639 = vld [vmem:[#allocation2 + $0x6e] sm:$0xff]
      %v1640 = vld [vmem:[#allocation2 + $0x76] sm:$0xff]
      %v1641 = vld [vmem:[#allocation2 + $0x7e] sm:$0xff]
      %v1642 = vld [vmem:[#allocation2 + $0x86] sm:$0xff]
      %v1643 = vld [vmem:[#allocation2 + $0x8e] sm:$0xff]
      %v1644 = vld [vmem:[#allocation2 + $0x96] sm:$0xff]
      %v1645 = vld [vmem:[#allocation2 + $0x9e] sm:$0xff]
      %v1646 = vld [vmem:[#allocation2 + $0xa6] sm:$0xff]
      %v1647 = vld [vmem:[#allocation2 + $0xae] sm:$0xff]
      %v1648 = vld [vmem:[#allocation2 + $0xb6] sm:$0xff]
      %v1649 = vld [vmem:[#allocation2 + $0xbe] sm:$0xff]
      %v1650 = vld [vmem:[#allocation2 + $0xc6] sm:$0xff]
      %v1651 = vld [vmem:[#allocation2 + $0xce] sm:$0xff]
      %v1652 = vld [vmem:[#allocation2 + $0xd6] sm:$0xff]
      %v1653 = vld [vmem:[#allocation2 + $0xde] sm:$0xff]
      %v1654 = vld [vmem:[#allocation2 + $0xe6] sm:$0xff]
      %v1655 = vld [vmem:[#allocation2 + $0xee] sm:$0xff]
      %v1656 = vld [vmem:[#allocation2 + $0xf6] sm:$0xff]
      %v1657 = vld [vmem:[#allocation2 + $0xfe] sm:$0xff]
      %v1658 = vld [vmem:[#allocation2 + $0x106] sm:$0xff]
      %v1659 = vld [vmem:[#allocation2 + $0x10e] sm:$0xff]
      %v1660 = vld [vmem:[#allocation2 + $0x116] sm:$0xff]
      %v1661 = vld [vmem:[#allocation2 + $0x11e] sm:$0xff]
      %v1662 = vld [vmem:[#allocation2 + $0x126] sm:$0xff]
      %v1663 = vld [vmem:[#allocation2 + $0x12e] sm:$0xff]
      %v1664 = vld [vmem:[#allocation2 + $0x136] sm:$0xff]
      %v1665 = vld [vmem:[#allocation2 + $0x13e] sm:$0xff]
      %1666 = vst [vmem:[#allocation3 + $0x40] sm:$0xff] %v1630
      %1667 = vst [vmem:[#allocation3 + $0x88] sm:$0xff] %v1631
      %1668 = vst [vmem:[#allocation3 + $0xd0] sm:$0xff] %v1632
      %1669 = vst [vmem:[#allocation3 + $0x118] sm:$0xff] %v1633
      %1670 = vst [vmem:[#allocation3 + $0x160] sm:$0xff] %v1634
      %1671 = vst [vmem:[#allocation3 + $0x1a8] sm:$0xff] %v1635
      %1672 = vst [vmem:[#allocation3 + $0x1f0] sm:$0xff] %v1636
      %1673 = vst [vmem:[#allocation3 + $0x238] sm:$0xff] %v1637
      %1674 = vst [vmem:[#allocation3 + $0x280] sm:$0xff] %v1638
      %1675 = vst [vmem:[#allocation3 + $0x2c8] sm:$0xff] %v1639
      %1676 = vst [vmem:[#allocation3 + $0x310] sm:$0xff] %v1640
      %1677 = vst [vmem:[#allocation3 + $0x358] sm:$0xff] %v1641
      %1678 = vst [vmem:[#allocation3 + $0x3a0] sm:$0xff] %v1642
      %1679 = vst [vmem:[#allocation3 + $0x3e8] sm:$0xff] %v1643
      %1680 = vst [vmem:[#allocation3 + $0x430] sm:$0xff] %v1644
      %1681 = vst [vmem:[#allocation3 + $0x478] sm:$0xff] %v1645
      %1682 = vst [vmem:[#allocation3 + $0x4c0] sm:$0xff] %v1646
      %1683 = vst [vmem:[#allocation3 + $0x508] sm:$0xff] %v1647
      %1684 = vst [vmem:[#allocation3 + $0x550] sm:$0xff] %v1648
      %1685 = vst [vmem:[#allocation3 + $0x598] sm:$0xff] %v1649
      %1686 = vst [vmem:[#allocation3 + $0x5e0] sm:$0xff] %v1650
      %1687 = vst [vmem:[#allocation3 + $0x628] sm:$0xff] %v1651
      %1688 = vst [vmem:[#allocation3 + $0x670] sm:$0xff] %v1652
      %1689 = vst [vmem:[#allocation3 + $0x6b8] sm:$0xff] %v1653
      %1690 = vst [vmem:[#allocation3 + $0x700] sm:$0xff] %v1654
      %1691 = vst [vmem:[#allocation3 + $0x748] sm:$0xff] %v1655
      %1692 = vst [vmem:[#allocation3 + $0x790] sm:$0xff] %v1656
      %1693 = vst [vmem:[#allocation3 + $0x7d8] sm:$0xff] %v1657
      %1694 = vst [vmem:[#allocation3 + $0x820] sm:$0xff] %v1658
      %1695 = vst [vmem:[#allocation3 + $0x868] sm:$0xff] %v1659
      %1696 = vst [vmem:[#allocation3 + $0x8b0] sm:$0xff] %v1660
      %1697 = vst [vmem:[#allocation3 + $0x8f8] sm:$0xff] %v1661
      %1698 = vst [vmem:[#allocation3 + $0x940] sm:$0xff] %v1662
      %1699 = vst [vmem:[#allocation3 + $0x988] sm:$0xff] %v1663
      %1700 = vst [vmem:[#allocation3 + $0x9d0] sm:$0xff] %v1664
      %1701 = vst [vmem:[#allocation3 + $0xa18] sm:$0xff] %v1665
      %v1702 = vld [vmem:[#allocation3] sm:$0xff]
      %v1703 = vld [vmem:[#allocation3 + $0x8] sm:$0xff]
      %v1704 = vld [vmem:[#allocation3 + $0x10] sm:$0xff]
      %v1705 = vld [vmem:[#allocation3 + $0x18] sm:$0xff]
      %v1706 = vld [vmem:[#allocation3 + $0x20] sm:$0xff]
      %v1707 = vld [vmem:[#allocation3 + $0x28] sm:$0xff]
      %v1708 = vld [vmem:[#allocation3 + $0x30] sm:$0xff]
      %v1709 = vld [vmem:[#allocation3 + $0x38] sm:$0xff]
      %v1710 = vld [vmem:[#allocation3 + $0x40] sm:$0xff]
      %v1711 = vld [vmem:[#allocation3 + $0x48] sm:$0xff]
      %v1712 = vld [vmem:[#allocation3 + $0x50] sm:$0xff]
      %v1713 = vld [vmem:[#allocation3 + $0x58] sm:$0xff]
      %v1714 = vld [vmem:[#allocation3 + $0x60] sm:$0xff]
      %v1715 = vld [vmem:[#allocation3 + $0x68] sm:$0xff]
      %v1716 = vld [vmem:[#allocation3 + $0x70] sm:$0xff]
      %v1717 = vld [vmem:[#allocation3 + $0x78] sm:$0xff]
      %v1718 = vld [vmem:[#allocation3 + $0x80] sm:$0xff]
      %v1719 = vld [vmem:[#allocation3 + $0x88] sm:$0xff]
      %v1720 = vld [vmem:[#allocation3 + $0x90] sm:$0xff]
      %v1721 = vld [vmem:[#allocation3 + $0x98] sm:$0xff]
      %v1722 = vld [vmem:[#allocation3 + $0xa0] sm:$0xff]
      %v1723 = vld [vmem:[#allocation3 + $0xa8] sm:$0xff]
      %v1724 = vld [vmem:[#allocation3 + $0xb0] sm:$0xff]
      %v1725 = vld [vmem:[#allocation3 + $0xb8] sm:$0xff]
      %v1726 = vld [vmem:[#allocation3 + $0xc0] sm:$0xff]
      %v1727 = vld [vmem:[#allocation3 + $0xc8] sm:$0xff]
      %v1728 = vld [vmem:[#allocation3 + $0xd0] sm:$0xff]
      %v1729 = vld [vmem:[#allocation3 + $0xd8] sm:$0xff]
      %v1730 = vld [vmem:[#allocation3 + $0xe0] sm:$0xff]
      %v1731 = vld [vmem:[#allocation3 + $0xe8] sm:$0xff]
      %v1732 = vld [vmem:[#allocation3 + $0xf0] sm:$0xff]
      %v1733 = vld [vmem:[#allocation3 + $0xf8] sm:$0xff]
      %v1734 = vld [vmem:[#allocation3 + $0x100] sm:$0xff]
      %v1735 = vld [vmem:[#allocation3 + $0x108] sm:$0xff]
      %v1736 = vld [vmem:[#allocation3 + $0x110] sm:$0xff]
      %v1737 = vld [vmem:[#allocation3 + $0x118] sm:$0xff]
      %v1738 = vld [vmem:[#allocation3 + $0x120] sm:$0xff]
      %v1739 = vld [vmem:[#allocation3 + $0x128] sm:$0xff]
      %v1740 = vld [vmem:[#allocation3 + $0x130] sm:$0xff]
      %v1741 = vld [vmem:[#allocation3 + $0x138] sm:$0xff]
      %v1742 = vld [vmem:[#allocation3 + $0x140] sm:$0xff]
      %v1743 = vld [vmem:[#allocation3 + $0x148] sm:$0xff]
      %v1744 = vld [vmem:[#allocation3 + $0x150] sm:$0xff]
      %v1745 = vld [vmem:[#allocation3 + $0x158] sm:$0xff]
      %v1746 = vld [vmem:[#allocation3 + $0x160] sm:$0xff]
      %v1747 = vld [vmem:[#allocation3 + $0x168] sm:$0xff]
      %v1748 = vld [vmem:[#allocation3 + $0x170] sm:$0xff]
      %v1749 = vld [vmem:[#allocation3 + $0x178] sm:$0xff]
      %v1750 = vld [vmem:[#allocation3 + $0x180] sm:$0xff]
      %v1751 = vld [vmem:[#allocation3 + $0x188] sm:$0xff]
      %v1752 = vld [vmem:[#allocation3 + $0x190] sm:$0xff]
      %v1753 = vld [vmem:[#allocation3 + $0x198] sm:$0xff]
      %v1754 = vld [vmem:[#allocation3 + $0x1a0] sm:$0xff]
      %v1755 = vld [vmem:[#allocation3 + $0x1a8] sm:$0xff]
      %v1756 = vld [vmem:[#allocation3 + $0x1b0] sm:$0xff]
      %v1757 = vld [vmem:[#allocation3 + $0x1b8] sm:$0xff]
      %v1758 = vld [vmem:[#allocation3 + $0x1c0] sm:$0xff]
      %v1759 = vld [vmem:[#allocation3 + $0x1c8] sm:$0xff]
      %v1760 = vld [vmem:[#allocation3 + $0x1d0] sm:$0xff]
      %v1761 = vld [vmem:[#allocation3 + $0x1d8] sm:$0xff]
      %v1762 = vld [vmem:[#allocation3 + $0x1e0] sm:$0xff]
      %v1763 = vld [vmem:[#allocation3 + $0x1e8] sm:$0xff]
      %v1764 = vld [vmem:[#allocation3 + $0x1f0] sm:$0xff]
      %v1765 = vld [vmem:[#allocation3 + $0x1f8] sm:$0xff]
      %v1766 = vld [vmem:[#allocation3 + $0x200] sm:$0xff]
      %v1767 = vld [vmem:[#allocation3 + $0x208] sm:$0xff]
      %v1768 = vld [vmem:[#allocation3 + $0x210] sm:$0xff]
      %v1769 = vld [vmem:[#allocation3 + $0x218] sm:$0xff]
      %v1770 = vld [vmem:[#allocation3 + $0x220] sm:$0xff]
      %v1771 = vld [vmem:[#allocation3 + $0x228] sm:$0xff]
      %v1772 = vld [vmem:[#allocation3 + $0x230] sm:$0xff]
      %v1773 = vld [vmem:[#allocation3 + $0x238] sm:$0xff]
      %v1774 = vld [vmem:[#allocation3 + $0x240] sm:$0xff]
      %v1775 = vld [vmem:[#allocation3 + $0x248] sm:$0xff]
      %v1776 = vld [vmem:[#allocation3 + $0x250] sm:$0xff]
      %v1777 = vld [vmem:[#allocation3 + $0x258] sm:$0xff]
      %v1778 = vld [vmem:[#allocation3 + $0x260] sm:$0xff]
      %v1779 = vld [vmem:[#allocation3 + $0x268] sm:$0xff]
      %v1780 = vld [vmem:[#allocation3 + $0x270] sm:$0xff]
      %v1781 = vld [vmem:[#allocation3 + $0x278] sm:$0xff]
      %v1782 = vld [vmem:[#allocation3 + $0x280] sm:$0xff]
      %v1783 = vld [vmem:[#allocation3 + $0x288] sm:$0xff]
      %v1784 = vld [vmem:[#allocation3 + $0x290] sm:$0xff]
      %v1785 = vld [vmem:[#allocation3 + $0x298] sm:$0xff]
      %v1786 = vld [vmem:[#allocation3 + $0x2a0] sm:$0xff]
      %v1787 = vld [vmem:[#allocation3 + $0x2a8] sm:$0xff]
      %v1788 = vld [vmem:[#allocation3 + $0x2b0] sm:$0xff]
      %v1789 = vld [vmem:[#allocation3 + $0x2b8] sm:$0xff]
      %v1790 = vld [vmem:[#allocation3 + $0x2c0] sm:$0xff]
      %v1791 = vld [vmem:[#allocation3 + $0x2c8] sm:$0xff]
      %v1792 = vld [vmem:[#allocation3 + $0x2d0] sm:$0xff]
      %v1793 = vld [vmem:[#allocation3 + $0x2d8] sm:$0xff]
      %v1794 = vld [vmem:[#allocation3 + $0x2e0] sm:$0xff]
      %v1795 = vld [vmem:[#allocation3 + $0x2e8] sm:$0xff]
      %v1796 = vld [vmem:[#allocation3 + $0x2f0] sm:$0xff]
      %v1797 = vld [vmem:[#allocation3 + $0x2f8] sm:$0xff]
      %v1798 = vld [vmem:[#allocation3 + $0x300] sm:$0xff]
      %v1799 = vld [vmem:[#allocation3 + $0x308] sm:$0xff]
      %v1800 = vld [vmem:[#allocation3 + $0x310] sm:$0xff]
      %v1801 = vld [vmem:[#allocation3 + $0x318] sm:$0xff]
      %v1802 = vld [vmem:[#allocation3 + $0x320] sm:$0xff]
      %v1803 = vld [vmem:[#allocation3 + $0x328] sm:$0xff]
      %v1804 = vld [vmem:[#allocation3 + $0x330] sm:$0xff]
      %v1805 = vld [vmem:[#allocation3 + $0x338] sm:$0xff]
      %v1806 = vld [vmem:[#allocation3 + $0x340] sm:$0xff]
      %v1807 = vld [vmem:[#allocation3 + $0x348] sm:$0xff]
      %v1808 = vld [vmem:[#allocation3 + $0x350] sm:$0xff]
      %v1809 = vld [vmem:[#allocation3 + $0x358] sm:$0xff]
      %v1810 = vld [vmem:[#allocation3 + $0x360] sm:$0xff]
      %v1811 = vld [vmem:[#allocation3 + $0x368] sm:$0xff]
      %v1812 = vld [vmem:[#allocation3 + $0x370] sm:$0xff]
      %v1813 = vld [vmem:[#allocation3 + $0x378] sm:$0xff]
      %v1814 = vld [vmem:[#allocation3 + $0x380] sm:$0xff]
      %v1815 = vld [vmem:[#allocation3 + $0x388] sm:$0xff]
      %v1816 = vld [vmem:[#allocation3 + $0x390] sm:$0xff]
      %v1817 = vld [vmem:[#allocation3 + $0x398] sm:$0xff]
      %v1818 = vld [vmem:[#allocation3 + $0x3a0] sm:$0xff]
      %v1819 = vld [vmem:[#allocation3 + $0x3a8] sm:$0xff]
      %v1820 = vld [vmem:[#allocation3 + $0x3b0] sm:$0xff]
      %v1821 = vld [vmem:[#allocation3 + $0x3b8] sm:$0xff]
      %v1822 = vld [vmem:[#allocation3 + $0x3c0] sm:$0xff]
      %v1823 = vld [vmem:[#allocation3 + $0x3c8] sm:$0xff]
      %v1824 = vld [vmem:[#allocation3 + $0x3d0] sm:$0xff]
      %v1825 = vld [vmem:[#allocation3 + $0x3d8] sm:$0xff]
      %v1826 = vld [vmem:[#allocation3 + $0x3e0] sm:$0xff]
      %v1827 = vld [vmem:[#allocation3 + $0x3e8] sm:$0xff]
      %v1828 = vld [vmem:[#allocation3 + $0x3f0] sm:$0xff]
      %v1829 = vld [vmem:[#allocation3 + $0x3f8] sm:$0xff]
      %v1830 = vld [vmem:[#allocation3 + $0x400] sm:$0xff]
      %v1831 = vld [vmem:[#allocation3 + $0x408] sm:$0xff]
      %v1832 = vld [vmem:[#allocation3 + $0x410] sm:$0xff]
      %v1833 = vld [vmem:[#allocation3 + $0x418] sm:$0xff]
      %v1834 = vld [vmem:[#allocation3 + $0x420] sm:$0xff]
      %v1835 = vld [vmem:[#allocation3 + $0x428] sm:$0xff]
      %v1836 = vld [vmem:[#allocation3 + $0x430] sm:$0xff]
      %v1837 = vld [vmem:[#allocation3 + $0x438] sm:$0xff]
      %v1838 = vld [vmem:[#allocation3 + $0x440] sm:$0xff]
      %v1839 = vld [vmem:[#allocation3 + $0x448] sm:$0xff]
      %v1840 = vld [vmem:[#allocation3 + $0x450] sm:$0xff]
      %v1841 = vld [vmem:[#allocation3 + $0x458] sm:$0xff]
      %v1842 = vld [vmem:[#allocation3 + $0x460] sm:$0xff]
      %v1843 = vld [vmem:[#allocation3 + $0x468] sm:$0xff]
      %v1844 = vld [vmem:[#allocation3 + $0x470] sm:$0xff]
      %v1845 = vld [vmem:[#allocation3 + $0x478] sm:$0xff]
      %v1846 = vld [vmem:[#allocation3 + $0x480] sm:$0xff]
      %v1847 = vld [vmem:[#allocation3 + $0x488] sm:$0xff]
      %v1848 = vld [vmem:[#allocation3 + $0x490] sm:$0xff]
      %v1849 = vld [vmem:[#allocation3 + $0x498] sm:$0xff]
      %v1850 = vld [vmem:[#allocation3 + $0x4a0] sm:$0xff]
      %v1851 = vld [vmem:[#allocation3 + $0x4a8] sm:$0xff]
      %v1852 = vld [vmem:[#allocation3 + $0x4b0] sm:$0xff]
      %v1853 = vld [vmem:[#allocation3 + $0x4b8] sm:$0xff]
      %v1854 = vld [vmem:[#allocation3 + $0x4c0] sm:$0xff]
      %v1855 = vld [vmem:[#allocation3 + $0x4c8] sm:$0xff]
      %v1856 = vld [vmem:[#allocation3 + $0x4d0] sm:$0xff]
      %v1857 = vld [vmem:[#allocation3 + $0x4d8] sm:$0xff]
      %v1858 = vld [vmem:[#allocation3 + $0x4e0] sm:$0xff]
      %v1859 = vld [vmem:[#allocation3 + $0x4e8] sm:$0xff]
      %v1860 = vld [vmem:[#allocation3 + $0x4f0] sm:$0xff]
      %v1861 = vld [vmem:[#allocation3 + $0x4f8] sm:$0xff]
      %v1862 = vld [vmem:[#allocation3 + $0x500] sm:$0xff]
      %v1863 = vld [vmem:[#allocation3 + $0x508] sm:$0xff]
      %v1864 = vld [vmem:[#allocation3 + $0x510] sm:$0xff]
      %v1865 = vld [vmem:[#allocation3 + $0x518] sm:$0xff]
      %v1866 = vld [vmem:[#allocation3 + $0x520] sm:$0xff]
      %v1867 = vld [vmem:[#allocation3 + $0x528] sm:$0xff]
      %v1868 = vld [vmem:[#allocation3 + $0x530] sm:$0xff]
      %v1869 = vld [vmem:[#allocation3 + $0x538] sm:$0xff]
      %v1870 = vld [vmem:[#allocation3 + $0x540] sm:$0xff]
      %v1871 = vld [vmem:[#allocation3 + $0x548] sm:$0xff]
      %v1872 = vld [vmem:[#allocation3 + $0x550] sm:$0xff]
      %v1873 = vld [vmem:[#allocation3 + $0x558] sm:$0xff]
      %v1874 = vld [vmem:[#allocation3 + $0x560] sm:$0xff]
      %v1875 = vld [vmem:[#allocation3 + $0x568] sm:$0xff]
      %v1876 = vld [vmem:[#allocation3 + $0x570] sm:$0xff]
      %v1877 = vld [vmem:[#allocation3 + $0x578] sm:$0xff]
      %v1878 = vld [vmem:[#allocation3 + $0x580] sm:$0xff]
      %v1879 = vld [vmem:[#allocation3 + $0x588] sm:$0xff]
      %v1880 = vld [vmem:[#allocation3 + $0x590] sm:$0xff]
      %v1881 = vld [vmem:[#allocation3 + $0x598] sm:$0xff]
      %v1882 = vld [vmem:[#allocation3 + $0x5a0] sm:$0xff]
      %v1883 = vld [vmem:[#allocation3 + $0x5a8] sm:$0xff]
      %v1884 = vld [vmem:[#allocation3 + $0x5b0] sm:$0xff]
      %v1885 = vld [vmem:[#allocation3 + $0x5b8] sm:$0xff]
      %v1886 = vld [vmem:[#allocation3 + $0x5c0] sm:$0xff]
      %v1887 = vld [vmem:[#allocation3 + $0x5c8] sm:$0xff]
      %v1888 = vld [vmem:[#allocation3 + $0x5d0] sm:$0xff]
      %v1889 = vld [vmem:[#allocation3 + $0x5d8] sm:$0xff]
      %v1890 = vld [vmem:[#allocation3 + $0x5e0] sm:$0xff]
      %v1891 = vld [vmem:[#allocation3 + $0x5e8] sm:$0xff]
      %v1892 = vld [vmem:[#allocation3 + $0x5f0] sm:$0xff]
      %v1893 = vld [vmem:[#allocation3 + $0x5f8] sm:$0xff]
      %v1894 = vld [vmem:[#allocation3 + $0x600] sm:$0xff]
      %v1895 = vld [vmem:[#allocation3 + $0x608] sm:$0xff]
      %v1896 = vld [vmem:[#allocation3 + $0x610] sm:$0xff]
      %v1897 = vld [vmem:[#allocation3 + $0x618] sm:$0xff]
      %v1898 = vld [vmem:[#allocation3 + $0x620] sm:$0xff]
      %v1899 = vld [vmem:[#allocation3 + $0x628] sm:$0xff]
      %v1900 = vld [vmem:[#allocation3 + $0x630] sm:$0xff]
      %v1901 = vld [vmem:[#allocation3 + $0x638] sm:$0xff]
      %v1902 = vld [vmem:[#allocation3 + $0x640] sm:$0xff]
      %v1903 = vld [vmem:[#allocation3 + $0x648] sm:$0xff]
      %v1904 = vld [vmem:[#allocation3 + $0x650] sm:$0xff]
      %v1905 = vld [vmem:[#allocation3 + $0x658] sm:$0xff]
      %v1906 = vld [vmem:[#allocation3 + $0x660] sm:$0xff]
      %v1907 = vld [vmem:[#allocation3 + $0x668] sm:$0xff]
      %v1908 = vld [vmem:[#allocation3 + $0x670] sm:$0xff]
      %v1909 = vld [vmem:[#allocation3 + $0x678] sm:$0xff]
      %v1910 = vld [vmem:[#allocation3 + $0x680] sm:$0xff]
      %v1911 = vld [vmem:[#allocation3 + $0x688] sm:$0xff]
      %v1912 = vld [vmem:[#allocation3 + $0x690] sm:$0xff]
      %v1913 = vld [vmem:[#allocation3 + $0x698] sm:$0xff]
      %v1914 = vld [vmem:[#allocation3 + $0x6a0] sm:$0xff]
      %v1915 = vld [vmem:[#allocation3 + $0x6a8] sm:$0xff]
      %v1916 = vld [vmem:[#allocation3 + $0x6b0] sm:$0xff]
      %v1917 = vld [vmem:[#allocation3 + $0x6b8] sm:$0xff]
      %v1918 = vld [vmem:[#allocation3 + $0x6c0] sm:$0xff]
      %v1919 = vld [vmem:[#allocation3 + $0x6c8] sm:$0xff]
      %v1920 = vld [vmem:[#allocation3 + $0x6d0] sm:$0xff]
      %v1921 = vld [vmem:[#allocation3 + $0x6d8] sm:$0xff]
      %v1922 = vld [vmem:[#allocation3 + $0x6e0] sm:$0xff]
      %v1923 = vld [vmem:[#allocation3 + $0x6e8] sm:$0xff]
      %v1924 = vld [vmem:[#allocation3 + $0x6f0] sm:$0xff]
      %v1925 = vld [vmem:[#allocation3 + $0x6f8] sm:$0xff]
      %v1926 = vld [vmem:[#allocation3 + $0x700] sm:$0xff]
      %v1927 = vld [vmem:[#allocation3 + $0x708] sm:$0xff]
      %v1928 = vld [vmem:[#allocation3 + $0x710] sm:$0xff]
      %v1929 = vld [vmem:[#allocation3 + $0x718] sm:$0xff]
      %v1930 = vld [vmem:[#allocation3 + $0x720] sm:$0xff]
      %v1931 = vld [vmem:[#allocation3 + $0x728] sm:$0xff]
      %v1932 = vld [vmem:[#allocation3 + $0x730] sm:$0xff]
      %v1933 = vld [vmem:[#allocation3 + $0x738] sm:$0xff]
      %v1934 = vld [vmem:[#allocation3 + $0x740] sm:$0xff]
      %v1935 = vld [vmem:[#allocation3 + $0x748] sm:$0xff]
      %v1936 = vld [vmem:[#allocation3 + $0x750] sm:$0xff]
      %v1937 = vld [vmem:[#allocation3 + $0x758] sm:$0xff]
      %v1938 = vld [vmem:[#allocation3 + $0x760] sm:$0xff]
      %v1939 = vld [vmem:[#allocation3 + $0x768] sm:$0xff]
      %v1940 = vld [vmem:[#allocation3 + $0x770] sm:$0xff]
      %v1941 = vld [vmem:[#allocation3 + $0x778] sm:$0xff]
      %v1942 = vld [vmem:[#allocation3 + $0x780] sm:$0xff]
      %v1943 = vld [vmem:[#allocation3 + $0x788] sm:$0xff]
      %v1944 = vld [vmem:[#allocation3 + $0x790] sm:$0xff]
      %v1945 = vld [vmem:[#allocation3 + $0x798] sm:$0xff]
      %v1946 = vld [vmem:[#allocation3 + $0x7a0] sm:$0xff]
      %v1947 = vld [vmem:[#allocation3 + $0x7a8] sm:$0xff]
      %v1948 = vld [vmem:[#allocation3 + $0x7b0] sm:$0xff]
      %v1949 = vld [vmem:[#allocation3 + $0x7b8] sm:$0xff]
      %v1950 = vld [vmem:[#allocation3 + $0x7c0] sm:$0xff]
      %v1951 = vld [vmem:[#allocation3 + $0x7c8] sm:$0xff]
      %v1952 = vld [vmem:[#allocation3 + $0x7d0] sm:$0xff]
      %v1953 = vld [vmem:[#allocation3 + $0x7d8] sm:$0xff]
      %v1954 = vld [vmem:[#allocation3 + $0x7e0] sm:$0xff]
      %v1955 = vld [vmem:[#allocation3 + $0x7e8] sm:$0xff]
      %v1956 = vld [vmem:[#allocation3 + $0x7f0] sm:$0xff]
      %v1957 = vld [vmem:[#allocation3 + $0x7f8] sm:$0xff]
      %v1958 = vld [vmem:[#allocation3 + $0x800] sm:$0xff]
      %v1959 = vld [vmem:[#allocation3 + $0x808] sm:$0xff]
      %v1960 = vld [vmem:[#allocation3 + $0x810] sm:$0xff]
      %v1961 = vld [vmem:[#allocation3 + $0x818] sm:$0xff]
      %v1962 = vld [vmem:[#allocation3 + $0x820] sm:$0xff]
      %v1963 = vld [vmem:[#allocation3 + $0x828] sm:$0xff]
      %v1964 = vld [vmem:[#allocation3 + $0x830] sm:$0xff]
      %v1965 = vld [vmem:[#allocation3 + $0x838] sm:$0xff]
      %v1966 = vld [vmem:[#allocation3 + $0x840] sm:$0xff]
      %v1967 = vld [vmem:[#allocation3 + $0x848] sm:$0xff]
      %v1968 = vld [vmem:[#allocation3 + $0x850] sm:$0xff]
      %v1969 = vld [vmem:[#allocation3 + $0x858] sm:$0xff]
      %v1970 = vld [vmem:[#allocation3 + $0x860] sm:$0xff]
      %v1971 = vld [vmem:[#allocation3 + $0x868] sm:$0xff]
      %v1972 = vld [vmem:[#allocation3 + $0x870] sm:$0xff]
      %v1973 = vld [vmem:[#allocation3 + $0x878] sm:$0xff]
      %v1974 = vld [vmem:[#allocation3 + $0x880] sm:$0xff]
      %v1975 = vld [vmem:[#allocation3 + $0x888] sm:$0xff]
      %v1976 = vld [vmem:[#allocation3 + $0x890] sm:$0xff]
      %v1977 = vld [vmem:[#allocation3 + $0x898] sm:$0xff]
      %v1978 = vld [vmem:[#allocation3 + $0x8a0] sm:$0xff]
      %v1979 = vld [vmem:[#allocation3 + $0x8a8] sm:$0xff]
      %v1980 = vld [vmem:[#allocation3 + $0x8b0] sm:$0xff]
      %v1981 = vld [vmem:[#allocation3 + $0x8b8] sm:$0xff]
      %v1982 = vld [vmem:[#allocation3 + $0x8c0] sm:$0xff]
      %v1983 = vld [vmem:[#allocation3 + $0x8c8] sm:$0xff]
      %v1984 = vld [vmem:[#allocation3 + $0x8d0] sm:$0xff]
      %v1985 = vld [vmem:[#allocation3 + $0x8d8] sm:$0xff]
      %v1986 = vld [vmem:[#allocation3 + $0x8e0] sm:$0xff]
      %v1987 = vld [vmem:[#allocation3 + $0x8e8] sm:$0xff]
      %v1988 = vld [vmem:[#allocation3 + $0x8f0] sm:$0xff]
      %v1989 = vld [vmem:[#allocation3 + $0x8f8] sm:$0xff]
      %v1990 = vld [vmem:[#allocation3 + $0x900] sm:$0xff]
      %v1991 = vld [vmem:[#allocation3 + $0x908] sm:$0xff]
      %v1992 = vld [vmem:[#allocation3 + $0x910] sm:$0xff]
      %v1993 = vld [vmem:[#allocation3 + $0x918] sm:$0xff]
      %v1994 = vld [vmem:[#allocation3 + $0x920] sm:$0xff]
      %v1995 = vld [vmem:[#allocation3 + $0x928] sm:$0xff]
      %v1996 = vld [vmem:[#allocation3 + $0x930] sm:$0xff]
      %v1997 = vld [vmem:[#allocation3 + $0x938] sm:$0xff]
      %v1998 = vld [vmem:[#allocation3 + $0x940] sm:$0xff]
      %v1999 = vld [vmem:[#allocation3 + $0x948] sm:$0xff]
      %v2000 = vld [vmem:[#allocation3 + $0x950] sm:$0xff]
      %v2001 = vld [vmem:[#allocation3 + $0x958] sm:$0xff]
      %v2002 = vld [vmem:[#allocation3 + $0x960] sm:$0xff]
      %v2003 = vld [vmem:[#allocation3 + $0x968] sm:$0xff]
      %v2004 = vld [vmem:[#allocation3 + $0x970] sm:$0xff]
      %v2005 = vld [vmem:[#allocation3 + $0x978] sm:$0xff]
      %v2006 = vld [vmem:[#allocation3 + $0x980] sm:$0xff]
      %v2007 = vld [vmem:[#allocation3 + $0x988] sm:$0xff]
      %v2008 = vld [vmem:[#allocation3 + $0x990] sm:$0xff]
      %v2009 = vld [vmem:[#allocation3 + $0x998] sm:$0xff]
      %v2010 = vld [vmem:[#allocation3 + $0x9a0] sm:$0xff]
      %v2011 = vld [vmem:[#allocation3 + $0x9a8] sm:$0xff]
      %v2012 = vld [vmem:[#allocation3 + $0x9b0] sm:$0xff]
      %v2013 = vld [vmem:[#allocation3 + $0x9b8] sm:$0xff]
      %v2014 = vld [vmem:[#allocation3 + $0x9c0] sm:$0xff]
      %v2015 = vld [vmem:[#allocation3 + $0x9c8] sm:$0xff]
      %v2016 = vld [vmem:[#allocation3 + $0x9d0] sm:$0xff]
      %v2017 = vld [vmem:[#allocation3 + $0x9d8] sm:$0xff]
      %v2018 = vld [vmem:[#allocation3 + $0x9e0] sm:$0xff]
      %v2019 = vld [vmem:[#allocation3 + $0x9e8] sm:$0xff]
      %v2020 = vld [vmem:[#allocation3 + $0x9f0] sm:$0xff]
      %v2021 = vld [vmem:[#allocation3 + $0x9f8] sm:$0xff]
      %v2022 = vld [vmem:[#allocation3 + $0xa00] sm:$0xff]
      %v2023 = vld [vmem:[#allocation3 + $0xa08] sm:$0xff]
      %v2024 = vld [vmem:[#allocation3 + $0xa10] sm:$0xff]
      %v2025 = vld [vmem:[#allocation3 + $0xa18] sm:$0xff]
      %v2026 = vld [vmem:[%s1] sm:$0xff]
      %v2027 = vld [vmem:[%s1 + $0x8] sm:$0xff]
      %v2028 = vld [vmem:[%s1 + $0x10] sm:$0xff]
      %v2029 = vld [vmem:[%s1 + $0x18] sm:$0xff]
      %v2030 = vld [vmem:[%s1 + $0x20] sm:$0xff]
      %v2031 = vld [vmem:[%s1 + $0x28] sm:$0xff]
      %v2032 = vld [vmem:[%s1 + $0x30] sm:$0xff]
      %v2033 = vld [vmem:[%s1 + $0x38] sm:$0xff]
      %v2034 = vld [vmem:[%s1 + $0x40] sm:$0xff]
      %v2035 = vld [vmem:[%s1 + $0x48] sm:$0xff]
      %v2036 = vld [vmem:[%s1 + $0x50] sm:$0xff]
      %v2037 = vld [vmem:[%s1 + $0x58] sm:$0xff]
      %v2038 = vld [vmem:[%s1 + $0x60] sm:$0xff]
      %v2039 = vld [vmem:[%s1 + $0x68] sm:$0xff]
      %v2040 = vld [vmem:[%s1 + $0x70] sm:$0xff]
      %v2041 = vld [vmem:[%s1 + $0x78] sm:$0xff]
      %v2042 = vld [vmem:[%s1 + $0x80] sm:$0xff]
      %v2043 = vld [vmem:[%s1 + $0x88] sm:$0xff]
      %v2044 = vld [vmem:[%s1 + $0x90] sm:$0xff]
      %v2045 = vld [vmem:[%s1 + $0x98] sm:$0xff]
      %v2046 = vld [vmem:[%s1 + $0xa0] sm:$0xff]
      %v2047 = vld [vmem:[%s1 + $0xa8] sm:$0xff]
      %v2048 = vld [vmem:[%s1 + $0xb0] sm:$0xff]
      %v2049 = vld [vmem:[%s1 + $0xb8] sm:$0xff]
      %v2050 = vld [vmem:[%s1 + $0xc0] sm:$0xff]
      %v2051 = vld [vmem:[%s1 + $0xc8] sm:$0xff]
      %v2052 = vld [vmem:[%s1 + $0xd0] sm:$0xff]
      %v2053 = vld [vmem:[%s1 + $0xd8] sm:$0xff]
      %v2054 = vld [vmem:[%s1 + $0xe0] sm:$0xff]
      %v2055 = vld [vmem:[%s1 + $0xe8] sm:$0xff]
      %v2056 = vld [vmem:[%s1 + $0xf0] sm:$0xff]
      %v2057 = vld [vmem:[%s1 + $0xf8] sm:$0xff]
      %v2058 = vld [vmem:[%s1 + $0x100] sm:$0xff]
      %v2059 = vld [vmem:[%s1 + $0x108] sm:$0xff]
      %v2060 = vld [vmem:[%s1 + $0x110] sm:$0xff]
      %v2061 = vld [vmem:[%s1 + $0x118] sm:$0xff]
      %v2062 = vld [vmem:[%s1 + $0x120] sm:$0xff]
      %v2063 = vld [vmem:[%s1 + $0x128] sm:$0xff]
      %v2064 = vld [vmem:[%s1 + $0x130] sm:$0xff]
      %v2065 = vld [vmem:[%s1 + $0x138] sm:$0xff]
      %v2066 = vld [vmem:[%s1 + $0x140] sm:$0xff]
      %v2067 = vld [vmem:[%s1 + $0x148] sm:$0xff]
      %v2068 = vld [vmem:[%s1 + $0x150] sm:$0xff]
      %v2069 = vld [vmem:[%s1 + $0x158] sm:$0xff]
      %v2070 = vld [vmem:[%s1 + $0x160] sm:$0xff]
      %v2071 = vld [vmem:[%s1 + $0x168] sm:$0xff]
      %v2072 = vld [vmem:[%s1 + $0x170] sm:$0xff]
      %v2073 = vld [vmem:[%s1 + $0x178] sm:$0xff]
      %v2074 = vld [vmem:[%s1 + $0x180] sm:$0xff]
      %v2075 = vld [vmem:[%s1 + $0x188] sm:$0xff]
      %v2076 = vld [vmem:[%s1 + $0x190] sm:$0xff]
      %v2077 = vld [vmem:[%s1 + $0x198] sm:$0xff]
      %v2078 = vld [vmem:[%s1 + $0x1a0] sm:$0xff]
      %v2079 = vld [vmem:[%s1 + $0x1a8] sm:$0xff]
      %v2080 = vld [vmem:[%s1 + $0x1b0] sm:$0xff]
      %v2081 = vld [vmem:[%s1 + $0x1b8] sm:$0xff]
      %v2082 = vld [vmem:[%s1 + $0x1c0] sm:$0xff]
      %v2083 = vld [vmem:[%s1 + $0x1c8] sm:$0xff]
      %v2084 = vld [vmem:[%s1 + $0x1d0] sm:$0xff]
      %v2085 = vld [vmem:[%s1 + $0x1d8] sm:$0xff]
      %v2086 = vld [vmem:[%s1 + $0x1e0] sm:$0xff]
      %v2087 = vld [vmem:[%s1 + $0x1e8] sm:$0xff]
      %v2088 = vld [vmem:[%s1 + $0x1f0] sm:$0xff]
      %v2089 = vld [vmem:[%s1 + $0x1f8] sm:$0xff]
      %v2090 = vld [vmem:[%s1 + $0x200] sm:$0xff]
      %v2091 = vld [vmem:[%s1 + $0x208] sm:$0xff]
      %v2092 = vld [vmem:[%s1 + $0x210] sm:$0xff]
      %v2093 = vld [vmem:[%s1 + $0x218] sm:$0xff]
      %v2094 = vld [vmem:[%s1 + $0x220] sm:$0xff]
      %v2095 = vld [vmem:[%s1 + $0x228] sm:$0xff]
      %v2096 = vld [vmem:[%s1 + $0x230] sm:$0xff]
      %v2097 = vld [vmem:[%s1 + $0x238] sm:$0xff]
      %v2098 = vld [vmem:[%s1 + $0x240] sm:$0xff]
      %v2099 = vld [vmem:[%s1 + $0x248] sm:$0xff]
      %v2100 = vld [vmem:[%s1 + $0x250] sm:$0xff]
      %v2101 = vld [vmem:[%s1 + $0x258] sm:$0xff]
      %v2102 = vld [vmem:[%s1 + $0x260] sm:$0xff]
      %v2103 = vld [vmem:[%s1 + $0x268] sm:$0xff]
      %v2104 = vld [vmem:[%s1 + $0x270] sm:$0xff]
      %v2105 = vld [vmem:[%s1 + $0x278] sm:$0xff]
      %v2106 = vld [vmem:[%s1 + $0x280] sm:$0xff]
      %v2107 = vld [vmem:[%s1 + $0x288] sm:$0xff]
      %v2108 = vld [vmem:[%s1 + $0x290] sm:$0xff]
      %v2109 = vld [vmem:[%s1 + $0x298] sm:$0xff]
      %v2110 = vld [vmem:[%s1 + $0x2a0] sm:$0xff]
      %v2111 = vld [vmem:[%s1 + $0x2a8] sm:$0xff]
      %v2112 = vld [vmem:[%s1 + $0x2b0] sm:$0xff]
      %v2113 = vld [vmem:[%s1 + $0x2b8] sm:$0xff]
      %v2114 = vld [vmem:[%s1 + $0x2c0] sm:$0xff]
      %v2115 = vld [vmem:[%s1 + $0x2c8] sm:$0xff]
      %v2116 = vld [vmem:[%s1 + $0x2d0] sm:$0xff]
      %v2117 = vld [vmem:[%s1 + $0x2d8] sm:$0xff]
      %v2118 = vld [vmem:[%s1 + $0x2e0] sm:$0xff]
      %v2119 = vld [vmem:[%s1 + $0x2e8] sm:$0xff]
      %v2120 = vld [vmem:[%s1 + $0x2f0] sm:$0xff]
      %v2121 = vld [vmem:[%s1 + $0x2f8] sm:$0xff]
      %v2122 = vld [vmem:[%s1 + $0x300] sm:$0xff]
      %v2123 = vld [vmem:[%s1 + $0x308] sm:$0xff]
      %v2124 = vld [vmem:[%s1 + $0x310] sm:$0xff]
      %v2125 = vld [vmem:[%s1 + $0x318] sm:$0xff]
      %v2126 = vld [vmem:[%s1 + $0x320] sm:$0xff]
      %v2127 = vld [vmem:[%s1 + $0x328] sm:$0xff]
      %v2128 = vld [vmem:[%s1 + $0x330] sm:$0xff]
      %v2129 = vld [vmem:[%s1 + $0x338] sm:$0xff]
      %v2130 = vld [vmem:[%s1 + $0x340] sm:$0xff]
      %v2131 = vld [vmem:[%s1 + $0x348] sm:$0xff]
      %v2132 = vld [vmem:[%s1 + $0x350] sm:$0xff]
      %v2133 = vld [vmem:[%s1 + $0x358] sm:$0xff]
      %v2134 = vld [vmem:[%s1 + $0x360] sm:$0xff]
      %v2135 = vld [vmem:[%s1 + $0x368] sm:$0xff]
      %v2136 = vld [vmem:[%s1 + $0x370] sm:$0xff]
      %v2137 = vld [vmem:[%s1 + $0x378] sm:$0xff]
      %v2138 = vld [vmem:[%s1 + $0x380] sm:$0xff]
      %v2139 = vld [vmem:[%s1 + $0x388] sm:$0xff]
      %v2140 = vld [vmem:[%s1 + $0x390] sm:$0xff]
      %v2141 = vld [vmem:[%s1 + $0x398] sm:$0xff]
      %v2142 = vld [vmem:[%s1 + $0x3a0] sm:$0xff]
      %v2143 = vld [vmem:[%s1 + $0x3a8] sm:$0xff]
      %v2144 = vld [vmem:[%s1 + $0x3b0] sm:$0xff]
      %v2145 = vld [vmem:[%s1 + $0x3b8] sm:$0xff]
      %v2146 = vld [vmem:[%s1 + $0x3c0] sm:$0xff]
      %v2147 = vld [vmem:[%s1 + $0x3c8] sm:$0xff]
      %v2148 = vld [vmem:[%s1 + $0x3d0] sm:$0xff]
      %v2149 = vld [vmem:[%s1 + $0x3d8] sm:$0xff]
      %v2150 = vld [vmem:[%s1 + $0x3e0] sm:$0xff]
      %v2151 = vld [vmem:[%s1 + $0x3e8] sm:$0xff]
      %v2152 = vld [vmem:[%s1 + $0x3f0] sm:$0xff]
      %v2153 = vld [vmem:[%s1 + $0x3f8] sm:$0xff]
      %v2154 = vld [vmem:[%s1 + $0x400] sm:$0xff]
      %v2155 = vld [vmem:[%s1 + $0x408] sm:$0xff]
      %v2156 = vld [vmem:[%s1 + $0x410] sm:$0xff]
      %v2157 = vld [vmem:[%s1 + $0x418] sm:$0xff]
      %v2158 = vld [vmem:[%s1 + $0x420] sm:$0xff]
      %v2159 = vld [vmem:[%s1 + $0x428] sm:$0xff]
      %v2160 = vld [vmem:[%s1 + $0x430] sm:$0xff]
      %v2161 = vld [vmem:[%s1 + $0x438] sm:$0xff]
      %v2162 = vld [vmem:[%s1 + $0x440] sm:$0xff]
      %v2163 = vld [vmem:[%s1 + $0x448] sm:$0xff]
      %v2164 = vld [vmem:[%s1 + $0x450] sm:$0xff]
      %v2165 = vld [vmem:[%s1 + $0x458] sm:$0xff]
      %v2166 = vld [vmem:[%s1 + $0x460] sm:$0xff]
      %v2167 = vld [vmem:[%s1 + $0x468] sm:$0xff]
      %v2168 = vld [vmem:[%s1 + $0x470] sm:$0xff]
      %v2169 = vld [vmem:[%s1 + $0x478] sm:$0xff]
      %v2171 = vlaneseq
      %v2172 = vshrl.u32 %v2171, 7
      %v2173 = vsub.s32 0, %v2172
      %v2174 = vrot.slane %v226, %v2173
      %2176 = vmatprep.subr.mxu0 0.0
      %2177 = vmatpush1.msra.mxu0 %v2026
      %2178 = vmatprep.subr.mxu0 0.0
      %2179 = vmatpush1.msra.mxu0 %v2027
      %2180 = vmatprep.subr.mxu0 0.0
      %2181 = vmatpush1.msra.mxu0 %v2028
      %2182 = vmatprep.subr.mxu0 0.0
      %2183 = vmatpush1.msra.mxu0 %v2029
      %2184 = vmatprep.subr.mxu0 0.0
      %2185 = vmatpush1.msra.mxu0 %v2030
      %2186 = vmatprep.subr.mxu0 0.0
      %2187 = vmatpush1.msra.mxu0 %v2031
      %2188 = vmatprep.subr.mxu0 0.0
      %2189 = vmatpush1.msra.mxu0 %v2032
      %2190 = vmatprep.subr.mxu0 0.0
      %2191 = vmatpush1.msra.mxu0 %v2033
      %2192 = vmatprep.subr.mxu0 0.0
      %2193 = vmatpush1.msra.mxu0 %v2034
      %2194 = vmatprep.subr.mxu0 0.0
      %2195 = vmatpush1.msra.mxu0 %v2035
      %2196 = vmatprep.subr.mxu0 0.0
      %2197 = vmatpush1.msra.mxu0 %v2036
      %2198 = vmatprep.subr.mxu0 0.0
      %2199 = vmatpush1.msra.mxu0 %v2037
      %2200 = vmatprep.subr.mxu0 0.0
      %2201 = vmatpush1.msra.mxu0 %v2038
      %2202 = vmatprep.subr.mxu0 0.0
      %2203 = vmatpush1.msra.mxu0 %v2039
      %2204 = vmatprep.subr.mxu0 0.0
      %2205 = vmatpush1.msra.mxu0 %v2040
      %2206 = vmatprep.subr.mxu0 0.0
      %2207 = vmatpush1.msra.mxu0 %v2041
      %2208 = vmatprep.subr.mxu0 0.0
      %2209 = vmatpush1.msra.mxu0 %v2042
      %2210 = vmatprep.subr.mxu0 0.0
      %2211 = vmatpush1.msra.mxu0 %v2043
      %2212 = vmatprep.subr.mxu0 0.0
      %2213 = vmatpush1.msra.mxu0 %v2044
      %2214 = vmatprep.subr.mxu0 0.0
      %2215 = vmatpush1.msra.mxu0 %v2045
      %2216 = vmatprep.subr.mxu0 0.0
      %2217 = vmatpush1.msra.mxu0 %v2046
      %2218 = vmatprep.subr.mxu0 0.0
      %2219 = vmatpush1.msra.mxu0 %v2047
      %2220 = vmatprep.subr.mxu0 0.0
      %2221 = vmatpush1.msra.mxu0 %v2048
      %2222 = vmatprep.subr.mxu0 0.0
      %2223 = vmatpush1.msra.mxu0 %v2049
      %2224 = vmatprep.subr.mxu0 0.0
      %2225 = vmatpush1.msra.mxu0 %v2050
      %2226 = vmatprep.subr.mxu0 0.0
      %2227 = vmatpush1.msra.mxu0 %v2051
      %2228 = vmatprep.subr.mxu0 0.0
      %2229 = vmatpush1.msra.mxu0 %v2052
      %2230 = vmatprep.subr.mxu0 0.0
      %2231 = vmatpush1.msra.mxu0 %v2053
      %2232 = vmatprep.subr.mxu0 0.0
      %2233 = vmatpush1.msra.mxu0 %v2054
      %2234 = vmatprep.subr.mxu0 0.0
      %2235 = vmatpush1.msra.mxu0 %v2055
      %2236 = vmatprep.subr.mxu0 0.0
      %2237 = vmatpush1.msra.mxu0 %v2056
      %2238 = vmatprep.subr.mxu0 0.0
      %2239 = vmatpush1.msra.mxu0 %v2057
      %2240 = vmatprep.mubr.f32.mxu0 %v1703
      %2241 = vmatmul.mubr.f32.gmra.mrb[0].mxu0 %v1702
      %v2242 = vpop.f32.mrb[0].mxu0
      %v2243 = vadd.f32 %v2174, %v2242
      %v2244 = vpop.f32.mrb[0].mxu0
      %2245 = vmatprep.mubr.f32.mxu0 %v1712
      %2246 = vmatmul.mubr.f32.gmra.mrb[0].mxu0 %v1711
      %v2247 = vpop.f32.mrb[0].mxu0
      %v2248 = vadd.f32 %v2174, %v2247
      %v2249 = vpop.f32.mrb[0].mxu0
      %2250 = vmatprep.mubr.f32.mxu0 %v1721
      %2251 = vmatmul.mubr.f32.gmra.mrb[0].mxu0 %v1720
      %v2252 = vpop.f32.mrb[0].mxu0
      %v2253 = vadd.f32 %v2174, %v2252
      %v2254 = vpop.f32.mrb[0].mxu0
      %2255 = vmatprep.mubr.f32.mxu0 %v1730
      %2256 = vmatmul.mubr.f32.gmra.mrb[0].mxu0 %v1729
      %v2257 = vpop.f32.mrb[0].mxu0
      %v2258 = vadd.f32 %v2174, %v2257
      %v2259 = vpop.f32.mrb[0].mxu0
      %2260 = vmatprep.mubr.f32.mxu0 %v1739
      %2261 = vmatmul.mubr.f32.gmra.mrb[0].mxu0 %v1738
      %v2262 = vpop.f32.mrb[0].mxu0
      %v2263 = vadd.f32 %v2174, %v2262
      %v2264 = vpop.f32.mrb[0].mxu0
      %2265 = vmatprep.mubr.f32.mxu0 %v1748
      %2266 = vmatmul.mubr.f32.gmra.mrb[0].mxu0 %v1747
      %v2267 = vpop.f32.mrb[0].mxu0
      %v2268 = vadd.f32 %v2174, %v2267
      %v2269 = vpop.f32.mrb[0].mxu0
      %2270 = vmatprep.mubr.f32.mxu0 %v1757
      %2271 = vmatmul.mubr.f32.gmra.mrb[0].mxu0 %v1756
      %v2272 = vpop.f32.mrb[0].mxu0
      %v2273 = vadd.f32 %v2174, %v2272
      %v2274 = vpop.f32.mrb[0].mxu0
      %2275 = vmatprep.mubr.f32.mxu0 %v1766
      %2276 = vmatmul.mubr.f32.gmra.mrb[0].mxu0 %v1765
      %v2277 = vpop.f32.mrb[0].mxu0
      %v2278 = vadd.f32 %v2174, %v2277
      %v2279 = vpop.f32.mrb[0].mxu0
      %2280 = vmatprep.mubr.f32.mxu0 %v1775
      %2281 = vmatmul.mubr.f32.gmra.mrb[0].mxu0 %v1774
      %v2282 = vpop.f32.mrb[0].mxu0
      %v2283 = vadd.f32 %v2174, %v2282
      %v2284 = vpop.f32.mrb[0].mxu0
      %2285 = vmatprep.mubr.f32.mxu0 %v1784
      %2286 = vmatmul.mubr.f32.gmra.mrb[0].mxu0 %v1783
      %v2287 = vpop.f32.mrb[0].mxu0
      %v2288 = vadd.f32 %v2174, %v2287
      %v2289 = vpop.f32.mrb[0].mxu0
      %2290 = vmatprep.mubr.f32.mxu0 %v1793
      %2291 = vmatmul.mubr.f32.gmra.mrb[0].mxu0 %v1792
      %v2292 = vpop.f32.mrb[0].mxu0
      %v2293 = vadd.f32 %v2174, %v2292
      %v2294 = vpop.f32.mrb[0].mxu0
      %2295 = vmatprep.mubr.f32.mxu0 %v1802
      %2296 = vmatmul.mubr.f32.gmra.mrb[0].mxu0 %v1801
      %v2297 = vpop.f32.mrb[0].mxu0
      %v2298 = vadd.f32 %v2174, %v2297
      %v2299 = vpop.f32.mrb[0].mxu0
      %2300 = vmatprep.mubr.f32.mxu0 %v1811
      %2301 = vmatmul.mubr.f32.gmra.mrb[0].mxu0 %v1810
      %v2302 = vpop.f32.mrb[0].mxu0
      %v2303 = vadd.f32 %v2174, %v2302
      %v2304 = vpop.f32.mrb[0].mxu0
      %2305 = vmatprep.mubr.f32.mxu0 %v1820
      %2306 = vmatmul.mubr.f32.gmra.mrb[0].mxu0 %v1819
      %v2307 = vpop.f32.mrb[0].mxu0
      %v2308 = vadd.f32 %v2174, %v2307
      %v2309 = vpop.f32.mrb[0].mxu0
      %2310 = vmatprep.mubr.f32.mxu0 %v1829
      %2311 = vmatmul.mubr.f32.gmra.mrb[0].mxu0 %v1828
      %v2312 = vpop.f32.mrb[0].mxu0
      %v2313 = vadd.f32 %v2174, %v2312
      %v2314 = vpop.f32.mrb[0].mxu0
      %2315 = vmatprep.mubr.f32.mxu0 %v1838
      %2316 = vmatmul.mubr.f32.gmra.mrb[0].mxu0 %v1837
      %v2317 = vpop.f32.mrb[0].mxu0
      %v2318 = vadd.f32 %v2174, %v2317
      %v2319 = vpop.f32.mrb[0].mxu0
      %2320 = vmatprep.mubr.f32.mxu0 %v1847
      %2321 = vmatmul.mubr.f32.gmra.mrb[0].mxu0 %v1846
      %v2322 = vpop.f32.mrb[0].mxu0
      %v2323 = vadd.f32 %v2174, %v2322
      %v2324 = vpop.f32.mrb[0].mxu0
      %2325 = vmatprep.mubr.f32.mxu0 %v1856
      %2326 = vmatmul.mubr.f32.gmra.mrb[0].mxu0 %v1855
      %v2327 = vpop.f32.mrb[0].mxu0
      %v2328 = vadd.f32 %v2174, %v2327
      %v2329 = vpop.f32.mrb[0].mxu0
      %2330 = vmatprep.mubr.f32.mxu0 %v1865
      %2331 = vmatmul.mubr.f32.gmra.mrb[0].mxu0 %v1864
      %v2332 = vpop.f32.mrb[0].mxu0
      %v2333 = vadd.f32 %v2174, %v2332
      %v2334 = vpop.f32.mrb[0].mxu0
      %2335 = vmatprep.mubr.f32.mxu0 %v1874
      %2336 = vmatmul.mubr.f32.gmra.mrb[0].mxu0 %v1873
      %v2337 = vpop.f32.mrb[0].mxu0
      %v2338 = vadd.f32 %v2174, %v2337
      %v2339 = vpop.f32.mrb[0].mxu0
      %2340 = vmatprep.mubr.f32.mxu0 %v1883
      %2341 = vmatmul.mubr.f32.gmra.mrb[0].mxu0 %v1882
      %v2342 = vpop.f32.mrb[0].mxu0
      %v2343 = vadd.f32 %v2174, %v2342
      %v2344 = vpop.f32.mrb[0].mxu0
      %2345 = vmatprep.mubr.f32.mxu0 %v1892
      %2346 = vmatmul.mubr.f32.gmra.mrb[0].mxu0 %v1891
      %v2347 = vpop.f32.mrb[0].mxu0
      %v2348 = vadd.f32 %v2174, %v2347
      %v2349 = vpop.f32.mrb[0].mxu0
      %2350 = vmatprep.mubr.f32.mxu0 %v1901
      %2351 = vmatmul.mubr.f32.gmra.mrb[0].mxu0 %v1900
      %v2352 = vpop.f32.mrb[0].mxu0
      %v2353 = vadd.f32 %v2174, %v2352
      %v2354 = vpop.f32.mrb[0].mxu0
      %2355 = vmatprep.mubr.f32.mxu0 %v1910
      %2356 = vmatmul.mubr.f32.gmra.mrb[0].mxu0 %v1909
      %v2357 = vpop.f32.mrb[0].mxu0
      %v2358 = vadd.f32 %v2174, %v2357
      %v2359 = vpop.f32.mrb[0].mxu0
      %2360 = vmatprep.mubr.f32.mxu0 %v1919
      %2361 = vmatmul.mubr.f32.gmra.mrb[0].mxu0 %v1918
      %v2362 = vpop.f32.mrb[0].mxu0
      %v2363 = vadd.f32 %v2174, %v2362
      %v2364 = vpop.f32.mrb[0].mxu0
      %2365 = vmatprep.mubr.f32.mxu0 %v1928
      %2366 = vmatmul.mubr.f32.gmra.mrb[0].mxu0 %v1927
      %v2367 = vpop.f32.mrb[0].mxu0
      %v2368 = vadd.f32 %v2174, %v2367
      %v2369 = vpop.f32.mrb[0].mxu0
      %2370 = vmatprep.mubr.f32.mxu0 %v1937
      %2371 = vmatmul.mubr.f32.gmra.mrb[0].mxu0 %v1936
      %v2372 = vpop.f32.mrb[0].mxu0
      %v2373 = vadd.f32 %v2174, %v2372
      %v2374 = vpop.f32.mrb[0].mxu0
      %2375 = vmatprep.mubr.f32.mxu0 %v1946
      %2376 = vmatmul.mubr.f32.gmra.mrb[0].mxu0 %v1945
      %v2377 = vpop.f32.mrb[0].mxu0
      %v2378 = vadd.f32 %v2174, %v2377
      %v2379 = vpop.f32.mrb[0].mxu0
      %2380 = vmatprep.mubr.f32.mxu0 %v1955
      %2381 = vmatmul.mubr.f32.gmra.mrb[0].mxu0 %v1954
      %v2382 = vpop.f32.mrb[0].mxu0
      %v2383 = vadd.f32 %v2174, %v2382
      %v2384 = vpop.f32.mrb[0].mxu0
      %2385 = vmatprep.mubr.f32.mxu0 %v1964
      %2386 = vmatmul.mubr.f32.gmra.mrb[0].mxu0 %v1963
      %v2387 = vpop.f32.mrb[0].mxu0
      %v2388 = vadd.f32 %v2174, %v2387
      %v2389 = vpop.f32.mrb[0].mxu0
      %2390 = vmatprep.mubr.f32.mxu0 %v1973
      %2391 = vmatmul.mubr.f32.gmra.mrb[0].mxu0 %v1972
      %v2392 = vpop.f32.mrb[0].mxu0
      %v2393 = vadd.f32 %v2174, %v2392
      %v2394 = vpop.f32.mrb[0].mxu0
      %2395 = vmatprep.mubr.f32.mxu0 %v1982
      %2396 = vmatmul.mubr.f32.gmra.mrb[0].mxu0 %v1981
      %v2397 = vpop.f32.mrb[0].mxu0
      %v2398 = vadd.f32 %v2174, %v2397
      %v2399 = vpop.f32.mrb[0].mxu0
      %2400 = vmatprep.mubr.f32.mxu0 %v1991
      %2401 = vmatmul.mubr.f32.gmra.mrb[0].mxu0 %v1990
      %v2402 = vpop.f32.mrb[0].mxu0
      %v2403 = vadd.f32 %v2174, %v2402
      %v2404 = vpop.f32.mrb[0].mxu0
      %2405 = vmatprep.mubr.f32.mxu0 %v2000
      %2406 = vmatmul.mubr.f32.gmra.mrb[0].mxu0 %v1999
      %v2407 = vpop.f32.mrb[0].mxu0
      %v2408 = vadd.f32 %v2174, %v2407
      %v2409 = vpop.f32.mrb[0].mxu0
      %2410 = vmatprep.mubr.f32.mxu0 %v2009
      %2411 = vmatmul.mubr.f32.gmra.mrb[0].mxu0 %v2008
      %v2412 = vpop.f32.mrb[0].mxu0
      %v2413 = vadd.f32 %v2174, %v2412
      %v2414 = vpop.f32.mrb[0].mxu0
      %2415 = vmatprep.mubr.f32.mxu0 %v2018
      %2416 = vmatmul.mubr.f32.gmra.mrb[0].mxu0 %v2017
      %v2417 = vpop.f32.mrb[0].mxu0
      %v2418 = vadd.f32 %v2174, %v2417
      %v2419 = vpop.f32.mrb[0].mxu0
      %2420 = vdwg.mxu0
      %2421 = vmatprep.subr.mxu0 0.0
      %2422 = vmatpush1.msra.mxu0 %v2058
      %2423 = vmatprep.subr.mxu0 0.0
      %2424 = vmatpush1.msra.mxu0 %v2059
      %2425 = vmatprep.subr.mxu0 0.0
      %2426 = vmatpush1.msra.mxu0 %v2060
      %2427 = vmatprep.subr.mxu0 0.0
      %2428 = vmatpush1.msra.mxu0 %v2061
      %2429 = vmatprep.subr.mxu0 0.0
      %2430 = vmatpush1.msra.mxu0 %v2062
      %2431 = vmatprep.subr.mxu0 0.0
      %2432 = vmatpush1.msra.mxu0 %v2063
      %2433 = vmatprep.subr.mxu0 0.0
      %2434 = vmatpush1.msra.mxu0 %v2064
      %2435 = vmatprep.subr.mxu0 0.0
      %2436 = vmatpush1.msra.mxu0 %v2065
      %2437 = vmatprep.subr.mxu0 0.0
      %2438 = vmatpush1.msra.mxu0 %v2066
      %2439 = vmatprep.subr.mxu0 0.0
      %2440 = vmatpush1.msra.mxu0 %v2067
      %2441 = vmatprep.subr.mxu0 0.0
      %2442 = vmatpush1.msra.mxu0 %v2068
      %2443 = vmatprep.subr.mxu0 0.0
      %2444 = vmatpush1.msra.mxu0 %v2069
      %2445 = vmatprep.subr.mxu0 0.0
      %2446 = vmatpush1.msra.mxu0 %v2070
      %2447 = vmatprep.subr.mxu0 0.0
      %2448 = vmatpush1.msra.mxu0 %v2071
      %2449 = vmatprep.subr.mxu0 0.0
      %2450 = vmatpush1.msra.mxu0 %v2072
      %2451 = vmatprep.subr.mxu0 0.0
      %2452 = vmatpush1.msra.mxu0 %v2073
      %2453 = vmatprep.subr.mxu0 0.0
      %2454 = vmatpush1.msra.mxu0 %v2074
      %2455 = vmatprep.subr.mxu0 0.0
      %2456 = vmatpush1.msra.mxu0 %v2075
      %2457 = vmatprep.subr.mxu0 0.0
      %2458 = vmatpush1.msra.mxu0 %v2076
      %2459 = vmatprep.subr.mxu0 0.0
      %2460 = vmatpush1.msra.mxu0 %v2077
      %2461 = vmatprep.subr.mxu0 0.0
      %2462 = vmatpush1.msra.mxu0 %v2078
      %2463 = vmatprep.subr.mxu0 0.0
      %2464 = vmatpush1.msra.mxu0 %v2079
      %2465 = vmatprep.subr.mxu0 0.0
      %2466 = vmatpush1.msra.mxu0 %v2080
      %2467 = vmatprep.subr.mxu0 0.0
      %2468 = vmatpush1.msra.mxu0 %v2081
      %2469 = vmatprep.subr.mxu0 0.0
      %2470 = vmatpush1.msra.mxu0 %v2082
      %2471 = vmatprep.subr.mxu0 0.0
      %2472 = vmatpush1.msra.mxu0 %v2083
      %2473 = vmatprep.subr.mxu0 0.0
      %2474 = vmatpush1.msra.mxu0 %v2084
      %2475 = vmatprep.subr.mxu0 0.0
      %2476 = vmatpush1.msra.mxu0 %v2085
      %2477 = vmatprep.subr.mxu0 0.0
      %2478 = vmatpush1.msra.mxu0 %v2086
      %2479 = vmatprep.subr.mxu0 0.0
      %2480 = vmatpush1.msra.mxu0 %v2087
      %2481 = vmatprep.subr.mxu0 0.0
      %2482 = vmatpush1.msra.mxu0 %v2088
      %2483 = vmatprep.subr.mxu0 0.0
      %2484 = vmatpush1.msra.mxu0 %v2089
      %2485 = vmatprep.mubr.f32.mxu0 %v1705
      %2486 = vmatmul.mubr.f32.gmra.mrb[0].mxu0 %v1704
      %v2487 = vpop.f32.mrb[0].mxu0
      %v2488 = vadd.f32 %v2243, %v2487
      %v2489 = vpop.f32.mrb[0].mxu0
      %2490 = vmatprep.mubr.f32.mxu0 %v1714
      %2491 = vmatmul.mubr.f32.gmra.mrb[0].mxu0 %v1713
      %v2492 = vpop.f32.mrb[0].mxu0
      %v2493 = vadd.f32 %v2248, %v2492
      %v2494 = vpop.f32.mrb[0].mxu0
      %2495 = vmatprep.mubr.f32.mxu0 %v1723
      %2496 = vmatmul.mubr.f32.gmra.mrb[0].mxu0 %v1722
      %v2497 = vpop.f32.mrb[0].mxu0
      %v2498 = vadd.f32 %v2253, %v2497
      %v2499 = vpop.f32.mrb[0].mxu0
      %2500 = vmatprep.mubr.f32.mxu0 %v1732
      %2501 = vmatmul.mubr.f32.gmra.mrb[0].mxu0 %v1731
      %v2502 = vpop.f32.mrb[0].mxu0
      %v2503 = vadd.f32 %v2258, %v2502
      %v2504 = vpop.f32.mrb[0].mxu0
      %2505 = vmatprep.mubr.f32.mxu0 %v1741
      %2506 = vmatmul.mubr.f32.gmra.mrb[0].mxu0 %v1740
      %v2507 = vpop.f32.mrb[0].mxu0
      %v2508 = vadd.f32 %v2263, %v2507
      %v2509 = vpop.f32.mrb[0].mxu0
      %2510 = vmatprep.mubr.f32.mxu0 %v1750
      %2511 = vmatmul.mubr.f32.gmra.mrb[0].mxu0 %v1749
      %v2512 = vpop.f32.mrb[0].mxu0
      %v2513 = vadd.f32 %v2268, %v2512
      %v2514 = vpop.f32.mrb[0].mxu0
      %2515 = vmatprep.mubr.f32.mxu0 %v1759
      %2516 = vmatmul.mubr.f32.gmra.mrb[0].mxu0 %v1758
      %v2517 = vpop.f32.mrb[0].mxu0
      %v2518 = vadd.f32 %v2273, %v2517
      %v2519 = vpop.f32.mrb[0].mxu0
      %2520 = vmatprep.mubr.f32.mxu0 %v1768
      %2521 = vmatmul.mubr.f32.gmra.mrb[0].mxu0 %v1767
      %v2522 = vpop.f32.mrb[0].mxu0
      %v2523 = vadd.f32 %v2278, %v2522
      %v2524 = vpop.f32.mrb[0].mxu0
      %2525 = vmatprep.mubr.f32.mxu0 %v1777
      %2526 = vmatmul.mubr.f32.gmra.mrb[0].mxu0 %v1776
      %v2527 = vpop.f32.mrb[0].mxu0
      %v2528 = vadd.f32 %v2283, %v2527
      %v2529 = vpop.f32.mrb[0].mxu0
      %2530 = vmatprep.mubr.f32.mxu0 %v1786
      %2531 = vmatmul.mubr.f32.gmra.mrb[0].mxu0 %v1785
      %v2532 = vpop.f32.mrb[0].mxu0
      %v2533 = vadd.f32 %v2288, %v2532
      %v2534 = vpop.f32.mrb[0].mxu0
      %2535 = vmatprep.mubr.f32.mxu0 %v1795
      %2536 = vmatmul.mubr.f32.gmra.mrb[0].mxu0 %v1794
      %v2537 = vpop.f32.mrb[0].mxu0
      %v2538 = vadd.f32 %v2293, %v2537
      %v2539 = vpop.f32.mrb[0].mxu0
      %2540 = vmatprep.mubr.f32.mxu0 %v1804
      %2541 = vmatmul.mubr.f32.gmra.mrb[0].mxu0 %v1803
      %v2542 = vpop.f32.mrb[0].mxu0
      %v2543 = vadd.f32 %v2298, %v2542
      %v2544 = vpop.f32.mrb[0].mxu0
      %2545 = vmatprep.mubr.f32.mxu0 %v1813
      %2546 = vmatmul.mubr.f32.gmra.mrb[0].mxu0 %v1812
      %v2547 = vpop.f32.mrb[0].mxu0
      %v2548 = vadd.f32 %v2303, %v2547
      %v2549 = vpop.f32.mrb[0].mxu0
      %2550 = vmatprep.mubr.f32.mxu0 %v1822
      %2551 = vmatmul.mubr.f32.gmra.mrb[0].mxu0 %v1821
      %v2552 = vpop.f32.mrb[0].mxu0
      %v2553 = vadd.f32 %v2308, %v2552
      %v2554 = vpop.f32.mrb[0].mxu0
      %2555 = vmatprep.mubr.f32.mxu0 %v1831
      %2556 = vmatmul.mubr.f32.gmra.mrb[0].mxu0 %v1830
      %v2557 = vpop.f32.mrb[0].mxu0
      %v2558 = vadd.f32 %v2313, %v2557
      %v2559 = vpop.f32.mrb[0].mxu0
      %2560 = vmatprep.mubr.f32.mxu0 %v1840
      %2561 = vmatmul.mubr.f32.gmra.mrb[0].mxu0 %v1839
      %v2562 = vpop.f32.mrb[0].mxu0
      %v2563 = vadd.f32 %v2318, %v2562
      %v2564 = vpop.f32.mrb[0].mxu0
      %2565 = vmatprep.mubr.f32.mxu0 %v1849
      %2566 = vmatmul.mubr.f32.gmra.mrb[0].mxu0 %v1848
      %v2567 = vpop.f32.mrb[0].mxu0
      %v2568 = vadd.f32 %v2323, %v2567
      %v2569 = vpop.f32.mrb[0].mxu0
      %2570 = vmatprep.mubr.f32.mxu0 %v1858
      %2571 = vmatmul.mubr.f32.gmra.mrb[0].mxu0 %v1857
      %v2572 = vpop.f32.mrb[0].mxu0
      %v2573 = vadd.f32 %v2328, %v2572
      %v2574 = vpop.f32.mrb[0].mxu0
      %2575 = vmatprep.mubr.f32.mxu0 %v1867
      %2576 = vmatmul.mubr.f32.gmra.mrb[0].mxu0 %v1866
      %v2577 = vpop.f32.mrb[0].mxu0
      %v2578 = vadd.f32 %v2333, %v2577
      %v2579 = vpop.f32.mrb[0].mxu0
      %2580 = vmatprep.mubr.f32.mxu0 %v1876
      %2581 = vmatmul.mubr.f32.gmra.mrb[0].mxu0 %v1875
      %v2582 = vpop.f32.mrb[0].mxu0
      %v2583 = vadd.f32 %v2338, %v2582
      %v2584 = vpop.f32.mrb[0].mxu0
      %2585 = vmatprep.mubr.f32.mxu0 %v1885
      %2586 = vmatmul.mubr.f32.gmra.mrb[0].mxu0 %v1884
      %v2587 = vpop.f32.mrb[0].mxu0
      %v2588 = vadd.f32 %v2343, %v2587
      %v2589 = vpop.f32.mrb[0].mxu0
      %2590 = vmatprep.mubr.f32.mxu0 %v1894
      %2591 = vmatmul.mubr.f32.gmra.mrb[0].mxu0 %v1893
      %v2592 = vpop.f32.mrb[0].mxu0
      %v2593 = vadd.f32 %v2348, %v2592
      %v2594 = vpop.f32.mrb[0].mxu0
      %2595 = vmatprep.mubr.f32.mxu0 %v1903
      %2596 = vmatmul.mubr.f32.gmra.mrb[0].mxu0 %v1902
      %v2597 = vpop.f32.mrb[0].mxu0
      %v2598 = vadd.f32 %v2353, %v2597
      %v2599 = vpop.f32.mrb[0].mxu0
      %2600 = vmatprep.mubr.f32.mxu0 %v1912
      %2601 = vmatmul.mubr.f32.gmra.mrb[0].mxu0 %v1911
      %v2602 = vpop.f32.mrb[0].mxu0
      %v2603 = vadd.f32 %v2358, %v2602
      %v2604 = vpop.f32.mrb[0].mxu0
      %2605 = vmatprep.mubr.f32.mxu0 %v1921
      %2606 = vmatmul.mubr.f32.gmra.mrb[0].mxu0 %v1920
      %v2607 = vpop.f32.mrb[0].mxu0
      %v2608 = vadd.f32 %v2363, %v2607
      %v2609 = vpop.f32.mrb[0].mxu0
      %2610 = vmatprep.mubr.f32.mxu0 %v1930
      %2611 = vmatmul.mubr.f32.gmra.mrb[0].mxu0 %v1929
      %v2612 = vpop.f32.mrb[0].mxu0
      %v2613 = vadd.f32 %v2368, %v2612
      %v2614 = vpop.f32.mrb[0].mxu0
      %2615 = vmatprep.mubr.f32.mxu0 %v1939
      %2616 = vmatmul.mubr.f32.gmra.mrb[0].mxu0 %v1938
      %v2617 = vpop.f32.mrb[0].mxu0
      %v2618 = vadd.f32 %v2373, %v2617
      %v2619 = vpop.f32.mrb[0].mxu0
      %2620 = vmatprep.mubr.f32.mxu0 %v1948
      %2621 = vmatmul.mubr.f32.gmra.mrb[0].mxu0 %v1947
      %v2622 = vpop.f32.mrb[0].mxu0
      %v2623 = vadd.f32 %v2378, %v2622
      %v2624 = vpop.f32.mrb[0].mxu0
      %2625 = vmatprep.mubr.f32.mxu0 %v1957
      %2626 = vmatmul.mubr.f32.gmra.mrb[0].mxu0 %v1956
      %v2627 = vpop.f32.mrb[0].mxu0
      %v2628 = vadd.f32 %v2383, %v2627
      %v2629 = vpop.f32.mrb[0].mxu0
      %2630 = vmatprep.mubr.f32.mxu0 %v1966
      %2631 = vmatmul.mubr.f32.gmra.mrb[0].mxu0 %v1965
      %v2632 = vpop.f32.mrb[0].mxu0
      %v2633 = vadd.f32 %v2388, %v2632
      %v2634 = vpop.f32.mrb[0].mxu0
      %2635 = vmatprep.mubr.f32.mxu0 %v1975
      %2636 = vmatmul.mubr.f32.gmra.mrb[0].mxu0 %v1974
      %v2637 = vpop.f32.mrb[0].mxu0
      %v2638 = vadd.f32 %v2393, %v2637
      %v2639 = vpop.f32.mrb[0].mxu0
      %2640 = vmatprep.mubr.f32.mxu0 %v1984
      %2641 = vmatmul.mubr.f32.gmra.mrb[0].mxu0 %v1983
      %v2642 = vpop.f32.mrb[0].mxu0
      %v2643 = vadd.f32 %v2398, %v2642
      %v2644 = vpop.f32.mrb[0].mxu0
      %2645 = vmatprep.mubr.f32.mxu0 %v1993
      %2646 = vmatmul.mubr.f32.gmra.mrb[0].mxu0 %v1992
      %v2647 = vpop.f32.mrb[0].mxu0
      %v2648 = vadd.f32 %v2403, %v2647
      %v2649 = vpop.f32.mrb[0].mxu0
      %2650 = vmatprep.mubr.f32.mxu0 %v2002
      %2651 = vmatmul.mubr.f32.gmra.mrb[0].mxu0 %v2001
      %v2652 = vpop.f32.mrb[0].mxu0
      %v2653 = vadd.f32 %v2408, %v2652
      %v2654 = vpop.f32.mrb[0].mxu0
      %2655 = vmatprep.mubr.f32.mxu0 %v2011
      %2656 = vmatmul.mubr.f32.gmra.mrb[0].mxu0 %v2010
      %v2657 = vpop.f32.mrb[0].mxu0
      %v2658 = vadd.f32 %v2413, %v2657
      %v2659 = vpop.f32.mrb[0].mxu0
      %2660 = vmatprep.mubr.f32.mxu0 %v2020
      %2661 = vmatmul.mubr.f32.gmra.mrb[0].mxu0 %v2019
      %v2662 = vpop.f32.mrb[0].mxu0
      %v2663 = vadd.f32 %v2418, %v2662
      %v2664 = vpop.f32.mrb[0].mxu0
      %2665 = vdwg.mxu0
      %2666 = vmatprep.subr.mxu0 0.0
      %2667 = vmatpush1.msra.mxu0 %v2090
      %2668 = vmatprep.subr.mxu0 0.0
      %2669 = vmatpush1.msra.mxu0 %v2091
      %2670 = vmatprep.subr.mxu0 0.0
      %2671 = vmatpush1.msra.mxu0 %v2092
      %2672 = vmatprep.subr.mxu0 0.0
      %2673 = vmatpush1.msra.mxu0 %v2093
      %2674 = vmatprep.subr.mxu0 0.0
      %2675 = vmatpush1.msra.mxu0 %v2094
      %2676 = vmatprep.subr.mxu0 0.0
      %2677 = vmatpush1.msra.mxu0 %v2095
      %2678 = vmatprep.subr.mxu0 0.0
      %2679 = vmatpush1.msra.mxu0 %v2096
      %2680 = vmatprep.subr.mxu0 0.0
      %2681 = vmatpush1.msra.mxu0 %v2097
      %2682 = vmatprep.subr.mxu0 0.0
      %2683 = vmatpush1.msra.mxu0 %v2098
      %2684 = vmatprep.subr.mxu0 0.0
      %2685 = vmatpush1.msra.mxu0 %v2099
      %2686 = vmatprep.subr.mxu0 0.0
      %2687 = vmatpush1.msra.mxu0 %v2100
      %2688 = vmatprep.subr.mxu0 0.0
      %2689 = vmatpush1.msra.mxu0 %v2101
      %2690 = vmatprep.subr.mxu0 0.0
      %2691 = vmatpush1.msra.mxu0 %v2102
      %2692 = vmatprep.subr.mxu0 0.0
      %2693 = vmatpush1.msra.mxu0 %v2103
      %2694 = vmatprep.subr.mxu0 0.0
      %2695 = vmatpush1.msra.mxu0 %v2104
      %2696 = vmatprep.subr.mxu0 0.0
      %2697 = vmatpush1.msra.mxu0 %v2105
      %2698 = vmatprep.subr.mxu0 0.0
      %2699 = vmatpush1.msra.mxu0 %v2106
      %2700 = vmatprep.subr.mxu0 0.0
      %2701 = vmatpush1.msra.mxu0 %v2107
      %2702 = vmatprep.subr.mxu0 0.0
      %2703 = vmatpush1.msra.mxu0 %v2108
      %2704 = vmatprep.subr.mxu0 0.0
      %2705 = vmatpush1.msra.mxu0 %v2109
      %2706 = vmatprep.subr.mxu0 0.0
      %2707 = vmatpush1.msra.mxu0 %v2110
      %2708 = vmatprep.subr.mxu0 0.0
      %2709 = vmatpush1.msra.mxu0 %v2111
      %2710 = vmatprep.subr.mxu0 0.0
      %2711 = vmatpush1.msra.mxu0 %v2112
      %2712 = vmatprep.subr.mxu0 0.0
      %2713 = vmatpush1.msra.mxu0 %v2113
      %2714 = vmatprep.subr.mxu0 0.0
      %2715 = vmatpush1.msra.mxu0 %v2114
      %2716 = vmatprep.subr.mxu0 0.0
      %2717 = vmatpush1.msra.mxu0 %v2115
      %2718 = vmatprep.subr.mxu0 0.0
      %2719 = vmatpush1.msra.mxu0 %v2116
      %2720 = vmatprep.subr.mxu0 0.0
      %2721 = vmatpush1.msra.mxu0 %v2117
      %2722 = vmatprep.subr.mxu0 0.0
      %2723 = vmatpush1.msra.mxu0 %v2118
      %2724 = vmatprep.subr.mxu0 0.0
      %2725 = vmatpush1.msra.mxu0 %v2119
      %2726 = vmatprep.subr.mxu0 0.0
      %2727 = vmatpush1.msra.mxu0 %v2120
      %2728 = vmatprep.subr.mxu0 0.0
      %2729 = vmatpush1.msra.mxu0 %v2121
      %2730 = vmatprep.mubr.f32.mxu0 %v1707
      %2731 = vmatmul.mubr.f32.gmra.mrb[0].mxu0 %v1706
      %v2732 = vpop.f32.mrb[0].mxu0
      %v2733 = vadd.f32 %v2488, %v2732
      %v2734 = vpop.f32.mrb[0].mxu0
      %2735 = vmatprep.mubr.f32.mxu0 %v1716
      %2736 = vmatmul.mubr.f32.gmra.mrb[0].mxu0 %v1715
      %v2737 = vpop.f32.mrb[0].mxu0
      %v2738 = vadd.f32 %v2493, %v2737
      %v2739 = vpop.f32.mrb[0].mxu0
      %2740 = vmatprep.mubr.f32.mxu0 %v1725
      %2741 = vmatmul.mubr.f32.gmra.mrb[0].mxu0 %v1724
      %v2742 = vpop.f32.mrb[0].mxu0
      %v2743 = vadd.f32 %v2498, %v2742
      %v2744 = vpop.f32.mrb[0].mxu0
      %2745 = vmatprep.mubr.f32.mxu0 %v1734
      %2746 = vmatmul.mubr.f32.gmra.mrb[0].mxu0 %v1733
      %v2747 = vpop.f32.mrb[0].mxu0
      %v2748 = vadd.f32 %v2503, %v2747
      %v2749 = vpop.f32.mrb[0].mxu0
      %2750 = vmatprep.mubr.f32.mxu0 %v1743
      %2751 = vmatmul.mubr.f32.gmra.mrb[0].mxu0 %v1742
      %v2752 = vpop.f32.mrb[0].mxu0
      %v2753 = vadd.f32 %v2508, %v2752
      %v2754 = vpop.f32.mrb[0].mxu0
      %2755 = vmatprep.mubr.f32.mxu0 %v1752
      %2756 = vmatmul.mubr.f32.gmra.mrb[0].mxu0 %v1751
      %v2757 = vpop.f32.mrb[0].mxu0
      %v2758 = vadd.f32 %v2513, %v2757
      %v2759 = vpop.f32.mrb[0].mxu0
      %2760 = vmatprep.mubr.f32.mxu0 %v1761
      %2761 = vmatmul.mubr.f32.gmra.mrb[0].mxu0 %v1760
      %v2762 = vpop.f32.mrb[0].mxu0
      %v2763 = vadd.f32 %v2518, %v2762
      %v2764 = vpop.f32.mrb[0].mxu0
      %2765 = vmatprep.mubr.f32.mxu0 %v1770
      %2766 = vmatmul.mubr.f32.gmra.mrb[0].mxu0 %v1769
      %v2767 = vpop.f32.mrb[0].mxu0
      %v2768 = vadd.f32 %v2523, %v2767
      %v2769 = vpop.f32.mrb[0].mxu0
      %2770 = vmatprep.mubr.f32.mxu0 %v1779
      %2771 = vmatmul.mubr.f32.gmra.mrb[0].mxu0 %v1778
      %v2772 = vpop.f32.mrb[0].mxu0
      %v2773 = vadd.f32 %v2528, %v2772
      %v2774 = vpop.f32.mrb[0].mxu0
      %2775 = vmatprep.mubr.f32.mxu0 %v1788
      %2776 = vmatmul.mubr.f32.gmra.mrb[0].mxu0 %v1787
      %v2777 = vpop.f32.mrb[0].mxu0
      %v2778 = vadd.f32 %v2533, %v2777
      %v2779 = vpop.f32.mrb[0].mxu0
      %2780 = vmatprep.mubr.f32.mxu0 %v1797
      %2781 = vmatmul.mubr.f32.gmra.mrb[0].mxu0 %v1796
      %v2782 = vpop.f32.mrb[0].mxu0
      %v2783 = vadd.f32 %v2538, %v2782
      %v2784 = vpop.f32.mrb[0].mxu0
      %2785 = vmatprep.mubr.f32.mxu0 %v1806
      %2786 = vmatmul.mubr.f32.gmra.mrb[0].mxu0 %v1805
      %v2787 = vpop.f32.mrb[0].mxu0
      %v2788 = vadd.f32 %v2543, %v2787
      %v2789 = vpop.f32.mrb[0].mxu0
      %2790 = vmatprep.mubr.f32.mxu0 %v1815
      %2791 = vmatmul.mubr.f32.gmra.mrb[0].mxu0 %v1814
      %v2792 = vpop.f32.mrb[0].mxu0
      %v2793 = vadd.f32 %v2548, %v2792
      %v2794 = vpop.f32.mrb[0].mxu0
      %2795 = vmatprep.mubr.f32.mxu0 %v1824
      %2796 = vmatmul.mubr.f32.gmra.mrb[0].mxu0 %v1823
      %v2797 = vpop.f32.mrb[0].mxu0
      %v2798 = vadd.f32 %v2553, %v2797
      %v2799 = vpop.f32.mrb[0].mxu0
      %2800 = vmatprep.mubr.f32.mxu0 %v1833
      %2801 = vmatmul.mubr.f32.gmra.mrb[0].mxu0 %v1832
      %v2802 = vpop.f32.mrb[0].mxu0
      %v2803 = vadd.f32 %v2558, %v2802
      %v2804 = vpop.f32.mrb[0].mxu0
      %2805 = vmatprep.mubr.f32.mxu0 %v1842
      %2806 = vmatmul.mubr.f32.gmra.mrb[0].mxu0 %v1841
      %v2807 = vpop.f32.mrb[0].mxu0
      %v2808 = vadd.f32 %v2563, %v2807
      %v2809 = vpop.f32.mrb[0].mxu0
      %2810 = vmatprep.mubr.f32.mxu0 %v1851
      %2811 = vmatmul.mubr.f32.gmra.mrb[0].mxu0 %v1850
      %v2812 = vpop.f32.mrb[0].mxu0
      %v2813 = vadd.f32 %v2568, %v2812
      %v2814 = vpop.f32.mrb[0].mxu0
      %2815 = vmatprep.mubr.f32.mxu0 %v1860
      %2816 = vmatmul.mubr.f32.gmra.mrb[0].mxu0 %v1859
      %v2817 = vpop.f32.mrb[0].mxu0
      %v2818 = vadd.f32 %v2573, %v2817
      %v2819 = vpop.f32.mrb[0].mxu0
      %2820 = vmatprep.mubr.f32.mxu0 %v1869
      %2821 = vmatmul.mubr.f32.gmra.mrb[0].mxu0 %v1868
      %v2822 = vpop.f32.mrb[0].mxu0
      %v2823 = vadd.f32 %v2578, %v2822
      %v2824 = vpop.f32.mrb[0].mxu0
      %2825 = vmatprep.mubr.f32.mxu0 %v1878
      %2826 = vmatmul.mubr.f32.gmra.mrb[0].mxu0 %v1877
      %v2827 = vpop.f32.mrb[0].mxu0
      %v2828 = vadd.f32 %v2583, %v2827
      %v2829 = vpop.f32.mrb[0].mxu0
      %2830 = vmatprep.mubr.f32.mxu0 %v1887
      %2831 = vmatmul.mubr.f32.gmra.mrb[0].mxu0 %v1886
      %v2832 = vpop.f32.mrb[0].mxu0
      %v2833 = vadd.f32 %v2588, %v2832
      %v2834 = vpop.f32.mrb[0].mxu0
      %2835 = vmatprep.mubr.f32.mxu0 %v1896
      %2836 = vmatmul.mubr.f32.gmra.mrb[0].mxu0 %v1895
      %v2837 = vpop.f32.mrb[0].mxu0
      %v2838 = vadd.f32 %v2593, %v2837
      %v2839 = vpop.f32.mrb[0].mxu0
      %2840 = vmatprep.mubr.f32.mxu0 %v1905
      %2841 = vmatmul.mubr.f32.gmra.mrb[0].mxu0 %v1904
      %v2842 = vpop.f32.mrb[0].mxu0
      %v2843 = vadd.f32 %v2598, %v2842
      %v2844 = vpop.f32.mrb[0].mxu0
      %2845 = vmatprep.mubr.f32.mxu0 %v1914
      %2846 = vmatmul.mubr.f32.gmra.mrb[0].mxu0 %v1913
      %v2847 = vpop.f32.mrb[0].mxu0
      %v2848 = vadd.f32 %v2603, %v2847
      %v2849 = vpop.f32.mrb[0].mxu0
      %2850 = vmatprep.mubr.f32.mxu0 %v1923
      %2851 = vmatmul.mubr.f32.gmra.mrb[0].mxu0 %v1922
      %v2852 = vpop.f32.mrb[0].mxu0
      %v2853 = vadd.f32 %v2608, %v2852
      %v2854 = vpop.f32.mrb[0].mxu0
      %2855 = vmatprep.mubr.f32.mxu0 %v1932
      %2856 = vmatmul.mubr.f32.gmra.mrb[0].mxu0 %v1931
      %v2857 = vpop.f32.mrb[0].mxu0
      %v2858 = vadd.f32 %v2613, %v2857
      %v2859 = vpop.f32.mrb[0].mxu0
      %2860 = vmatprep.mubr.f32.mxu0 %v1941
      %2861 = vmatmul.mubr.f32.gmra.mrb[0].mxu0 %v1940
      %v2862 = vpop.f32.mrb[0].mxu0
      %v2863 = vadd.f32 %v2618, %v2862
      %v2864 = vpop.f32.mrb[0].mxu0
      %2865 = vmatprep.mubr.f32.mxu0 %v1950
      %2866 = vmatmul.mubr.f32.gmra.mrb[0].mxu0 %v1949
      %v2867 = vpop.f32.mrb[0].mxu0
      %v2868 = vadd.f32 %v2623, %v2867
      %v2869 = vpop.f32.mrb[0].mxu0
      %2870 = vmatprep.mubr.f32.mxu0 %v1959
      %2871 = vmatmul.mubr.f32.gmra.mrb[0].mxu0 %v1958
      %v2872 = vpop.f32.mrb[0].mxu0
      %v2873 = vadd.f32 %v2628, %v2872
      %v2874 = vpop.f32.mrb[0].mxu0
      %2875 = vmatprep.mubr.f32.mxu0 %v1968
      %2876 = vmatmul.mubr.f32.gmra.mrb[0].mxu0 %v1967
      %v2877 = vpop.f32.mrb[0].mxu0
      %v2878 = vadd.f32 %v2633, %v2877
      %v2879 = vpop.f32.mrb[0].mxu0
      %2880 = vmatprep.mubr.f32.mxu0 %v1977
      %2881 = vmatmul.mubr.f32.gmra.mrb[0].mxu0 %v1976
      %v2882 = vpop.f32.mrb[0].mxu0
      %v2883 = vadd.f32 %v2638, %v2882
      %v2884 = vpop.f32.mrb[0].mxu0
      %2885 = vmatprep.mubr.f32.mxu0 %v1986
      %2886 = vmatmul.mubr.f32.gmra.mrb[0].mxu0 %v1985
      %v2887 = vpop.f32.mrb[0].mxu0
      %v2888 = vadd.f32 %v2643, %v2887
      %v2889 = vpop.f32.mrb[0].mxu0
      %2890 = vmatprep.mubr.f32.mxu0 %v1995
      %2891 = vmatmul.mubr.f32.gmra.mrb[0].mxu0 %v1994
      %v2892 = vpop.f32.mrb[0].mxu0
      %v2893 = vadd.f32 %v2648, %v2892
      %v2894 = vpop.f32.mrb[0].mxu0
      %2895 = vmatprep.mubr.f32.mxu0 %v2004
      %2896 = vmatmul.mubr.f32.gmra.mrb[0].mxu0 %v2003
      %v2897 = vpop.f32.mrb[0].mxu0
      %v2898 = vadd.f32 %v2653, %v2897
      %v2899 = vpop.f32.mrb[0].mxu0
      %2900 = vmatprep.mubr.f32.mxu0 %v2013
      %2901 = vmatmul.mubr.f32.gmra.mrb[0].mxu0 %v2012
      %v2902 = vpop.f32.mrb[0].mxu0
      %v2903 = vadd.f32 %v2658, %v2902
      %v2904 = vpop.f32.mrb[0].mxu0
      %2905 = vmatprep.mubr.f32.mxu0 %v2022
      %2906 = vmatmul.mubr.f32.gmra.mrb[0].mxu0 %v2021
      %v2907 = vpop.f32.mrb[0].mxu0
      %v2908 = vadd.f32 %v2663, %v2907
      %v2909 = vpop.f32.mrb[0].mxu0
      %2910 = vdwg.mxu0
      %2911 = vmatprep.subr.mxu0 0.0
      %2912 = vmatpush1.msra.mxu0 %v2122
      %2913 = vmatprep.subr.mxu0 0.0
      %2914 = vmatpush1.msra.mxu0 %v2123
      %2915 = vmatprep.subr.mxu0 0.0
      %2916 = vmatpush1.msra.mxu0 %v2124
      %2917 = vmatprep.subr.mxu0 0.0
      %2918 = vmatpush1.msra.mxu0 %v2125
      %2919 = vmatprep.subr.mxu0 0.0
      %2920 = vmatpush1.msra.mxu0 %v2126
      %2921 = vmatprep.subr.mxu0 0.0
      %2922 = vmatpush1.msra.mxu0 %v2127
      %2923 = vmatprep.subr.mxu0 0.0
      %2924 = vmatpush1.msra.mxu0 %v2128
      %2925 = vmatprep.subr.mxu0 0.0
      %2926 = vmatpush1.msra.mxu0 %v2129
      %2927 = vmatprep.subr.mxu0 0.0
      %2928 = vmatpush1.msra.mxu0 %v2130
      %2929 = vmatprep.subr.mxu0 0.0
      %2930 = vmatpush1.msra.mxu0 %v2131
      %2931 = vmatprep.subr.mxu0 0.0
      %2932 = vmatpush1.msra.mxu0 %v2132
      %2933 = vmatprep.subr.mxu0 0.0
      %2934 = vmatpush1.msra.mxu0 %v2133
      %2935 = vmatprep.subr.mxu0 0.0
      %2936 = vmatpush1.msra.mxu0 %v2134
      %2937 = vmatprep.subr.mxu0 0.0
      %2938 = vmatpush1.msra.mxu0 %v2135
      %2939 = vmatprep.subr.mxu0 0.0
      %2940 = vmatpush1.msra.mxu0 %v2136
      %2941 = vmatprep.subr.mxu0 0.0
      %2942 = vmatpush1.msra.mxu0 %v2137
      %2943 = vmatprep.subr.mxu0 0.0
      %2944 = vmatpush1.msra.mxu0 %v2138
      %2945 = vmatprep.subr.mxu0 0.0
      %2946 = vmatpush1.msra.mxu0 %v2139
      %2947 = vmatprep.subr.mxu0 0.0
      %2948 = vmatpush1.msra.mxu0 %v2140
      %2949 = vmatprep.subr.mxu0 0.0
      %2950 = vmatpush1.msra.mxu0 %v2141
      %2951 = vmatprep.subr.mxu0 0.0
      %2952 = vmatpush1.msra.mxu0 %v2142
      %2953 = vmatprep.subr.mxu0 0.0
      %2954 = vmatpush1.msra.mxu0 %v2143
      %2955 = vmatprep.subr.mxu0 0.0
      %2956 = vmatpush1.msra.mxu0 %v2144
      %2957 = vmatprep.subr.mxu0 0.0
      %2958 = vmatpush1.msra.mxu0 %v2145
      %2959 = vmatprep.subr.mxu0 0.0
      %2960 = vmatpush1.msra.mxu0 %v2146
      %2961 = vmatprep.subr.mxu0 0.0
      %2962 = vmatpush1.msra.mxu0 %v2147
      %2963 = vmatprep.subr.mxu0 0.0
      %2964 = vmatpush1.msra.mxu0 %v2148
      %2965 = vmatprep.subr.mxu0 0.0
      %2966 = vmatpush1.msra.mxu0 %v2149
      %2967 = vmatprep.subr.mxu0 0.0
      %2968 = vmatpush1.msra.mxu0 %v2150
      %2969 = vmatprep.subr.mxu0 0.0
      %2970 = vmatpush1.msra.mxu0 %v2151
      %2971 = vmatprep.subr.mxu0 0.0
      %2972 = vmatpush1.msra.mxu0 %v2152
      %2973 = vmatprep.subr.mxu0 0.0
      %2974 = vmatpush1.msra.mxu0 %v2153
      %2975 = vmatprep.mubr.f32.mxu0 %v1709
      %2976 = vmatmul.mubr.f32.gmra.mrb[0].mxu0 %v1708
      %v2977 = vpop.f32.mrb[0].mxu0
      %v2978 = vadd.f32 %v2733, %v2977
      %v2979 = vpop.f32.mrb[0].mxu0
      %2980 = vmatprep.mubr.f32.mxu0 %v1718
      %2981 = vmatmul.mubr.f32.gmra.mrb[0].mxu0 %v1717
      %v2982 = vpop.f32.mrb[0].mxu0
      %v2983 = vadd.f32 %v2738, %v2982
      %v2984 = vpop.f32.mrb[0].mxu0
      %2985 = vmatprep.mubr.f32.mxu0 %v1727
      %2986 = vmatmul.mubr.f32.gmra.mrb[0].mxu0 %v1726
      %v2987 = vpop.f32.mrb[0].mxu0
      %v2988 = vadd.f32 %v2743, %v2987
      %v2989 = vpop.f32.mrb[0].mxu0
      %2990 = vmatprep.mubr.f32.mxu0 %v1736
      %2991 = vmatmul.mubr.f32.gmra.mrb[0].mxu0 %v1735
      %v2992 = vpop.f32.mrb[0].mxu0
      %v2993 = vadd.f32 %v2748, %v2992
      %v2994 = vpop.f32.mrb[0].mxu0
      %2995 = vmatprep.mubr.f32.mxu0 %v1745
      %2996 = vmatmul.mubr.f32.gmra.mrb[0].mxu0 %v1744
      %v2997 = vpop.f32.mrb[0].mxu0
      %v2998 = vadd.f32 %v2753, %v2997
      %v2999 = vpop.f32.mrb[0].mxu0
      %3000 = vmatprep.mubr.f32.mxu0 %v1754
      %3001 = vmatmul.mubr.f32.gmra.mrb[0].mxu0 %v1753
      %v3002 = vpop.f32.mrb[0].mxu0
      %v3003 = vadd.f32 %v2758, %v3002
      %v3004 = vpop.f32.mrb[0].mxu0
      %3005 = vmatprep.mubr.f32.mxu0 %v1763
      %3006 = vmatmul.mubr.f32.gmra.mrb[0].mxu0 %v1762
      %v3007 = vpop.f32.mrb[0].mxu0
      %v3008 = vadd.f32 %v2763, %v3007
      %v3009 = vpop.f32.mrb[0].mxu0
      %3010 = vmatprep.mubr.f32.mxu0 %v1772
      %3011 = vmatmul.mubr.f32.gmra.mrb[0].mxu0 %v1771
      %v3012 = vpop.f32.mrb[0].mxu0
      %v3013 = vadd.f32 %v2768, %v3012
      %v3014 = vpop.f32.mrb[0].mxu0
      %3015 = vmatprep.mubr.f32.mxu0 %v1781
      %3016 = vmatmul.mubr.f32.gmra.mrb[0].mxu0 %v1780
      %v3017 = vpop.f32.mrb[0].mxu0
      %v3018 = vadd.f32 %v2773, %v3017
      %v3019 = vpop.f32.mrb[0].mxu0
      %3020 = vmatprep.mubr.f32.mxu0 %v1790
      %3021 = vmatmul.mubr.f32.gmra.mrb[0].mxu0 %v1789
      %v3022 = vpop.f32.mrb[0].mxu0
      %v3023 = vadd.f32 %v2778, %v3022
      %v3024 = vpop.f32.mrb[0].mxu0
      %3025 = vmatprep.mubr.f32.mxu0 %v1799
      %3026 = vmatmul.mubr.f32.gmra.mrb[0].mxu0 %v1798
      %v3027 = vpop.f32.mrb[0].mxu0
      %v3028 = vadd.f32 %v2783, %v3027
      %v3029 = vpop.f32.mrb[0].mxu0
      %3030 = vmatprep.mubr.f32.mxu0 %v1808
      %3031 = vmatmul.mubr.f32.gmra.mrb[0].mxu0 %v1807
      %v3032 = vpop.f32.mrb[0].mxu0
      %v3033 = vadd.f32 %v2788, %v3032
      %v3034 = vpop.f32.mrb[0].mxu0
      %3035 = vmatprep.mubr.f32.mxu0 %v1817
      %3036 = vmatmul.mubr.f32.gmra.mrb[0].mxu0 %v1816
      %v3037 = vpop.f32.mrb[0].mxu0
      %v3038 = vadd.f32 %v2793, %v3037
      %v3039 = vpop.f32.mrb[0].mxu0
      %3040 = vmatprep.mubr.f32.mxu0 %v1826
      %3041 = vmatmul.mubr.f32.gmra.mrb[0].mxu0 %v1825
      %v3042 = vpop.f32.mrb[0].mxu0
      %v3043 = vadd.f32 %v2798, %v3042
      %v3044 = vpop.f32.mrb[0].mxu0
      %3045 = vmatprep.mubr.f32.mxu0 %v1835
      %3046 = vmatmul.mubr.f32.gmra.mrb[0].mxu0 %v1834
      %v3047 = vpop.f32.mrb[0].mxu0
      %v3048 = vadd.f32 %v2803, %v3047
      %v3049 = vpop.f32.mrb[0].mxu0
      %3050 = vmatprep.mubr.f32.mxu0 %v1844
      %3051 = vmatmul.mubr.f32.gmra.mrb[0].mxu0 %v1843
      %v3052 = vpop.f32.mrb[0].mxu0
      %v3053 = vadd.f32 %v2808, %v3052
      %v3054 = vpop.f32.mrb[0].mxu0
      %3055 = vmatprep.mubr.f32.mxu0 %v1853
      %3056 = vmatmul.mubr.f32.gmra.mrb[0].mxu0 %v1852
      %v3057 = vpop.f32.mrb[0].mxu0
      %v3058 = vadd.f32 %v2813, %v3057
      %v3059 = vpop.f32.mrb[0].mxu0
      %3060 = vmatprep.mubr.f32.mxu0 %v1862
      %3061 = vmatmul.mubr.f32.gmra.mrb[0].mxu0 %v1861
      %v3062 = vpop.f32.mrb[0].mxu0
      %v3063 = vadd.f32 %v2818, %v3062
      %v3064 = vpop.f32.mrb[0].mxu0
      %3065 = vmatprep.mubr.f32.mxu0 %v1871
      %3066 = vmatmul.mubr.f32.gmra.mrb[0].mxu0 %v1870
      %v3067 = vpop.f32.mrb[0].mxu0
      %v3068 = vadd.f32 %v2823, %v3067
      %v3069 = vpop.f32.mrb[0].mxu0
      %3070 = vmatprep.mubr.f32.mxu0 %v1880
      %3071 = vmatmul.mubr.f32.gmra.mrb[0].mxu0 %v1879
      %v3072 = vpop.f32.mrb[0].mxu0
      %v3073 = vadd.f32 %v2828, %v3072
      %v3074 = vpop.f32.mrb[0].mxu0
      %3075 = vmatprep.mubr.f32.mxu0 %v1889
      %3076 = vmatmul.mubr.f32.gmra.mrb[0].mxu0 %v1888
      %v3077 = vpop.f32.mrb[0].mxu0
      %v3078 = vadd.f32 %v2833, %v3077
      %v3079 = vpop.f32.mrb[0].mxu0
      %3080 = vmatprep.mubr.f32.mxu0 %v1898
      %3081 = vmatmul.mubr.f32.gmra.mrb[0].mxu0 %v1897
      %v3082 = vpop.f32.mrb[0].mxu0
      %v3083 = vadd.f32 %v2838, %v3082
      %v3084 = vpop.f32.mrb[0].mxu0
      %3085 = vmatprep.mubr.f32.mxu0 %v1907
      %3086 = vmatmul.mubr.f32.gmra.mrb[0].mxu0 %v1906
      %v3087 = vpop.f32.mrb[0].mxu0
      %v3088 = vadd.f32 %v2843, %v3087
      %v3089 = vpop.f32.mrb[0].mxu0
      %3090 = vmatprep.mubr.f32.mxu0 %v1916
      %3091 = vmatmul.mubr.f32.gmra.mrb[0].mxu0 %v1915
      %v3092 = vpop.f32.mrb[0].mxu0
      %v3093 = vadd.f32 %v2848, %v3092
      %v3094 = vpop.f32.mrb[0].mxu0
      %3095 = vmatprep.mubr.f32.mxu0 %v1925
      %3096 = vmatmul.mubr.f32.gmra.mrb[0].mxu0 %v1924
      %v3097 = vpop.f32.mrb[0].mxu0
      %v3098 = vadd.f32 %v2853, %v3097
      %v3099 = vpop.f32.mrb[0].mxu0
      %3100 = vmatprep.mubr.f32.mxu0 %v1934
      %3101 = vmatmul.mubr.f32.gmra.mrb[0].mxu0 %v1933
      %v3102 = vpop.f32.mrb[0].mxu0
      %v3103 = vadd.f32 %v2858, %v3102
      %v3104 = vpop.f32.mrb[0].mxu0
      %3105 = vmatprep.mubr.f32.mxu0 %v1943
      %3106 = vmatmul.mubr.f32.gmra.mrb[0].mxu0 %v1942
      %v3107 = vpop.f32.mrb[0].mxu0
      %v3108 = vadd.f32 %v2863, %v3107
      %v3109 = vpop.f32.mrb[0].mxu0
      %3110 = vmatprep.mubr.f32.mxu0 %v1952
      %3111 = vmatmul.mubr.f32.gmra.mrb[0].mxu0 %v1951
      %v3112 = vpop.f32.mrb[0].mxu0
      %v3113 = vadd.f32 %v2868, %v3112
      %v3114 = vpop.f32.mrb[0].mxu0
      %3115 = vmatprep.mubr.f32.mxu0 %v1961
      %3116 = vmatmul.mubr.f32.gmra.mrb[0].mxu0 %v1960
      %v3117 = vpop.f32.mrb[0].mxu0
      %v3118 = vadd.f32 %v2873, %v3117
      %v3119 = vpop.f32.mrb[0].mxu0
      %3120 = vmatprep.mubr.f32.mxu0 %v1970
      %3121 = vmatmul.mubr.f32.gmra.mrb[0].mxu0 %v1969
      %v3122 = vpop.f32.mrb[0].mxu0
      %v3123 = vadd.f32 %v2878, %v3122
      %v3124 = vpop.f32.mrb[0].mxu0
      %3125 = vmatprep.mubr.f32.mxu0 %v1979
      %3126 = vmatmul.mubr.f32.gmra.mrb[0].mxu0 %v1978
      %v3127 = vpop.f32.mrb[0].mxu0
      %v3128 = vadd.f32 %v2883, %v3127
      %v3129 = vpop.f32.mrb[0].mxu0
      %3130 = vmatprep.mubr.f32.mxu0 %v1988
      %3131 = vmatmul.mubr.f32.gmra.mrb[0].mxu0 %v1987
      %v3132 = vpop.f32.mrb[0].mxu0
      %v3133 = vadd.f32 %v2888, %v3132
      %v3134 = vpop.f32.mrb[0].mxu0
      %3135 = vmatprep.mubr.f32.mxu0 %v1997
      %3136 = vmatmul.mubr.f32.gmra.mrb[0].mxu0 %v1996
      %v3137 = vpop.f32.mrb[0].mxu0
      %v3138 = vadd.f32 %v2893, %v3137
      %v3139 = vpop.f32.mrb[0].mxu0
      %3140 = vmatprep.mubr.f32.mxu0 %v2006
      %3141 = vmatmul.mubr.f32.gmra.mrb[0].mxu0 %v2005
      %v3142 = vpop.f32.mrb[0].mxu0
      %v3143 = vadd.f32 %v2898, %v3142
      %v3144 = vpop.f32.mrb[0].mxu0
      %3145 = vmatprep.mubr.f32.mxu0 %v2015
      %3146 = vmatmul.mubr.f32.gmra.mrb[0].mxu0 %v2014
      %v3147 = vpop.f32.mrb[0].mxu0
      %v3148 = vadd.f32 %v2903, %v3147
      %v3149 = vpop.f32.mrb[0].mxu0
      %3150 = vmatprep.mubr.f32.mxu0 %v2024
      %3151 = vmatmul.mubr.f32.gmra.mrb[0].mxu0 %v2023
      %v3152 = vpop.f32.mrb[0].mxu0
      %v3153 = vadd.f32 %v2908, %v3152
      %v3154 = vpop.f32.mrb[0].mxu0
      %3155 = vdwg.mxu0
      %3156 = vmatprep.subr.mxu0 0.0
      %3157 = vmatpush1.msra.mxu0 %v2154
      %3158 = vmatprep.subr.mxu0 0.0
      %3159 = vmatpush1.msra.mxu0 %v2155
      %3160 = vmatprep.subr.mxu0 0.0
      %3161 = vmatpush1.msra.mxu0 %v2156
      %3162 = vmatprep.subr.mxu0 0.0
      %3163 = vmatpush1.msra.mxu0 %v2157
      %3164 = vmatprep.subr.mxu0 0.0
      %3165 = vmatpush1.msra.mxu0 %v2158
      %3166 = vmatprep.subr.mxu0 0.0
      %3167 = vmatpush1.msra.mxu0 %v2159
      %3168 = vmatprep.subr.mxu0 0.0
      %3169 = vmatpush1.msra.mxu0 %v2160
      %3170 = vmatprep.subr.mxu0 0.0
      %3171 = vmatpush1.msra.mxu0 %v2161
      %3172 = vmatprep.subr.mxu0 0.0
      %3173 = vmatpush1.msra.mxu0 %v2162
      %3174 = vmatprep.subr.mxu0 0.0
      %3175 = vmatpush1.msra.mxu0 %v2163
      %3176 = vmatprep.subr.mxu0 0.0
      %3177 = vmatpush1.msra.mxu0 %v2164
      %3178 = vmatprep.subr.mxu0 0.0
      %3179 = vmatpush1.msra.mxu0 %v2165
      %3180 = vmatprep.subr.mxu0 0.0
      %3181 = vmatpush1.msra.mxu0 %v2166
      %3182 = vmatprep.subr.mxu0 0.0
      %3183 = vmatpush1.msra.mxu0 %v2167
      %3184 = vmatprep.subr.mxu0 0.0
      %3185 = vmatpush1.msra.mxu0 %v2168
      %3186 = vmatprep.subr.mxu0 0.0
      %3187 = vmatpush1.msra.mxu0 %v2169
      %3188 = vmatprep.subr.mxu0 0.0
      %3189 = vmatpush1.msra.mxu0 0.0
      %3190 = vmatprep.subr.mxu0 0.0
      %3191 = vmatpush1.msra.mxu0 0.0
      %3192 = vmatprep.subr.mxu0 0.0
      %3193 = vmatpush1.msra.mxu0 0.0
      %3194 = vmatprep.subr.mxu0 0.0
      %3195 = vmatpush1.msra.mxu0 0.0
      %3196 = vmatprep.subr.mxu0 0.0
      %3197 = vmatpush1.msra.mxu0 0.0
      %3198 = vmatprep.subr.mxu0 0.0
      %3199 = vmatpush1.msra.mxu0 0.0
      %3200 = vmatprep.subr.mxu0 0.0
      %3201 = vmatpush1.msra.mxu0 0.0
      %3202 = vmatprep.subr.mxu0 0.0
      %3203 = vmatpush1.msra.mxu0 0.0
      %3204 = vmatprep.subr.mxu0 0.0
      %3205 = vmatpush1.msra.mxu0 0.0
      %3206 = vmatprep.subr.mxu0 0.0
      %3207 = vmatpush1.msra.mxu0 0.0
      %3208 = vmatprep.subr.mxu0 0.0
      %3209 = vmatpush1.msra.mxu0 0.0
      %3210 = vmatprep.subr.mxu0 0.0
      %3211 = vmatpush1.msra.mxu0 0.0
      %3212 = vmatprep.subr.mxu0 0.0
      %3213 = vmatpush1.msra.mxu0 0.0
      %3214 = vmatprep.subr.mxu0 0.0
      %3215 = vmatpush1.msra.mxu0 0.0
      %3216 = vmatprep.subr.mxu0 0.0
      %3217 = vmatpush1.msra.mxu0 0.0
      %3218 = vmatprep.subr.mxu0 0.0
      %3219 = vmatpush1.msra.mxu0 0.0
      %3220 = vmatprep.mubr.f32.mxu0 0.0
      %3221 = vmatmul.mubr.f32.gmra.mrb[0].mxu0 %v1710
      %v3222 = vpop.f32.mrb[0].mxu0
      %v3223 = vadd.f32 %v2978, %v3222
      %v3224 = vpop.f32.mrb[0].mxu0
      %3225 = vmatprep.mubr.f32.mxu0 0.0
      %3226 = vmatmul.mubr.f32.gmra.mrb[0].mxu0 %v1719
      %v3227 = vpop.f32.mrb[0].mxu0
      %v3228 = vadd.f32 %v2983, %v3227
      %v3229 = vpop.f32.mrb[0].mxu0
      %3230 = vmatprep.mubr.f32.mxu0 0.0
      %3231 = vmatmul.mubr.f32.gmra.mrb[0].mxu0 %v1728
      %v3232 = vpop.f32.mrb[0].mxu0
      %v3233 = vadd.f32 %v2988, %v3232
      %v3234 = vpop.f32.mrb[0].mxu0
      %3235 = vmatprep.mubr.f32.mxu0 0.0
      %3236 = vmatmul.mubr.f32.gmra.mrb[0].mxu0 %v1737
      %v3237 = vpop.f32.mrb[0].mxu0
      %v3238 = vadd.f32 %v2993, %v3237
      %v3239 = vpop.f32.mrb[0].mxu0
      %3240 = vmatprep.mubr.f32.mxu0 0.0
      %3241 = vmatmul.mubr.f32.gmra.mrb[0].mxu0 %v1746
      %v3242 = vpop.f32.mrb[0].mxu0
      %v3243 = vadd.f32 %v2998, %v3242
      %v3244 = vpop.f32.mrb[0].mxu0
      %3245 = vmatprep.mubr.f32.mxu0 0.0
      %3246 = vmatmul.mubr.f32.gmra.mrb[0].mxu0 %v1755
      %v3247 = vpop.f32.mrb[0].mxu0
      %v3248 = vadd.f32 %v3003, %v3247
      %v3249 = vpop.f32.mrb[0].mxu0
      %3250 = vmatprep.mubr.f32.mxu0 0.0
      %3251 = vmatmul.mubr.f32.gmra.mrb[0].mxu0 %v1764
      %v3252 = vpop.f32.mrb[0].mxu0
      %v3253 = vadd.f32 %v3008, %v3252
      %v3254 = vpop.f32.mrb[0].mxu0
      %3255 = vmatprep.mubr.f32.mxu0 0.0
      %3256 = vmatmul.mubr.f32.gmra.mrb[0].mxu0 %v1773
      %v3257 = vpop.f32.mrb[0].mxu0
      %v3258 = vadd.f32 %v3013, %v3257
      %v3259 = vpop.f32.mrb[0].mxu0
      %3260 = vmatprep.mubr.f32.mxu0 0.0
      %3261 = vmatmul.mubr.f32.gmra.mrb[0].mxu0 %v1782
      %v3262 = vpop.f32.mrb[0].mxu0
      %v3263 = vadd.f32 %v3018, %v3262
      %v3264 = vpop.f32.mrb[0].mxu0
      %3265 = vmatprep.mubr.f32.mxu0 0.0
      %3266 = vmatmul.mubr.f32.gmra.mrb[0].mxu0 %v1791
      %v3267 = vpop.f32.mrb[0].mxu0
      %v3268 = vadd.f32 %v3023, %v3267
      %v3269 = vpop.f32.mrb[0].mxu0
      %3270 = vmatprep.mubr.f32.mxu0 0.0
      %3271 = vmatmul.mubr.f32.gmra.mrb[0].mxu0 %v1800
      %v3272 = vpop.f32.mrb[0].mxu0
      %v3273 = vadd.f32 %v3028, %v3272
      %v3274 = vpop.f32.mrb[0].mxu0
      %3275 = vmatprep.mubr.f32.mxu0 0.0
      %3276 = vmatmul.mubr.f32.gmra.mrb[0].mxu0 %v1809
      %v3277 = vpop.f32.mrb[0].mxu0
      %v3278 = vadd.f32 %v3033, %v3277
      %v3279 = vpop.f32.mrb[0].mxu0
      %3280 = vmatprep.mubr.f32.mxu0 0.0
      %3281 = vmatmul.mubr.f32.gmra.mrb[0].mxu0 %v1818
      %v3282 = vpop.f32.mrb[0].mxu0
      %v3283 = vadd.f32 %v3038, %v3282
      %v3284 = vpop.f32.mrb[0].mxu0
      %3285 = vmatprep.mubr.f32.mxu0 0.0
      %3286 = vmatmul.mubr.f32.gmra.mrb[0].mxu0 %v1827
      %v3287 = vpop.f32.mrb[0].mxu0
      %v3288 = vadd.f32 %v3043, %v3287
      %v3289 = vpop.f32.mrb[0].mxu0
      %3290 = vmatprep.mubr.f32.mxu0 0.0
      %3291 = vmatmul.mubr.f32.gmra.mrb[0].mxu0 %v1836
      %v3292 = vpop.f32.mrb[0].mxu0
      %v3293 = vadd.f32 %v3048, %v3292
      %v3294 = vpop.f32.mrb[0].mxu0
      %3295 = vmatprep.mubr.f32.mxu0 0.0
      %3296 = vmatmul.mubr.f32.gmra.mrb[0].mxu0 %v1845
      %v3297 = vpop.f32.mrb[0].mxu0
      %v3298 = vadd.f32 %v3053, %v3297
      %v3299 = vpop.f32.mrb[0].mxu0
      %3300 = vmatprep.mubr.f32.mxu0 0.0
      %3301 = vmatmul.mubr.f32.gmra.mrb[0].mxu0 %v1854
      %v3302 = vpop.f32.mrb[0].mxu0
      %v3303 = vadd.f32 %v3058, %v3302
      %v3304 = vpop.f32.mrb[0].mxu0
      %3305 = vmatprep.mubr.f32.mxu0 0.0
      %3306 = vmatmul.mubr.f32.gmra.mrb[0].mxu0 %v1863
      %v3307 = vpop.f32.mrb[0].mxu0
      %v3308 = vadd.f32 %v3063, %v3307
      %v3309 = vpop.f32.mrb[0].mxu0
      %3310 = vmatprep.mubr.f32.mxu0 0.0
      %3311 = vmatmul.mubr.f32.gmra.mrb[0].mxu0 %v1872
      %v3312 = vpop.f32.mrb[0].mxu0
      %v3313 = vadd.f32 %v3068, %v3312
      %v3314 = vpop.f32.mrb[0].mxu0
      %3315 = vmatprep.mubr.f32.mxu0 0.0
      %3316 = vmatmul.mubr.f32.gmra.mrb[0].mxu0 %v1881
      %v3317 = vpop.f32.mrb[0].mxu0
      %v3318 = vadd.f32 %v3073, %v3317
      %v3319 = vpop.f32.mrb[0].mxu0
      %3320 = vmatprep.mubr.f32.mxu0 0.0
      %3321 = vmatmul.mubr.f32.gmra.mrb[0].mxu0 %v1890
      %v3322 = vpop.f32.mrb[0].mxu0
      %v3323 = vadd.f32 %v3078, %v3322
      %v3324 = vpop.f32.mrb[0].mxu0
      %3325 = vmatprep.mubr.f32.mxu0 0.0
      %3326 = vmatmul.mubr.f32.gmra.mrb[0].mxu0 %v1899
      %v3327 = vpop.f32.mrb[0].mxu0
      %v3328 = vadd.f32 %v3083, %v3327
      %v3329 = vpop.f32.mrb[0].mxu0
      %3330 = vmatprep.mubr.f32.mxu0 0.0
      %3331 = vmatmul.mubr.f32.gmra.mrb[0].mxu0 %v1908
      %v3332 = vpop.f32.mrb[0].mxu0
      %v3333 = vadd.f32 %v3088, %v3332
      %v3334 = vpop.f32.mrb[0].mxu0
      %3335 = vmatprep.mubr.f32.mxu0 0.0
      %3336 = vmatmul.mubr.f32.gmra.mrb[0].mxu0 %v1917
      %v3337 = vpop.f32.mrb[0].mxu0
      %v3338 = vadd.f32 %v3093, %v3337
      %v3339 = vpop.f32.mrb[0].mxu0
      %3340 = vmatprep.mubr.f32.mxu0 0.0
      %3341 = vmatmul.mubr.f32.gmra.mrb[0].mxu0 %v1926
      %v3342 = vpop.f32.mrb[0].mxu0
      %v3343 = vadd.f32 %v3098, %v3342
      %v3344 = vpop.f32.mrb[0].mxu0
      %3345 = vmatprep.mubr.f32.mxu0 0.0
      %3346 = vmatmul.mubr.f32.gmra.mrb[0].mxu0 %v1935
      %v3347 = vpop.f32.mrb[0].mxu0
      %v3348 = vadd.f32 %v3103, %v3347
      %v3349 = vpop.f32.mrb[0].mxu0
      %3350 = vmatprep.mubr.f32.mxu0 0.0
      %3351 = vmatmul.mubr.f32.gmra.mrb[0].mxu0 %v1944
      %v3352 = vpop.f32.mrb[0].mxu0
      %v3353 = vadd.f32 %v3108, %v3352
      %v3354 = vpop.f32.mrb[0].mxu0
      %3355 = vmatprep.mubr.f32.mxu0 0.0
      %3356 = vmatmul.mubr.f32.gmra.mrb[0].mxu0 %v1953
      %v3357 = vpop.f32.mrb[0].mxu0
      %v3358 = vadd.f32 %v3113, %v3357
      %v3359 = vpop.f32.mrb[0].mxu0
      %3360 = vmatprep.mubr.f32.mxu0 0.0
      %3361 = vmatmul.mubr.f32.gmra.mrb[0].mxu0 %v1962
      %v3362 = vpop.f32.mrb[0].mxu0
      %v3363 = vadd.f32 %v3118, %v3362
      %v3364 = vpop.f32.mrb[0].mxu0
      %3365 = vmatprep.mubr.f32.mxu0 0.0
      %3366 = vmatmul.mubr.f32.gmra.mrb[0].mxu0 %v1971
      %v3367 = vpop.f32.mrb[0].mxu0
      %v3368 = vadd.f32 %v3123, %v3367
      %v3369 = vpop.f32.mrb[0].mxu0
      %3370 = vmatprep.mubr.f32.mxu0 0.0
      %3371 = vmatmul.mubr.f32.gmra.mrb[0].mxu0 %v1980
      %v3372 = vpop.f32.mrb[0].mxu0
      %v3373 = vadd.f32 %v3128, %v3372
      %v3374 = vpop.f32.mrb[0].mxu0
      %3375 = vmatprep.mubr.f32.mxu0 0.0
      %3376 = vmatmul.mubr.f32.gmra.mrb[0].mxu0 %v1989
      %v3377 = vpop.f32.mrb[0].mxu0
      %v3378 = vadd.f32 %v3133, %v3377
      %v3379 = vpop.f32.mrb[0].mxu0
      %3380 = vmatprep.mubr.f32.mxu0 0.0
      %3381 = vmatmul.mubr.f32.gmra.mrb[0].mxu0 %v1998
      %v3382 = vpop.f32.mrb[0].mxu0
      %v3383 = vadd.f32 %v3138, %v3382
      %v3384 = vpop.f32.mrb[0].mxu0
      %3385 = vmatprep.mubr.f32.mxu0 0.0
      %3386 = vmatmul.mubr.f32.gmra.mrb[0].mxu0 %v2007
      %v3387 = vpop.f32.mrb[0].mxu0
      %v3388 = vadd.f32 %v3143, %v3387
      %v3389 = vpop.f32.mrb[0].mxu0
      %3390 = vmatprep.mubr.f32.mxu0 0.0
      %3391 = vmatmul.mubr.f32.gmra.mrb[0].mxu0 %v2016
      %v3392 = vpop.f32.mrb[0].mxu0
      %v3393 = vadd.f32 %v3148, %v3392
      %v3394 = vpop.f32.mrb[0].mxu0
      %3395 = vmatprep.mubr.f32.mxu0 0.0
      %3396 = vmatmul.mubr.f32.gmra.mrb[0].mxu0 %v2025
      %v3397 = vpop.f32.mrb[0].mxu0
      %v3398 = vadd.f32 %v3153, %v3397
      %v3399 = vpop.f32.mrb[0].mxu0
      %3400 = vdwg.mxu0
      %v3401 = vmax.f32 %v3223, 0.0
      %v3402 = vmax.f32 %v3228, 0.0
      %v3403 = vmax.f32 %v3233, 0.0
      %v3404 = vmax.f32 %v3238, 0.0
      %v3405 = vmax.f32 %v3243, 0.0
      %v3406 = vmax.f32 %v3248, 0.0
      %v3407 = vmax.f32 %v3253, 0.0
      %v3408 = vmax.f32 %v3258, 0.0
      %v3409 = vmax.f32 %v3263, 0.0
      %v3410 = vmax.f32 %v3268, 0.0
      %v3411 = vmax.f32 %v3273, 0.0
      %v3412 = vmax.f32 %v3278, 0.0
      %v3413 = vmax.f32 %v3283, 0.0
      %v3414 = vmax.f32 %v3288, 0.0
      %v3415 = vmax.f32 %v3293, 0.0
      %v3416 = vmax.f32 %v3298, 0.0
      %v3417 = vmax.f32 %v3303, 0.0
      %v3418 = vmax.f32 %v3308, 0.0
      %v3419 = vmax.f32 %v3313, 0.0
      %v3420 = vmax.f32 %v3318, 0.0
      %v3421 = vmax.f32 %v3323, 0.0
      %v3422 = vmax.f32 %v3328, 0.0
      %v3423 = vmax.f32 %v3333, 0.0
      %v3424 = vmax.f32 %v3338, 0.0
      %v3425 = vmax.f32 %v3343, 0.0
      %v3426 = vmax.f32 %v3348, 0.0
      %v3427 = vmax.f32 %v3353, 0.0
      %v3428 = vmax.f32 %v3358, 0.0
      %v3429 = vmax.f32 %v3363, 0.0
      %v3430 = vmax.f32 %v3368, 0.0
      %v3431 = vmax.f32 %v3373, 0.0
      %v3432 = vmax.f32 %v3378, 0.0
      %v3433 = vmax.f32 %v3383, 0.0
      %v3434 = vmax.f32 %v3388, 0.0
      %v3435 = vmax.f32 %v3393, 0.0
      %v3436 = vmax.f32 %v3398, 0.0
      %v3437 = vsel %vm230, 1, 0
      %vm3438 = vcmp.eq.s32.totalorder %v3437, 1
      %v3439 = vsel %vm3438, %v3401, %v3223
      %v3440 = vsel %vm3438, %v3402, %v3228
      %v3441 = vsel %vm3438, %v3403, %v3233
      %v3442 = vsel %vm3438, %v3404, %v3238
      %v3443 = vsel %vm3438, %v3405, %v3243
      %v3444 = vsel %vm3438, %v3406, %v3248
      %v3445 = vsel %vm3438, %v3407, %v3253
      %v3446 = vsel %vm3438, %v3408, %v3258
      %v3447 = vsel %vm3438, %v3409, %v3263
      %v3448 = vsel %vm3438, %v3410, %v3268
      %v3449 = vsel %vm3438, %v3411, %v3273
      %v3450 = vsel %vm3438, %v3412, %v3278
      %v3451 = vsel %vm3438, %v3413, %v3283
      %v3452 = vsel %vm3438, %v3414, %v3288
      %v3453 = vsel %vm3438, %v3415, %v3293
      %v3454 = vsel %vm3438, %v3416, %v3298
      %v3455 = vsel %vm3438, %v3417, %v3303
      %v3456 = vsel %vm3438, %v3418, %v3308
      %v3457 = vsel %vm3438, %v3419, %v3313
      %v3458 = vsel %vm3438, %v3420, %v3318
      %v3459 = vsel %vm3438, %v3421, %v3323
      %v3460 = vsel %vm3438, %v3422, %v3328
      %v3461 = vsel %vm3438, %v3423, %v3333
      %v3462 = vsel %vm3438, %v3424, %v3338
      %v3463 = vsel %vm3438, %v3425, %v3343
      %v3464 = vsel %vm3438, %v3426, %v3348
      %v3465 = vsel %vm3438, %v3427, %v3353
      %v3466 = vsel %vm3438, %v3428, %v3358
      %v3467 = vsel %vm3438, %v3429, %v3363
      %v3468 = vsel %vm3438, %v3430, %v3368
      %v3469 = vsel %vm3438, %v3431, %v3373
      %v3470 = vsel %vm3438, %v3432, %v3378
      %v3471 = vsel %vm3438, %v3433, %v3383
      %v3472 = vsel %vm3438, %v3434, %v3388
      %v3473 = vsel %vm3438, %v3435, %v3393
      %v3474 = vsel %vm3438, %v3436, %v3398
      %v3475 = vsel %vm844, 1, 0
      %v3476 = vsel %vm845, 1, 0
      %v3477 = vsel %vm846, 1, 0
      %v3478 = vsel %vm847, 1, 0
      %v3479 = vsel %vm848, 1, 0
      %v3480 = vsel %vm849, 1, 0
      %v3481 = vsel %vm850, 1, 0
      %v3482 = vsel %vm851, 1, 0
      %v3483 = vsel %vm852, 1, 0
      %v3484 = vsel %vm853, 1, 0
      %v3485 = vsel %vm854, 1, 0
      %v3486 = vsel %vm855, 1, 0
      %v3487 = vsel %vm856, 1, 0
      %v3488 = vsel %vm857, 1, 0
      %v3489 = vsel %vm858, 1, 0
      %v3490 = vsel %vm859, 1, 0
      %v3491 = vsel %vm860, 1, 0
      %v3492 = vsel %vm861, 1, 0
      %v3493 = vsel %vm862, 1, 0
      %v3494 = vsel %vm863, 1, 0
      %v3495 = vsel %vm864, 1, 0
      %v3496 = vsel %vm865, 1, 0
      %v3497 = vsel %vm866, 1, 0
      %v3498 = vsel %vm867, 1, 0
      %v3499 = vsel %vm868, 1, 0
      %v3500 = vsel %vm869, 1, 0
      %v3501 = vsel %vm870, 1, 0
      %v3502 = vsel %vm871, 1, 0
      %v3503 = vsel %vm872, 1, 0
      %v3504 = vsel %vm873, 1, 0
      %v3505 = vsel %vm874, 1, 0
      %v3506 = vsel %vm875, 1, 0
      %v3507 = vsel %vm876, 1, 0
      %v3508 = vsel %vm877, 1, 0
      %v3509 = vsel %vm878, 1, 0
      %v3510 = vsel %vm879, 1, 0
      %vm3511 = vcmp.eq.s32.totalorder %v3475, 1
      %vm3512 = vcmp.eq.s32.totalorder %v3476, 1
      %vm3513 = vcmp.eq.s32.totalorder %v3477, 1
      %vm3514 = vcmp.eq.s32.totalorder %v3478, 1
      %vm3515 = vcmp.eq.s32.totalorder %v3479, 1
      %vm3516 = vcmp.eq.s32.totalorder %v3480, 1
      %vm3517 = vcmp.eq.s32.totalorder %v3481, 1
      %vm3518 = vcmp.eq.s32.totalorder %v3482, 1
      %vm3519 = vcmp.eq.s32.totalorder %v3483, 1
      %vm3520 = vcmp.eq.s32.totalorder %v3484, 1
      %vm3521 = vcmp.eq.s32.totalorder %v3485, 1
      %vm3522 = vcmp.eq.s32.totalorder %v3486, 1
      %vm3523 = vcmp.eq.s32.totalorder %v3487, 1
      %vm3524 = vcmp.eq.s32.totalorder %v3488, 1
      %vm3525 = vcmp.eq.s32.totalorder %v3489, 1
      %vm3526 = vcmp.eq.s32.totalorder %v3490, 1
      %vm3527 = vcmp.eq.s32.totalorder %v3491, 1
      %vm3528 = vcmp.eq.s32.totalorder %v3492, 1
      %vm3529 = vcmp.eq.s32.totalorder %v3493, 1
      %vm3530 = vcmp.eq.s32.totalorder %v3494, 1
      %vm3531 = vcmp.eq.s32.totalorder %v3495, 1
      %vm3532 = vcmp.eq.s32.totalorder %v3496, 1
      %vm3533 = vcmp.eq.s32.totalorder %v3497, 1
      %vm3534 = vcmp.eq.s32.totalorder %v3498, 1
      %vm3535 = vcmp.eq.s32.totalorder %v3499, 1
      %vm3536 = vcmp.eq.s32.totalorder %v3500, 1
      %vm3537 = vcmp.eq.s32.totalorder %v3501, 1
      %vm3538 = vcmp.eq.s32.totalorder %v3502, 1
      %vm3539 = vcmp.eq.s32.totalorder %v3503, 1
      %vm3540 = vcmp.eq.s32.totalorder %v3504, 1
      %vm3541 = vcmp.eq.s32.totalorder %v3505, 1
      %vm3542 = vcmp.eq.s32.totalorder %v3506, 1
      %vm3543 = vcmp.eq.s32.totalorder %v3507, 1
      %vm3544 = vcmp.eq.s32.totalorder %v3508, 1
      %vm3545 = vcmp.eq.s32.totalorder %v3509, 1
      %vm3546 = vcmp.eq.s32.totalorder %v3510, 1
      %v3547 = vsel %vm3511, %v3439, 0.0
      %v3548 = vsel %vm3512, %v3440, 0.0
      %v3549 = vsel %vm3513, %v3441, 0.0
      %v3550 = vsel %vm3514, %v3442, 0.0
      %v3551 = vsel %vm3515, %v3443, 0.0
      %v3552 = vsel %vm3516, %v3444, 0.0
      %v3553 = vsel %vm3517, %v3445, 0.0
      %v3554 = vsel %vm3518, %v3446, 0.0
      %v3555 = vsel %vm3519, %v3447, 0.0
      %v3556 = vsel %vm3520, %v3448, 0.0
      %v3557 = vsel %vm3521, %v3449, 0.0
      %v3558 = vsel %vm3522, %v3450, 0.0
      %v3559 = vsel %vm3523, %v3451, 0.0
      %v3560 = vsel %vm3524, %v3452, 0.0
      %v3561 = vsel %vm3525, %v3453, 0.0
      %v3562 = vsel %vm3526, %v3454, 0.0
      %v3563 = vsel %vm3527, %v3455, 0.0
      %v3564 = vsel %vm3528, %v3456, 0.0
      %v3565 = vsel %vm3529, %v3457, 0.0
      %v3566 = vsel %vm3530, %v3458, 0.0
      %v3567 = vsel %vm3531, %v3459, 0.0
      %v3568 = vsel %vm3532, %v3460, 0.0
      %v3569 = vsel %vm3533, %v3461, 0.0
      %v3570 = vsel %vm3534, %v3462, 0.0
      %v3571 = vsel %vm3535, %v3463, 0.0
      %v3572 = vsel %vm3536, %v3464, 0.0
      %v3573 = vsel %vm3537, %v3465, 0.0
      %v3574 = vsel %vm3538, %v3466, 0.0
      %v3575 = vsel %vm3539, %v3467, 0.0
      %v3576 = vsel %vm3540, %v3468, 0.0
      %v3577 = vsel %vm3541, %v3469, 0.0
      %v3578 = vsel %vm3542, %v3470, 0.0
      %v3579 = vsel %vm3543, %v3471, 0.0
      %v3580 = vsel %vm3544, %v3472, 0.0
      %v3581 = vsel %vm3545, %v3473, 0.0
      %v3582 = vsel %vm3546, %v3474, 0.0
      %3583 = vst [vmem:[#allocation4 + $0x13] sm:$0xff] %v3547
      %3584 = vst [vmem:[#allocation4 + $0x1b] sm:$0xff] %v3548
      %3585 = vst [vmem:[#allocation4 + $0x23] sm:$0xff] %v3549
      %3586 = vst [vmem:[#allocation4 + $0x2b] sm:$0xff] %v3550
      %3587 = vst [vmem:[#allocation4 + $0x33] sm:$0xff] %v3551
      %3588 = vst [vmem:[#allocation4 + $0x3b] sm:$0xff] %v3552
      %3589 = vst [vmem:[#allocation4 + $0x43] sm:$0xff] %v3553
      %3590 = vst [vmem:[#allocation4 + $0x4b] sm:$0xff] %v3554
      %3591 = vst [vmem:[#allocation4 + $0x53] sm:$0xff] %v3555
      %3592 = vst [vmem:[#allocation4 + $0x5b] sm:$0xff] %v3556
      %3593 = vst [vmem:[#allocation4 + $0x63] sm:$0xff] %v3557
      %3594 = vst [vmem:[#allocation4 + $0x6b] sm:$0xff] %v3558
      %3595 = vst [vmem:[#allocation4 + $0x73] sm:$0xff] %v3559
      %3596 = vst [vmem:[#allocation4 + $0x7b] sm:$0xff] %v3560
      %3597 = vst [vmem:[#allocation4 + $0x83] sm:$0xff] %v3561
      %3598 = vst [vmem:[#allocation4 + $0x8b] sm:$0xff] %v3562
      %3599 = vst [vmem:[#allocation4 + $0x93] sm:$0xff] %v3563
      %3600 = vst [vmem:[#allocation4 + $0x9b] sm:$0xff] %v3564
      %3601 = vst [vmem:[#allocation4 + $0xa3] sm:$0xff] %v3565
      %3602 = vst [vmem:[#allocation4 + $0xab] sm:$0xff] %v3566
      %3603 = vst [vmem:[#allocation4 + $0xb3] sm:$0xff] %v3567
      %3604 = vst [vmem:[#allocation4 + $0xbb] sm:$0xff] %v3568
      %3605 = vst [vmem:[#allocation4 + $0xc3] sm:$0xff] %v3569
      %3606 = vst [vmem:[#allocation4 + $0xcb] sm:$0xff] %v3570
      %3607 = vst [vmem:[#allocation4 + $0xd3] sm:$0xff] %v3571
      %3608 = vst [vmem:[#allocation4 + $0xdb] sm:$0xff] %v3572
      %3609 = vst [vmem:[#allocation4 + $0xe3] sm:$0xff] %v3573
      %3610 = vst [vmem:[#allocation4 + $0xeb] sm:$0xff] %v3574
      %3611 = vst [vmem:[#allocation4 + $0xf3] sm:$0xff] %v3575
      %3612 = vst [vmem:[#allocation4 + $0xfb] sm:$0xff] %v3576
      %3613 = vst [vmem:[#allocation4 + $0x103] sm:$0xff] %v3577
      %3614 = vst [vmem:[#allocation4 + $0x10b] sm:$0xff] %v3578
      %3615 = vst [vmem:[#allocation4 + $0x113] sm:$0xff] %v3579
      %3616 = vst [vmem:[#allocation4 + $0x11b] sm:$0xff] %v3580
      %3617 = vst [vmem:[#allocation4 + $0x123] sm:$0xff] %v3581
      %3618 = vst [vmem:[#allocation4 + $0x12b] sm:$0xff] %v3582
      %v3619 = vld [vmem:[#allocation4] sm:$0xff]
      %v3620 = vld [vmem:[#allocation4 + $0x8] sm:$0xff]
      %v3621 = vld [vmem:[#allocation4 + $0x10] sm:$0xff]
      %v3622 = vld [vmem:[#allocation4 + $0x18] sm:$0xff]
      %v3623 = vld [vmem:[#allocation4 + $0x20] sm:$0xff]
      %v3624 = vld [vmem:[#allocation4 + $0x28] sm:$0xff]
      %v3625 = vld [vmem:[#allocation4 + $0x30] sm:$0xff]
      %v3626 = vld [vmem:[#allocation4 + $0x38] sm:$0xff]
      %v3627 = vld [vmem:[#allocation4 + $0x40] sm:$0xff]
      %v3628 = vld [vmem:[#allocation4 + $0x48] sm:$0xff]
      %v3629 = vld [vmem:[#allocation4 + $0x50] sm:$0xff]
      %v3630 = vld [vmem:[#allocation4 + $0x58] sm:$0xff]
      %v3631 = vld [vmem:[#allocation4 + $0x60] sm:$0xff]
      %v3632 = vld [vmem:[#allocation4 + $0x68] sm:$0xff]
      %v3633 = vld [vmem:[#allocation4 + $0x70] sm:$0xff]
      %v3634 = vld [vmem:[#allocation4 + $0x78] sm:$0xff]
      %v3635 = vld [vmem:[#allocation4 + $0x80] sm:$0xff]
      %v3636 = vld [vmem:[#allocation4 + $0x88] sm:$0xff]
      %v3637 = vld [vmem:[#allocation4 + $0x90] sm:$0xff]
      %v3638 = vld [vmem:[#allocation4 + $0x98] sm:$0xff]
      %v3639 = vld [vmem:[#allocation4 + $0xa0] sm:$0xff]
      %v3640 = vld [vmem:[#allocation4 + $0xa8] sm:$0xff]
      %v3641 = vld [vmem:[#allocation4 + $0xb0] sm:$0xff]
      %v3642 = vld [vmem:[#allocation4 + $0xb8] sm:$0xff]
      %v3643 = vld [vmem:[#allocation4 + $0xc0] sm:$0xff]
      %v3644 = vld [vmem:[#allocation4 + $0xc8] sm:$0xff]
      %v3645 = vld [vmem:[#allocation4 + $0xd0] sm:$0xff]
      %v3646 = vld [vmem:[#allocation4 + $0xd8] sm:$0xff]
      %v3647 = vld [vmem:[#allocation4 + $0xe0] sm:$0xff]
      %v3648 = vld [vmem:[#allocation4 + $0xe8] sm:$0xff]
      %v3649 = vld [vmem:[#allocation4 + $0xf0] sm:$0xff]
      %v3650 = vld [vmem:[#allocation4 + $0xf8] sm:$0xff]
      %v3651 = vld [vmem:[#allocation4 + $0x100] sm:$0xff]
      %v3652 = vld [vmem:[#allocation4 + $0x108] sm:$0xff]
      %v3653 = vld [vmem:[#allocation4 + $0x110] sm:$0xff]
      %v3654 = vld [vmem:[#allocation4 + $0x118] sm:$0xff]
      %3655 = vst [vmem:[#allocation5] sm:$0xff] %v3619
      %3656 = vst [vmem:[#allocation5 + $0x48] sm:$0xff] %v3620
      %3657 = vst [vmem:[#allocation5 + $0x90] sm:$0xff] %v3621
      %3658 = vst [vmem:[#allocation5 + $0xd8] sm:$0xff] %v3622
      %3659 = vst [vmem:[#allocation5 + $0x120] sm:$0xff] %v3623
      %3660 = vst [vmem:[#allocation5 + $0x168] sm:$0xff] %v3624
      %3661 = vst [vmem:[#allocation5 + $0x1b0] sm:$0xff] %v3625
      %3662 = vst [vmem:[#allocation5 + $0x1f8] sm:$0xff] %v3626
      %3663 = vst [vmem:[#allocation5 + $0x240] sm:$0xff] %v3627
      %3664 = vst [vmem:[#allocation5 + $0x288] sm:$0xff] %v3628
      %3665 = vst [vmem:[#allocation5 + $0x2d0] sm:$0xff] %v3629
      %3666 = vst [vmem:[#allocation5 + $0x318] sm:$0xff] %v3630
      %3667 = vst [vmem:[#allocation5 + $0x360] sm:$0xff] %v3631
      %3668 = vst [vmem:[#allocation5 + $0x3a8] sm:$0xff] %v3632
      %3669 = vst [vmem:[#allocation5 + $0x3f0] sm:$0xff] %v3633
      %3670 = vst [vmem:[#allocation5 + $0x438] sm:$0xff] %v3634
      %3671 = vst [vmem:[#allocation5 + $0x480] sm:$0xff] %v3635
      %3672 = vst [vmem:[#allocation5 + $0x4c8] sm:$0xff] %v3636
      %3673 = vst [vmem:[#allocation5 + $0x510] sm:$0xff] %v3637
      %3674 = vst [vmem:[#allocation5 + $0x558] sm:$0xff] %v3638
      %3675 = vst [vmem:[#allocation5 + $0x5a0] sm:$0xff] %v3639
      %3676 = vst [vmem:[#allocation5 + $0x5e8] sm:$0xff] %v3640
      %3677 = vst [vmem:[#allocation5 + $0x630] sm:$0xff] %v3641
      %3678 = vst [vmem:[#allocation5 + $0x678] sm:$0xff] %v3642
      %3679 = vst [vmem:[#allocation5 + $0x6c0] sm:$0xff] %v3643
      %3680 = vst [vmem:[#allocation5 + $0x708] sm:$0xff] %v3644
      %3681 = vst [vmem:[#allocation5 + $0x750] sm:$0xff] %v3645
      %3682 = vst [vmem:[#allocation5 + $0x798] sm:$0xff] %v3646
      %3683 = vst [vmem:[#allocation5 + $0x7e0] sm:$0xff] %v3647
      %3684 = vst [vmem:[#allocation5 + $0x828] sm:$0xff] %v3648
      %3685 = vst [vmem:[#allocation5 + $0x870] sm:$0xff] %v3649
      %3686 = vst [vmem:[#allocation5 + $0x8b8] sm:$0xff] %v3650
      %3687 = vst [vmem:[#allocation5 + $0x900] sm:$0xff] %v3651
      %3688 = vst [vmem:[#allocation5 + $0x948] sm:$0xff] %v3652
      %3689 = vst [vmem:[#allocation5 + $0x990] sm:$0xff] %v3653
      %3690 = vst [vmem:[#allocation5 + $0x9d8] sm:$0xff] %v3654
      %v3691 = vld [vmem:[#allocation4 + $0x1] sm:$0xff]
      %v3692 = vld [vmem:[#allocation4 + $0x9] sm:$0xff]
      %v3693 = vld [vmem:[#allocation4 + $0x11] sm:$0xff]
      %v3694 = vld [vmem:[#allocation4 + $0x19] sm:$0xff]
      %v3695 = vld [vmem:[#allocation4 + $0x21] sm:$0xff]
      %v3696 = vld [vmem:[#allocation4 + $0x29] sm:$0xff]
      %v3697 = vld [vmem:[#allocation4 + $0x31] sm:$0xff]
      %v3698 = vld [vmem:[#allocation4 + $0x39] sm:$0xff]
      %v3699 = vld [vmem:[#allocation4 + $0x41] sm:$0xff]
      %v3700 = vld [vmem:[#allocation4 + $0x49] sm:$0xff]
      %v3701 = vld [vmem:[#allocation4 + $0x51] sm:$0xff]
      %v3702 = vld [vmem:[#allocation4 + $0x59] sm:$0xff]
      %v3703 = vld [vmem:[#allocation4 + $0x61] sm:$0xff]
      %v3704 = vld [vmem:[#allocation4 + $0x69] sm:$0xff]
      %v3705 = vld [vmem:[#allocation4 + $0x71] sm:$0xff]
      %v3706 = vld [vmem:[#allocation4 + $0x79] sm:$0xff]
      %v3707 = vld [vmem:[#allocation4 + $0x81] sm:$0xff]
      %v3708 = vld [vmem:[#allocation4 + $0x89] sm:$0xff]
      %v3709 = vld [vmem:[#allocation4 + $0x91] sm:$0xff]
      %v3710 = vld [vmem:[#allocation4 + $0x99] sm:$0xff]
      %v3711 = vld [vmem:[#allocation4 + $0xa1] sm:$0xff]
      %v3712 = vld [vmem:[#allocation4 + $0xa9] sm:$0xff]
      %v3713 = vld [vmem:[#allocation4 + $0xb1] sm:$0xff]
      %v3714 = vld [vmem:[#allocation4 + $0xb9] sm:$0xff]
      %v3715 = vld [vmem:[#allocation4 + $0xc1] sm:$0xff]
      %v3716 = vld [vmem:[#allocation4 + $0xc9] sm:$0xff]
      %v3717 = vld [vmem:[#allocation4 + $0xd1] sm:$0xff]
      %v3718 = vld [vmem:[#allocation4 + $0xd9] sm:$0xff]
      %v3719 = vld [vmem:[#allocation4 + $0xe1] sm:$0xff]
      %v3720 = vld [vmem:[#allocation4 + $0xe9] sm:$0xff]
      %v3721 = vld [vmem:[#allocation4 + $0xf1] sm:$0xff]
      %v3722 = vld [vmem:[#allocation4 + $0xf9] sm:$0xff]
      %v3723 = vld [vmem:[#allocation4 + $0x101] sm:$0xff]
      %v3724 = vld [vmem:[#allocation4 + $0x109] sm:$0xff]
      %v3725 = vld [vmem:[#allocation4 + $0x111] sm:$0xff]
      %v3726 = vld [vmem:[#allocation4 + $0x119] sm:$0xff]
      %3727 = vst [vmem:[#allocation5 + $0x8] sm:$0xff] %v3691
      %3728 = vst [vmem:[#allocation5 + $0x50] sm:$0xff] %v3692
      %3729 = vst [vmem:[#allocation5 + $0x98] sm:$0xff] %v3693
      %3730 = vst [vmem:[#allocation5 + $0xe0] sm:$0xff] %v3694
      %3731 = vst [vmem:[#allocation5 + $0x128] sm:$0xff] %v3695
      %3732 = vst [vmem:[#allocation5 + $0x170] sm:$0xff] %v3696
      %3733 = vst [vmem:[#allocation5 + $0x1b8] sm:$0xff] %v3697
      %3734 = vst [vmem:[#allocation5 + $0x200] sm:$0xff] %v3698
      %3735 = vst [vmem:[#allocation5 + $0x248] sm:$0xff] %v3699
      %3736 = vst [vmem:[#allocation5 + $0x290] sm:$0xff] %v3700
      %3737 = vst [vmem:[#allocation5 + $0x2d8] sm:$0xff] %v3701
      %3738 = vst [vmem:[#allocation5 + $0x320] sm:$0xff] %v3702
      %3739 = vst [vmem:[#allocation5 + $0x368] sm:$0xff] %v3703
      %3740 = vst [vmem:[#allocation5 + $0x3b0] sm:$0xff] %v3704
      %3741 = vst [vmem:[#allocation5 + $0x3f8] sm:$0xff] %v3705
      %3742 = vst [vmem:[#allocation5 + $0x440] sm:$0xff] %v3706
      %3743 = vst [vmem:[#allocation5 + $0x488] sm:$0xff] %v3707
      %3744 = vst [vmem:[#allocation5 + $0x4d0] sm:$0xff] %v3708
      %3745 = vst [vmem:[#allocation5 + $0x518] sm:$0xff] %v3709
      %3746 = vst [vmem:[#allocation5 + $0x560] sm:$0xff] %v3710
      %3747 = vst [vmem:[#allocation5 + $0x5a8] sm:$0xff] %v3711
      %3748 = vst [vmem:[#allocation5 + $0x5f0] sm:$0xff] %v3712
      %3749 = vst [vmem:[#allocation5 + $0x638] sm:$0xff] %v3713
      %3750 = vst [vmem:[#allocation5 + $0x680] sm:$0xff] %v3714
      %3751 = vst [vmem:[#allocation5 + $0x6c8] sm:$0xff] %v3715
      %3752 = vst [vmem:[#allocation5 + $0x710] sm:$0xff] %v3716
      %3753 = vst [vmem:[#allocation5 + $0x758] sm:$0xff] %v3717
      %3754 = vst [vmem:[#allocation5 + $0x7a0] sm:$0xff] %v3718
      %3755 = vst [vmem:[#allocation5 + $0x7e8] sm:$0xff] %v3719
      %3756 = vst [vmem:[#allocation5 + $0x830] sm:$0xff] %v3720
      %3757 = vst [vmem:[#allocation5 + $0x878] sm:$0xff] %v3721
      %3758 = vst [vmem:[#allocation5 + $0x8c0] sm:$0xff] %v3722
      %3759 = vst [vmem:[#allocation5 + $0x908] sm:$0xff] %v3723
      %3760 = vst [vmem:[#allocation5 + $0x950] sm:$0xff] %v3724
      %3761 = vst [vmem:[#allocation5 + $0x998] sm:$0xff] %v3725
      %3762 = vst [vmem:[#allocation5 + $0x9e0] sm:$0xff] %v3726
      %v3763 = vld [vmem:[#allocation4 + $0x2] sm:$0xff]
      %v3764 = vld [vmem:[#allocation4 + $0xa] sm:$0xff]
      %v3765 = vld [vmem:[#allocation4 + $0x12] sm:$0xff]
      %v3766 = vld [vmem:[#allocation4 + $0x1a] sm:$0xff]
      %v3767 = vld [vmem:[#allocation4 + $0x22] sm:$0xff]
      %v3768 = vld [vmem:[#allocation4 + $0x2a] sm:$0xff]
      %v3769 = vld [vmem:[#allocation4 + $0x32] sm:$0xff]
      %v3770 = vld [vmem:[#allocation4 + $0x3a] sm:$0xff]
      %v3771 = vld [vmem:[#allocation4 + $0x42] sm:$0xff]
      %v3772 = vld [vmem:[#allocation4 + $0x4a] sm:$0xff]
      %v3773 = vld [vmem:[#allocation4 + $0x52] sm:$0xff]
      %v3774 = vld [vmem:[#allocation4 + $0x5a] sm:$0xff]
      %v3775 = vld [vmem:[#allocation4 + $0x62] sm:$0xff]
      %v3776 = vld [vmem:[#allocation4 + $0x6a] sm:$0xff]
      %v3777 = vld [vmem:[#allocation4 + $0x72] sm:$0xff]
      %v3778 = vld [vmem:[#allocation4 + $0x7a] sm:$0xff]
      %v3779 = vld [vmem:[#allocation4 + $0x82] sm:$0xff]
      %v3780 = vld [vmem:[#allocation4 + $0x8a] sm:$0xff]
      %v3781 = vld [vmem:[#allocation4 + $0x92] sm:$0xff]
      %v3782 = vld [vmem:[#allocation4 + $0x9a] sm:$0xff]
      %v3783 = vld [vmem:[#allocation4 + $0xa2] sm:$0xff]
      %v3784 = vld [vmem:[#allocation4 + $0xaa] sm:$0xff]
      %v3785 = vld [vmem:[#allocation4 + $0xb2] sm:$0xff]
      %v3786 = vld [vmem:[#allocation4 + $0xba] sm:$0xff]
      %v3787 = vld [vmem:[#allocation4 + $0xc2] sm:$0xff]
      %v3788 = vld [vmem:[#allocation4 + $0xca] sm:$0xff]
      %v3789 = vld [vmem:[#allocation4 + $0xd2] sm:$0xff]
      %v3790 = vld [vmem:[#allocation4 + $0xda] sm:$0xff]
      %v3791 = vld [vmem:[#allocation4 + $0xe2] sm:$0xff]
      %v3792 = vld [vmem:[#allocation4 + $0xea] sm:$0xff]
      %v3793 = vld [vmem:[#allocation4 + $0xf2] sm:$0xff]
      %v3794 = vld [vmem:[#allocation4 + $0xfa] sm:$0xff]
      %v3795 = vld [vmem:[#allocation4 + $0x102] sm:$0xff]
      %v3796 = vld [vmem:[#allocation4 + $0x10a] sm:$0xff]
      %v3797 = vld [vmem:[#allocation4 + $0x112] sm:$0xff]
      %v3798 = vld [vmem:[#allocation4 + $0x11a] sm:$0xff]
      %3799 = vst [vmem:[#allocation5 + $0x10] sm:$0xff] %v3763
      %3800 = vst [vmem:[#allocation5 + $0x58] sm:$0xff] %v3764
      %3801 = vst [vmem:[#allocation5 + $0xa0] sm:$0xff] %v3765
      %3802 = vst [vmem:[#allocation5 + $0xe8] sm:$0xff] %v3766
      %3803 = vst [vmem:[#allocation5 + $0x130] sm:$0xff] %v3767
      %3804 = vst [vmem:[#allocation5 + $0x178] sm:$0xff] %v3768
      %3805 = vst [vmem:[#allocation5 + $0x1c0] sm:$0xff] %v3769
      %3806 = vst [vmem:[#allocation5 + $0x208] sm:$0xff] %v3770
      %3807 = vst [vmem:[#allocation5 + $0x250] sm:$0xff] %v3771
      %3808 = vst [vmem:[#allocation5 + $0x298] sm:$0xff] %v3772
      %3809 = vst [vmem:[#allocation5 + $0x2e0] sm:$0xff] %v3773
      %3810 = vst [vmem:[#allocation5 + $0x328] sm:$0xff] %v3774
      %3811 = vst [vmem:[#allocation5 + $0x370] sm:$0xff] %v3775
      %3812 = vst [vmem:[#allocation5 + $0x3b8] sm:$0xff] %v3776
      %3813 = vst [vmem:[#allocation5 + $0x400] sm:$0xff] %v3777
      %3814 = vst [vmem:[#allocation5 + $0x448] sm:$0xff] %v3778
      %3815 = vst [vmem:[#allocation5 + $0x490] sm:$0xff] %v3779
      %3816 = vst [vmem:[#allocation5 + $0x4d8] sm:$0xff] %v3780
      %3817 = vst [vmem:[#allocation5 + $0x520] sm:$0xff] %v3781
      %3818 = vst [vmem:[#allocation5 + $0x568] sm:$0xff] %v3782
      %3819 = vst [vmem:[#allocation5 + $0x5b0] sm:$0xff] %v3783
      %3820 = vst [vmem:[#allocation5 + $0x5f8] sm:$0xff] %v3784
      %3821 = vst [vmem:[#allocation5 + $0x640] sm:$0xff] %v3785
      %3822 = vst [vmem:[#allocation5 + $0x688] sm:$0xff] %v3786
      %3823 = vst [vmem:[#allocation5 + $0x6d0] sm:$0xff] %v3787
      %3824 = vst [vmem:[#allocation5 + $0x718] sm:$0xff] %v3788
      %3825 = vst [vmem:[#allocation5 + $0x760] sm:$0xff] %v3789
      %3826 = vst [vmem:[#allocation5 + $0x7a8] sm:$0xff] %v3790
      %3827 = vst [vmem:[#allocation5 + $0x7f0] sm:$0xff] %v3791
      %3828 = vst [vmem:[#allocation5 + $0x838] sm:$0xff] %v3792
      %3829 = vst [vmem:[#allocation5 + $0x880] sm:$0xff] %v3793
      %3830 = vst [vmem:[#allocation5 + $0x8c8] sm:$0xff] %v3794
      %3831 = vst [vmem:[#allocation5 + $0x910] sm:$0xff] %v3795
      %3832 = vst [vmem:[#allocation5 + $0x958] sm:$0xff] %v3796
      %3833 = vst [vmem:[#allocation5 + $0x9a0] sm:$0xff] %v3797
      %3834 = vst [vmem:[#allocation5 + $0x9e8] sm:$0xff] %v3798
      %v3835 = vld [vmem:[#allocation4 + $0x12] sm:$0xff]
      %v3836 = vld [vmem:[#allocation4 + $0x1a] sm:$0xff]
      %v3837 = vld [vmem:[#allocation4 + $0x22] sm:$0xff]
      %v3838 = vld [vmem:[#allocation4 + $0x2a] sm:$0xff]
      %v3839 = vld [vmem:[#allocation4 + $0x32] sm:$0xff]
      %v3840 = vld [vmem:[#allocation4 + $0x3a] sm:$0xff]
      %v3841 = vld [vmem:[#allocation4 + $0x42] sm:$0xff]
      %v3842 = vld [vmem:[#allocation4 + $0x4a] sm:$0xff]
      %v3843 = vld [vmem:[#allocation4 + $0x52] sm:$0xff]
      %v3844 = vld [vmem:[#allocation4 + $0x5a] sm:$0xff]
      %v3845 = vld [vmem:[#allocation4 + $0x62] sm:$0xff]
      %v3846 = vld [vmem:[#allocation4 + $0x6a] sm:$0xff]
      %v3847 = vld [vmem:[#allocation4 + $0x72] sm:$0xff]
      %v3848 = vld [vmem:[#allocation4 + $0x7a] sm:$0xff]
      %v3849 = vld [vmem:[#allocation4 + $0x82] sm:$0xff]
      %v3850 = vld [vmem:[#allocation4 + $0x8a] sm:$0xff]
      %v3851 = vld [vmem:[#allocation4 + $0x92] sm:$0xff]
      %v3852 = vld [vmem:[#allocation4 + $0x9a] sm:$0xff]
      %v3853 = vld [vmem:[#allocation4 + $0xa2] sm:$0xff]
      %v3854 = vld [vmem:[#allocation4 + $0xaa] sm:$0xff]
      %v3855 = vld [vmem:[#allocation4 + $0xb2] sm:$0xff]
      %v3856 = vld [vmem:[#allocation4 + $0xba] sm:$0xff]
      %v3857 = vld [vmem:[#allocation4 + $0xc2] sm:$0xff]
      %v3858 = vld [vmem:[#allocation4 + $0xca] sm:$0xff]
      %v3859 = vld [vmem:[#allocation4 + $0xd2] sm:$0xff]
      %v3860 = vld [vmem:[#allocation4 + $0xda] sm:$0xff]
      %v3861 = vld [vmem:[#allocation4 + $0xe2] sm:$0xff]
      %v3862 = vld [vmem:[#allocation4 + $0xea] sm:$0xff]
      %v3863 = vld [vmem:[#allocation4 + $0xf2] sm:$0xff]
      %v3864 = vld [vmem:[#allocation4 + $0xfa] sm:$0xff]
      %v3865 = vld [vmem:[#allocation4 + $0x102] sm:$0xff]
      %v3866 = vld [vmem:[#allocation4 + $0x10a] sm:$0xff]
      %v3867 = vld [vmem:[#allocation4 + $0x112] sm:$0xff]
      %v3868 = vld [vmem:[#allocation4 + $0x11a] sm:$0xff]
      %v3869 = vld [vmem:[#allocation4 + $0x122] sm:$0xff]
      %v3870 = vld [vmem:[#allocation4 + $0x12a] sm:$0xff]
      %3871 = vst [vmem:[#allocation5 + $0x18] sm:$0xff] %v3835
      %3872 = vst [vmem:[#allocation5 + $0x60] sm:$0xff] %v3836
      %3873 = vst [vmem:[#allocation5 + $0xa8] sm:$0xff] %v3837
      %3874 = vst [vmem:[#allocation5 + $0xf0] sm:$0xff] %v3838
      %3875 = vst [vmem:[#allocation5 + $0x138] sm:$0xff] %v3839
      %3876 = vst [vmem:[#allocation5 + $0x180] sm:$0xff] %v3840
      %3877 = vst [vmem:[#allocation5 + $0x1c8] sm:$0xff] %v3841
      %3878 = vst [vmem:[#allocation5 + $0x210] sm:$0xff] %v3842
      %3879 = vst [vmem:[#allocation5 + $0x258] sm:$0xff] %v3843
      %3880 = vst [vmem:[#allocation5 + $0x2a0] sm:$0xff] %v3844
      %3881 = vst [vmem:[#allocation5 + $0x2e8] sm:$0xff] %v3845
      %3882 = vst [vmem:[#allocation5 + $0x330] sm:$0xff] %v3846
      %3883 = vst [vmem:[#allocation5 + $0x378] sm:$0xff] %v3847
      %3884 = vst [vmem:[#allocation5 + $0x3c0] sm:$0xff] %v3848
      %3885 = vst [vmem:[#allocation5 + $0x408] sm:$0xff] %v3849
      %3886 = vst [vmem:[#allocation5 + $0x450] sm:$0xff] %v3850
      %3887 = vst [vmem:[#allocation5 + $0x498] sm:$0xff] %v3851
      %3888 = vst [vmem:[#allocation5 + $0x4e0] sm:$0xff] %v3852
      %3889 = vst [vmem:[#allocation5 + $0x528] sm:$0xff] %v3853
      %3890 = vst [vmem:[#allocation5 + $0x570] sm:$0xff] %v3854
      %3891 = vst [vmem:[#allocation5 + $0x5b8] sm:$0xff] %v3855
      %3892 = vst [vmem:[#allocation5 + $0x600] sm:$0xff] %v3856
      %3893 = vst [vmem:[#allocation5 + $0x648] sm:$0xff] %v3857
      %3894 = vst [vmem:[#allocation5 + $0x690] sm:$0xff] %v3858
      %3895 = vst [vmem:[#allocation5 + $0x6d8] sm:$0xff] %v3859
      %3896 = vst [vmem:[#allocation5 + $0x720] sm:$0xff] %v3860
      %3897 = vst [vmem:[#allocation5 + $0x768] sm:$0xff] %v3861
      %3898 = vst [vmem:[#allocation5 + $0x7b0] sm:$0xff] %v3862
      %3899 = vst [vmem:[#allocation5 + $0x7f8] sm:$0xff] %v3863
      %3900 = vst [vmem:[#allocation5 + $0x840] sm:$0xff] %v3864
      %3901 = vst [vmem:[#allocation5 + $0x888] sm:$0xff] %v3865
      %3902 = vst [vmem:[#allocation5 + $0x8d0] sm:$0xff] %v3866
      %3903 = vst [vmem:[#allocation5 + $0x918] sm:$0xff] %v3867
      %3904 = vst [vmem:[#allocation5 + $0x960] sm:$0xff] %v3868
      %3905 = vst [vmem:[#allocation5 + $0x9a8] sm:$0xff] %v3869
      %3906 = vst [vmem:[#allocation5 + $0x9f0] sm:$0xff] %v3870
      %v3907 = vld [vmem:[#allocation4 + $0x13] sm:$0xff]
      %v3908 = vld [vmem:[#allocation4 + $0x1b] sm:$0xff]
      %v3909 = vld [vmem:[#allocation4 + $0x23] sm:$0xff]
      %v3910 = vld [vmem:[#allocation4 + $0x2b] sm:$0xff]
      %v3911 = vld [vmem:[#allocation4 + $0x33] sm:$0xff]
      %v3912 = vld [vmem:[#allocation4 + $0x3b] sm:$0xff]
      %v3913 = vld [vmem:[#allocation4 + $0x43] sm:$0xff]
      %v3914 = vld [vmem:[#allocation4 + $0x4b] sm:$0xff]
      %v3915 = vld [vmem:[#allocation4 + $0x53] sm:$0xff]
      %v3916 = vld [vmem:[#allocation4 + $0x5b] sm:$0xff]
      %v3917 = vld [vmem:[#allocation4 + $0x63] sm:$0xff]
      %v3918 = vld [vmem:[#allocation4 + $0x6b] sm:$0xff]
      %v3919 = vld [vmem:[#allocation4 + $0x73] sm:$0xff]
      %v3920 = vld [vmem:[#allocation4 + $0x7b] sm:$0xff]
      %v3921 = vld [vmem:[#allocation4 + $0x83] sm:$0xff]
      %v3922 = vld [vmem:[#allocation4 + $0x8b] sm:$0xff]
      %v3923 = vld [vmem:[#allocation4 + $0x93] sm:$0xff]
      %v3924 = vld [vmem:[#allocation4 + $0x9b] sm:$0xff]
      %v3925 = vld [vmem:[#allocation4 + $0xa3] sm:$0xff]
      %v3926 = vld [vmem:[#allocation4 + $0xab] sm:$0xff]
      %v3927 = vld [vmem:[#allocation4 + $0xb3] sm:$0xff]
      %v3928 = vld [vmem:[#allocation4 + $0xbb] sm:$0xff]
      %v3929 = vld [vmem:[#allocation4 + $0xc3] sm:$0xff]
      %v3930 = vld [vmem:[#allocation4 + $0xcb] sm:$0xff]
      %v3931 = vld [vmem:[#allocation4 + $0xd3] sm:$0xff]
      %v3932 = vld [vmem:[#allocation4 + $0xdb] sm:$0xff]
      %v3933 = vld [vmem:[#allocation4 + $0xe3] sm:$0xff]
      %v3934 = vld [vmem:[#allocation4 + $0xeb] sm:$0xff]
      %v3935 = vld [vmem:[#allocation4 + $0xf3] sm:$0xff]
      %v3936 = vld [vmem:[#allocation4 + $0xfb] sm:$0xff]
      %v3937 = vld [vmem:[#allocation4 + $0x103] sm:$0xff]
      %v3938 = vld [vmem:[#allocation4 + $0x10b] sm:$0xff]
      %v3939 = vld [vmem:[#allocation4 + $0x113] sm:$0xff]
      %v3940 = vld [vmem:[#allocation4 + $0x11b] sm:$0xff]
      %v3941 = vld [vmem:[#allocation4 + $0x123] sm:$0xff]
      %v3942 = vld [vmem:[#allocation4 + $0x12b] sm:$0xff]
      %3943 = vst [vmem:[#allocation5 + $0x20] sm:$0xff] %v3907
      %3944 = vst [vmem:[#allocation5 + $0x68] sm:$0xff] %v3908
      %3945 = vst [vmem:[#allocation5 + $0xb0] sm:$0xff] %v3909
      %3946 = vst [vmem:[#allocation5 + $0xf8] sm:$0xff] %v3910
      %3947 = vst [vmem:[#allocation5 + $0x140] sm:$0xff] %v3911
      %3948 = vst [vmem:[#allocation5 + $0x188] sm:$0xff] %v3912
      %3949 = vst [vmem:[#allocation5 + $0x1d0] sm:$0xff] %v3913
      %3950 = vst [vmem:[#allocation5 + $0x218] sm:$0xff] %v3914
      %3951 = vst [vmem:[#allocation5 + $0x260] sm:$0xff] %v3915
      %3952 = vst [vmem:[#allocation5 + $0x2a8] sm:$0xff] %v3916
      %3953 = vst [vmem:[#allocation5 + $0x2f0] sm:$0xff] %v3917
      %3954 = vst [vmem:[#allocation5 + $0x338] sm:$0xff] %v3918
      %3955 = vst [vmem:[#allocation5 + $0x380] sm:$0xff] %v3919
      %3956 = vst [vmem:[#allocation5 + $0x3c8] sm:$0xff] %v3920
      %3957 = vst [vmem:[#allocation5 + $0x410] sm:$0xff] %v3921
      %3958 = vst [vmem:[#allocation5 + $0x458] sm:$0xff] %v3922
      %3959 = vst [vmem:[#allocation5 + $0x4a0] sm:$0xff] %v3923
      %3960 = vst [vmem:[#allocation5 + $0x4e8] sm:$0xff] %v3924
      %3961 = vst [vmem:[#allocation5 + $0x530] sm:$0xff] %v3925
      %3962 = vst [vmem:[#allocation5 + $0x578] sm:$0xff] %v3926
      %3963 = vst [vmem:[#allocation5 + $0x5c0] sm:$0xff] %v3927
      %3964 = vst [vmem:[#allocation5 + $0x608] sm:$0xff] %v3928
      %3965 = vst [vmem:[#allocation5 + $0x650] sm:$0xff] %v3929
      %3966 = vst [vmem:[#allocation5 + $0x698] sm:$0xff] %v3930
      %3967 = vst [vmem:[#allocation5 + $0x6e0] sm:$0xff] %v3931
      %3968 = vst [vmem:[#allocation5 + $0x728] sm:$0xff] %v3932
      %3969 = vst [vmem:[#allocation5 + $0x770] sm:$0xff] %v3933
      %3970 = vst [vmem:[#allocation5 + $0x7b8] sm:$0xff] %v3934
      %3971 = vst [vmem:[#allocation5 + $0x800] sm:$0xff] %v3935
      %3972 = vst [vmem:[#allocation5 + $0x848] sm:$0xff] %v3936
      %3973 = vst [vmem:[#allocation5 + $0x890] sm:$0xff] %v3937
      %3974 = vst [vmem:[#allocation5 + $0x8d8] sm:$0xff] %v3938
      %3975 = vst [vmem:[#allocation5 + $0x920] sm:$0xff] %v3939
      %3976 = vst [vmem:[#allocation5 + $0x968] sm:$0xff] %v3940
      %3977 = vst [vmem:[#allocation5 + $0x9b0] sm:$0xff] %v3941
      %3978 = vst [vmem:[#allocation5 + $0x9f8] sm:$0xff] %v3942
      %v3979 = vld [vmem:[#allocation4 + $0x14] sm:$0xff]
      %v3980 = vld [vmem:[#allocation4 + $0x1c] sm:$0xff]
      %v3981 = vld [vmem:[#allocation4 + $0x24] sm:$0xff]
      %v3982 = vld [vmem:[#allocation4 + $0x2c] sm:$0xff]
      %v3983 = vld [vmem:[#allocation4 + $0x34] sm:$0xff]
      %v3984 = vld [vmem:[#allocation4 + $0x3c] sm:$0xff]
      %v3985 = vld [vmem:[#allocation4 + $0x44] sm:$0xff]
      %v3986 = vld [vmem:[#allocation4 + $0x4c] sm:$0xff]
      %v3987 = vld [vmem:[#allocation4 + $0x54] sm:$0xff]
      %v3988 = vld [vmem:[#allocation4 + $0x5c] sm:$0xff]
      %v3989 = vld [vmem:[#allocation4 + $0x64] sm:$0xff]
      %v3990 = vld [vmem:[#allocation4 + $0x6c] sm:$0xff]
      %v3991 = vld [vmem:[#allocation4 + $0x74] sm:$0xff]
      %v3992 = vld [vmem:[#allocation4 + $0x7c] sm:$0xff]
      %v3993 = vld [vmem:[#allocation4 + $0x84] sm:$0xff]
      %v3994 = vld [vmem:[#allocation4 + $0x8c] sm:$0xff]
      %v3995 = vld [vmem:[#allocation4 + $0x94] sm:$0xff]
      %v3996 = vld [vmem:[#allocation4 + $0x9c] sm:$0xff]
      %v3997 = vld [vmem:[#allocation4 + $0xa4] sm:$0xff]
      %v3998 = vld [vmem:[#allocation4 + $0xac] sm:$0xff]
      %v3999 = vld [vmem:[#allocation4 + $0xb4] sm:$0xff]
      %v4000 = vld [vmem:[#allocation4 + $0xbc] sm:$0xff]
      %v4001 = vld [vmem:[#allocation4 + $0xc4] sm:$0xff]
      %v4002 = vld [vmem:[#allocation4 + $0xcc] sm:$0xff]
      %v4003 = vld [vmem:[#allocation4 + $0xd4] sm:$0xff]
      %v4004 = vld [vmem:[#allocation4 + $0xdc] sm:$0xff]
      %v4005 = vld [vmem:[#allocation4 + $0xe4] sm:$0xff]
      %v4006 = vld [vmem:[#allocation4 + $0xec] sm:$0xff]
      %v4007 = vld [vmem:[#allocation4 + $0xf4] sm:$0xff]
      %v4008 = vld [vmem:[#allocation4 + $0xfc] sm:$0xff]
      %v4009 = vld [vmem:[#allocation4 + $0x104] sm:$0xff]
      %v4010 = vld [vmem:[#allocation4 + $0x10c] sm:$0xff]
      %v4011 = vld [vmem:[#allocation4 + $0x114] sm:$0xff]
      %v4012 = vld [vmem:[#allocation4 + $0x11c] sm:$0xff]
      %v4013 = vld [vmem:[#allocation4 + $0x124] sm:$0xff]
      %v4014 = vld [vmem:[#allocation4 + $0x12c] sm:$0xff]
      %4015 = vst [vmem:[#allocation5 + $0x28] sm:$0xff] %v3979
      %4016 = vst [vmem:[#allocation5 + $0x70] sm:$0xff] %v3980
      %4017 = vst [vmem:[#allocation5 + $0xb8] sm:$0xff] %v3981
      %4018 = vst [vmem:[#allocation5 + $0x100] sm:$0xff] %v3982
      %4019 = vst [vmem:[#allocation5 + $0x148] sm:$0xff] %v3983
      %4020 = vst [vmem:[#allocation5 + $0x190] sm:$0xff] %v3984
      %4021 = vst [vmem:[#allocation5 + $0x1d8] sm:$0xff] %v3985
      %4022 = vst [vmem:[#allocation5 + $0x220] sm:$0xff] %v3986
      %4023 = vst [vmem:[#allocation5 + $0x268] sm:$0xff] %v3987
      %4024 = vst [vmem:[#allocation5 + $0x2b0] sm:$0xff] %v3988
      %4025 = vst [vmem:[#allocation5 + $0x2f8] sm:$0xff] %v3989
      %4026 = vst [vmem:[#allocation5 + $0x340] sm:$0xff] %v3990
      %4027 = vst [vmem:[#allocation5 + $0x388] sm:$0xff] %v3991
      %4028 = vst [vmem:[#allocation5 + $0x3d0] sm:$0xff] %v3992
      %4029 = vst [vmem:[#allocation5 + $0x418] sm:$0xff] %v3993
      %4030 = vst [vmem:[#allocation5 + $0x460] sm:$0xff] %v3994
      %4031 = vst [vmem:[#allocation5 + $0x4a8] sm:$0xff] %v3995
      %4032 = vst [vmem:[#allocation5 + $0x4f0] sm:$0xff] %v3996
      %4033 = vst [vmem:[#allocation5 + $0x538] sm:$0xff] %v3997
      %4034 = vst [vmem:[#allocation5 + $0x580] sm:$0xff] %v3998
      %4035 = vst [vmem:[#allocation5 + $0x5c8] sm:$0xff] %v3999
      %4036 = vst [vmem:[#allocation5 + $0x610] sm:$0xff] %v4000
      %4037 = vst [vmem:[#allocation5 + $0x658] sm:$0xff] %v4001
      %4038 = vst [vmem:[#allocation5 + $0x6a0] sm:$0xff] %v4002
      %4039 = vst [vmem:[#allocation5 + $0x6e8] sm:$0xff] %v4003
      %4040 = vst [vmem:[#allocation5 + $0x730] sm:$0xff] %v4004
      %4041 = vst [vmem:[#allocation5 + $0x778] sm:$0xff] %v4005
      %4042 = vst [vmem:[#allocation5 + $0x7c0] sm:$0xff] %v4006
      %4043 = vst [vmem:[#allocation5 + $0x808] sm:$0xff] %v4007
      %4044 = vst [vmem:[#allocation5 + $0x850] sm:$0xff] %v4008
      %4045 = vst [vmem:[#allocation5 + $0x898] sm:$0xff] %v4009
      %4046 = vst [vmem:[#allocation5 + $0x8e0] sm:$0xff] %v4010
      %4047 = vst [vmem:[#allocation5 + $0x928] sm:$0xff] %v4011
      %4048 = vst [vmem:[#allocation5 + $0x970] sm:$0xff] %v4012
      %4049 = vst [vmem:[#allocation5 + $0x9b8] sm:$0xff] %v4013
      %4050 = vst [vmem:[#allocation5 + $0xa00] sm:$0xff] %v4014
      %v4051 = vld [vmem:[#allocation4 + $0x24] sm:$0xff]
      %v4052 = vld [vmem:[#allocation4 + $0x2c] sm:$0xff]
      %v4053 = vld [vmem:[#allocation4 + $0x34] sm:$0xff]
      %v4054 = vld [vmem:[#allocation4 + $0x3c] sm:$0xff]
      %v4055 = vld [vmem:[#allocation4 + $0x44] sm:$0xff]
      %v4056 = vld [vmem:[#allocation4 + $0x4c] sm:$0xff]
      %v4057 = vld [vmem:[#allocation4 + $0x54] sm:$0xff]
      %v4058 = vld [vmem:[#allocation4 + $0x5c] sm:$0xff]
      %v4059 = vld [vmem:[#allocation4 + $0x64] sm:$0xff]
      %v4060 = vld [vmem:[#allocation4 + $0x6c] sm:$0xff]
      %v4061 = vld [vmem:[#allocation4 + $0x74] sm:$0xff]
      %v4062 = vld [vmem:[#allocation4 + $0x7c] sm:$0xff]
      %v4063 = vld [vmem:[#allocation4 + $0x84] sm:$0xff]
      %v4064 = vld [vmem:[#allocation4 + $0x8c] sm:$0xff]
      %v4065 = vld [vmem:[#allocation4 + $0x94] sm:$0xff]
      %v4066 = vld [vmem:[#allocation4 + $0x9c] sm:$0xff]
      %v4067 = vld [vmem:[#allocation4 + $0xa4] sm:$0xff]
      %v4068 = vld [vmem:[#allocation4 + $0xac] sm:$0xff]
      %v4069 = vld [vmem:[#allocation4 + $0xb4] sm:$0xff]
      %v4070 = vld [vmem:[#allocation4 + $0xbc] sm:$0xff]
      %v4071 = vld [vmem:[#allocation4 + $0xc4] sm:$0xff]
      %v4072 = vld [vmem:[#allocation4 + $0xcc] sm:$0xff]
      %v4073 = vld [vmem:[#allocation4 + $0xd4] sm:$0xff]
      %v4074 = vld [vmem:[#allocation4 + $0xdc] sm:$0xff]
      %v4075 = vld [vmem:[#allocation4 + $0xe4] sm:$0xff]
      %v4076 = vld [vmem:[#allocation4 + $0xec] sm:$0xff]
      %v4077 = vld [vmem:[#allocation4 + $0xf4] sm:$0xff]
      %v4078 = vld [vmem:[#allocation4 + $0xfc] sm:$0xff]
      %v4079 = vld [vmem:[#allocation4 + $0x104] sm:$0xff]
      %v4080 = vld [vmem:[#allocation4 + $0x10c] sm:$0xff]
      %v4081 = vld [vmem:[#allocation4 + $0x114] sm:$0xff]
      %v4082 = vld [vmem:[#allocation4 + $0x11c] sm:$0xff]
      %v4083 = vld [vmem:[#allocation4 + $0x124] sm:$0xff]
      %v4084 = vld [vmem:[#allocation4 + $0x12c] sm:$0xff]
      %v4085 = vld [vmem:[#allocation4 + $0x134] sm:$0xff]
      %v4086 = vld [vmem:[#allocation4 + $0x13c] sm:$0xff]
      %4087 = vst [vmem:[#allocation5 + $0x30] sm:$0xff] %v4051
      %4088 = vst [vmem:[#allocation5 + $0x78] sm:$0xff] %v4052
      %4089 = vst [vmem:[#allocation5 + $0xc0] sm:$0xff] %v4053
      %4090 = vst [vmem:[#allocation5 + $0x108] sm:$0xff] %v4054
      %4091 = vst [vmem:[#allocation5 + $0x150] sm:$0xff] %v4055
      %4092 = vst [vmem:[#allocation5 + $0x198] sm:$0xff] %v4056
      %4093 = vst [vmem:[#allocation5 + $0x1e0] sm:$0xff] %v4057
      %4094 = vst [vmem:[#allocation5 + $0x228] sm:$0xff] %v4058
      %4095 = vst [vmem:[#allocation5 + $0x270] sm:$0xff] %v4059
      %4096 = vst [vmem:[#allocation5 + $0x2b8] sm:$0xff] %v4060
      %4097 = vst [vmem:[#allocation5 + $0x300] sm:$0xff] %v4061
      %4098 = vst [vmem:[#allocation5 + $0x348] sm:$0xff] %v4062
      %4099 = vst [vmem:[#allocation5 + $0x390] sm:$0xff] %v4063
      %4100 = vst [vmem:[#allocation5 + $0x3d8] sm:$0xff] %v4064
      %4101 = vst [vmem:[#allocation5 + $0x420] sm:$0xff] %v4065
      %4102 = vst [vmem:[#allocation5 + $0x468] sm:$0xff] %v4066
      %4103 = vst [vmem:[#allocation5 + $0x4b0] sm:$0xff] %v4067
      %4104 = vst [vmem:[#allocation5 + $0x4f8] sm:$0xff] %v4068
      %4105 = vst [vmem:[#allocation5 + $0x540] sm:$0xff] %v4069
      %4106 = vst [vmem:[#allocation5 + $0x588] sm:$0xff] %v4070
      %4107 = vst [vmem:[#allocation5 + $0x5d0] sm:$0xff] %v4071
      %4108 = vst [vmem:[#allocation5 + $0x618] sm:$0xff] %v4072
      %4109 = vst [vmem:[#allocation5 + $0x660] sm:$0xff] %v4073
      %4110 = vst [vmem:[#allocation5 + $0x6a8] sm:$0xff] %v4074
      %4111 = vst [vmem:[#allocation5 + $0x6f0] sm:$0xff] %v4075
      %4112 = vst [vmem:[#allocation5 + $0x738] sm:$0xff] %v4076
      %4113 = vst [vmem:[#allocation5 + $0x780] sm:$0xff] %v4077
      %4114 = vst [vmem:[#allocation5 + $0x7c8] sm:$0xff] %v4078
      %4115 = vst [vmem:[#allocation5 + $0x810] sm:$0xff] %v4079
      %4116 = vst [vmem:[#allocation5 + $0x858] sm:$0xff] %v4080
      %4117 = vst [vmem:[#allocation5 + $0x8a0] sm:$0xff] %v4081
      %4118 = vst [vmem:[#allocation5 + $0x8e8] sm:$0xff] %v4082
      %4119 = vst [vmem:[#allocation5 + $0x930] sm:$0xff] %v4083
      %4120 = vst [vmem:[#allocation5 + $0x978] sm:$0xff] %v4084
      %4121 = vst [vmem:[#allocation5 + $0x9c0] sm:$0xff] %v4085
      %4122 = vst [vmem:[#allocation5 + $0xa08] sm:$0xff] %v4086
      %v4123 = vld [vmem:[#allocation4 + $0x25] sm:$0xff]
      %v4124 = vld [vmem:[#allocation4 + $0x2d] sm:$0xff]
      %v4125 = vld [vmem:[#allocation4 + $0x35] sm:$0xff]
      %v4126 = vld [vmem:[#allocation4 + $0x3d] sm:$0xff]
      %v4127 = vld [vmem:[#allocation4 + $0x45] sm:$0xff]
      %v4128 = vld [vmem:[#allocation4 + $0x4d] sm:$0xff]
      %v4129 = vld [vmem:[#allocation4 + $0x55] sm:$0xff]
      %v4130 = vld [vmem:[#allocation4 + $0x5d] sm:$0xff]
      %v4131 = vld [vmem:[#allocation4 + $0x65] sm:$0xff]
      %v4132 = vld [vmem:[#allocation4 + $0x6d] sm:$0xff]
      %v4133 = vld [vmem:[#allocation4 + $0x75] sm:$0xff]
      %v4134 = vld [vmem:[#allocation4 + $0x7d] sm:$0xff]
      %v4135 = vld [vmem:[#allocation4 + $0x85] sm:$0xff]
      %v4136 = vld [vmem:[#allocation4 + $0x8d] sm:$0xff]
      %v4137 = vld [vmem:[#allocation4 + $0x95] sm:$0xff]
      %v4138 = vld [vmem:[#allocation4 + $0x9d] sm:$0xff]
      %v4139 = vld [vmem:[#allocation4 + $0xa5] sm:$0xff]
      %v4140 = vld [vmem:[#allocation4 + $0xad] sm:$0xff]
      %v4141 = vld [vmem:[#allocation4 + $0xb5] sm:$0xff]
      %v4142 = vld [vmem:[#allocation4 + $0xbd] sm:$0xff]
      %v4143 = vld [vmem:[#allocation4 + $0xc5] sm:$0xff]
      %v4144 = vld [vmem:[#allocation4 + $0xcd] sm:$0xff]
      %v4145 = vld [vmem:[#allocation4 + $0xd5] sm:$0xff]
      %v4146 = vld [vmem:[#allocation4 + $0xdd] sm:$0xff]
      %v4147 = vld [vmem:[#allocation4 + $0xe5] sm:$0xff]
      %v4148 = vld [vmem:[#allocation4 + $0xed] sm:$0xff]
      %v4149 = vld [vmem:[#allocation4 + $0xf5] sm:$0xff]
      %v4150 = vld [vmem:[#allocation4 + $0xfd] sm:$0xff]
      %v4151 = vld [vmem:[#allocation4 + $0x105] sm:$0xff]
      %v4152 = vld [vmem:[#allocation4 + $0x10d] sm:$0xff]
      %v4153 = vld [vmem:[#allocation4 + $0x115] sm:$0xff]
      %v4154 = vld [vmem:[#allocation4 + $0x11d] sm:$0xff]
      %v4155 = vld [vmem:[#allocation4 + $0x125] sm:$0xff]
      %v4156 = vld [vmem:[#allocation4 + $0x12d] sm:$0xff]
      %v4157 = vld [vmem:[#allocation4 + $0x135] sm:$0xff]
      %v4158 = vld [vmem:[#allocation4 + $0x13d] sm:$0xff]
      %4159 = vst [vmem:[#allocation5 + $0x38] sm:$0xff] %v4123
      %4160 = vst [vmem:[#allocation5 + $0x80] sm:$0xff] %v4124
      %4161 = vst [vmem:[#allocation5 + $0xc8] sm:$0xff] %v4125
      %4162 = vst [vmem:[#allocation5 + $0x110] sm:$0xff] %v4126
      %4163 = vst [vmem:[#allocation5 + $0x158] sm:$0xff] %v4127
      %4164 = vst [vmem:[#allocation5 + $0x1a0] sm:$0xff] %v4128
      %4165 = vst [vmem:[#allocation5 + $0x1e8] sm:$0xff] %v4129
      %4166 = vst [vmem:[#allocation5 + $0x230] sm:$0xff] %v4130
      %4167 = vst [vmem:[#allocation5 + $0x278] sm:$0xff] %v4131
      %4168 = vst [vmem:[#allocation5 + $0x2c0] sm:$0xff] %v4132
      %4169 = vst [vmem:[#allocation5 + $0x308] sm:$0xff] %v4133
      %4170 = vst [vmem:[#allocation5 + $0x350] sm:$0xff] %v4134
      %4171 = vst [vmem:[#allocation5 + $0x398] sm:$0xff] %v4135
      %4172 = vst [vmem:[#allocation5 + $0x3e0] sm:$0xff] %v4136
      %4173 = vst [vmem:[#allocation5 + $0x428] sm:$0xff] %v4137
      %4174 = vst [vmem:[#allocation5 + $0x470] sm:$0xff] %v4138
      %4175 = vst [vmem:[#allocation5 + $0x4b8] sm:$0xff] %v4139
      %4176 = vst [vmem:[#allocation5 + $0x500] sm:$0xff] %v4140
      %4177 = vst [vmem:[#allocation5 + $0x548] sm:$0xff] %v4141
      %4178 = vst [vmem:[#allocation5 + $0x590] sm:$0xff] %v4142
      %4179 = vst [vmem:[#allocation5 + $0x5d8] sm:$0xff] %v4143
      %4180 = vst [vmem:[#allocation5 + $0x620] sm:$0xff] %v4144
      %4181 = vst [vmem:[#allocation5 + $0x668] sm:$0xff] %v4145
      %4182 = vst [vmem:[#allocation5 + $0x6b0] sm:$0xff] %v4146
      %4183 = vst [vmem:[#allocation5 + $0x6f8] sm:$0xff] %v4147
      %4184 = vst [vmem:[#allocation5 + $0x740] sm:$0xff] %v4148
      %4185 = vst [vmem:[#allocation5 + $0x788] sm:$0xff] %v4149
      %4186 = vst [vmem:[#allocation5 + $0x7d0] sm:$0xff] %v4150
      %4187 = vst [vmem:[#allocation5 + $0x818] sm:$0xff] %v4151
      %4188 = vst [vmem:[#allocation5 + $0x860] sm:$0xff] %v4152
      %4189 = vst [vmem:[#allocation5 + $0x8a8] sm:$0xff] %v4153
      %4190 = vst [vmem:[#allocation5 + $0x8f0] sm:$0xff] %v4154
      %4191 = vst [vmem:[#allocation5 + $0x938] sm:$0xff] %v4155
      %4192 = vst [vmem:[#allocation5 + $0x980] sm:$0xff] %v4156
      %4193 = vst [vmem:[#allocation5 + $0x9c8] sm:$0xff] %v4157
      %4194 = vst [vmem:[#allocation5 + $0xa10] sm:$0xff] %v4158
      %v4195 = vld [vmem:[#allocation4 + $0x26] sm:$0xff]
      %v4196 = vld [vmem:[#allocation4 + $0x2e] sm:$0xff]
      %v4197 = vld [vmem:[#allocation4 + $0x36] sm:$0xff]
      %v4198 = vld [vmem:[#allocation4 + $0x3e] sm:$0xff]
      %v4199 = vld [vmem:[#allocation4 + $0x46] sm:$0xff]
      %v4200 = vld [vmem:[#allocation4 + $0x4e] sm:$0xff]
      %v4201 = vld [vmem:[#allocation4 + $0x56] sm:$0xff]
      %v4202 = vld [vmem:[#allocation4 + $0x5e] sm:$0xff]
      %v4203 = vld [vmem:[#allocation4 + $0x66] sm:$0xff]
      %v4204 = vld [vmem:[#allocation4 + $0x6e] sm:$0xff]
      %v4205 = vld [vmem:[#allocation4 + $0x76] sm:$0xff]
      %v4206 = vld [vmem:[#allocation4 + $0x7e] sm:$0xff]
      %v4207 = vld [vmem:[#allocation4 + $0x86] sm:$0xff]
      %v4208 = vld [vmem:[#allocation4 + $0x8e] sm:$0xff]
      %v4209 = vld [vmem:[#allocation4 + $0x96] sm:$0xff]
      %v4210 = vld [vmem:[#allocation4 + $0x9e] sm:$0xff]
      %v4211 = vld [vmem:[#allocation4 + $0xa6] sm:$0xff]
      %v4212 = vld [vmem:[#allocation4 + $0xae] sm:$0xff]
      %v4213 = vld [vmem:[#allocation4 + $0xb6] sm:$0xff]
      %v4214 = vld [vmem:[#allocation4 + $0xbe] sm:$0xff]
      %v4215 = vld [vmem:[#allocation4 + $0xc6] sm:$0xff]
      %v4216 = vld [vmem:[#allocation4 + $0xce] sm:$0xff]
      %v4217 = vld [vmem:[#allocation4 + $0xd6] sm:$0xff]
      %v4218 = vld [vmem:[#allocation4 + $0xde] sm:$0xff]
      %v4219 = vld [vmem:[#allocation4 + $0xe6] sm:$0xff]
      %v4220 = vld [vmem:[#allocation4 + $0xee] sm:$0xff]
      %v4221 = vld [vmem:[#allocation4 + $0xf6] sm:$0xff]
      %v4222 = vld [vmem:[#allocation4 + $0xfe] sm:$0xff]
      %v4223 = vld [vmem:[#allocation4 + $0x106] sm:$0xff]
      %v4224 = vld [vmem:[#allocation4 + $0x10e] sm:$0xff]
      %v4225 = vld [vmem:[#allocation4 + $0x116] sm:$0xff]
      %v4226 = vld [vmem:[#allocation4 + $0x11e] sm:$0xff]
      %v4227 = vld [vmem:[#allocation4 + $0x126] sm:$0xff]
      %v4228 = vld [vmem:[#allocation4 + $0x12e] sm:$0xff]
      %v4229 = vld [vmem:[#allocation4 + $0x136] sm:$0xff]
      %v4230 = vld [vmem:[#allocation4 + $0x13e] sm:$0xff]
      %4231 = vst [vmem:[#allocation5 + $0x40] sm:$0xff] %v4195
      %4232 = vst [vmem:[#allocation5 + $0x88] sm:$0xff] %v4196
      %4233 = vst [vmem:[#allocation5 + $0xd0] sm:$0xff] %v4197
      %4234 = vst [vmem:[#allocation5 + $0x118] sm:$0xff] %v4198
      %4235 = vst [vmem:[#allocation5 + $0x160] sm:$0xff] %v4199
      %4236 = vst [vmem:[#allocation5 + $0x1a8] sm:$0xff] %v4200
      %4237 = vst [vmem:[#allocation5 + $0x1f0] sm:$0xff] %v4201
      %4238 = vst [vmem:[#allocation5 + $0x238] sm:$0xff] %v4202
      %4239 = vst [vmem:[#allocation5 + $0x280] sm:$0xff] %v4203
      %4240 = vst [vmem:[#allocation5 + $0x2c8] sm:$0xff] %v4204
      %4241 = vst [vmem:[#allocation5 + $0x310] sm:$0xff] %v4205
      %4242 = vst [vmem:[#allocation5 + $0x358] sm:$0xff] %v4206
      %4243 = vst [vmem:[#allocation5 + $0x3a0] sm:$0xff] %v4207
      %4244 = vst [vmem:[#allocation5 + $0x3e8] sm:$0xff] %v4208
      %4245 = vst [vmem:[#allocation5 + $0x430] sm:$0xff] %v4209
      %4246 = vst [vmem:[#allocation5 + $0x478] sm:$0xff] %v4210
      %4247 = vst [vmem:[#allocation5 + $0x4c0] sm:$0xff] %v4211
      %4248 = vst [vmem:[#allocation5 + $0x508] sm:$0xff] %v4212
      %4249 = vst [vmem:[#allocation5 + $0x550] sm:$0xff] %v4213
      %4250 = vst [vmem:[#allocation5 + $0x598] sm:$0xff] %v4214
      %4251 = vst [vmem:[#allocation5 + $0x5e0] sm:$0xff] %v4215
      %4252 = vst [vmem:[#allocation5 + $0x628] sm:$0xff] %v4216
      %4253 = vst [vmem:[#allocation5 + $0x670] sm:$0xff] %v4217
      %4254 = vst [vmem:[#allocation5 + $0x6b8] sm:$0xff] %v4218
      %4255 = vst [vmem:[#allocation5 + $0x700] sm:$0xff] %v4219
      %4256 = vst [vmem:[#allocation5 + $0x748] sm:$0xff] %v4220
      %4257 = vst [vmem:[#allocation5 + $0x790] sm:$0xff] %v4221
      %4258 = vst [vmem:[#allocation5 + $0x7d8] sm:$0xff] %v4222
      %4259 = vst [vmem:[#allocation5 + $0x820] sm:$0xff] %v4223
      %4260 = vst [vmem:[#allocation5 + $0x868] sm:$0xff] %v4224
      %4261 = vst [vmem:[#allocation5 + $0x8b0] sm:$0xff] %v4225
      %4262 = vst [vmem:[#allocation5 + $0x8f8] sm:$0xff] %v4226
      %4263 = vst [vmem:[#allocation5 + $0x940] sm:$0xff] %v4227
      %4264 = vst [vmem:[#allocation5 + $0x988] sm:$0xff] %v4228
      %4265 = vst [vmem:[#allocation5 + $0x9d0] sm:$0xff] %v4229
      %4266 = vst [vmem:[#allocation5 + $0xa18] sm:$0xff] %v4230
      %v4267 = vld [vmem:[#allocation5] sm:$0xff]
      %v4268 = vld [vmem:[#allocation5 + $0x8] sm:$0xff]
      %v4269 = vld [vmem:[#allocation5 + $0x10] sm:$0xff]
      %v4270 = vld [vmem:[#allocation5 + $0x18] sm:$0xff]
      %v4271 = vld [vmem:[#allocation5 + $0x20] sm:$0xff]
      %v4272 = vld [vmem:[#allocation5 + $0x28] sm:$0xff]
      %v4273 = vld [vmem:[#allocation5 + $0x30] sm:$0xff]
      %v4274 = vld [vmem:[#allocation5 + $0x38] sm:$0xff]
      %v4275 = vld [vmem:[#allocation5 + $0x40] sm:$0xff]
      %v4276 = vld [vmem:[#allocation5 + $0x48] sm:$0xff]
      %v4277 = vld [vmem:[#allocation5 + $0x50] sm:$0xff]
      %v4278 = vld [vmem:[#allocation5 + $0x58] sm:$0xff]
      %v4279 = vld [vmem:[#allocation5 + $0x60] sm:$0xff]
      %v4280 = vld [vmem:[#allocation5 + $0x68] sm:$0xff]
      %v4281 = vld [vmem:[#allocation5 + $0x70] sm:$0xff]
      %v4282 = vld [vmem:[#allocation5 + $0x78] sm:$0xff]
      %v4283 = vld [vmem:[#allocation5 + $0x80] sm:$0xff]
      %v4284 = vld [vmem:[#allocation5 + $0x88] sm:$0xff]
      %v4285 = vld [vmem:[#allocation5 + $0x90] sm:$0xff]
      %v4286 = vld [vmem:[#allocation5 + $0x98] sm:$0xff]
      %v4287 = vld [vmem:[#allocation5 + $0xa0] sm:$0xff]
      %v4288 = vld [vmem:[#allocation5 + $0xa8] sm:$0xff]
      %v4289 = vld [vmem:[#allocation5 + $0xb0] sm:$0xff]
      %v4290 = vld [vmem:[#allocation5 + $0xb8] sm:$0xff]
      %v4291 = vld [vmem:[#allocation5 + $0xc0] sm:$0xff]
      %v4292 = vld [vmem:[#allocation5 + $0xc8] sm:$0xff]
      %v4293 = vld [vmem:[#allocation5 + $0xd0] sm:$0xff]
      %v4294 = vld [vmem:[#allocation5 + $0xd8] sm:$0xff]
      %v4295 = vld [vmem:[#allocation5 + $0xe0] sm:$0xff]
      %v4296 = vld [vmem:[#allocation5 + $0xe8] sm:$0xff]
      %v4297 = vld [vmem:[#allocation5 + $0xf0] sm:$0xff]
      %v4298 = vld [vmem:[#allocation5 + $0xf8] sm:$0xff]
      %v4299 = vld [vmem:[#allocation5 + $0x100] sm:$0xff]
      %v4300 = vld [vmem:[#allocation5 + $0x108] sm:$0xff]
      %v4301 = vld [vmem:[#allocation5 + $0x110] sm:$0xff]
      %v4302 = vld [vmem:[#allocation5 + $0x118] sm:$0xff]
      %v4303 = vld [vmem:[#allocation5 + $0x120] sm:$0xff]
      %v4304 = vld [vmem:[#allocation5 + $0x128] sm:$0xff]
      %v4305 = vld [vmem:[#allocation5 + $0x130] sm:$0xff]
      %v4306 = vld [vmem:[#allocation5 + $0x138] sm:$0xff]
      %v4307 = vld [vmem:[#allocation5 + $0x140] sm:$0xff]
      %v4308 = vld [vmem:[#allocation5 + $0x148] sm:$0xff]
      %v4309 = vld [vmem:[#allocation5 + $0x150] sm:$0xff]
      %v4310 = vld [vmem:[#allocation5 + $0x158] sm:$0xff]
      %v4311 = vld [vmem:[#allocation5 + $0x160] sm:$0xff]
      %v4312 = vld [vmem:[#allocation5 + $0x168] sm:$0xff]
      %v4313 = vld [vmem:[#allocation5 + $0x170] sm:$0xff]
      %v4314 = vld [vmem:[#allocation5 + $0x178] sm:$0xff]
      %v4315 = vld [vmem:[#allocation5 + $0x180] sm:$0xff]
      %v4316 = vld [vmem:[#allocation5 + $0x188] sm:$0xff]
      %v4317 = vld [vmem:[#allocation5 + $0x190] sm:$0xff]
      %v4318 = vld [vmem:[#allocation5 + $0x198] sm:$0xff]
      %v4319 = vld [vmem:[#allocation5 + $0x1a0] sm:$0xff]
      %v4320 = vld [vmem:[#allocation5 + $0x1a8] sm:$0xff]
      %v4321 = vld [vmem:[#allocation5 + $0x1b0] sm:$0xff]
      %v4322 = vld [vmem:[#allocation5 + $0x1b8] sm:$0xff]
      %v4323 = vld [vmem:[#allocation5 + $0x1c0] sm:$0xff]
      %v4324 = vld [vmem:[#allocation5 + $0x1c8] sm:$0xff]
      %v4325 = vld [vmem:[#allocation5 + $0x1d0] sm:$0xff]
      %v4326 = vld [vmem:[#allocation5 + $0x1d8] sm:$0xff]
      %v4327 = vld [vmem:[#allocation5 + $0x1e0] sm:$0xff]
      %v4328 = vld [vmem:[#allocation5 + $0x1e8] sm:$0xff]
      %v4329 = vld [vmem:[#allocation5 + $0x1f0] sm:$0xff]
      %v4330 = vld [vmem:[#allocation5 + $0x1f8] sm:$0xff]
      %v4331 = vld [vmem:[#allocation5 + $0x200] sm:$0xff]
      %v4332 = vld [vmem:[#allocation5 + $0x208] sm:$0xff]
      %v4333 = vld [vmem:[#allocation5 + $0x210] sm:$0xff]
      %v4334 = vld [vmem:[#allocation5 + $0x218] sm:$0xff]
      %v4335 = vld [vmem:[#allocation5 + $0x220] sm:$0xff]
      %v4336 = vld [vmem:[#allocation5 + $0x228] sm:$0xff]
      %v4337 = vld [vmem:[#allocation5 + $0x230] sm:$0xff]
      %v4338 = vld [vmem:[#allocation5 + $0x238] sm:$0xff]
      %v4339 = vld [vmem:[#allocation5 + $0x240] sm:$0xff]
      %v4340 = vld [vmem:[#allocation5 + $0x248] sm:$0xff]
      %v4341 = vld [vmem:[#allocation5 + $0x250] sm:$0xff]
      %v4342 = vld [vmem:[#allocation5 + $0x258] sm:$0xff]
      %v4343 = vld [vmem:[#allocation5 + $0x260] sm:$0xff]
      %v4344 = vld [vmem:[#allocation5 + $0x268] sm:$0xff]
      %v4345 = vld [vmem:[#allocation5 + $0x270] sm:$0xff]
      %v4346 = vld [vmem:[#allocation5 + $0x278] sm:$0xff]
      %v4347 = vld [vmem:[#allocation5 + $0x280] sm:$0xff]
      %v4348 = vld [vmem:[#allocation5 + $0x288] sm:$0xff]
      %v4349 = vld [vmem:[#allocation5 + $0x290] sm:$0xff]
      %v4350 = vld [vmem:[#allocation5 + $0x298] sm:$0xff]
      %v4351 = vld [vmem:[#allocation5 + $0x2a0] sm:$0xff]
      %v4352 = vld [vmem:[#allocation5 + $0x2a8] sm:$0xff]
      %v4353 = vld [vmem:[#allocation5 + $0x2b0] sm:$0xff]
      %v4354 = vld [vmem:[#allocation5 + $0x2b8] sm:$0xff]
      %v4355 = vld [vmem:[#allocation5 + $0x2c0] sm:$0xff]
      %v4356 = vld [vmem:[#allocation5 + $0x2c8] sm:$0xff]
      %v4357 = vld [vmem:[#allocation5 + $0x2d0] sm:$0xff]
      %v4358 = vld [vmem:[#allocation5 + $0x2d8] sm:$0xff]
      %v4359 = vld [vmem:[#allocation5 + $0x2e0] sm:$0xff]
      %v4360 = vld [vmem:[#allocation5 + $0x2e8] sm:$0xff]
      %v4361 = vld [vmem:[#allocation5 + $0x2f0] sm:$0xff]
      %v4362 = vld [vmem:[#allocation5 + $0x2f8] sm:$0xff]
      %v4363 = vld [vmem:[#allocation5 + $0x300] sm:$0xff]
      %v4364 = vld [vmem:[#allocation5 + $0x308] sm:$0xff]
      %v4365 = vld [vmem:[#allocation5 + $0x310] sm:$0xff]
      %v4366 = vld [vmem:[#allocation5 + $0x318] sm:$0xff]
      %v4367 = vld [vmem:[#allocation5 + $0x320] sm:$0xff]
      %v4368 = vld [vmem:[#allocation5 + $0x328] sm:$0xff]
      %v4369 = vld [vmem:[#allocation5 + $0x330] sm:$0xff]
      %v4370 = vld [vmem:[#allocation5 + $0x338] sm:$0xff]
      %v4371 = vld [vmem:[#allocation5 + $0x340] sm:$0xff]
      %v4372 = vld [vmem:[#allocation5 + $0x348] sm:$0xff]
      %v4373 = vld [vmem:[#allocation5 + $0x350] sm:$0xff]
      %v4374 = vld [vmem:[#allocation5 + $0x358] sm:$0xff]
      %v4375 = vld [vmem:[#allocation5 + $0x360] sm:$0xff]
      %v4376 = vld [vmem:[#allocation5 + $0x368] sm:$0xff]
      %v4377 = vld [vmem:[#allocation5 + $0x370] sm:$0xff]
      %v4378 = vld [vmem:[#allocation5 + $0x378] sm:$0xff]
      %v4379 = vld [vmem:[#allocation5 + $0x380] sm:$0xff]
      %v4380 = vld [vmem:[#allocation5 + $0x388] sm:$0xff]
      %v4381 = vld [vmem:[#allocation5 + $0x390] sm:$0xff]
      %v4382 = vld [vmem:[#allocation5 + $0x398] sm:$0xff]
      %v4383 = vld [vmem:[#allocation5 + $0x3a0] sm:$0xff]
      %v4384 = vld [vmem:[#allocation5 + $0x3a8] sm:$0xff]
      %v4385 = vld [vmem:[#allocation5 + $0x3b0] sm:$0xff]
      %v4386 = vld [vmem:[#allocation5 + $0x3b8] sm:$0xff]
      %v4387 = vld [vmem:[#allocation5 + $0x3c0] sm:$0xff]
      %v4388 = vld [vmem:[#allocation5 + $0x3c8] sm:$0xff]
      %v4389 = vld [vmem:[#allocation5 + $0x3d0] sm:$0xff]
      %v4390 = vld [vmem:[#allocation5 + $0x3d8] sm:$0xff]
      %v4391 = vld [vmem:[#allocation5 + $0x3e0] sm:$0xff]
      %v4392 = vld [vmem:[#allocation5 + $0x3e8] sm:$0xff]
      %v4393 = vld [vmem:[#allocation5 + $0x3f0] sm:$0xff]
      %v4394 = vld [vmem:[#allocation5 + $0x3f8] sm:$0xff]
      %v4395 = vld [vmem:[#allocation5 + $0x400] sm:$0xff]
      %v4396 = vld [vmem:[#allocation5 + $0x408] sm:$0xff]
      %v4397 = vld [vmem:[#allocation5 + $0x410] sm:$0xff]
      %v4398 = vld [vmem:[#allocation5 + $0x418] sm:$0xff]
      %v4399 = vld [vmem:[#allocation5 + $0x420] sm:$0xff]
      %v4400 = vld [vmem:[#allocation5 + $0x428] sm:$0xff]
      %v4401 = vld [vmem:[#allocation5 + $0x430] sm:$0xff]
      %v4402 = vld [vmem:[#allocation5 + $0x438] sm:$0xff]
      %v4403 = vld [vmem:[#allocation5 + $0x440] sm:$0xff]
      %v4404 = vld [vmem:[#allocation5 + $0x448] sm:$0xff]
      %v4405 = vld [vmem:[#allocation5 + $0x450] sm:$0xff]
      %v4406 = vld [vmem:[#allocation5 + $0x458] sm:$0xff]
      %v4407 = vld [vmem:[#allocation5 + $0x460] sm:$0xff]
      %v4408 = vld [vmem:[#allocation5 + $0x468] sm:$0xff]
      %v4409 = vld [vmem:[#allocation5 + $0x470] sm:$0xff]
      %v4410 = vld [vmem:[#allocation5 + $0x478] sm:$0xff]
      %v4411 = vld [vmem:[#allocation5 + $0x480] sm:$0xff]
      %v4412 = vld [vmem:[#allocation5 + $0x488] sm:$0xff]
      %v4413 = vld [vmem:[#allocation5 + $0x490] sm:$0xff]
      %v4414 = vld [vmem:[#allocation5 + $0x498] sm:$0xff]
      %v4415 = vld [vmem:[#allocation5 + $0x4a0] sm:$0xff]
      %v4416 = vld [vmem:[#allocation5 + $0x4a8] sm:$0xff]
      %v4417 = vld [vmem:[#allocation5 + $0x4b0] sm:$0xff]
      %v4418 = vld [vmem:[#allocation5 + $0x4b8] sm:$0xff]
      %v4419 = vld [vmem:[#allocation5 + $0x4c0] sm:$0xff]
      %v4420 = vld [vmem:[#allocation5 + $0x4c8] sm:$0xff]
      %v4421 = vld [vmem:[#allocation5 + $0x4d0] sm:$0xff]
      %v4422 = vld [vmem:[#allocation5 + $0x4d8] sm:$0xff]
      %v4423 = vld [vmem:[#allocation5 + $0x4e0] sm:$0xff]
      %v4424 = vld [vmem:[#allocation5 + $0x4e8] sm:$0xff]
      %v4425 = vld [vmem:[#allocation5 + $0x4f0] sm:$0xff]
      %v4426 = vld [vmem:[#allocation5 + $0x4f8] sm:$0xff]
      %v4427 = vld [vmem:[#allocation5 + $0x500] sm:$0xff]
      %v4428 = vld [vmem:[#allocation5 + $0x508] sm:$0xff]
      %v4429 = vld [vmem:[#allocation5 + $0x510] sm:$0xff]
      %v4430 = vld [vmem:[#allocation5 + $0x518] sm:$0xff]
      %v4431 = vld [vmem:[#allocation5 + $0x520] sm:$0xff]
      %v4432 = vld [vmem:[#allocation5 + $0x528] sm:$0xff]
      %v4433 = vld [vmem:[#allocation5 + $0x530] sm:$0xff]
      %v4434 = vld [vmem:[#allocation5 + $0x538] sm:$0xff]
      %v4435 = vld [vmem:[#allocation5 + $0x540] sm:$0xff]
      %v4436 = vld [vmem:[#allocation5 + $0x548] sm:$0xff]
      %v4437 = vld [vmem:[#allocation5 + $0x550] sm:$0xff]
      %v4438 = vld [vmem:[#allocation5 + $0x558] sm:$0xff]
      %v4439 = vld [vmem:[#allocation5 + $0x560] sm:$0xff]
      %v4440 = vld [vmem:[#allocation5 + $0x568] sm:$0xff]
      %v4441 = vld [vmem:[#allocation5 + $0x570] sm:$0xff]
      %v4442 = vld [vmem:[#allocation5 + $0x578] sm:$0xff]
      %v4443 = vld [vmem:[#allocation5 + $0x580] sm:$0xff]
      %v4444 = vld [vmem:[#allocation5 + $0x588] sm:$0xff]
      %v4445 = vld [vmem:[#allocation5 + $0x590] sm:$0xff]
      %v4446 = vld [vmem:[#allocation5 + $0x598] sm:$0xff]
      %v4447 = vld [vmem:[#allocation5 + $0x5a0] sm:$0xff]
      %v4448 = vld [vmem:[#allocation5 + $0x5a8] sm:$0xff]
      %v4449 = vld [vmem:[#allocation5 + $0x5b0] sm:$0xff]
      %v4450 = vld [vmem:[#allocation5 + $0x5b8] sm:$0xff]
      %v4451 = vld [vmem:[#allocation5 + $0x5c0] sm:$0xff]
      %v4452 = vld [vmem:[#allocation5 + $0x5c8] sm:$0xff]
      %v4453 = vld [vmem:[#allocation5 + $0x5d0] sm:$0xff]
      %v4454 = vld [vmem:[#allocation5 + $0x5d8] sm:$0xff]
      %v4455 = vld [vmem:[#allocation5 + $0x5e0] sm:$0xff]
      %v4456 = vld [vmem:[#allocation5 + $0x5e8] sm:$0xff]
      %v4457 = vld [vmem:[#allocation5 + $0x5f0] sm:$0xff]
      %v4458 = vld [vmem:[#allocation5 + $0x5f8] sm:$0xff]
      %v4459 = vld [vmem:[#allocation5 + $0x600] sm:$0xff]
      %v4460 = vld [vmem:[#allocation5 + $0x608] sm:$0xff]
      %v4461 = vld [vmem:[#allocation5 + $0x610] sm:$0xff]
      %v4462 = vld [vmem:[#allocation5 + $0x618] sm:$0xff]
      %v4463 = vld [vmem:[#allocation5 + $0x620] sm:$0xff]
      %v4464 = vld [vmem:[#allocation5 + $0x628] sm:$0xff]
      %v4465 = vld [vmem:[#allocation5 + $0x630] sm:$0xff]
      %v4466 = vld [vmem:[#allocation5 + $0x638] sm:$0xff]
      %v4467 = vld [vmem:[#allocation5 + $0x640] sm:$0xff]
      %v4468 = vld [vmem:[#allocation5 + $0x648] sm:$0xff]
      %v4469 = vld [vmem:[#allocation5 + $0x650] sm:$0xff]
      %v4470 = vld [vmem:[#allocation5 + $0x658] sm:$0xff]
      %v4471 = vld [vmem:[#allocation5 + $0x660] sm:$0xff]
      %v4472 = vld [vmem:[#allocation5 + $0x668] sm:$0xff]
      %v4473 = vld [vmem:[#allocation5 + $0x670] sm:$0xff]
      %v4474 = vld [vmem:[#allocation5 + $0x678] sm:$0xff]
      %v4475 = vld [vmem:[#allocation5 + $0x680] sm:$0xff]
      %v4476 = vld [vmem:[#allocation5 + $0x688] sm:$0xff]
      %v4477 = vld [vmem:[#allocation5 + $0x690] sm:$0xff]
      %v4478 = vld [vmem:[#allocation5 + $0x698] sm:$0xff]
      %v4479 = vld [vmem:[#allocation5 + $0x6a0] sm:$0xff]
      %v4480 = vld [vmem:[#allocation5 + $0x6a8] sm:$0xff]
      %v4481 = vld [vmem:[#allocation5 + $0x6b0] sm:$0xff]
      %v4482 = vld [vmem:[#allocation5 + $0x6b8] sm:$0xff]
      %v4483 = vld [vmem:[#allocation5 + $0x6c0] sm:$0xff]
      %v4484 = vld [vmem:[#allocation5 + $0x6c8] sm:$0xff]
      %v4485 = vld [vmem:[#allocation5 + $0x6d0] sm:$0xff]
      %v4486 = vld [vmem:[#allocation5 + $0x6d8] sm:$0xff]
      %v4487 = vld [vmem:[#allocation5 + $0x6e0] sm:$0xff]
      %v4488 = vld [vmem:[#allocation5 + $0x6e8] sm:$0xff]
      %v4489 = vld [vmem:[#allocation5 + $0x6f0] sm:$0xff]
      %v4490 = vld [vmem:[#allocation5 + $0x6f8] sm:$0xff]
      %v4491 = vld [vmem:[#allocation5 + $0x700] sm:$0xff]
      %v4492 = vld [vmem:[#allocation5 + $0x708] sm:$0xff]
      %v4493 = vld [vmem:[#allocation5 + $0x710] sm:$0xff]
      %v4494 = vld [vmem:[#allocation5 + $0x718] sm:$0xff]
      %v4495 = vld [vmem:[#allocation5 + $0x720] sm:$0xff]
      %v4496 = vld [vmem:[#allocation5 + $0x728] sm:$0xff]
      %v4497 = vld [vmem:[#allocation5 + $0x730] sm:$0xff]
      %v4498 = vld [vmem:[#allocation5 + $0x738] sm:$0xff]
      %v4499 = vld [vmem:[#allocation5 + $0x740] sm:$0xff]
      %v4500 = vld [vmem:[#allocation5 + $0x748] sm:$0xff]
      %v4501 = vld [vmem:[#allocation5 + $0x750] sm:$0xff]
      %v4502 = vld [vmem:[#allocation5 + $0x758] sm:$0xff]
      %v4503 = vld [vmem:[#allocation5 + $0x760] sm:$0xff]
      %v4504 = vld [vmem:[#allocation5 + $0x768] sm:$0xff]
      %v4505 = vld [vmem:[#allocation5 + $0x770] sm:$0xff]
      %v4506 = vld [vmem:[#allocation5 + $0x778] sm:$0xff]
      %v4507 = vld [vmem:[#allocation5 + $0x780] sm:$0xff]
      %v4508 = vld [vmem:[#allocation5 + $0x788] sm:$0xff]
      %v4509 = vld [vmem:[#allocation5 + $0x790] sm:$0xff]
      %v4510 = vld [vmem:[#allocation5 + $0x798] sm:$0xff]
      %v4511 = vld [vmem:[#allocation5 + $0x7a0] sm:$0xff]
      %v4512 = vld [vmem:[#allocation5 + $0x7a8] sm:$0xff]
      %v4513 = vld [vmem:[#allocation5 + $0x7b0] sm:$0xff]
      %v4514 = vld [vmem:[#allocation5 + $0x7b8] sm:$0xff]
      %v4515 = vld [vmem:[#allocation5 + $0x7c0] sm:$0xff]
      %v4516 = vld [vmem:[#allocation5 + $0x7c8] sm:$0xff]
      %v4517 = vld [vmem:[#allocation5 + $0x7d0] sm:$0xff]
      %v4518 = vld [vmem:[#allocation5 + $0x7d8] sm:$0xff]
      %v4519 = vld [vmem:[#allocation5 + $0x7e0] sm:$0xff]
      %v4520 = vld [vmem:[#allocation5 + $0x7e8] sm:$0xff]
      %v4521 = vld [vmem:[#allocation5 + $0x7f0] sm:$0xff]
      %v4522 = vld [vmem:[#allocation5 + $0x7f8] sm:$0xff]
      %v4523 = vld [vmem:[#allocation5 + $0x800] sm:$0xff]
      %v4524 = vld [vmem:[#allocation5 + $0x808] sm:$0xff]
      %v4525 = vld [vmem:[#allocation5 + $0x810] sm:$0xff]
      %v4526 = vld [vmem:[#allocation5 + $0x818] sm:$0xff]
      %v4527 = vld [vmem:[#allocation5 + $0x820] sm:$0xff]
      %v4528 = vld [vmem:[#allocation5 + $0x828] sm:$0xff]
      %v4529 = vld [vmem:[#allocation5 + $0x830] sm:$0xff]
      %v4530 = vld [vmem:[#allocation5 + $0x838] sm:$0xff]
      %v4531 = vld [vmem:[#allocation5 + $0x840] sm:$0xff]
      %v4532 = vld [vmem:[#allocation5 + $0x848] sm:$0xff]
      %v4533 = vld [vmem:[#allocation5 + $0x850] sm:$0xff]
      %v4534 = vld [vmem:[#allocation5 + $0x858] sm:$0xff]
      %v4535 = vld [vmem:[#allocation5 + $0x860] sm:$0xff]
      %v4536 = vld [vmem:[#allocation5 + $0x868] sm:$0xff]
      %v4537 = vld [vmem:[#allocation5 + $0x870] sm:$0xff]
      %v4538 = vld [vmem:[#allocation5 + $0x878] sm:$0xff]
      %v4539 = vld [vmem:[#allocation5 + $0x880] sm:$0xff]
      %v4540 = vld [vmem:[#allocation5 + $0x888] sm:$0xff]
      %v4541 = vld [vmem:[#allocation5 + $0x890] sm:$0xff]
      %v4542 = vld [vmem:[#allocation5 + $0x898] sm:$0xff]
      %v4543 = vld [vmem:[#allocation5 + $0x8a0] sm:$0xff]
      %v4544 = vld [vmem:[#allocation5 + $0x8a8] sm:$0xff]
      %v4545 = vld [vmem:[#allocation5 + $0x8b0] sm:$0xff]
      %v4546 = vld [vmem:[#allocation5 + $0x8b8] sm:$0xff]
      %v4547 = vld [vmem:[#allocation5 + $0x8c0] sm:$0xff]
      %v4548 = vld [vmem:[#allocation5 + $0x8c8] sm:$0xff]
      %v4549 = vld [vmem:[#allocation5 + $0x8d0] sm:$0xff]
      %v4550 = vld [vmem:[#allocation5 + $0x8d8] sm:$0xff]
      %v4551 = vld [vmem:[#allocation5 + $0x8e0] sm:$0xff]
      %v4552 = vld [vmem:[#allocation5 + $0x8e8] sm:$0xff]
      %v4553 = vld [vmem:[#allocation5 + $0x8f0] sm:$0xff]
      %v4554 = vld [vmem:[#allocation5 + $0x8f8] sm:$0xff]
      %v4555 = vld [vmem:[#allocation5 + $0x900] sm:$0xff]
      %v4556 = vld [vmem:[#allocation5 + $0x908] sm:$0xff]
      %v4557 = vld [vmem:[#allocation5 + $0x910] sm:$0xff]
      %v4558 = vld [vmem:[#allocation5 + $0x918] sm:$0xff]
      %v4559 = vld [vmem:[#allocation5 + $0x920] sm:$0xff]
      %v4560 = vld [vmem:[#allocation5 + $0x928] sm:$0xff]
      %v4561 = vld [vmem:[#allocation5 + $0x930] sm:$0xff]
      %v4562 = vld [vmem:[#allocation5 + $0x938] sm:$0xff]
      %v4563 = vld [vmem:[#allocation5 + $0x940] sm:$0xff]
      %v4564 = vld [vmem:[#allocation5 + $0x948] sm:$0xff]
      %v4565 = vld [vmem:[#allocation5 + $0x950] sm:$0xff]
      %v4566 = vld [vmem:[#allocation5 + $0x958] sm:$0xff]
      %v4567 = vld [vmem:[#allocation5 + $0x960] sm:$0xff]
      %v4568 = vld [vmem:[#allocation5 + $0x968] sm:$0xff]
      %v4569 = vld [vmem:[#allocation5 + $0x970] sm:$0xff]
      %v4570 = vld [vmem:[#allocation5 + $0x978] sm:$0xff]
      %v4571 = vld [vmem:[#allocation5 + $0x980] sm:$0xff]
      %v4572 = vld [vmem:[#allocation5 + $0x988] sm:$0xff]
      %v4573 = vld [vmem:[#allocation5 + $0x990] sm:$0xff]
      %v4574 = vld [vmem:[#allocation5 + $0x998] sm:$0xff]
      %v4575 = vld [vmem:[#allocation5 + $0x9a0] sm:$0xff]
      %v4576 = vld [vmem:[#allocation5 + $0x9a8] sm:$0xff]
      %v4577 = vld [vmem:[#allocation5 + $0x9b0] sm:$0xff]
      %v4578 = vld [vmem:[#allocation5 + $0x9b8] sm:$0xff]
      %v4579 = vld [vmem:[#allocation5 + $0x9c0] sm:$0xff]
      %v4580 = vld [vmem:[#allocation5 + $0x9c8] sm:$0xff]
      %v4581 = vld [vmem:[#allocation5 + $0x9d0] sm:$0xff]
      %v4582 = vld [vmem:[#allocation5 + $0x9d8] sm:$0xff]
      %v4583 = vld [vmem:[#allocation5 + $0x9e0] sm:$0xff]
      %v4584 = vld [vmem:[#allocation5 + $0x9e8] sm:$0xff]
      %v4585 = vld [vmem:[#allocation5 + $0x9f0] sm:$0xff]
      %v4586 = vld [vmem:[#allocation5 + $0x9f8] sm:$0xff]
      %v4587 = vld [vmem:[#allocation5 + $0xa00] sm:$0xff]
      %v4588 = vld [vmem:[#allocation5 + $0xa08] sm:$0xff]
      %v4589 = vld [vmem:[#allocation5 + $0xa10] sm:$0xff]
      %v4590 = vld [vmem:[#allocation5 + $0xa18] sm:$0xff]
      %v4591 = vld [vmem:[%s3] sm:$0xff]
      %v4592 = vld [vmem:[%s3 + $0x8] sm:$0xff]
      %v4593 = vld [vmem:[%s3 + $0x10] sm:$0xff]
      %v4594 = vld [vmem:[%s3 + $0x18] sm:$0xff]
      %v4595 = vld [vmem:[%s3 + $0x20] sm:$0xff]
      %v4596 = vld [vmem:[%s3 + $0x28] sm:$0xff]
      %v4597 = vld [vmem:[%s3 + $0x30] sm:$0xff]
      %v4598 = vld [vmem:[%s3 + $0x38] sm:$0xff]
      %v4599 = vld [vmem:[%s3 + $0x40] sm:$0xff]
      %v4600 = vld [vmem:[%s3 + $0x48] sm:$0xff]
      %v4601 = vld [vmem:[%s3 + $0x50] sm:$0xff]
      %v4602 = vld [vmem:[%s3 + $0x58] sm:$0xff]
      %v4603 = vld [vmem:[%s3 + $0x60] sm:$0xff]
      %v4604 = vld [vmem:[%s3 + $0x68] sm:$0xff]
      %v4605 = vld [vmem:[%s3 + $0x70] sm:$0xff]
      %v4606 = vld [vmem:[%s3 + $0x78] sm:$0xff]
      %v4607 = vld [vmem:[%s3 + $0x80] sm:$0xff]
      %v4608 = vld [vmem:[%s3 + $0x88] sm:$0xff]
      %v4609 = vld [vmem:[%s3 + $0x90] sm:$0xff]
      %v4610 = vld [vmem:[%s3 + $0x98] sm:$0xff]
      %v4611 = vld [vmem:[%s3 + $0xa0] sm:$0xff]
      %v4612 = vld [vmem:[%s3 + $0xa8] sm:$0xff]
      %v4613 = vld [vmem:[%s3 + $0xb0] sm:$0xff]
      %v4614 = vld [vmem:[%s3 + $0xb8] sm:$0xff]
      %v4615 = vld [vmem:[%s3 + $0xc0] sm:$0xff]
      %v4616 = vld [vmem:[%s3 + $0xc8] sm:$0xff]
      %v4617 = vld [vmem:[%s3 + $0xd0] sm:$0xff]
      %v4618 = vld [vmem:[%s3 + $0xd8] sm:$0xff]
      %v4619 = vld [vmem:[%s3 + $0xe0] sm:$0xff]
      %v4620 = vld [vmem:[%s3 + $0xe8] sm:$0xff]
      %v4621 = vld [vmem:[%s3 + $0xf0] sm:$0xff]
      %v4622 = vld [vmem:[%s3 + $0xf8] sm:$0xff]
      %v4623 = vld [vmem:[%s3 + $0x100] sm:$0xff]
      %v4624 = vld [vmem:[%s3 + $0x108] sm:$0xff]
      %v4625 = vld [vmem:[%s3 + $0x110] sm:$0xff]
      %v4626 = vld [vmem:[%s3 + $0x118] sm:$0xff]
      %v4627 = vld [vmem:[%s3 + $0x120] sm:$0xff]
      %v4628 = vld [vmem:[%s3 + $0x128] sm:$0xff]
      %v4629 = vld [vmem:[%s3 + $0x130] sm:$0xff]
      %v4630 = vld [vmem:[%s3 + $0x138] sm:$0xff]
      %v4631 = vld [vmem:[%s3 + $0x140] sm:$0xff]
      %v4632 = vld [vmem:[%s3 + $0x148] sm:$0xff]
      %v4633 = vld [vmem:[%s3 + $0x150] sm:$0xff]
      %v4634 = vld [vmem:[%s3 + $0x158] sm:$0xff]
      %v4635 = vld [vmem:[%s3 + $0x160] sm:$0xff]
      %v4636 = vld [vmem:[%s3 + $0x168] sm:$0xff]
      %v4637 = vld [vmem:[%s3 + $0x170] sm:$0xff]
      %v4638 = vld [vmem:[%s3 + $0x178] sm:$0xff]
      %v4639 = vld [vmem:[%s3 + $0x180] sm:$0xff]
      %v4640 = vld [vmem:[%s3 + $0x188] sm:$0xff]
      %v4641 = vld [vmem:[%s3 + $0x190] sm:$0xff]
      %v4642 = vld [vmem:[%s3 + $0x198] sm:$0xff]
      %v4643 = vld [vmem:[%s3 + $0x1a0] sm:$0xff]
      %v4644 = vld [vmem:[%s3 + $0x1a8] sm:$0xff]
      %v4645 = vld [vmem:[%s3 + $0x1b0] sm:$0xff]
      %v4646 = vld [vmem:[%s3 + $0x1b8] sm:$0xff]
      %v4647 = vld [vmem:[%s3 + $0x1c0] sm:$0xff]
      %v4648 = vld [vmem:[%s3 + $0x1c8] sm:$0xff]
      %v4649 = vld [vmem:[%s3 + $0x1d0] sm:$0xff]
      %v4650 = vld [vmem:[%s3 + $0x1d8] sm:$0xff]
      %v4651 = vld [vmem:[%s3 + $0x1e0] sm:$0xff]
      %v4652 = vld [vmem:[%s3 + $0x1e8] sm:$0xff]
      %v4653 = vld [vmem:[%s3 + $0x1f0] sm:$0xff]
      %v4654 = vld [vmem:[%s3 + $0x1f8] sm:$0xff]
      %v4655 = vld [vmem:[%s3 + $0x200] sm:$0xff]
      %v4656 = vld [vmem:[%s3 + $0x208] sm:$0xff]
      %v4657 = vld [vmem:[%s3 + $0x210] sm:$0xff]
      %v4658 = vld [vmem:[%s3 + $0x218] sm:$0xff]
      %v4659 = vld [vmem:[%s3 + $0x220] sm:$0xff]
      %v4660 = vld [vmem:[%s3 + $0x228] sm:$0xff]
      %v4661 = vld [vmem:[%s3 + $0x230] sm:$0xff]
      %v4662 = vld [vmem:[%s3 + $0x238] sm:$0xff]
      %v4663 = vld [vmem:[%s3 + $0x240] sm:$0xff]
      %v4664 = vld [vmem:[%s3 + $0x248] sm:$0xff]
      %v4665 = vld [vmem:[%s3 + $0x250] sm:$0xff]
      %v4666 = vld [vmem:[%s3 + $0x258] sm:$0xff]
      %v4667 = vld [vmem:[%s3 + $0x260] sm:$0xff]
      %v4668 = vld [vmem:[%s3 + $0x268] sm:$0xff]
      %v4669 = vld [vmem:[%s3 + $0x270] sm:$0xff]
      %v4670 = vld [vmem:[%s3 + $0x278] sm:$0xff]
      %v4671 = vld [vmem:[%s3 + $0x280] sm:$0xff]
      %v4672 = vld [vmem:[%s3 + $0x288] sm:$0xff]
      %v4673 = vld [vmem:[%s3 + $0x290] sm:$0xff]
      %v4674 = vld [vmem:[%s3 + $0x298] sm:$0xff]
      %v4675 = vld [vmem:[%s3 + $0x2a0] sm:$0xff]
      %v4676 = vld [vmem:[%s3 + $0x2a8] sm:$0xff]
      %v4677 = vld [vmem:[%s3 + $0x2b0] sm:$0xff]
      %v4678 = vld [vmem:[%s3 + $0x2b8] sm:$0xff]
      %v4679 = vld [vmem:[%s3 + $0x2c0] sm:$0xff]
      %v4680 = vld [vmem:[%s3 + $0x2c8] sm:$0xff]
      %v4681 = vld [vmem:[%s3 + $0x2d0] sm:$0xff]
      %v4682 = vld [vmem:[%s3 + $0x2d8] sm:$0xff]
      %v4683 = vld [vmem:[%s3 + $0x2e0] sm:$0xff]
      %v4684 = vld [vmem:[%s3 + $0x2e8] sm:$0xff]
      %v4685 = vld [vmem:[%s3 + $0x2f0] sm:$0xff]
      %v4686 = vld [vmem:[%s3 + $0x2f8] sm:$0xff]
      %v4687 = vld [vmem:[%s3 + $0x300] sm:$0xff]
      %v4688 = vld [vmem:[%s3 + $0x308] sm:$0xff]
      %v4689 = vld [vmem:[%s3 + $0x310] sm:$0xff]
      %v4690 = vld [vmem:[%s3 + $0x318] sm:$0xff]
      %v4691 = vld [vmem:[%s3 + $0x320] sm:$0xff]
      %v4692 = vld [vmem:[%s3 + $0x328] sm:$0xff]
      %v4693 = vld [vmem:[%s3 + $0x330] sm:$0xff]
      %v4694 = vld [vmem:[%s3 + $0x338] sm:$0xff]
      %v4695 = vld [vmem:[%s3 + $0x340] sm:$0xff]
      %v4696 = vld [vmem:[%s3 + $0x348] sm:$0xff]
      %v4697 = vld [vmem:[%s3 + $0x350] sm:$0xff]
      %v4698 = vld [vmem:[%s3 + $0x358] sm:$0xff]
      %v4699 = vld [vmem:[%s3 + $0x360] sm:$0xff]
      %v4700 = vld [vmem:[%s3 + $0x368] sm:$0xff]
      %v4701 = vld [vmem:[%s3 + $0x370] sm:$0xff]
      %v4702 = vld [vmem:[%s3 + $0x378] sm:$0xff]
      %v4703 = vld [vmem:[%s3 + $0x380] sm:$0xff]
      %v4704 = vld [vmem:[%s3 + $0x388] sm:$0xff]
      %v4705 = vld [vmem:[%s3 + $0x390] sm:$0xff]
      %v4706 = vld [vmem:[%s3 + $0x398] sm:$0xff]
      %v4707 = vld [vmem:[%s3 + $0x3a0] sm:$0xff]
      %v4708 = vld [vmem:[%s3 + $0x3a8] sm:$0xff]
      %v4709 = vld [vmem:[%s3 + $0x3b0] sm:$0xff]
      %v4710 = vld [vmem:[%s3 + $0x3b8] sm:$0xff]
      %v4711 = vld [vmem:[%s3 + $0x3c0] sm:$0xff]
      %v4712 = vld [vmem:[%s3 + $0x3c8] sm:$0xff]
      %v4713 = vld [vmem:[%s3 + $0x3d0] sm:$0xff]
      %v4714 = vld [vmem:[%s3 + $0x3d8] sm:$0xff]
      %v4715 = vld [vmem:[%s3 + $0x3e0] sm:$0xff]
      %v4716 = vld [vmem:[%s3 + $0x3e8] sm:$0xff]
      %v4717 = vld [vmem:[%s3 + $0x3f0] sm:$0xff]
      %v4718 = vld [vmem:[%s3 + $0x3f8] sm:$0xff]
      %v4719 = vld [vmem:[%s3 + $0x400] sm:$0xff]
      %v4720 = vld [vmem:[%s3 + $0x408] sm:$0xff]
      %v4721 = vld [vmem:[%s3 + $0x410] sm:$0xff]
      %v4722 = vld [vmem:[%s3 + $0x418] sm:$0xff]
      %v4723 = vld [vmem:[%s3 + $0x420] sm:$0xff]
      %v4724 = vld [vmem:[%s3 + $0x428] sm:$0xff]
      %v4725 = vld [vmem:[%s3 + $0x430] sm:$0xff]
      %v4726 = vld [vmem:[%s3 + $0x438] sm:$0xff]
      %v4727 = vld [vmem:[%s3 + $0x440] sm:$0xff]
      %v4728 = vld [vmem:[%s3 + $0x448] sm:$0xff]
      %v4729 = vld [vmem:[%s3 + $0x450] sm:$0xff]
      %v4730 = vld [vmem:[%s3 + $0x458] sm:$0xff]
      %v4731 = vld [vmem:[%s3 + $0x460] sm:$0xff]
      %v4732 = vld [vmem:[%s3 + $0x468] sm:$0xff]
      %v4733 = vld [vmem:[%s3 + $0x470] sm:$0xff]
      %v4734 = vld [vmem:[%s3 + $0x478] sm:$0xff]
      %v4736 = vlaneseq
      %v4737 = vshrl.u32 %v4736, 7
      %v4738 = vsub.s32 0, %v4737
      %v4739 = vrot.slane %v227, %v4738
      %4741 = vmatprep.subr.mxu0 0.0
      %4742 = vmatpush1.msra.mxu0 %v4591
      %4743 = vmatprep.subr.mxu0 0.0
      %4744 = vmatpush1.msra.mxu0 %v4592
      %4745 = vmatprep.subr.mxu0 0.0
      %4746 = vmatpush1.msra.mxu0 %v4593
      %4747 = vmatprep.subr.mxu0 0.0
      %4748 = vmatpush1.msra.mxu0 %v4594
      %4749 = vmatprep.subr.mxu0 0.0
      %4750 = vmatpush1.msra.mxu0 %v4595
      %4751 = vmatprep.subr.mxu0 0.0
      %4752 = vmatpush1.msra.mxu0 %v4596
      %4753 = vmatprep.subr.mxu0 0.0
      %4754 = vmatpush1.msra.mxu0 %v4597
      %4755 = vmatprep.subr.mxu0 0.0
      %4756 = vmatpush1.msra.mxu0 %v4598
      %4757 = vmatprep.subr.mxu0 0.0
      %4758 = vmatpush1.msra.mxu0 %v4599
      %4759 = vmatprep.subr.mxu0 0.0
      %4760 = vmatpush1.msra.mxu0 %v4600
      %4761 = vmatprep.subr.mxu0 0.0
      %4762 = vmatpush1.msra.mxu0 %v4601
      %4763 = vmatprep.subr.mxu0 0.0
      %4764 = vmatpush1.msra.mxu0 %v4602
      %4765 = vmatprep.subr.mxu0 0.0
      %4766 = vmatpush1.msra.mxu0 %v4603
      %4767 = vmatprep.subr.mxu0 0.0
      %4768 = vmatpush1.msra.mxu0 %v4604
      %4769 = vmatprep.subr.mxu0 0.0
      %4770 = vmatpush1.msra.mxu0 %v4605
      %4771 = vmatprep.subr.mxu0 0.0
      %4772 = vmatpush1.msra.mxu0 %v4606
      %4773 = vmatprep.subr.mxu0 0.0
      %4774 = vmatpush1.msra.mxu0 %v4607
      %4775 = vmatprep.subr.mxu0 0.0
      %4776 = vmatpush1.msra.mxu0 %v4608
      %4777 = vmatprep.subr.mxu0 0.0
      %4778 = vmatpush1.msra.mxu0 %v4609
      %4779 = vmatprep.subr.mxu0 0.0
      %4780 = vmatpush1.msra.mxu0 %v4610
      %4781 = vmatprep.subr.mxu0 0.0
      %4782 = vmatpush1.msra.mxu0 %v4611
      %4783 = vmatprep.subr.mxu0 0.0
      %4784 = vmatpush1.msra.mxu0 %v4612
      %4785 = vmatprep.subr.mxu0 0.0
      %4786 = vmatpush1.msra.mxu0 %v4613
      %4787 = vmatprep.subr.mxu0 0.0
      %4788 = vmatpush1.msra.mxu0 %v4614
      %4789 = vmatprep.subr.mxu0 0.0
      %4790 = vmatpush1.msra.mxu0 %v4615
      %4791 = vmatprep.subr.mxu0 0.0
      %4792 = vmatpush1.msra.mxu0 %v4616
      %4793 = vmatprep.subr.mxu0 0.0
      %4794 = vmatpush1.msra.mxu0 %v4617
      %4795 = vmatprep.subr.mxu0 0.0
      %4796 = vmatpush1.msra.mxu0 %v4618
      %4797 = vmatprep.subr.mxu0 0.0
      %4798 = vmatpush1.msra.mxu0 %v4619
      %4799 = vmatprep.subr.mxu0 0.0
      %4800 = vmatpush1.msra.mxu0 %v4620
      %4801 = vmatprep.subr.mxu0 0.0
      %4802 = vmatpush1.msra.mxu0 %v4621
      %4803 = vmatprep.subr.mxu0 0.0
      %4804 = vmatpush1.msra.mxu0 %v4622
      %4805 = vmatprep.mubr.f32.mxu0 %v4268
      %4806 = vmatmul.mubr.f32.gmra.mrb[0].mxu0 %v4267
      %v4807 = vpop.f32.mrb[0].mxu0
      %v4808 = vadd.f32 %v4739, %v4807
      %v4809 = vpop.f32.mrb[0].mxu0
      %4810 = vmatprep.mubr.f32.mxu0 %v4277
      %4811 = vmatmul.mubr.f32.gmra.mrb[0].mxu0 %v4276
      %v4812 = vpop.f32.mrb[0].mxu0
      %v4813 = vadd.f32 %v4739, %v4812
      %v4814 = vpop.f32.mrb[0].mxu0
      %4815 = vmatprep.mubr.f32.mxu0 %v4286
      %4816 = vmatmul.mubr.f32.gmra.mrb[0].mxu0 %v4285
      %v4817 = vpop.f32.mrb[0].mxu0
      %v4818 = vadd.f32 %v4739, %v4817
      %v4819 = vpop.f32.mrb[0].mxu0
      %4820 = vmatprep.mubr.f32.mxu0 %v4295
      %4821 = vmatmul.mubr.f32.gmra.mrb[0].mxu0 %v4294
      %v4822 = vpop.f32.mrb[0].mxu0
      %v4823 = vadd.f32 %v4739, %v4822
      %v4824 = vpop.f32.mrb[0].mxu0
      %4825 = vmatprep.mubr.f32.mxu0 %v4304
      %4826 = vmatmul.mubr.f32.gmra.mrb[0].mxu0 %v4303
      %v4827 = vpop.f32.mrb[0].mxu0
      %v4828 = vadd.f32 %v4739, %v4827
      %v4829 = vpop.f32.mrb[0].mxu0
      %4830 = vmatprep.mubr.f32.mxu0 %v4313
      %4831 = vmatmul.mubr.f32.gmra.mrb[0].mxu0 %v4312
      %v4832 = vpop.f32.mrb[0].mxu0
      %v4833 = vadd.f32 %v4739, %v4832
      %v4834 = vpop.f32.mrb[0].mxu0
      %4835 = vmatprep.mubr.f32.mxu0 %v4322
      %4836 = vmatmul.mubr.f32.gmra.mrb[0].mxu0 %v4321
      %v4837 = vpop.f32.mrb[0].mxu0
      %v4838 = vadd.f32 %v4739, %v4837
      %v4839 = vpop.f32.mrb[0].mxu0
      %4840 = vmatprep.mubr.f32.mxu0 %v4331
      %4841 = vmatmul.mubr.f32.gmra.mrb[0].mxu0 %v4330
      %v4842 = vpop.f32.mrb[0].mxu0
      %v4843 = vadd.f32 %v4739, %v4842
      %v4844 = vpop.f32.mrb[0].mxu0
      %4845 = vmatprep.mubr.f32.mxu0 %v4340
      %4846 = vmatmul.mubr.f32.gmra.mrb[0].mxu0 %v4339
      %v4847 = vpop.f32.mrb[0].mxu0
      %v4848 = vadd.f32 %v4739, %v4847
      %v4849 = vpop.f32.mrb[0].mxu0
      %4850 = vmatprep.mubr.f32.mxu0 %v4349
      %4851 = vmatmul.mubr.f32.gmra.mrb[0].mxu0 %v4348
      %v4852 = vpop.f32.mrb[0].mxu0
      %v4853 = vadd.f32 %v4739, %v4852
      %v4854 = vpop.f32.mrb[0].mxu0
      %4855 = vmatprep.mubr.f32.mxu0 %v4358
      %4856 = vmatmul.mubr.f32.gmra.mrb[0].mxu0 %v4357
      %v4857 = vpop.f32.mrb[0].mxu0
      %v4858 = vadd.f32 %v4739, %v4857
      %v4859 = vpop.f32.mrb[0].mxu0
      %4860 = vmatprep.mubr.f32.mxu0 %v4367
      %4861 = vmatmul.mubr.f32.gmra.mrb[0].mxu0 %v4366
      %v4862 = vpop.f32.mrb[0].mxu0
      %v4863 = vadd.f32 %v4739, %v4862
      %v4864 = vpop.f32.mrb[0].mxu0
      %4865 = vmatprep.mubr.f32.mxu0 %v4376
      %4866 = vmatmul.mubr.f32.gmra.mrb[0].mxu0 %v4375
      %v4867 = vpop.f32.mrb[0].mxu0
      %v4868 = vadd.f32 %v4739, %v4867
      %v4869 = vpop.f32.mrb[0].mxu0
      %4870 = vmatprep.mubr.f32.mxu0 %v4385
      %4871 = vmatmul.mubr.f32.gmra.mrb[0].mxu0 %v4384
      %v4872 = vpop.f32.mrb[0].mxu0
      %v4873 = vadd.f32 %v4739, %v4872
      %v4874 = vpop.f32.mrb[0].mxu0
      %4875 = vmatprep.mubr.f32.mxu0 %v4394
      %4876 = vmatmul.mubr.f32.gmra.mrb[0].mxu0 %v4393
      %v4877 = vpop.f32.mrb[0].mxu0
      %v4878 = vadd.f32 %v4739, %v4877
      %v4879 = vpop.f32.mrb[0].mxu0
      %4880 = vmatprep.mubr.f32.mxu0 %v4403
      %4881 = vmatmul.mubr.f32.gmra.mrb[0].mxu0 %v4402
      %v4882 = vpop.f32.mrb[0].mxu0
      %v4883 = vadd.f32 %v4739, %v4882
      %v4884 = vpop.f32.mrb[0].mxu0
      %4885 = vmatprep.mubr.f32.mxu0 %v4412
      %4886 = vmatmul.mubr.f32.gmra.mrb[0].mxu0 %v4411
      %v4887 = vpop.f32.mrb[0].mxu0
      %v4888 = vadd.f32 %v4739, %v4887
      %v4889 = vpop.f32.mrb[0].mxu0
      %4890 = vmatprep.mubr.f32.mxu0 %v4421
      %4891 = vmatmul.mubr.f32.gmra.mrb[0].mxu0 %v4420
      %v4892 = vpop.f32.mrb[0].mxu0
      %v4893 = vadd.f32 %v4739, %v4892
      %v4894 = vpop.f32.mrb[0].mxu0
      %4895 = vmatprep.mubr.f32.mxu0 %v4430
      %4896 = vmatmul.mubr.f32.gmra.mrb[0].mxu0 %v4429
      %v4897 = vpop.f32.mrb[0].mxu0
      %v4898 = vadd.f32 %v4739, %v4897
      %v4899 = vpop.f32.mrb[0].mxu0
      %4900 = vmatprep.mubr.f32.mxu0 %v4439
      %4901 = vmatmul.mubr.f32.gmra.mrb[0].mxu0 %v4438
      %v4902 = vpop.f32.mrb[0].mxu0
      %v4903 = vadd.f32 %v4739, %v4902
      %v4904 = vpop.f32.mrb[0].mxu0
      %4905 = vmatprep.mubr.f32.mxu0 %v4448
      %4906 = vmatmul.mubr.f32.gmra.mrb[0].mxu0 %v4447
      %v4907 = vpop.f32.mrb[0].mxu0
      %v4908 = vadd.f32 %v4739, %v4907
      %v4909 = vpop.f32.mrb[0].mxu0
      %4910 = vmatprep.mubr.f32.mxu0 %v4457
      %4911 = vmatmul.mubr.f32.gmra.mrb[0].mxu0 %v4456
      %v4912 = vpop.f32.mrb[0].mxu0
      %v4913 = vadd.f32 %v4739, %v4912
      %v4914 = vpop.f32.mrb[0].mxu0
      %4915 = vmatprep.mubr.f32.mxu0 %v4466
      %4916 = vmatmul.mubr.f32.gmra.mrb[0].mxu0 %v4465
      %v4917 = vpop.f32.mrb[0].mxu0
      %v4918 = vadd.f32 %v4739, %v4917
      %v4919 = vpop.f32.mrb[0].mxu0
      %4920 = vmatprep.mubr.f32.mxu0 %v4475
      %4921 = vmatmul.mubr.f32.gmra.mrb[0].mxu0 %v4474
      %v4922 = vpop.f32.mrb[0].mxu0
      %v4923 = vadd.f32 %v4739, %v4922
      %v4924 = vpop.f32.mrb[0].mxu0
      %4925 = vmatprep.mubr.f32.mxu0 %v4484
      %4926 = vmatmul.mubr.f32.gmra.mrb[0].mxu0 %v4483
      %v4927 = vpop.f32.mrb[0].mxu0
      %v4928 = vadd.f32 %v4739, %v4927
      %v4929 = vpop.f32.mrb[0].mxu0
      %4930 = vmatprep.mubr.f32.mxu0 %v4493
      %4931 = vmatmul.mubr.f32.gmra.mrb[0].mxu0 %v4492
      %v4932 = vpop.f32.mrb[0].mxu0
      %v4933 = vadd.f32 %v4739, %v4932
      %v4934 = vpop.f32.mrb[0].mxu0
      %4935 = vmatprep.mubr.f32.mxu0 %v4502
      %4936 = vmatmul.mubr.f32.gmra.mrb[0].mxu0 %v4501
      %v4937 = vpop.f32.mrb[0].mxu0
      %v4938 = vadd.f32 %v4739, %v4937
      %v4939 = vpop.f32.mrb[0].mxu0
      %4940 = vmatprep.mubr.f32.mxu0 %v4511
      %4941 = vmatmul.mubr.f32.gmra.mrb[0].mxu0 %v4510
      %v4942 = vpop.f32.mrb[0].mxu0
      %v4943 = vadd.f32 %v4739, %v4942
      %v4944 = vpop.f32.mrb[0].mxu0
      %4945 = vmatprep.mubr.f32.mxu0 %v4520
      %4946 = vmatmul.mubr.f32.gmra.mrb[0].mxu0 %v4519
      %v4947 = vpop.f32.mrb[0].mxu0
      %v4948 = vadd.f32 %v4739, %v4947
      %v4949 = vpop.f32.mrb[0].mxu0
      %4950 = vmatprep.mubr.f32.mxu0 %v4529
      %4951 = vmatmul.mubr.f32.gmra.mrb[0].mxu0 %v4528
      %v4952 = vpop.f32.mrb[0].mxu0
      %v4953 = vadd.f32 %v4739, %v4952
      %v4954 = vpop.f32.mrb[0].mxu0
      %4955 = vmatprep.mubr.f32.mxu0 %v4538
      %4956 = vmatmul.mubr.f32.gmra.mrb[0].mxu0 %v4537
      %v4957 = vpop.f32.mrb[0].mxu0
      %v4958 = vadd.f32 %v4739, %v4957
      %v4959 = vpop.f32.mrb[0].mxu0
      %4960 = vmatprep.mubr.f32.mxu0 %v4547
      %4961 = vmatmul.mubr.f32.gmra.mrb[0].mxu0 %v4546
      %v4962 = vpop.f32.mrb[0].mxu0
      %v4963 = vadd.f32 %v4739, %v4962
      %v4964 = vpop.f32.mrb[0].mxu0
      %4965 = vmatprep.mubr.f32.mxu0 %v4556
      %4966 = vmatmul.mubr.f32.gmra.mrb[0].mxu0 %v4555
      %v4967 = vpop.f32.mrb[0].mxu0
      %v4968 = vadd.f32 %v4739, %v4967
      %v4969 = vpop.f32.mrb[0].mxu0
      %4970 = vmatprep.mubr.f32.mxu0 %v4565
      %4971 = vmatmul.mubr.f32.gmra.mrb[0].mxu0 %v4564
      %v4972 = vpop.f32.mrb[0].mxu0
      %v4973 = vadd.f32 %v4739, %v4972
      %v4974 = vpop.f32.mrb[0].mxu0
      %4975 = vmatprep.mubr.f32.mxu0 %v4574
      %4976 = vmatmul.mubr.f32.gmra.mrb[0].mxu0 %v4573
      %v4977 = vpop.f32.mrb[0].mxu0
      %v4978 = vadd.f32 %v4739, %v4977
      %v4979 = vpop.f32.mrb[0].mxu0
      %4980 = vmatprep.mubr.f32.mxu0 %v4583
      %4981 = vmatmul.mubr.f32.gmra.mrb[0].mxu0 %v4582
      %v4982 = vpop.f32.mrb[0].mxu0
      %v4983 = vadd.f32 %v4739, %v4982
      %v4984 = vpop.f32.mrb[0].mxu0
      %4985 = vdwg.mxu0
      %4986 = vmatprep.subr.mxu0 0.0
      %4987 = vmatpush1.msra.mxu0 %v4623
      %4988 = vmatprep.subr.mxu0 0.0
      %4989 = vmatpush1.msra.mxu0 %v4624
      %4990 = vmatprep.subr.mxu0 0.0
      %4991 = vmatpush1.msra.mxu0 %v4625
      %4992 = vmatprep.subr.mxu0 0.0
      %4993 = vmatpush1.msra.mxu0 %v4626
      %4994 = vmatprep.subr.mxu0 0.0
      %4995 = vmatpush1.msra.mxu0 %v4627
      %4996 = vmatprep.subr.mxu0 0.0
      %4997 = vmatpush1.msra.mxu0 %v4628
      %4998 = vmatprep.subr.mxu0 0.0
      %4999 = vmatpush1.msra.mxu0 %v4629
      %5000 = vmatprep.subr.mxu0 0.0
      %5001 = vmatpush1.msra.mxu0 %v4630
      %5002 = vmatprep.subr.mxu0 0.0
      %5003 = vmatpush1.msra.mxu0 %v4631
      %5004 = vmatprep.subr.mxu0 0.0
      %5005 = vmatpush1.msra.mxu0 %v4632
      %5006 = vmatprep.subr.mxu0 0.0
      %5007 = vmatpush1.msra.mxu0 %v4633
      %5008 = vmatprep.subr.mxu0 0.0
      %5009 = vmatpush1.msra.mxu0 %v4634
      %5010 = vmatprep.subr.mxu0 0.0
      %5011 = vmatpush1.msra.mxu0 %v4635
      %5012 = vmatprep.subr.mxu0 0.0
      %5013 = vmatpush1.msra.mxu0 %v4636
      %5014 = vmatprep.subr.mxu0 0.0
      %5015 = vmatpush1.msra.mxu0 %v4637
      %5016 = vmatprep.subr.mxu0 0.0
      %5017 = vmatpush1.msra.mxu0 %v4638
      %5018 = vmatprep.subr.mxu0 0.0
      %5019 = vmatpush1.msra.mxu0 %v4639
      %5020 = vmatprep.subr.mxu0 0.0
      %5021 = vmatpush1.msra.mxu0 %v4640
      %5022 = vmatprep.subr.mxu0 0.0
      %5023 = vmatpush1.msra.mxu0 %v4641
      %5024 = vmatprep.subr.mxu0 0.0
      %5025 = vmatpush1.msra.mxu0 %v4642
      %5026 = vmatprep.subr.mxu0 0.0
      %5027 = vmatpush1.msra.mxu0 %v4643
      %5028 = vmatprep.subr.mxu0 0.0
      %5029 = vmatpush1.msra.mxu0 %v4644
      %5030 = vmatprep.subr.mxu0 0.0
      %5031 = vmatpush1.msra.mxu0 %v4645
      %5032 = vmatprep.subr.mxu0 0.0
      %5033 = vmatpush1.msra.mxu0 %v4646
      %5034 = vmatprep.subr.mxu0 0.0
      %5035 = vmatpush1.msra.mxu0 %v4647
      %5036 = vmatprep.subr.mxu0 0.0
      %5037 = vmatpush1.msra.mxu0 %v4648
      %5038 = vmatprep.subr.mxu0 0.0
      %5039 = vmatpush1.msra.mxu0 %v4649
      %5040 = vmatprep.subr.mxu0 0.0
      %5041 = vmatpush1.msra.mxu0 %v4650
      %5042 = vmatprep.subr.mxu0 0.0
      %5043 = vmatpush1.msra.mxu0 %v4651
      %5044 = vmatprep.subr.mxu0 0.0
      %5045 = vmatpush1.msra.mxu0 %v4652
      %5046 = vmatprep.subr.mxu0 0.0
      %5047 = vmatpush1.msra.mxu0 %v4653
      %5048 = vmatprep.subr.mxu0 0.0
      %5049 = vmatpush1.msra.mxu0 %v4654
      %5050 = vmatprep.mubr.f32.mxu0 %v4270
      %5051 = vmatmul.mubr.f32.gmra.mrb[0].mxu0 %v4269
      %v5052 = vpop.f32.mrb[0].mxu0
      %v5053 = vadd.f32 %v4808, %v5052
      %v5054 = vpop.f32.mrb[0].mxu0
      %5055 = vmatprep.mubr.f32.mxu0 %v4279
      %5056 = vmatmul.mubr.f32.gmra.mrb[0].mxu0 %v4278
      %v5057 = vpop.f32.mrb[0].mxu0
      %v5058 = vadd.f32 %v4813, %v5057
      %v5059 = vpop.f32.mrb[0].mxu0
      %5060 = vmatprep.mubr.f32.mxu0 %v4288
      %5061 = vmatmul.mubr.f32.gmra.mrb[0].mxu0 %v4287
      %v5062 = vpop.f32.mrb[0].mxu0
      %v5063 = vadd.f32 %v4818, %v5062
      %v5064 = vpop.f32.mrb[0].mxu0
      %5065 = vmatprep.mubr.f32.mxu0 %v4297
      %5066 = vmatmul.mubr.f32.gmra.mrb[0].mxu0 %v4296
      %v5067 = vpop.f32.mrb[0].mxu0
      %v5068 = vadd.f32 %v4823, %v5067
      %v5069 = vpop.f32.mrb[0].mxu0
      %5070 = vmatprep.mubr.f32.mxu0 %v4306
      %5071 = vmatmul.mubr.f32.gmra.mrb[0].mxu0 %v4305
      %v5072 = vpop.f32.mrb[0].mxu0
      %v5073 = vadd.f32 %v4828, %v5072
      %v5074 = vpop.f32.mrb[0].mxu0
      %5075 = vmatprep.mubr.f32.mxu0 %v4315
      %5076 = vmatmul.mubr.f32.gmra.mrb[0].mxu0 %v4314
      %v5077 = vpop.f32.mrb[0].mxu0
      %v5078 = vadd.f32 %v4833, %v5077
      %v5079 = vpop.f32.mrb[0].mxu0
      %5080 = vmatprep.mubr.f32.mxu0 %v4324
      %5081 = vmatmul.mubr.f32.gmra.mrb[0].mxu0 %v4323
      %v5082 = vpop.f32.mrb[0].mxu0
      %v5083 = vadd.f32 %v4838, %v5082
      %v5084 = vpop.f32.mrb[0].mxu0
      %5085 = vmatprep.mubr.f32.mxu0 %v4333
      %5086 = vmatmul.mubr.f32.gmra.mrb[0].mxu0 %v4332
      %v5087 = vpop.f32.mrb[0].mxu0
      %v5088 = vadd.f32 %v4843, %v5087
      %v5089 = vpop.f32.mrb[0].mxu0
      %5090 = vmatprep.mubr.f32.mxu0 %v4342
      %5091 = vmatmul.mubr.f32.gmra.mrb[0].mxu0 %v4341
      %v5092 = vpop.f32.mrb[0].mxu0
      %v5093 = vadd.f32 %v4848, %v5092
      %v5094 = vpop.f32.mrb[0].mxu0
      %5095 = vmatprep.mubr.f32.mxu0 %v4351
      %5096 = vmatmul.mubr.f32.gmra.mrb[0].mxu0 %v4350
      %v5097 = vpop.f32.mrb[0].mxu0
      %v5098 = vadd.f32 %v4853, %v5097
      %v5099 = vpop.f32.mrb[0].mxu0
      %5100 = vmatprep.mubr.f32.mxu0 %v4360
      %5101 = vmatmul.mubr.f32.gmra.mrb[0].mxu0 %v4359
      %v5102 = vpop.f32.mrb[0].mxu0
      %v5103 = vadd.f32 %v4858, %v5102
      %v5104 = vpop.f32.mrb[0].mxu0
      %5105 = vmatprep.mubr.f32.mxu0 %v4369
      %5106 = vmatmul.mubr.f32.gmra.mrb[0].mxu0 %v4368
      %v5107 = vpop.f32.mrb[0].mxu0
      %v5108 = vadd.f32 %v4863, %v5107
      %v5109 = vpop.f32.mrb[0].mxu0
      %5110 = vmatprep.mubr.f32.mxu0 %v4378
      %5111 = vmatmul.mubr.f32.gmra.mrb[0].mxu0 %v4377
      %v5112 = vpop.f32.mrb[0].mxu0
      %v5113 = vadd.f32 %v4868, %v5112
      %v5114 = vpop.f32.mrb[0].mxu0
      %5115 = vmatprep.mubr.f32.mxu0 %v4387
      %5116 = vmatmul.mubr.f32.gmra.mrb[0].mxu0 %v4386
      %v5117 = vpop.f32.mrb[0].mxu0
      %v5118 = vadd.f32 %v4873, %v5117
      %v5119 = vpop.f32.mrb[0].mxu0
      %5120 = vmatprep.mubr.f32.mxu0 %v4396
      %5121 = vmatmul.mubr.f32.gmra.mrb[0].mxu0 %v4395
      %v5122 = vpop.f32.mrb[0].mxu0
      %v5123 = vadd.f32 %v4878, %v5122
      %v5124 = vpop.f32.mrb[0].mxu0
      %5125 = vmatprep.mubr.f32.mxu0 %v4405
      %5126 = vmatmul.mubr.f32.gmra.mrb[0].mxu0 %v4404
      %v5127 = vpop.f32.mrb[0].mxu0
      %v5128 = vadd.f32 %v4883, %v5127
      %v5129 = vpop.f32.mrb[0].mxu0
      %5130 = vmatprep.mubr.f32.mxu0 %v4414
      %5131 = vmatmul.mubr.f32.gmra.mrb[0].mxu0 %v4413
      %v5132 = vpop.f32.mrb[0].mxu0
      %v5133 = vadd.f32 %v4888, %v5132
      %v5134 = vpop.f32.mrb[0].mxu0
      %5135 = vmatprep.mubr.f32.mxu0 %v4423
      %5136 = vmatmul.mubr.f32.gmra.mrb[0].mxu0 %v4422
      %v5137 = vpop.f32.mrb[0].mxu0
      %v5138 = vadd.f32 %v4893, %v5137
      %v5139 = vpop.f32.mrb[0].mxu0
      %5140 = vmatprep.mubr.f32.mxu0 %v4432
      %5141 = vmatmul.mubr.f32.gmra.mrb[0].mxu0 %v4431
      %v5142 = vpop.f32.mrb[0].mxu0
      %v5143 = vadd.f32 %v4898, %v5142
      %v5144 = vpop.f32.mrb[0].mxu0
      %5145 = vmatprep.mubr.f32.mxu0 %v4441
      %5146 = vmatmul.mubr.f32.gmra.mrb[0].mxu0 %v4440
      %v5147 = vpop.f32.mrb[0].mxu0
      %v5148 = vadd.f32 %v4903, %v5147
      %v5149 = vpop.f32.mrb[0].mxu0
      %5150 = vmatprep.mubr.f32.mxu0 %v4450
      %5151 = vmatmul.mubr.f32.gmra.mrb[0].mxu0 %v4449
      %v5152 = vpop.f32.mrb[0].mxu0
      %v5153 = vadd.f32 %v4908, %v5152
      %v5154 = vpop.f32.mrb[0].mxu0
      %5155 = vmatprep.mubr.f32.mxu0 %v4459
      %5156 = vmatmul.mubr.f32.gmra.mrb[0].mxu0 %v4458
      %v5157 = vpop.f32.mrb[0].mxu0
      %v5158 = vadd.f32 %v4913, %v5157
      %v5159 = vpop.f32.mrb[0].mxu0
      %5160 = vmatprep.mubr.f32.mxu0 %v4468
      %5161 = vmatmul.mubr.f32.gmra.mrb[0].mxu0 %v4467
      %v5162 = vpop.f32.mrb[0].mxu0
      %v5163 = vadd.f32 %v4918, %v5162
      %v5164 = vpop.f32.mrb[0].mxu0
      %5165 = vmatprep.mubr.f32.mxu0 %v4477
      %5166 = vmatmul.mubr.f32.gmra.mrb[0].mxu0 %v4476
      %v5167 = vpop.f32.mrb[0].mxu0
      %v5168 = vadd.f32 %v4923, %v5167
      %v5169 = vpop.f32.mrb[0].mxu0
      %5170 = vmatprep.mubr.f32.mxu0 %v4486
      %5171 = vmatmul.mubr.f32.gmra.mrb[0].mxu0 %v4485
      %v5172 = vpop.f32.mrb[0].mxu0
      %v5173 = vadd.f32 %v4928, %v5172
      %v5174 = vpop.f32.mrb[0].mxu0
      %5175 = vmatprep.mubr.f32.mxu0 %v4495
      %5176 = vmatmul.mubr.f32.gmra.mrb[0].mxu0 %v4494
      %v5177 = vpop.f32.mrb[0].mxu0
      %v5178 = vadd.f32 %v4933, %v5177
      %v5179 = vpop.f32.mrb[0].mxu0
      %5180 = vmatprep.mubr.f32.mxu0 %v4504
      %5181 = vmatmul.mubr.f32.gmra.mrb[0].mxu0 %v4503
      %v5182 = vpop.f32.mrb[0].mxu0
      %v5183 = vadd.f32 %v4938, %v5182
      %v5184 = vpop.f32.mrb[0].mxu0
      %5185 = vmatprep.mubr.f32.mxu0 %v4513
      %5186 = vmatmul.mubr.f32.gmra.mrb[0].mxu0 %v4512
      %v5187 = vpop.f32.mrb[0].mxu0
      %v5188 = vadd.f32 %v4943, %v5187
      %v5189 = vpop.f32.mrb[0].mxu0
      %5190 = vmatprep.mubr.f32.mxu0 %v4522
      %5191 = vmatmul.mubr.f32.gmra.mrb[0].mxu0 %v4521
      %v5192 = vpop.f32.mrb[0].mxu0
      %v5193 = vadd.f32 %v4948, %v5192
      %v5194 = vpop.f32.mrb[0].mxu0
      %5195 = vmatprep.mubr.f32.mxu0 %v4531
      %5196 = vmatmul.mubr.f32.gmra.mrb[0].mxu0 %v4530
      %v5197 = vpop.f32.mrb[0].mxu0
      %v5198 = vadd.f32 %v4953, %v5197
      %v5199 = vpop.f32.mrb[0].mxu0
      %5200 = vmatprep.mubr.f32.mxu0 %v4540
      %5201 = vmatmul.mubr.f32.gmra.mrb[0].mxu0 %v4539
      %v5202 = vpop.f32.mrb[0].mxu0
      %v5203 = vadd.f32 %v4958, %v5202
      %v5204 = vpop.f32.mrb[0].mxu0
      %5205 = vmatprep.mubr.f32.mxu0 %v4549
      %5206 = vmatmul.mubr.f32.gmra.mrb[0].mxu0 %v4548
      %v5207 = vpop.f32.mrb[0].mxu0
      %v5208 = vadd.f32 %v4963, %v5207
      %v5209 = vpop.f32.mrb[0].mxu0
      %5210 = vmatprep.mubr.f32.mxu0 %v4558
      %5211 = vmatmul.mubr.f32.gmra.mrb[0].mxu0 %v4557
      %v5212 = vpop.f32.mrb[0].mxu0
      %v5213 = vadd.f32 %v4968, %v5212
      %v5214 = vpop.f32.mrb[0].mxu0
      %5215 = vmatprep.mubr.f32.mxu0 %v4567
      %5216 = vmatmul.mubr.f32.gmra.mrb[0].mxu0 %v4566
      %v5217 = vpop.f32.mrb[0].mxu0
      %v5218 = vadd.f32 %v4973, %v5217
      %v5219 = vpop.f32.mrb[0].mxu0
      %5220 = vmatprep.mubr.f32.mxu0 %v4576
      %5221 = vmatmul.mubr.f32.gmra.mrb[0].mxu0 %v4575
      %v5222 = vpop.f32.mrb[0].mxu0
      %v5223 = vadd.f32 %v4978, %v5222
      %v5224 = vpop.f32.mrb[0].mxu0
      %5225 = vmatprep.mubr.f32.mxu0 %v4585
      %5226 = vmatmul.mubr.f32.gmra.mrb[0].mxu0 %v4584
      %v5227 = vpop.f32.mrb[0].mxu0
      %v5228 = vadd.f32 %v4983, %v5227
      %v5229 = vpop.f32.mrb[0].mxu0
      %5230 = vdwg.mxu0
      %5231 = vmatprep.subr.mxu0 0.0
      %5232 = vmatpush1.msra.mxu0 %v4655
      %5233 = vmatprep.subr.mxu0 0.0
      %5234 = vmatpush1.msra.mxu0 %v4656
      %5235 = vmatprep.subr.mxu0 0.0
      %5236 = vmatpush1.msra.mxu0 %v4657
      %5237 = vmatprep.subr.mxu0 0.0
      %5238 = vmatpush1.msra.mxu0 %v4658
      %5239 = vmatprep.subr.mxu0 0.0
      %5240 = vmatpush1.msra.mxu0 %v4659
      %5241 = vmatprep.subr.mxu0 0.0
      %5242 = vmatpush1.msra.mxu0 %v4660
      %5243 = vmatprep.subr.mxu0 0.0
      %5244 = vmatpush1.msra.mxu0 %v4661
      %5245 = vmatprep.subr.mxu0 0.0
      %5246 = vmatpush1.msra.mxu0 %v4662
      %5247 = vmatprep.subr.mxu0 0.0
      %5248 = vmatpush1.msra.mxu0 %v4663
      %5249 = vmatprep.subr.mxu0 0.0
      %5250 = vmatpush1.msra.mxu0 %v4664
      %5251 = vmatprep.subr.mxu0 0.0
      %5252 = vmatpush1.msra.mxu0 %v4665
      %5253 = vmatprep.subr.mxu0 0.0
      %5254 = vmatpush1.msra.mxu0 %v4666
      %5255 = vmatprep.subr.mxu0 0.0
      %5256 = vmatpush1.msra.mxu0 %v4667
      %5257 = vmatprep.subr.mxu0 0.0
      %5258 = vmatpush1.msra.mxu0 %v4668
      %5259 = vmatprep.subr.mxu0 0.0
      %5260 = vmatpush1.msra.mxu0 %v4669
      %5261 = vmatprep.subr.mxu0 0.0
      %5262 = vmatpush1.msra.mxu0 %v4670
      %5263 = vmatprep.subr.mxu0 0.0
      %5264 = vmatpush1.msra.mxu0 %v4671
      %5265 = vmatprep.subr.mxu0 0.0
      %5266 = vmatpush1.msra.mxu0 %v4672
      %5267 = vmatprep.subr.mxu0 0.0
      %5268 = vmatpush1.msra.mxu0 %v4673
      %5269 = vmatprep.subr.mxu0 0.0
      %5270 = vmatpush1.msra.mxu0 %v4674
      %5271 = vmatprep.subr.mxu0 0.0
      %5272 = vmatpush1.msra.mxu0 %v4675
      %5273 = vmatprep.subr.mxu0 0.0
      %5274 = vmatpush1.msra.mxu0 %v4676
      %5275 = vmatprep.subr.mxu0 0.0
      %5276 = vmatpush1.msra.mxu0 %v4677
      %5277 = vmatprep.subr.mxu0 0.0
      %5278 = vmatpush1.msra.mxu0 %v4678
      %5279 = vmatprep.subr.mxu0 0.0
      %5280 = vmatpush1.msra.mxu0 %v4679
      %5281 = vmatprep.subr.mxu0 0.0
      %5282 = vmatpush1.msra.mxu0 %v4680
      %5283 = vmatprep.subr.mxu0 0.0
      %5284 = vmatpush1.msra.mxu0 %v4681
      %5285 = vmatprep.subr.mxu0 0.0
      %5286 = vmatpush1.msra.mxu0 %v4682
      %5287 = vmatprep.subr.mxu0 0.0
      %5288 = vmatpush1.msra.mxu0 %v4683
      %5289 = vmatprep.subr.mxu0 0.0
      %5290 = vmatpush1.msra.mxu0 %v4684
      %5291 = vmatprep.subr.mxu0 0.0
      %5292 = vmatpush1.msra.mxu0 %v4685
      %5293 = vmatprep.subr.mxu0 0.0
      %5294 = vmatpush1.msra.mxu0 %v4686
      %5295 = vmatprep.mubr.f32.mxu0 %v4272
      %5296 = vmatmul.mubr.f32.gmra.mrb[0].mxu0 %v4271
      %v5297 = vpop.f32.mrb[0].mxu0
      %v5298 = vadd.f32 %v5053, %v5297
      %v5299 = vpop.f32.mrb[0].mxu0
      %5300 = vmatprep.mubr.f32.mxu0 %v4281
      %5301 = vmatmul.mubr.f32.gmra.mrb[0].mxu0 %v4280
      %v5302 = vpop.f32.mrb[0].mxu0
      %v5303 = vadd.f32 %v5058, %v5302
      %v5304 = vpop.f32.mrb[0].mxu0
      %5305 = vmatprep.mubr.f32.mxu0 %v4290
      %5306 = vmatmul.mubr.f32.gmra.mrb[0].mxu0 %v4289
      %v5307 = vpop.f32.mrb[0].mxu0
      %v5308 = vadd.f32 %v5063, %v5307
      %v5309 = vpop.f32.mrb[0].mxu0
      %5310 = vmatprep.mubr.f32.mxu0 %v4299
      %5311 = vmatmul.mubr.f32.gmra.mrb[0].mxu0 %v4298
      %v5312 = vpop.f32.mrb[0].mxu0
      %v5313 = vadd.f32 %v5068, %v5312
      %v5314 = vpop.f32.mrb[0].mxu0
      %5315 = vmatprep.mubr.f32.mxu0 %v4308
      %5316 = vmatmul.mubr.f32.gmra.mrb[0].mxu0 %v4307
      %v5317 = vpop.f32.mrb[0].mxu0
      %v5318 = vadd.f32 %v5073, %v5317
      %v5319 = vpop.f32.mrb[0].mxu0
      %5320 = vmatprep.mubr.f32.mxu0 %v4317
      %5321 = vmatmul.mubr.f32.gmra.mrb[0].mxu0 %v4316
      %v5322 = vpop.f32.mrb[0].mxu0
      %v5323 = vadd.f32 %v5078, %v5322
      %v5324 = vpop.f32.mrb[0].mxu0
      %5325 = vmatprep.mubr.f32.mxu0 %v4326
      %5326 = vmatmul.mubr.f32.gmra.mrb[0].mxu0 %v4325
      %v5327 = vpop.f32.mrb[0].mxu0
      %v5328 = vadd.f32 %v5083, %v5327
      %v5329 = vpop.f32.mrb[0].mxu0
      %5330 = vmatprep.mubr.f32.mxu0 %v4335
      %5331 = vmatmul.mubr.f32.gmra.mrb[0].mxu0 %v4334
      %v5332 = vpop.f32.mrb[0].mxu0
      %v5333 = vadd.f32 %v5088, %v5332
      %v5334 = vpop.f32.mrb[0].mxu0
      %5335 = vmatprep.mubr.f32.mxu0 %v4344
      %5336 = vmatmul.mubr.f32.gmra.mrb[0].mxu0 %v4343
      %v5337 = vpop.f32.mrb[0].mxu0
      %v5338 = vadd.f32 %v5093, %v5337
      %v5339 = vpop.f32.mrb[0].mxu0
      %5340 = vmatprep.mubr.f32.mxu0 %v4353
      %5341 = vmatmul.mubr.f32.gmra.mrb[0].mxu0 %v4352
      %v5342 = vpop.f32.mrb[0].mxu0
      %v5343 = vadd.f32 %v5098, %v5342
      %v5344 = vpop.f32.mrb[0].mxu0
      %5345 = vmatprep.mubr.f32.mxu0 %v4362
      %5346 = vmatmul.mubr.f32.gmra.mrb[0].mxu0 %v4361
      %v5347 = vpop.f32.mrb[0].mxu0
      %v5348 = vadd.f32 %v5103, %v5347
      %v5349 = vpop.f32.mrb[0].mxu0
      %5350 = vmatprep.mubr.f32.mxu0 %v4371
      %5351 = vmatmul.mubr.f32.gmra.mrb[0].mxu0 %v4370
      %v5352 = vpop.f32.mrb[0].mxu0
      %v5353 = vadd.f32 %v5108, %v5352
      %v5354 = vpop.f32.mrb[0].mxu0
      %5355 = vmatprep.mubr.f32.mxu0 %v4380
      %5356 = vmatmul.mubr.f32.gmra.mrb[0].mxu0 %v4379
      %v5357 = vpop.f32.mrb[0].mxu0
      %v5358 = vadd.f32 %v5113, %v5357
      %v5359 = vpop.f32.mrb[0].mxu0
      %5360 = vmatprep.mubr.f32.mxu0 %v4389
      %5361 = vmatmul.mubr.f32.gmra.mrb[0].mxu0 %v4388
      %v5362 = vpop.f32.mrb[0].mxu0
      %v5363 = vadd.f32 %v5118, %v5362
      %v5364 = vpop.f32.mrb[0].mxu0
      %5365 = vmatprep.mubr.f32.mxu0 %v4398
      %5366 = vmatmul.mubr.f32.gmra.mrb[0].mxu0 %v4397
      %v5367 = vpop.f32.mrb[0].mxu0
      %v5368 = vadd.f32 %v5123, %v5367
      %v5369 = vpop.f32.mrb[0].mxu0
      %5370 = vmatprep.mubr.f32.mxu0 %v4407
      %5371 = vmatmul.mubr.f32.gmra.mrb[0].mxu0 %v4406
      %v5372 = vpop.f32.mrb[0].mxu0
      %v5373 = vadd.f32 %v5128, %v5372
      %v5374 = vpop.f32.mrb[0].mxu0
      %5375 = vmatprep.mubr.f32.mxu0 %v4416
      %5376 = vmatmul.mubr.f32.gmra.mrb[0].mxu0 %v4415
      %v5377 = vpop.f32.mrb[0].mxu0
      %v5378 = vadd.f32 %v5133, %v5377
      %v5379 = vpop.f32.mrb[0].mxu0
      %5380 = vmatprep.mubr.f32.mxu0 %v4425
      %5381 = vmatmul.mubr.f32.gmra.mrb[0].mxu0 %v4424
      %v5382 = vpop.f32.mrb[0].mxu0
      %v5383 = vadd.f32 %v5138, %v5382
      %v5384 = vpop.f32.mrb[0].mxu0
      %5385 = vmatprep.mubr.f32.mxu0 %v4434
      %5386 = vmatmul.mubr.f32.gmra.mrb[0].mxu0 %v4433
      %v5387 = vpop.f32.mrb[0].mxu0
      %v5388 = vadd.f32 %v5143, %v5387
      %v5389 = vpop.f32.mrb[0].mxu0
      %5390 = vmatprep.mubr.f32.mxu0 %v4443
      %5391 = vmatmul.mubr.f32.gmra.mrb[0].mxu0 %v4442
      %v5392 = vpop.f32.mrb[0].mxu0
      %v5393 = vadd.f32 %v5148, %v5392
      %v5394 = vpop.f32.mrb[0].mxu0
      %5395 = vmatprep.mubr.f32.mxu0 %v4452
      %5396 = vmatmul.mubr.f32.gmra.mrb[0].mxu0 %v4451
      %v5397 = vpop.f32.mrb[0].mxu0
      %v5398 = vadd.f32 %v5153, %v5397
      %v5399 = vpop.f32.mrb[0].mxu0
      %5400 = vmatprep.mubr.f32.mxu0 %v4461
      %5401 = vmatmul.mubr.f32.gmra.mrb[0].mxu0 %v4460
      %v5402 = vpop.f32.mrb[0].mxu0
      %v5403 = vadd.f32 %v5158, %v5402
      %v5404 = vpop.f32.mrb[0].mxu0
      %5405 = vmatprep.mubr.f32.mxu0 %v4470
      %5406 = vmatmul.mubr.f32.gmra.mrb[0].mxu0 %v4469
      %v5407 = vpop.f32.mrb[0].mxu0
      %v5408 = vadd.f32 %v5163, %v5407
      %v5409 = vpop.f32.mrb[0].mxu0
      %5410 = vmatprep.mubr.f32.mxu0 %v4479
      %5411 = vmatmul.mubr.f32.gmra.mrb[0].mxu0 %v4478
      %v5412 = vpop.f32.mrb[0].mxu0
      %v5413 = vadd.f32 %v5168, %v5412
      %v5414 = vpop.f32.mrb[0].mxu0
      %5415 = vmatprep.mubr.f32.mxu0 %v4488
      %5416 = vmatmul.mubr.f32.gmra.mrb[0].mxu0 %v4487
      %v5417 = vpop.f32.mrb[0].mxu0
      %v5418 = vadd.f32 %v5173, %v5417
      %v5419 = vpop.f32.mrb[0].mxu0
      %5420 = vmatprep.mubr.f32.mxu0 %v4497
      %5421 = vmatmul.mubr.f32.gmra.mrb[0].mxu0 %v4496
      %v5422 = vpop.f32.mrb[0].mxu0
      %v5423 = vadd.f32 %v5178, %v5422
      %v5424 = vpop.f32.mrb[0].mxu0
      %5425 = vmatprep.mubr.f32.mxu0 %v4506
      %5426 = vmatmul.mubr.f32.gmra.mrb[0].mxu0 %v4505
      %v5427 = vpop.f32.mrb[0].mxu0
      %v5428 = vadd.f32 %v5183, %v5427
      %v5429 = vpop.f32.mrb[0].mxu0
      %5430 = vmatprep.mubr.f32.mxu0 %v4515
      %5431 = vmatmul.mubr.f32.gmra.mrb[0].mxu0 %v4514
      %v5432 = vpop.f32.mrb[0].mxu0
      %v5433 = vadd.f32 %v5188, %v5432
      %v5434 = vpop.f32.mrb[0].mxu0
      %5435 = vmatprep.mubr.f32.mxu0 %v4524
      %5436 = vmatmul.mubr.f32.gmra.mrb[0].mxu0 %v4523
      %v5437 = vpop.f32.mrb[0].mxu0
      %v5438 = vadd.f32 %v5193, %v5437
      %v5439 = vpop.f32.mrb[0].mxu0
      %5440 = vmatprep.mubr.f32.mxu0 %v4533
      %5441 = vmatmul.mubr.f32.gmra.mrb[0].mxu0 %v4532
      %v5442 = vpop.f32.mrb[0].mxu0
      %v5443 = vadd.f32 %v5198, %v5442
      %v5444 = vpop.f32.mrb[0].mxu0
      %5445 = vmatprep.mubr.f32.mxu0 %v4542
      %5446 = vmatmul.mubr.f32.gmra.mrb[0].mxu0 %v4541
      %v5447 = vpop.f32.mrb[0].mxu0
      %v5448 = vadd.f32 %v5203, %v5447
      %v5449 = vpop.f32.mrb[0].mxu0
      %5450 = vmatprep.mubr.f32.mxu0 %v4551
      %5451 = vmatmul.mubr.f32.gmra.mrb[0].mxu0 %v4550
      %v5452 = vpop.f32.mrb[0].mxu0
      %v5453 = vadd.f32 %v5208, %v5452
      %v5454 = vpop.f32.mrb[0].mxu0
      %5455 = vmatprep.mubr.f32.mxu0 %v4560
      %5456 = vmatmul.mubr.f32.gmra.mrb[0].mxu0 %v4559
      %v5457 = vpop.f32.mrb[0].mxu0
      %v5458 = vadd.f32 %v5213, %v5457
      %v5459 = vpop.f32.mrb[0].mxu0
      %5460 = vmatprep.mubr.f32.mxu0 %v4569
      %5461 = vmatmul.mubr.f32.gmra.mrb[0].mxu0 %v4568
      %v5462 = vpop.f32.mrb[0].mxu0
      %v5463 = vadd.f32 %v5218, %v5462
      %v5464 = vpop.f32.mrb[0].mxu0
      %5465 = vmatprep.mubr.f32.mxu0 %v4578
      %5466 = vmatmul.mubr.f32.gmra.mrb[0].mxu0 %v4577
      %v5467 = vpop.f32.mrb[0].mxu0
      %v5468 = vadd.f32 %v5223, %v5467
      %v5469 = vpop.f32.mrb[0].mxu0
      %5470 = vmatprep.mubr.f32.mxu0 %v4587
      %5471 = vmatmul.mubr.f32.gmra.mrb[0].mxu0 %v4586
      %v5472 = vpop.f32.mrb[0].mxu0
      %v5473 = vadd.f32 %v5228, %v5472
      %v5474 = vpop.f32.mrb[0].mxu0
      %5475 = vdwg.mxu0
      %5476 = vmatprep.subr.mxu0 0.0
      %5477 = vmatpush1.msra.mxu0 %v4687
      %5478 = vmatprep.subr.mxu0 0.0
      %5479 = vmatpush1.msra.mxu0 %v4688
      %5480 = vmatprep.subr.mxu0 0.0
      %5481 = vmatpush1.msra.mxu0 %v4689
      %5482 = vmatprep.subr.mxu0 0.0
      %5483 = vmatpush1.msra.mxu0 %v4690
      %5484 = vmatprep.subr.mxu0 0.0
      %5485 = vmatpush1.msra.mxu0 %v4691
      %5486 = vmatprep.subr.mxu0 0.0
      %5487 = vmatpush1.msra.mxu0 %v4692
      %5488 = vmatprep.subr.mxu0 0.0
      %5489 = vmatpush1.msra.mxu0 %v4693
      %5490 = vmatprep.subr.mxu0 0.0
      %5491 = vmatpush1.msra.mxu0 %v4694
      %5492 = vmatprep.subr.mxu0 0.0
      %5493 = vmatpush1.msra.mxu0 %v4695
      %5494 = vmatprep.subr.mxu0 0.0
      %5495 = vmatpush1.msra.mxu0 %v4696
      %5496 = vmatprep.subr.mxu0 0.0
      %5497 = vmatpush1.msra.mxu0 %v4697
      %5498 = vmatprep.subr.mxu0 0.0
      %5499 = vmatpush1.msra.mxu0 %v4698
      %5500 = vmatprep.subr.mxu0 0.0
      %5501 = vmatpush1.msra.mxu0 %v4699
      %5502 = vmatprep.subr.mxu0 0.0
      %5503 = vmatpush1.msra.mxu0 %v4700
      %5504 = vmatprep.subr.mxu0 0.0
      %5505 = vmatpush1.msra.mxu0 %v4701
      %5506 = vmatprep.subr.mxu0 0.0
      %5507 = vmatpush1.msra.mxu0 %v4702
      %5508 = vmatprep.subr.mxu0 0.0
      %5509 = vmatpush1.msra.mxu0 %v4703
      %5510 = vmatprep.subr.mxu0 0.0
      %5511 = vmatpush1.msra.mxu0 %v4704
      %5512 = vmatprep.subr.mxu0 0.0
      %5513 = vmatpush1.msra.mxu0 %v4705
      %5514 = vmatprep.subr.mxu0 0.0
      %5515 = vmatpush1.msra.mxu0 %v4706
      %5516 = vmatprep.subr.mxu0 0.0
      %5517 = vmatpush1.msra.mxu0 %v4707
      %5518 = vmatprep.subr.mxu0 0.0
      %5519 = vmatpush1.msra.mxu0 %v4708
      %5520 = vmatprep.subr.mxu0 0.0
      %5521 = vmatpush1.msra.mxu0 %v4709
      %5522 = vmatprep.subr.mxu0 0.0
      %5523 = vmatpush1.msra.mxu0 %v4710
      %5524 = vmatprep.subr.mxu0 0.0
      %5525 = vmatpush1.msra.mxu0 %v4711
      %5526 = vmatprep.subr.mxu0 0.0
      %5527 = vmatpush1.msra.mxu0 %v4712
      %5528 = vmatprep.subr.mxu0 0.0
      %5529 = vmatpush1.msra.mxu0 %v4713
      %5530 = vmatprep.subr.mxu0 0.0
      %5531 = vmatpush1.msra.mxu0 %v4714
      %5532 = vmatprep.subr.mxu0 0.0
      %5533 = vmatpush1.msra.mxu0 %v4715
      %5534 = vmatprep.subr.mxu0 0.0
      %5535 = vmatpush1.msra.mxu0 %v4716
      %5536 = vmatprep.subr.mxu0 0.0
      %5537 = vmatpush1.msra.mxu0 %v4717
      %5538 = vmatprep.subr.mxu0 0.0
      %5539 = vmatpush1.msra.mxu0 %v4718
      %5540 = vmatprep.mubr.f32.mxu0 %v4274
      %5541 = vmatmul.mubr.f32.gmra.mrb[0].mxu0 %v4273
      %v5542 = vpop.f32.mrb[0].mxu0
      %v5543 = vadd.f32 %v5298, %v5542
      %v5544 = vpop.f32.mrb[0].mxu0
      %5545 = vmatprep.mubr.f32.mxu0 %v4283
      %5546 = vmatmul.mubr.f32.gmra.mrb[0].mxu0 %v4282
      %v5547 = vpop.f32.mrb[0].mxu0
      %v5548 = vadd.f32 %v5303, %v5547
      %v5549 = vpop.f32.mrb[0].mxu0
      %5550 = vmatprep.mubr.f32.mxu0 %v4292
      %5551 = vmatmul.mubr.f32.gmra.mrb[0].mxu0 %v4291
      %v5552 = vpop.f32.mrb[0].mxu0
      %v5553 = vadd.f32 %v5308, %v5552
      %v5554 = vpop.f32.mrb[0].mxu0
      %5555 = vmatprep.mubr.f32.mxu0 %v4301
      %5556 = vmatmul.mubr.f32.gmra.mrb[0].mxu0 %v4300
      %v5557 = vpop.f32.mrb[0].mxu0
      %v5558 = vadd.f32 %v5313, %v5557
      %v5559 = vpop.f32.mrb[0].mxu0
      %5560 = vmatprep.mubr.f32.mxu0 %v4310
      %5561 = vmatmul.mubr.f32.gmra.mrb[0].mxu0 %v4309
      %v5562 = vpop.f32.mrb[0].mxu0
      %v5563 = vadd.f32 %v5318, %v5562
      %v5564 = vpop.f32.mrb[0].mxu0
      %5565 = vmatprep.mubr.f32.mxu0 %v4319
      %5566 = vmatmul.mubr.f32.gmra.mrb[0].mxu0 %v4318
      %v5567 = vpop.f32.mrb[0].mxu0
      %v5568 = vadd.f32 %v5323, %v5567
      %v5569 = vpop.f32.mrb[0].mxu0
      %5570 = vmatprep.mubr.f32.mxu0 %v4328
      %5571 = vmatmul.mubr.f32.gmra.mrb[0].mxu0 %v4327
      %v5572 = vpop.f32.mrb[0].mxu0
      %v5573 = vadd.f32 %v5328, %v5572
      %v5574 = vpop.f32.mrb[0].mxu0
      %5575 = vmatprep.mubr.f32.mxu0 %v4337
      %5576 = vmatmul.mubr.f32.gmra.mrb[0].mxu0 %v4336
      %v5577 = vpop.f32.mrb[0].mxu0
      %v5578 = vadd.f32 %v5333, %v5577
      %v5579 = vpop.f32.mrb[0].mxu0
      %5580 = vmatprep.mubr.f32.mxu0 %v4346
      %5581 = vmatmul.mubr.f32.gmra.mrb[0].mxu0 %v4345
      %v5582 = vpop.f32.mrb[0].mxu0
      %v5583 = vadd.f32 %v5338, %v5582
      %v5584 = vpop.f32.mrb[0].mxu0
      %5585 = vmatprep.mubr.f32.mxu0 %v4355
      %5586 = vmatmul.mubr.f32.gmra.mrb[0].mxu0 %v4354
      %v5587 = vpop.f32.mrb[0].mxu0
      %v5588 = vadd.f32 %v5343, %v5587
      %v5589 = vpop.f32.mrb[0].mxu0
      %5590 = vmatprep.mubr.f32.mxu0 %v4364
      %5591 = vmatmul.mubr.f32.gmra.mrb[0].mxu0 %v4363
      %v5592 = vpop.f32.mrb[0].mxu0
      %v5593 = vadd.f32 %v5348, %v5592
      %v5594 = vpop.f32.mrb[0].mxu0
      %5595 = vmatprep.mubr.f32.mxu0 %v4373
      %5596 = vmatmul.mubr.f32.gmra.mrb[0].mxu0 %v4372
      %v5597 = vpop.f32.mrb[0].mxu0
      %v5598 = vadd.f32 %v5353, %v5597
      %v5599 = vpop.f32.mrb[0].mxu0
      %5600 = vmatprep.mubr.f32.mxu0 %v4382
      %5601 = vmatmul.mubr.f32.gmra.mrb[0].mxu0 %v4381
      %v5602 = vpop.f32.mrb[0].mxu0
      %v5603 = vadd.f32 %v5358, %v5602
      %v5604 = vpop.f32.mrb[0].mxu0
      %5605 = vmatprep.mubr.f32.mxu0 %v4391
      %5606 = vmatmul.mubr.f32.gmra.mrb[0].mxu0 %v4390
      %v5607 = vpop.f32.mrb[0].mxu0
      %v5608 = vadd.f32 %v5363, %v5607
      %v5609 = vpop.f32.mrb[0].mxu0
      %5610 = vmatprep.mubr.f32.mxu0 %v4400
      %5611 = vmatmul.mubr.f32.gmra.mrb[0].mxu0 %v4399
      %v5612 = vpop.f32.mrb[0].mxu0
      %v5613 = vadd.f32 %v5368, %v5612
      %v5614 = vpop.f32.mrb[0].mxu0
      %5615 = vmatprep.mubr.f32.mxu0 %v4409
      %5616 = vmatmul.mubr.f32.gmra.mrb[0].mxu0 %v4408
      %v5617 = vpop.f32.mrb[0].mxu0
      %v5618 = vadd.f32 %v5373, %v5617
      %v5619 = vpop.f32.mrb[0].mxu0
      %5620 = vmatprep.mubr.f32.mxu0 %v4418
      %5621 = vmatmul.mubr.f32.gmra.mrb[0].mxu0 %v4417
      %v5622 = vpop.f32.mrb[0].mxu0
      %v5623 = vadd.f32 %v5378, %v5622
      %v5624 = vpop.f32.mrb[0].mxu0
      %5625 = vmatprep.mubr.f32.mxu0 %v4427
      %5626 = vmatmul.mubr.f32.gmra.mrb[0].mxu0 %v4426
      %v5627 = vpop.f32.mrb[0].mxu0
      %v5628 = vadd.f32 %v5383, %v5627
      %v5629 = vpop.f32.mrb[0].mxu0
      %5630 = vmatprep.mubr.f32.mxu0 %v4436
      %5631 = vmatmul.mubr.f32.gmra.mrb[0].mxu0 %v4435
      %v5632 = vpop.f32.mrb[0].mxu0
      %v5633 = vadd.f32 %v5388, %v5632
      %v5634 = vpop.f32.mrb[0].mxu0
      %5635 = vmatprep.mubr.f32.mxu0 %v4445
      %5636 = vmatmul.mubr.f32.gmra.mrb[0].mxu0 %v4444
      %v5637 = vpop.f32.mrb[0].mxu0
      %v5638 = vadd.f32 %v5393, %v5637
      %v5639 = vpop.f32.mrb[0].mxu0
      %5640 = vmatprep.mubr.f32.mxu0 %v4454
      %5641 = vmatmul.mubr.f32.gmra.mrb[0].mxu0 %v4453
      %v5642 = vpop.f32.mrb[0].mxu0
      %v5643 = vadd.f32 %v5398, %v5642
      %v5644 = vpop.f32.mrb[0].mxu0
      %5645 = vmatprep.mubr.f32.mxu0 %v4463
      %5646 = vmatmul.mubr.f32.gmra.mrb[0].mxu0 %v4462
      %v5647 = vpop.f32.mrb[0].mxu0
      %v5648 = vadd.f32 %v5403, %v5647
      %v5649 = vpop.f32.mrb[0].mxu0
      %5650 = vmatprep.mubr.f32.mxu0 %v4472
      %5651 = vmatmul.mubr.f32.gmra.mrb[0].mxu0 %v4471
      %v5652 = vpop.f32.mrb[0].mxu0
      %v5653 = vadd.f32 %v5408, %v5652
      %v5654 = vpop.f32.mrb[0].mxu0
      %5655 = vmatprep.mubr.f32.mxu0 %v4481
      %5656 = vmatmul.mubr.f32.gmra.mrb[0].mxu0 %v4480
      %v5657 = vpop.f32.mrb[0].mxu0
      %v5658 = vadd.f32 %v5413, %v5657
      %v5659 = vpop.f32.mrb[0].mxu0
      %5660 = vmatprep.mubr.f32.mxu0 %v4490
      %5661 = vmatmul.mubr.f32.gmra.mrb[0].mxu0 %v4489
      %v5662 = vpop.f32.mrb[0].mxu0
      %v5663 = vadd.f32 %v5418, %v5662
      %v5664 = vpop.f32.mrb[0].mxu0
      %5665 = vmatprep.mubr.f32.mxu0 %v4499
      %5666 = vmatmul.mubr.f32.gmra.mrb[0].mxu0 %v4498
      %v5667 = vpop.f32.mrb[0].mxu0
      %v5668 = vadd.f32 %v5423, %v5667
      %v5669 = vpop.f32.mrb[0].mxu0
      %5670 = vmatprep.mubr.f32.mxu0 %v4508
      %5671 = vmatmul.mubr.f32.gmra.mrb[0].mxu0 %v4507
      %v5672 = vpop.f32.mrb[0].mxu0
      %v5673 = vadd.f32 %v5428, %v5672
      %v5674 = vpop.f32.mrb[0].mxu0
      %5675 = vmatprep.mubr.f32.mxu0 %v4517
      %5676 = vmatmul.mubr.f32.gmra.mrb[0].mxu0 %v4516
      %v5677 = vpop.f32.mrb[0].mxu0
      %v5678 = vadd.f32 %v5433, %v5677
      %v5679 = vpop.f32.mrb[0].mxu0
      %5680 = vmatprep.mubr.f32.mxu0 %v4526
      %5681 = vmatmul.mubr.f32.gmra.mrb[0].mxu0 %v4525
      %v5682 = vpop.f32.mrb[0].mxu0
      %v5683 = vadd.f32 %v5438, %v5682
      %v5684 = vpop.f32.mrb[0].mxu0
      %5685 = vmatprep.mubr.f32.mxu0 %v4535
      %5686 = vmatmul.mubr.f32.gmra.mrb[0].mxu0 %v4534
      %v5687 = vpop.f32.mrb[0].mxu0
      %v5688 = vadd.f32 %v5443, %v5687
      %v5689 = vpop.f32.mrb[0].mxu0
      %5690 = vmatprep.mubr.f32.mxu0 %v4544
      %5691 = vmatmul.mubr.f32.gmra.mrb[0].mxu0 %v4543
      %v5692 = vpop.f32.mrb[0].mxu0
      %v5693 = vadd.f32 %v5448, %v5692
      %v5694 = vpop.f32.mrb[0].mxu0
      %5695 = vmatprep.mubr.f32.mxu0 %v4553
      %5696 = vmatmul.mubr.f32.gmra.mrb[0].mxu0 %v4552
      %v5697 = vpop.f32.mrb[0].mxu0
      %v5698 = vadd.f32 %v5453, %v5697
      %v5699 = vpop.f32.mrb[0].mxu0
      %5700 = vmatprep.mubr.f32.mxu0 %v4562
      %5701 = vmatmul.mubr.f32.gmra.mrb[0].mxu0 %v4561
      %v5702 = vpop.f32.mrb[0].mxu0
      %v5703 = vadd.f32 %v5458, %v5702
      %v5704 = vpop.f32.mrb[0].mxu0
      %5705 = vmatprep.mubr.f32.mxu0 %v4571
      %5706 = vmatmul.mubr.f32.gmra.mrb[0].mxu0 %v4570
      %v5707 = vpop.f32.mrb[0].mxu0
      %v5708 = vadd.f32 %v5463, %v5707
      %v5709 = vpop.f32.mrb[0].mxu0
      %5710 = vmatprep.mubr.f32.mxu0 %v4580
      %5711 = vmatmul.mubr.f32.gmra.mrb[0].mxu0 %v4579
      %v5712 = vpop.f32.mrb[0].mxu0
      %v5713 = vadd.f32 %v5468, %v5712
      %v5714 = vpop.f32.mrb[0].mxu0
      %5715 = vmatprep.mubr.f32.mxu0 %v4589
      %5716 = vmatmul.mubr.f32.gmra.mrb[0].mxu0 %v4588
      %v5717 = vpop.f32.mrb[0].mxu0
      %v5718 = vadd.f32 %v5473, %v5717
      %v5719 = vpop.f32.mrb[0].mxu0
      %5720 = vdwg.mxu0
      %5721 = vmatprep.subr.mxu0 0.0
      %5722 = vmatpush1.msra.mxu0 %v4719
      %5723 = vmatprep.subr.mxu0 0.0
      %5724 = vmatpush1.msra.mxu0 %v4720
      %5725 = vmatprep.subr.mxu0 0.0
      %5726 = vmatpush1.msra.mxu0 %v4721
      %5727 = vmatprep.subr.mxu0 0.0
      %5728 = vmatpush1.msra.mxu0 %v4722
      %5729 = vmatprep.subr.mxu0 0.0
      %5730 = vmatpush1.msra.mxu0 %v4723
      %5731 = vmatprep.subr.mxu0 0.0
      %5732 = vmatpush1.msra.mxu0 %v4724
      %5733 = vmatprep.subr.mxu0 0.0
      %5734 = vmatpush1.msra.mxu0 %v4725
      %5735 = vmatprep.subr.mxu0 0.0
      %5736 = vmatpush1.msra.mxu0 %v4726
      %5737 = vmatprep.subr.mxu0 0.0
      %5738 = vmatpush1.msra.mxu0 %v4727
      %5739 = vmatprep.subr.mxu0 0.0
      %5740 = vmatpush1.msra.mxu0 %v4728
      %5741 = vmatprep.subr.mxu0 0.0
      %5742 = vmatpush1.msra.mxu0 %v4729
      %5743 = vmatprep.subr.mxu0 0.0
      %5744 = vmatpush1.msra.mxu0 %v4730
      %5745 = vmatprep.subr.mxu0 0.0
      %5746 = vmatpush1.msra.mxu0 %v4731
      %5747 = vmatprep.subr.mxu0 0.0
      %5748 = vmatpush1.msra.mxu0 %v4732
      %5749 = vmatprep.subr.mxu0 0.0
      %5750 = vmatpush1.msra.mxu0 %v4733
      %5751 = vmatprep.subr.mxu0 0.0
      %5752 = vmatpush1.msra.mxu0 %v4734
      %5753 = vmatprep.subr.mxu0 0.0
      %5754 = vmatpush1.msra.mxu0 0.0
      %5755 = vmatprep.subr.mxu0 0.0
      %5756 = vmatpush1.msra.mxu0 0.0
      %5757 = vmatprep.subr.mxu0 0.0
      %5758 = vmatpush1.msra.mxu0 0.0
      %5759 = vmatprep.subr.mxu0 0.0
      %5760 = vmatpush1.msra.mxu0 0.0
      %5761 = vmatprep.subr.mxu0 0.0
      %5762 = vmatpush1.msra.mxu0 0.0
      %5763 = vmatprep.subr.mxu0 0.0
      %5764 = vmatpush1.msra.mxu0 0.0
      %5765 = vmatprep.subr.mxu0 0.0
      %5766 = vmatpush1.msra.mxu0 0.0
      %5767 = vmatprep.subr.mxu0 0.0
      %5768 = vmatpush1.msra.mxu0 0.0
      %5769 = vmatprep.subr.mxu0 0.0
      %5770 = vmatpush1.msra.mxu0 0.0
      %5771 = vmatprep.subr.mxu0 0.0
      %5772 = vmatpush1.msra.mxu0 0.0
      %5773 = vmatprep.subr.mxu0 0.0
      %5774 = vmatpush1.msra.mxu0 0.0
      %5775 = vmatprep.subr.mxu0 0.0
      %5776 = vmatpush1.msra.mxu0 0.0
      %5777 = vmatprep.subr.mxu0 0.0
      %5778 = vmatpush1.msra.mxu0 0.0
      %5779 = vmatprep.subr.mxu0 0.0
      %5780 = vmatpush1.msra.mxu0 0.0
      %5781 = vmatprep.subr.mxu0 0.0
      %5782 = vmatpush1.msra.mxu0 0.0
      %5783 = vmatprep.subr.mxu0 0.0
      %5784 = vmatpush1.msra.mxu0 0.0
      %5785 = vmatprep.mubr.f32.mxu0 0.0
      %5786 = vmatmul.mubr.f32.gmra.mrb[0].mxu0 %v4275
      %v5787 = vpop.f32.mrb[0].mxu0
      %v5788 = vadd.f32 %v5543, %v5787
      %v5789 = vpop.f32.mrb[0].mxu0
      %5790 = vmatprep.mubr.f32.mxu0 0.0
      %5791 = vmatmul.mubr.f32.gmra.mrb[0].mxu0 %v4284
      %v5792 = vpop.f32.mrb[0].mxu0
      %v5793 = vadd.f32 %v5548, %v5792
      %v5794 = vpop.f32.mrb[0].mxu0
      %5795 = vmatprep.mubr.f32.mxu0 0.0
      %5796 = vmatmul.mubr.f32.gmra.mrb[0].mxu0 %v4293
      %v5797 = vpop.f32.mrb[0].mxu0
      %v5798 = vadd.f32 %v5553, %v5797
      %v5799 = vpop.f32.mrb[0].mxu0
      %5800 = vmatprep.mubr.f32.mxu0 0.0
      %5801 = vmatmul.mubr.f32.gmra.mrb[0].mxu0 %v4302
      %v5802 = vpop.f32.mrb[0].mxu0
      %v5803 = vadd.f32 %v5558, %v5802
      %v5804 = vpop.f32.mrb[0].mxu0
      %5805 = vmatprep.mubr.f32.mxu0 0.0
      %5806 = vmatmul.mubr.f32.gmra.mrb[0].mxu0 %v4311
      %v5807 = vpop.f32.mrb[0].mxu0
      %v5808 = vadd.f32 %v5563, %v5807
      %v5809 = vpop.f32.mrb[0].mxu0
      %5810 = vmatprep.mubr.f32.mxu0 0.0
      %5811 = vmatmul.mubr.f32.gmra.mrb[0].mxu0 %v4320
      %v5812 = vpop.f32.mrb[0].mxu0
      %v5813 = vadd.f32 %v5568, %v5812
      %v5814 = vpop.f32.mrb[0].mxu0
      %5815 = vmatprep.mubr.f32.mxu0 0.0
      %5816 = vmatmul.mubr.f32.gmra.mrb[0].mxu0 %v4329
      %v5817 = vpop.f32.mrb[0].mxu0
      %v5818 = vadd.f32 %v5573, %v5817
      %v5819 = vpop.f32.mrb[0].mxu0
      %5820 = vmatprep.mubr.f32.mxu0 0.0
      %5821 = vmatmul.mubr.f32.gmra.mrb[0].mxu0 %v4338
      %v5822 = vpop.f32.mrb[0].mxu0
      %v5823 = vadd.f32 %v5578, %v5822
      %v5824 = vpop.f32.mrb[0].mxu0
      %5825 = vmatprep.mubr.f32.mxu0 0.0
      %5826 = vmatmul.mubr.f32.gmra.mrb[0].mxu0 %v4347
      %v5827 = vpop.f32.mrb[0].mxu0
      %v5828 = vadd.f32 %v5583, %v5827
      %v5829 = vpop.f32.mrb[0].mxu0
      %5830 = vmatprep.mubr.f32.mxu0 0.0
      %5831 = vmatmul.mubr.f32.gmra.mrb[0].mxu0 %v4356
      %v5832 = vpop.f32.mrb[0].mxu0
      %v5833 = vadd.f32 %v5588, %v5832
      %v5834 = vpop.f32.mrb[0].mxu0
      %5835 = vmatprep.mubr.f32.mxu0 0.0
      %5836 = vmatmul.mubr.f32.gmra.mrb[0].mxu0 %v4365
      %v5837 = vpop.f32.mrb[0].mxu0
      %v5838 = vadd.f32 %v5593, %v5837
      %v5839 = vpop.f32.mrb[0].mxu0
      %5840 = vmatprep.mubr.f32.mxu0 0.0
      %5841 = vmatmul.mubr.f32.gmra.mrb[0].mxu0 %v4374
      %v5842 = vpop.f32.mrb[0].mxu0
      %v5843 = vadd.f32 %v5598, %v5842
      %v5844 = vpop.f32.mrb[0].mxu0
      %5845 = vmatprep.mubr.f32.mxu0 0.0
      %5846 = vmatmul.mubr.f32.gmra.mrb[0].mxu0 %v4383
      %v5847 = vpop.f32.mrb[0].mxu0
      %v5848 = vadd.f32 %v5603, %v5847
      %v5849 = vpop.f32.mrb[0].mxu0
      %5850 = vmatprep.mubr.f32.mxu0 0.0
      %5851 = vmatmul.mubr.f32.gmra.mrb[0].mxu0 %v4392
      %v5852 = vpop.f32.mrb[0].mxu0
      %v5853 = vadd.f32 %v5608, %v5852
      %v5854 = vpop.f32.mrb[0].mxu0
      %5855 = vmatprep.mubr.f32.mxu0 0.0
      %5856 = vmatmul.mubr.f32.gmra.mrb[0].mxu0 %v4401
      %v5857 = vpop.f32.mrb[0].mxu0
      %v5858 = vadd.f32 %v5613, %v5857
      %v5859 = vpop.f32.mrb[0].mxu0
      %5860 = vmatprep.mubr.f32.mxu0 0.0
      %5861 = vmatmul.mubr.f32.gmra.mrb[0].mxu0 %v4410
      %v5862 = vpop.f32.mrb[0].mxu0
      %v5863 = vadd.f32 %v5618, %v5862
      %v5864 = vpop.f32.mrb[0].mxu0
      %5865 = vmatprep.mubr.f32.mxu0 0.0
      %5866 = vmatmul.mubr.f32.gmra.mrb[0].mxu0 %v4419
      %v5867 = vpop.f32.mrb[0].mxu0
      %v5868 = vadd.f32 %v5623, %v5867
      %v5869 = vpop.f32.mrb[0].mxu0
      %5870 = vmatprep.mubr.f32.mxu0 0.0
      %5871 = vmatmul.mubr.f32.gmra.mrb[0].mxu0 %v4428
      %v5872 = vpop.f32.mrb[0].mxu0
      %v5873 = vadd.f32 %v5628, %v5872
      %v5874 = vpop.f32.mrb[0].mxu0
      %5875 = vmatprep.mubr.f32.mxu0 0.0
      %5876 = vmatmul.mubr.f32.gmra.mrb[0].mxu0 %v4437
      %v5877 = vpop.f32.mrb[0].mxu0
      %v5878 = vadd.f32 %v5633, %v5877
      %v5879 = vpop.f32.mrb[0].mxu0
      %5880 = vmatprep.mubr.f32.mxu0 0.0
      %5881 = vmatmul.mubr.f32.gmra.mrb[0].mxu0 %v4446
      %v5882 = vpop.f32.mrb[0].mxu0
      %v5883 = vadd.f32 %v5638, %v5882
      %v5884 = vpop.f32.mrb[0].mxu0
      %5885 = vmatprep.mubr.f32.mxu0 0.0
      %5886 = vmatmul.mubr.f32.gmra.mrb[0].mxu0 %v4455
      %v5887 = vpop.f32.mrb[0].mxu0
      %v5888 = vadd.f32 %v5643, %v5887
      %v5889 = vpop.f32.mrb[0].mxu0
      %5890 = vmatprep.mubr.f32.mxu0 0.0
      %5891 = vmatmul.mubr.f32.gmra.mrb[0].mxu0 %v4464
      %v5892 = vpop.f32.mrb[0].mxu0
      %v5893 = vadd.f32 %v5648, %v5892
      %v5894 = vpop.f32.mrb[0].mxu0
      %5895 = vmatprep.mubr.f32.mxu0 0.0
      %5896 = vmatmul.mubr.f32.gmra.mrb[0].mxu0 %v4473
      %v5897 = vpop.f32.mrb[0].mxu0
      %v5898 = vadd.f32 %v5653, %v5897
      %v5899 = vpop.f32.mrb[0].mxu0
      %5900 = vmatprep.mubr.f32.mxu0 0.0
      %5901 = vmatmul.mubr.f32.gmra.mrb[0].mxu0 %v4482
      %v5902 = vpop.f32.mrb[0].mxu0
      %v5903 = vadd.f32 %v5658, %v5902
      %v5904 = vpop.f32.mrb[0].mxu0
      %5905 = vmatprep.mubr.f32.mxu0 0.0
      %5906 = vmatmul.mubr.f32.gmra.mrb[0].mxu0 %v4491
      %v5907 = vpop.f32.mrb[0].mxu0
      %v5908 = vadd.f32 %v5663, %v5907
      %v5909 = vpop.f32.mrb[0].mxu0
      %5910 = vmatprep.mubr.f32.mxu0 0.0
      %5911 = vmatmul.mubr.f32.gmra.mrb[0].mxu0 %v4500
      %v5912 = vpop.f32.mrb[0].mxu0
      %v5913 = vadd.f32 %v5668, %v5912
      %v5914 = vpop.f32.mrb[0].mxu0
      %5915 = vmatprep.mubr.f32.mxu0 0.0
      %5916 = vmatmul.mubr.f32.gmra.mrb[0].mxu0 %v4509
      %v5917 = vpop.f32.mrb[0].mxu0
      %v5918 = vadd.f32 %v5673, %v5917
      %v5919 = vpop.f32.mrb[0].mxu0
      %5920 = vmatprep.mubr.f32.mxu0 0.0
      %5921 = vmatmul.mubr.f32.gmra.mrb[0].mxu0 %v4518
      %v5922 = vpop.f32.mrb[0].mxu0
      %v5923 = vadd.f32 %v5678, %v5922
      %v5924 = vpop.f32.mrb[0].mxu0
      %5925 = vmatprep.mubr.f32.mxu0 0.0
      %5926 = vmatmul.mubr.f32.gmra.mrb[0].mxu0 %v4527
      %v5927 = vpop.f32.mrb[0].mxu0
      %v5928 = vadd.f32 %v5683, %v5927
      %v5929 = vpop.f32.mrb[0].mxu0
      %5930 = vmatprep.mubr.f32.mxu0 0.0
      %5931 = vmatmul.mubr.f32.gmra.mrb[0].mxu0 %v4536
      %v5932 = vpop.f32.mrb[0].mxu0
      %v5933 = vadd.f32 %v5688, %v5932
      %v5934 = vpop.f32.mrb[0].mxu0
      %5935 = vmatprep.mubr.f32.mxu0 0.0
      %5936 = vmatmul.mubr.f32.gmra.mrb[0].mxu0 %v4545
      %v5937 = vpop.f32.mrb[0].mxu0
      %v5938 = vadd.f32 %v5693, %v5937
      %v5939 = vpop.f32.mrb[0].mxu0
      %5940 = vmatprep.mubr.f32.mxu0 0.0
      %5941 = vmatmul.mubr.f32.gmra.mrb[0].mxu0 %v4554
      %v5942 = vpop.f32.mrb[0].mxu0
      %v5943 = vadd.f32 %v5698, %v5942
      %v5944 = vpop.f32.mrb[0].mxu0
      %5945 = vmatprep.mubr.f32.mxu0 0.0
      %5946 = vmatmul.mubr.f32.gmra.mrb[0].mxu0 %v4563
      %v5947 = vpop.f32.mrb[0].mxu0
      %v5948 = vadd.f32 %v5703, %v5947
      %v5949 = vpop.f32.mrb[0].mxu0
      %5950 = vmatprep.mubr.f32.mxu0 0.0
      %5951 = vmatmul.mubr.f32.gmra.mrb[0].mxu0 %v4572
      %v5952 = vpop.f32.mrb[0].mxu0
      %v5953 = vadd.f32 %v5708, %v5952
      %v5954 = vpop.f32.mrb[0].mxu0
      %5955 = vmatprep.mubr.f32.mxu0 0.0
      %5956 = vmatmul.mubr.f32.gmra.mrb[0].mxu0 %v4581
      %v5957 = vpop.f32.mrb[0].mxu0
      %v5958 = vadd.f32 %v5713, %v5957
      %v5959 = vpop.f32.mrb[0].mxu0
      %5960 = vmatprep.mubr.f32.mxu0 0.0
      %5961 = vmatmul.mubr.f32.gmra.mrb[0].mxu0 %v4590
      %v5962 = vpop.f32.mrb[0].mxu0
      %v5963 = vadd.f32 %v5718, %v5962
      %v5964 = vpop.f32.mrb[0].mxu0
      %5965 = vdwg.mxu0
      %v5966 = vmax.f32 %v5788, 0.0
      %v5967 = vmax.f32 %v5793, 0.0
      %v5968 = vmax.f32 %v5798, 0.0
      %v5969 = vmax.f32 %v5803, 0.0
      %v5970 = vmax.f32 %v5808, 0.0
      %v5971 = vmax.f32 %v5813, 0.0
      %v5972 = vmax.f32 %v5818, 0.0
      %v5973 = vmax.f32 %v5823, 0.0
      %v5974 = vmax.f32 %v5828, 0.0
      %v5975 = vmax.f32 %v5833, 0.0
      %v5976 = vmax.f32 %v5838, 0.0
      %v5977 = vmax.f32 %v5843, 0.0
      %v5978 = vmax.f32 %v5848, 0.0
      %v5979 = vmax.f32 %v5853, 0.0
      %v5980 = vmax.f32 %v5858, 0.0
      %v5981 = vmax.f32 %v5863, 0.0
      %v5982 = vmax.f32 %v5868, 0.0
      %v5983 = vmax.f32 %v5873, 0.0
      %v5984 = vmax.f32 %v5878, 0.0
      %v5985 = vmax.f32 %v5883, 0.0
      %v5986 = vmax.f32 %v5888, 0.0
      %v5987 = vmax.f32 %v5893, 0.0
      %v5988 = vmax.f32 %v5898, 0.0
      %v5989 = vmax.f32 %v5903, 0.0
      %v5990 = vmax.f32 %v5908, 0.0
      %v5991 = vmax.f32 %v5913, 0.0
      %v5992 = vmax.f32 %v5918, 0.0
      %v5993 = vmax.f32 %v5923, 0.0
      %v5994 = vmax.f32 %v5928, 0.0
      %v5995 = vmax.f32 %v5933, 0.0
      %v5996 = vmax.f32 %v5938, 0.0
      %v5997 = vmax.f32 %v5943, 0.0
      %v5998 = vmax.f32 %v5948, 0.0
      %v5999 = vmax.f32 %v5953, 0.0
      %v6000 = vmax.f32 %v5958, 0.0
      %v6001 = vmax.f32 %v5963, 0.0
      %v6002 = vsel %vm3511, %v5966, 0.0
      %v6003 = vsel %vm3512, %v5967, 0.0
      %v6004 = vsel %vm3513, %v5968, 0.0
      %v6005 = vsel %vm3514, %v5969, 0.0
      %v6006 = vsel %vm3515, %v5970, 0.0
      %v6007 = vsel %vm3516, %v5971, 0.0
      %v6008 = vsel %vm3517, %v5972, 0.0
      %v6009 = vsel %vm3518, %v5973, 0.0
      %v6010 = vsel %vm3519, %v5974, 0.0
      %v6011 = vsel %vm3520, %v5975, 0.0
      %v6012 = vsel %vm3521, %v5976, 0.0
      %v6013 = vsel %vm3522, %v5977, 0.0
      %v6014 = vsel %vm3523, %v5978, 0.0
      %v6015 = vsel %vm3524, %v5979, 0.0
      %v6016 = vsel %vm3525, %v5980, 0.0
      %v6017 = vsel %vm3526, %v5981, 0.0
      %v6018 = vsel %vm3527, %v5982, 0.0
      %v6019 = vsel %vm3528, %v5983, 0.0
      %v6020 = vsel %vm3529, %v5984, 0.0
      %v6021 = vsel %vm3530, %v5985, 0.0
      %v6022 = vsel %vm3531, %v5986, 0.0
      %v6023 = vsel %vm3532, %v5987, 0.0
      %v6024 = vsel %vm3533, %v5988, 0.0
      %v6025 = vsel %vm3534, %v5989, 0.0
      %v6026 = vsel %vm3535, %v5990, 0.0
      %v6027 = vsel %vm3536, %v5991, 0.0
      %v6028 = vsel %vm3537, %v5992, 0.0
      %v6029 = vsel %vm3538, %v5993, 0.0
      %v6030 = vsel %vm3539, %v5994, 0.0
      %v6031 = vsel %vm3540, %v5995, 0.0
      %v6032 = vsel %vm3541, %v5996, 0.0
      %v6033 = vsel %vm3542, %v5997, 0.0
      %v6034 = vsel %vm3543, %v5998, 0.0
      %v6035 = vsel %vm3544, %v5999, 0.0
      %v6036 = vsel %vm3545, %v6000, 0.0
      %v6037 = vsel %vm3546, %v6001, 0.0
      %6038 = vst [vmem:[%s224] sm:$0xff] %v6002
      %6039 = vst [vmem:[%s224 + $0x8] sm:$0xff] %v6003
      %6040 = vst [vmem:[%s224 + $0x10] sm:$0xff] %v6004
      %6041 = vst [vmem:[%s224 + $0x18] sm:$0xff] %v6005
      %6042 = vst [vmem:[%s224 + $0x20] sm:$0xff] %v6006
      %6043 = vst [vmem:[%s224 + $0x28] sm:$0xff] %v6007
      %6044 = vst [vmem:[%s224 + $0x30] sm:$0xff] %v6008
      %6045 = vst [vmem:[%s224 + $0x38] sm:$0xff] %v6009
      %6046 = vst [vmem:[%s224 + $0x40] sm:$0xff] %v6010
      %6047 = vst [vmem:[%s224 + $0x48] sm:$0xff] %v6011
      %6048 = vst [vmem:[%s224 + $0x50] sm:$0xff] %v6012
      %6049 = vst [vmem:[%s224 + $0x58] sm:$0xff] %v6013
      %6050 = vst [vmem:[%s224 + $0x60] sm:$0xff] %v6014
      %6051 = vst [vmem:[%s224 + $0x68] sm:$0xff] %v6015
      %6052 = vst [vmem:[%s224 + $0x70] sm:$0xff] %v6016
      %6053 = vst [vmem:[%s224 + $0x78] sm:$0xff] %v6017
      %6054 = vst [vmem:[%s224 + $0x80] sm:$0xff] %v6018
      %6055 = vst [vmem:[%s224 + $0x88] sm:$0xff] %v6019
      %6056 = vst [vmem:[%s224 + $0x90] sm:$0xff] %v6020
      %6057 = vst [vmem:[%s224 + $0x98] sm:$0xff] %v6021
      %6058 = vst [vmem:[%s224 + $0xa0] sm:$0xff] %v6022
      %6059 = vst [vmem:[%s224 + $0xa8] sm:$0xff] %v6023
      %6060 = vst [vmem:[%s224 + $0xb0] sm:$0xff] %v6024
      %6061 = vst [vmem:[%s224 + $0xb8] sm:$0xff] %v6025
      %6062 = vst [vmem:[%s224 + $0xc0] sm:$0xff] %v6026
      %6063 = vst [vmem:[%s224 + $0xc8] sm:$0xff] %v6027
      %6064 = vst [vmem:[%s224 + $0xd0] sm:$0xff] %v6028
      %6065 = vst [vmem:[%s224 + $0xd8] sm:$0xff] %v6029
      %6066 = vst [vmem:[%s224 + $0xe0] sm:$0xff] %v6030
      %6067 = vst [vmem:[%s224 + $0xe8] sm:$0xff] %v6031
      %6068 = vst [vmem:[%s224 + $0xf0] sm:$0xff] %v6032
      %6069 = vst [vmem:[%s224 + $0xf8] sm:$0xff] %v6033
      %6070 = vst [vmem:[%s224 + $0x100] sm:$0xff] %v6034
      %6071 = vst [vmem:[%s224 + $0x108] sm:$0xff] %v6035
      %6072 = vst [vmem:[%s224 + $0x110] sm:$0xff] %v6036
      %6073 = vst [vmem:[%s224 + $0x118] sm:$0xff] %v6037
      %s6074 = smul.u32 36, %s16
      %p6075 = scmp.lt.s32.totalorder %s6074, 71
      %s6076 = scalar_select %p6075, %s6074, 71
      %s6077 = smul.addr %s6076, 8
      %s6078 = scalar_lea.vmem %s5, %s6077
      // Predicated region
      $region41: #{basic_block_forward.1} parent=39 // pred_check
        %p6079 = pneg %p144
      $region42: #{basic_block_forward.1} parent=39 // pred_check_branch
        %6081 = sbr.rel (%p6079) target = $region44
      $region43: #{basic_block_forward.1} parent=39 // pred_region
        %s6082 = smul.u32 36, %s16
      $region44: #{basic_block_forward.1} parent=39 // pred_fallthru
        _
    $region40: #{basic_block_forward.1} parent=5 // pred_fallthru
      _
    %p6083 = scmp.le.s32.totalorder 2, %s11
    // Predicated region
    $region45: #{basic_block_forward.1} parent=5 // pred_check
      %p6084 = pneg %p6083
    $region46: #{basic_block_forward.1} parent=5 // pred_check_branch
      %6086 = sbr.rel (%p6084) target = $region48
    $region47: #{basic_block_forward.1} parent=5 // pred_region
      %s6087 = ssub.s32 %s11, 2
      // Predicated region
      $region49: #{basic_block_forward.1} parent=47 // pred_check
        %p6088 = pneg %p150
      $region50: #{basic_block_forward.1} parent=47 // pred_check_branch
        %6090 = sbr.rel (%p6088) target = $region52
      $region51: #{basic_block_forward.1} parent=47 // pred_region
        %s6091 = smul.u32 36, %s17
        %p6092 = scmp.lt.s32.totalorder %s6091, 71
        %s6093 = scalar_select %p6092, %s6091, 71
        %s6094 = smul.addr %s6093, 8
        %s6095 = scalar_lea.vmem %s5, %s6094
      $region52: #{basic_block_forward.1} parent=47 // pred_fallthru
        _
    $region48: #{basic_block_forward.1} parent=5 // pred_fallthru
      _
  $region6: #{basic_block_forward.1} parent=0 // loop_footer
    %s15 = sadd.s32 1, %s11
  $region7: #{basic_block_forward.1} parent=0 // loop_footer_branch
    %10 = sbr.rel target = $region3
  $region8: #{basic_block_forward.1} parent=0 // loop_exit
    _

</llo_original>
